<compile_context>
chip_gen: v7x
topology: tpu7x:2x2x1
jax: 0.10.0
libtpu: 0.0.40
codegen_flags: <defaults>
</compile_context>

<pallas_src>
import math

import numpy as np

import jax
import jax.numpy as jnp
from jax import lax
from jax.experimental import pallas as pl
from jax.experimental.pallas import tpu as pltpu

# ----------------------------- config ----------------------------------------
IN_CHANNELS = 3
NUM_CLASSES = 7
DIMS = (32, 64, 128)
STEM_PATCH = 4
B, T, H, W = 2, 5, 16, 16          # 5-frame video, small spatial size
LN_EPS = 1e-5
BN_EPS = 1e-5
HEAD_PAD = 128                     # lane-dense padded width of the head output
N_TAPS = 27
MASK_LANES = 32                    # boundary-mask table is (R, 32); lane k = tap k


def _grid_after_ds(g):
    # Conv3d(kernel=2, stride=2) output size (PyTorch floor arithmetic).
    return tuple((d - 2) // 2 + 1 for d in g)


# ----------------------------- host-side structural data ----------------------
def _dw_masks(batch, grid):
    """Boundary masks for the depthwise 3x3x3 conv (padding 1).

    (R, MASK_LANES) f32, R = batch * prod(grid); column k is 1.0 where tap k's
    neighbour is in bounds, 0.0 where it would read zero padding."""
    Tt, Hh, Ww = grid
    R = batch * Tt * Hh * Ww
    M = np.zeros((R, MASK_LANES), np.float32)
    for k, (kt, kh, kw) in enumerate(np.ndindex(3, 3, 3)):
        dt, dh, dw = kt - 1, kh - 1, kw - 1
        for b in range(batch):
            for t in range(Tt):
                for h in range(Hh):
                    for w in range(Ww):
                        if (0 <= t + dt < Tt and 0 <= h + dh < Hh
                                and 0 <= w + dw < Ww):
                            M[((b * Tt + t) * Hh + h) * Ww + w, k] = 1.0
    return M


def _ds_gather_stacked(batch, grid_in):
    """Stacked gather matrix for Conv3d(k=2, s=2): (8*Rout, Rin), tap-major."""
    Ti, Hi, Wi = grid_in
    To, Ho, Wo = _grid_after_ds(grid_in)
    Rin = batch * Ti * Hi * Wi
    Rout = batch * To * Ho * Wo

    def rin(b, t, h, w):
        return ((b * Ti + t) * Hi + h) * Wi + w

    def rout(b, t, h, w):
        return ((b * To + t) * Ho + h) * Wo + w

    P = np.zeros((8, Rout, Rin), np.float32)
    for k, (kt, kh, kw) in enumerate(np.ndindex(2, 2, 2)):
        for b in range(batch):
            for to in range(To):
                for ho in range(Ho):
                    for wo in range(Wo):
                        P[k, rout(b, to, ho, wo),
                          rin(b, 2 * to + kt, 2 * ho + kh, 2 * wo + kw)] = 1.0
    return P.reshape(8 * Rout, Rin)


def _pool_mat(batch, grid):
    """AdaptiveAvgPool3d(1) as a (B, R) averaging matrix."""
    S = int(np.prod(grid))
    P = np.zeros((batch, batch * S), np.float32)
    for b in range(batch):
        P[b, b * S:(b + 1) * S] = 1.0 / S
    return P


# ----------------------------- in-kernel helpers ------------------------------
def _gelu(x):
    # TODO(synk): nn.GELU() default is the exact erf form; using the tanh
    # approximation for robust Mosaic lowering (max abs diff ~1e-3).
    c = math.sqrt(2.0 / math.pi)
    return 0.5 * x * (1.0 + jnp.tanh(c * (x + 0.044715 * x * x * x)))


def _layernorm(x, g, b):
    # single-pass mean / variance
    mu = jnp.mean(x, axis=-1, keepdims=True)
    ms = jnp.mean(x * x, axis=-1, keepdims=True)
    var = ms - mu * mu
    return (x - mu) * lax.rsqrt(var + LN_EPS) * g + b


def _shift_rows(x, shift):
    """y[r, :] = x[(r + shift) mod R, :]; wrapped rows are zeroed by the caller."""
    if shift == 0:
        return x
    sp = shift % x.shape[0]
    return jnp.concatenate([x[sp:, :], x[:sp, :]], axis=0)


def _dwconv3x3x3(x, grid, mask_ref, wdw_ref, bdw_ref):
    """Depthwise 3x3x3 conv, padding 1, on channel-last (R, C) activations."""
    Tt, Hh, Ww = grid
    masks = mask_ref[...]                       # (R, 32); lane k = tap-k validity
    acc = None
    for kt in range(3):
        for kh in range(3):
            for kw in range(3):
                dt, dh, dw = kt - 1, kh - 1, kw - 1
                # taps that can only ever read zero padding are dropped statically
                if (dt != 0 and Tt < 2) or (dh != 0 and Hh < 2) or (dw != 0 and Ww < 2):
                    continue
                k = (kt * 3 + kh) * 3 + kw
                shift = dt * Hh * Ww + dh * Ww + dw
                term = _shift_rows(x, shift) * wdw_ref[k]      # (R, C) * (1, C)
                if (dt, dh, dw) != (0, 0, 0):
                    term = term * masks[:, k:k + 1]            # zero padded rows
                acc = term if acc is None else acc + term
    return acc + bdw_ref[...]


def _convnext_block(x, grid, mask_ref, wdw_ref, bdw_ref, lng_ref, lnb_ref,
                    wp1_ref, bp1_ref, wp2_ref, bp2_ref, ls_ref):
    y = _dwconv3x3x3(x, grid, mask_ref, wdw_ref, bdw_ref)
    y = _layernorm(y, lng_ref[...], lnb_ref[...])
    y = _gelu(jnp.dot(y.astype(jnp.bfloat16), wp1_ref[...],
                      preferred_element_type=jnp.float32) + bp1_ref[...])
    y = jnp.dot(y.astype(jnp.bfloat16), wp2_ref[...],
                preferred_element_type=jnp.float32) + bp2_ref[...]
    return x + ls_ref[...] * y                   # residual + LayerScale


def _downsample(x, p_ref, wds_ref, bds_ref):
    """Conv3d(k=2, s=2) + folded BatchNorm + GELU.

    One stacked bf16 gather matmul, then 8 accumulated dense tap matmuls."""
    rout = p_ref.shape[0] // 8
    g = jnp.dot(p_ref[...], x.astype(jnp.bfloat16),
                preferred_element_type=jnp.float32)            # (8*Rout, Cin)
    acc = None
    for k in range(8):
        gk = g[k * rout:(k + 1) * rout].astype(jnp.bfloat16)
        t = jnp.dot(gk, wds_ref[k], preferred_element_type=jnp.float32)
        acc = t if acc is None else acc + t
    return _gelu(acc + bds_ref[...])


# ----------------------------- the single fused kernel ------------------------
def _make_kernel(g1, g2, g3):
    def kernel(*refs):
        (xp_ref, wst_ref, bst_ref,
         msk1, wdw1, bdw1, lng1, lnb1, wp1a, bp1a, wp1b, bp1b, ls1,
         p1, wds1, bds1,
         msk2, wdw2, bdw2, lng2, lnb2, wp2a, bp2a, wp2b, bp2b, ls2,
         p2, wds2, bds2,
         msk3, wdw3, bdw3, lng3, lnb3, wp3a, bp3a, wp3b, bp3b, ls3,
         pool_ref, wh_ref, bh_ref,
         out_ref) = refs

        # stage 1: stem (patchify matmul, BN folded) + GELU, ConvNeXt block
        x = _gelu(jnp.dot(xp_ref[...].astype(jnp.bfloat16), wst_ref[...],
                          preferred_element_type=jnp.float32) + bst_ref[...])
        x = _convnext_block(x, g1, msk1, wdw1, bdw1, lng1, lnb1,
                            wp1a, bp1a, wp1b, bp1b, ls1)

        # stage 2
        x = _downsample(x, p1, wds1, bds1)
        x = _convnext_block(x, g2, msk2, wdw2, bdw2, lng2, lnb2,
                            wp2a, bp2a, wp2b, bp2b, ls2)

        # stage 3
        x = _downsample(x, p2, wds2, bds2)
        x = _convnext_block(x, g3, msk3, wdw3, bdw3, lng3, lnb3,
                            wp3a, bp3a, wp3b, bp3b, ls3)

        # global average pool (matrix form) + lane-padded classifier head
        pooled = jnp.dot(pool_ref[...], x, preferred_element_type=jnp.float32)
        out_ref[...] = jnp.dot(pooled.astype(jnp.bfloat16), wh_ref[...],
                               preferred_element_type=jnp.float32) + bh_ref[...]
    return kernel


# ----------------------------- wrapper ----------------------------------------
def _extract_stem_patches(x, p):
    # (B, C, T, H, W) -> (B*T*(H/p)*(W/p), C*p*p); kernel (1,p,p), stride (1,p,p).
    Bb, C, Tt, Hh, Ww = x.shape
    assert Hh % p == 0 and Ww % p == 0
    nh, nw = Hh // p, Ww // p
    xp = x.reshape(Bb, C, Tt, nh, p, nw, p)
    xp = xp.transpose(0, 2, 3, 5, 1, 4, 6)               # (B, T, nh, nw, C, p, p)
    return xp.reshape(Bb * Tt * nh * nw, C * p * p)


@jax.jit
def convnext3d_forward(x, flat_params):
    b = x.shape[0]
    g1 = (x.shape[2], x.shape[3] // STEM_PATCH, x.shape[4] // STEM_PATCH)
    g2 = _grid_after_ds(g1)
    g3 = _grid_after_ds(g2)
    xp = _extract_stem_patches(x, STEM_PATCH)
    out_padded = pl.pallas_call(
        _make_kernel(g1, g2, g3),
        out_shape=jax.ShapeDtypeStruct((b, HEAD_PAD), jnp.float32),
        compiler_params=pltpu.CompilerParams(vmem_limit_bytes=32 * 1024 * 1024),
        cost_estimate=pl.CostEstimate(flops=7_000_000, transcendentals=40_000,
                                      bytes_accessed=750_000),
    )(xp, *flat_params)
    return out_padded[:, :NUM_CLASSES]


# ----------------------------- parameters -------------------------------------
def init_params(key, batch, t, h, w):
    g1 = (t, h // STEM_PATCH, w // STEM_PATCH)
    g2 = _grid_after_ds(g1)
    g3 = _grid_after_ds(g2)
    d0, d1, d2 = DIMS
    cpp = IN_CHANNELS * 1 * STEM_PATCH * STEM_PATCH

    keys = iter(jax.random.split(key, 256))

    def nrm(shape, scale=0.05):
        return (scale * jax.random.normal(next(keys), shape)).astype(jnp.float32)

    def rowvec(c, scale=0.05):
        return nrm((1, c), scale)

    def bf16(a):
        return a.astype(jnp.bfloat16)

    def fold_bn(w_conv, b_conv, c_out):
        # eval-mode BatchNorm3d folded into the preceding conv.
        # TODO(synk): running_mean=0 / running_var=1 matches a freshly
        # initialized BatchNorm3d; fold the real running stats when porting
        # trained weights.
        gamma = 1.0 + nrm((c_out,), 0.05)
        beta = nrm((c_out,), 0.05)
        mean = jnp.zeros((c_out,), jnp.float32)
        var = jnp.ones((c_out,), jnp.float32)
        s = gamma / jnp.sqrt(var + BN_EPS)
        return w_conv * s, ((b_conv - mean) * s + beta).reshape(1, -1)

    # stem: Conv3d(3 -> 32, k=(1,4,4), s=(1,4,4)) + BN + GELU
    w_stem_eff, b_stem_eff = fold_bn(nrm((cpp, d0)), nrm((d0,)), d0)

    def block_params(grid, dim):
        return [
            jnp.asarray(_dw_masks(batch, grid)),          # (R, 32) boundary masks
            nrm((N_TAPS, 1, dim)),                        # depthwise weights
            rowvec(dim),                                  # depthwise bias
            1.0 + rowvec(dim), rowvec(dim),               # LayerNorm gamma / beta
            bf16(nrm((dim, 4 * dim))), rowvec(4 * dim),   # pwconv1
            bf16(nrm((4 * dim, dim))), rowvec(dim),       # pwconv2
            rowvec(dim, 0.1),   # LayerScale gamma (torch init is zeros; nonzero
                                # here so the block path is actually exercised)
        ]

    def ds_params(grid_in, cin, cout):
        P = _ds_gather_stacked(batch, grid_in)            # (8*Rout, Rin) 0/1
        w_eff, b_eff = fold_bn(nrm((8, cin, cout)), nrm((cout,)), cout)
        return [jnp.asarray(P, jnp.bfloat16), bf16(w_eff), b_eff]

    pool = jnp.asarray(_pool_mat(batch, g3))              # (B, R3)
    w_head, b_head = nrm((d2, NUM_CLASSES)), nrm((NUM_CLASSES,))
    w_head_pad = jnp.zeros((d2, HEAD_PAD), jnp.float32).at[:, :NUM_CLASSES].set(w_head)
    b_head_pad = jnp.zeros((1, HEAD_PAD), jnp.float32).at[0, :NUM_CLASSES].set(b_head)

    flat = [bf16(w_stem_eff), b_stem_eff]
    flat += block_params(g1, d0)
    flat += ds_params(g1, d0, d1)
    flat += block_params(g2, d1)
    flat += ds_params(g2, d1, d2)
    flat += block_params(g3, d2)
    flat += [pool, bf16(w_head_pad), b_head_pad]
    return flat


# ----------------------------- main -------------------------------------------
if __name__ == "__main__":
    key = jax.random.PRNGKey(0)
    kp, kx = jax.random.split(key)
    flat_params = init_params(kp, B, T, H, W)
    x = jax.random.normal(kx, (B, IN_CHANNELS, T, H, W), jnp.float32)

    out = jax.block_until_ready(convnext3d_forward(x, flat_params))
    assert out.shape == (B, NUM_CLASSES), out.shape
    assert bool(jnp.all(jnp.isfinite(out)))
    print("KERNEL_OK")
</pallas_src>

<mosaic_0001>
module attributes {stable_mosaic.version = 11 : i64} {
  func.func @kernel(%arg0: memref<160x48xf32, #tpu.memory_space<vmem>>, %arg1: memref<48x32xbf16, #tpu.memory_space<vmem>>, %arg2: memref<1x32xf32, #tpu.memory_space<vmem>>, %arg3: memref<160x32xf32, #tpu.memory_space<vmem>>, %arg4: memref<27x1x32xf32, #tpu.memory_space<vmem>>, %arg5: memref<1x32xf32, #tpu.memory_space<vmem>>, %arg6: memref<1x32xf32, #tpu.memory_space<vmem>>, %arg7: memref<1x32xf32, #tpu.memory_space<vmem>>, %arg8: memref<32x128xbf16, #tpu.memory_space<vmem>>, %arg9: memref<1x128xf32, #tpu.memory_space<vmem>>, %arg10: memref<128x32xbf16, #tpu.memory_space<vmem>>, %arg11: memref<1x32xf32, #tpu.memory_space<vmem>>, %arg12: memref<1x32xf32, #tpu.memory_space<vmem>>, %arg13: memref<128x160xbf16, #tpu.memory_space<vmem>>, %arg14: memref<8x32x64xbf16, #tpu.memory_space<vmem>>, %arg15: memref<1x64xf32, #tpu.memory_space<vmem>>, %arg16: memref<16x32xf32, #tpu.memory_space<vmem>>, %arg17: memref<27x1x64xf32, #tpu.memory_space<vmem>>, %arg18: memref<1x64xf32, #tpu.memory_space<vmem>>, %arg19: memref<1x64xf32, #tpu.memory_space<vmem>>, %arg20: memref<1x64xf32, #tpu.memory_space<vmem>>, %arg21: memref<64x256xbf16, #tpu.memory_space<vmem>>, %arg22: memref<1x256xf32, #tpu.memory_space<vmem>>, %arg23: memref<256x64xbf16, #tpu.memory_space<vmem>>, %arg24: memref<1x64xf32, #tpu.memory_space<vmem>>, %arg25: memref<1x64xf32, #tpu.memory_space<vmem>>, %arg26: memref<16x16xbf16, #tpu.memory_space<vmem>>, %arg27: memref<8x64x128xbf16, #tpu.memory_space<vmem>>, %arg28: memref<1x128xf32, #tpu.memory_space<vmem>>, %arg29: memref<2x32xf32, #tpu.memory_space<vmem>>, %arg30: memref<27x1x128xf32, #tpu.memory_space<vmem>>, %arg31: memref<1x128xf32, #tpu.memory_space<vmem>>, %arg32: memref<1x128xf32, #tpu.memory_space<vmem>>, %arg33: memref<1x128xf32, #tpu.memory_space<vmem>>, %arg34: memref<128x512xbf16, #tpu.memory_space<vmem>>, %arg35: memref<1x512xf32, #tpu.memory_space<vmem>>, %arg36: memref<512x128xbf16, #tpu.memory_space<vmem>>, %arg37: memref<1x128xf32, #tpu.memory_space<vmem>>, %arg38: memref<1x128xf32, #tpu.memory_space<vmem>>, %arg39: memref<2x2xf32, #tpu.memory_space<vmem>>, %arg40: memref<128x128xbf16, #tpu.memory_space<vmem>>, %arg41: memref<1x128xf32, #tpu.memory_space<vmem>>, %arg42: memref<2x128xf32, #tpu.memory_space<vmem>>) attributes {dimension_semantics = [], scalar_prefetch = 0 : i64, scratch_operands = 0 : i64, tpu.core_type = #tpu.core_type<tc>} {
    %c0 = arith.constant 0 : index
    %c0_0 = arith.constant 0 : index
    %0 = vector.load %arg0[%c0, %c0_0] : memref<160x48xf32, #tpu.memory_space<vmem>>, vector<160x48xf32>
    %1 = arith.truncf %0 : vector<160x48xf32> to vector<160x48xbf16>
    %c0_1 = arith.constant 0 : index
    %c0_2 = arith.constant 0 : index
    %2 = vector.load %arg1[%c0_1, %c0_2] : memref<48x32xbf16, #tpu.memory_space<vmem>>, vector<48x32xbf16>
    %cst = arith.constant dense<0.000000e+00> : vector<160x32xf32>
    %3 = tpu.matmul %1, %2, %cst {dimension_numbers = #tpu.dot_dimension_numbers<[1], [0], [0], [1], [0, 0, 1, 1], [], []>} : vector<160x48xbf16>, vector<48x32xbf16>, vector<160x32xf32> -> vector<160x32xf32>
    %c0_3 = arith.constant 0 : index
    %c0_4 = arith.constant 0 : index
    %4 = vector.load %arg2[%c0_3, %c0_4] : memref<1x32xf32, #tpu.memory_space<vmem>>, vector<1x32xf32>
    %5 = vector.broadcast %4 : vector<1x32xf32> to vector<160x32xf32>
    %6 = arith.addf %3, %5 : vector<160x32xf32>
    %cst_5 = arith.constant 5.000000e-01 : f32
    %7 = vector.broadcast %cst_5 : f32 to vector<160x32xf32>
    %8 = arith.mulf %7, %6 : vector<160x32xf32>
    %cst_6 = arith.constant 4.471500e-02 : f32
    %9 = vector.broadcast %cst_6 : f32 to vector<160x32xf32>
    %10 = arith.mulf %9, %6 : vector<160x32xf32>
    %11 = arith.mulf %10, %6 : vector<160x32xf32>
    %12 = arith.mulf %11, %6 : vector<160x32xf32>
    %13 = arith.addf %6, %12 : vector<160x32xf32>
    %cst_7 = arith.constant 0.797884583 : f32
    %14 = vector.broadcast %cst_7 : f32 to vector<160x32xf32>
    %15 = arith.mulf %14, %13 : vector<160x32xf32>
    %16 = math.tanh %15 : vector<160x32xf32>
    %cst_8 = arith.constant 1.000000e+00 : f32
    %17 = vector.broadcast %cst_8 : f32 to vector<160x32xf32>
    %18 = arith.addf %17, %16 : vector<160x32xf32>
    %19 = arith.mulf %8, %18 : vector<160x32xf32>
    %c0_9 = arith.constant 0 : index
    %c0_10 = arith.constant 0 : index
    %20 = vector.load %arg3[%c0_9, %c0_10] : memref<160x32xf32, #tpu.memory_space<vmem>>, vector<160x32xf32>
    %21 = vector.extract_strided_slice %19 {offsets = [139, 0], sizes = [21, 32], strides = [1, 1]} : vector<160x32xf32> to vector<21x32xf32>
    %22 = vector.extract_strided_slice %19 {offsets = [0, 0], sizes = [139, 32], strides = [1, 1]} : vector<160x32xf32> to vector<139x32xf32>
    %23 = tpu.concatenate %21, %22 in 0 : vector<21x32xf32>, vector<139x32xf32> -> vector<160x32xf32>
    %c0_11 = arith.constant 0 : index
    %c0_12 = arith.constant 0 : index
    %c0_13 = arith.constant 0 : index
    %24 = vector.load %arg4[%c0_11, %c0_12, %c0_13] : memref<27x1x32xf32, #tpu.memory_space<vmem>>, vector<1x1x32xf32>
    %25 = vector.shape_cast %24 : vector<1x1x32xf32> to vector<1x32xf32>
    %26 = vector.broadcast %25 : vector<1x32xf32> to vector<160x32xf32>
    %27 = arith.mulf %23, %26 : vector<160x32xf32>
    %28 = vector.extract_strided_slice %20 {offsets = [0, 0], sizes = [160, 1], strides = [1, 1]} : vector<160x32xf32> to vector<160x1xf32>
    %29 = vector.broadcast %28 : vector<160x1xf32> to vector<160x32xf32>
    %30 = arith.mulf %27, %29 : vector<160x32xf32>
    %31 = vector.extract_strided_slice %19 {offsets = [140, 0], sizes = [20, 32], strides = [1, 1]} : vector<160x32xf32> to vector<20x32xf32>
    %32 = vector.extract_strided_slice %19 {offsets = [0, 0], sizes = [140, 32], strides = [1, 1]} : vector<160x32xf32> to vector<140x32xf32>
    %33 = tpu.concatenate %31, %32 in 0 : vector<20x32xf32>, vector<140x32xf32> -> vector<160x32xf32>
    %c1 = arith.constant 1 : index
    %c0_14 = arith.constant 0 : index
    %c0_15 = arith.constant 0 : index
    %34 = vector.load %arg4[%c1, %c0_14, %c0_15] : memref<27x1x32xf32, #tpu.memory_space<vmem>>, vector<1x1x32xf32>
    %35 = vector.shape_cast %34 : vector<1x1x32xf32> to vector<1x32xf32>
    %36 = vector.broadcast %35 : vector<1x32xf32> to vector<160x32xf32>
    %37 = arith.mulf %33, %36 : vector<160x32xf32>
    %38 = vector.extract_strided_slice %20 {offsets = [0, 1], sizes = [160, 1], strides = [1, 1]} : vector<160x32xf32> to vector<160x1xf32>
    %39 = vector.broadcast %38 : vector<160x1xf32> to vector<160x32xf32>
    %40 = arith.mulf %37, %39 : vector<160x32xf32>
    %41 = arith.addf %30, %40 : vector<160x32xf32>
    %42 = vector.extract_strided_slice %19 {offsets = [141, 0], sizes = [19, 32], strides = [1, 1]} : vector<160x32xf32> to vector<19x32xf32>
    %43 = vector.extract_strided_slice %19 {offsets = [0, 0], sizes = [141, 32], strides = [1, 1]} : vector<160x32xf32> to vector<141x32xf32>
    %44 = tpu.concatenate %42, %43 in 0 : vector<19x32xf32>, vector<141x32xf32> -> vector<160x32xf32>
    %c2 = arith.constant 2 : index
    %c0_16 = arith.constant 0 : index
    %c0_17 = arith.constant 0 : index
    %45 = vector.load %arg4[%c2, %c0_16, %c0_17] : memref<27x1x32xf32, #tpu.memory_space<vmem>>, vector<1x1x32xf32>
    %46 = vector.shape_cast %45 : vector<1x1x32xf32> to vector<1x32xf32>
    %47 = vector.broadcast %46 : vector<1x32xf32> to vector<160x32xf32>
    %48 = arith.mulf %44, %47 : vector<160x32xf32>
    %49 = vector.extract_strided_slice %20 {offsets = [0, 2], sizes = [160, 1], strides = [1, 1]} : vector<160x32xf32> to vector<160x1xf32>
    %50 = vector.broadcast %49 : vector<160x1xf32> to vector<160x32xf32>
    %51 = arith.mulf %48, %50 : vector<160x32xf32>
    %52 = arith.addf %41, %51 : vector<160x32xf32>
    %53 = vector.extract_strided_slice %19 {offsets = [143, 0], sizes = [17, 32], strides = [1, 1]} : vector<160x32xf32> to vector<17x32xf32>
    %54 = vector.extract_strided_slice %19 {offsets = [0, 0], sizes = [143, 32], strides = [1, 1]} : vector<160x32xf32> to vector<143x32xf32>
    %55 = tpu.concatenate %53, %54 in 0 : vector<17x32xf32>, vector<143x32xf32> -> vector<160x32xf32>
    %c3 = arith.constant 3 : index
    %c0_18 = arith.constant 0 : index
    %c0_19 = arith.constant 0 : index
    %56 = vector.load %arg4[%c3, %c0_18, %c0_19] : memref<27x1x32xf32, #tpu.memory_space<vmem>>, vector<1x1x32xf32>
    %57 = vector.shape_cast %56 : vector<1x1x32xf32> to vector<1x32xf32>
    %58 = vector.broadcast %57 : vector<1x32xf32> to vector<160x32xf32>
    %59 = arith.mulf %55, %58 : vector<160x32xf32>
    %60 = vector.extract_strided_slice %20 {offsets = [0, 3], sizes = [160, 1], strides = [1, 1]} : vector<160x32xf32> to vector<160x1xf32>
    %61 = vector.broadcast %60 : vector<160x1xf32> to vector<160x32xf32>
    %62 = arith.mulf %59, %61 : vector<160x32xf32>
    %63 = arith.addf %52, %62 : vector<160x32xf32>
    %64 = vector.extract_strided_slice %19 {offsets = [144, 0], sizes = [16, 32], strides = [1, 1]} : vector<160x32xf32> to vector<16x32xf32>
    %65 = vector.extract_strided_slice %19 {offsets = [0, 0], sizes = [144, 32], strides = [1, 1]} : vector<160x32xf32> to vector<144x32xf32>
    %66 = tpu.concatenate %64, %65 in 0 : vector<16x32xf32>, vector<144x32xf32> -> vector<160x32xf32>
    %c4 = arith.constant 4 : index
    %c0_20 = arith.constant 0 : index
    %c0_21 = arith.constant 0 : index
    %67 = vector.load %arg4[%c4, %c0_20, %c0_21] : memref<27x1x32xf32, #tpu.memory_space<vmem>>, vector<1x1x32xf32>
    %68 = vector.shape_cast %67 : vector<1x1x32xf32> to vector<1x32xf32>
    %69 = vector.broadcast %68 : vector<1x32xf32> to vector<160x32xf32>
    %70 = arith.mulf %66, %69 : vector<160x32xf32>
    %71 = vector.extract_strided_slice %20 {offsets = [0, 4], sizes = [160, 1], strides = [1, 1]} : vector<160x32xf32> to vector<160x1xf32>
    %72 = vector.broadcast %71 : vector<160x1xf32> to vector<160x32xf32>
    %73 = arith.mulf %70, %72 : vector<160x32xf32>
    %74 = arith.addf %63, %73 : vector<160x32xf32>
    %75 = vector.extract_strided_slice %19 {offsets = [145, 0], sizes = [15, 32], strides = [1, 1]} : vector<160x32xf32> to vector<15x32xf32>
    %76 = vector.extract_strided_slice %19 {offsets = [0, 0], sizes = [145, 32], strides = [1, 1]} : vector<160x32xf32> to vector<145x32xf32>
    %77 = tpu.concatenate %75, %76 in 0 : vector<15x32xf32>, vector<145x32xf32> -> vector<160x32xf32>
    %c5 = arith.constant 5 : index
    %c0_22 = arith.constant 0 : index
    %c0_23 = arith.constant 0 : index
    %78 = vector.load %arg4[%c5, %c0_22, %c0_23] : memref<27x1x32xf32, #tpu.memory_space<vmem>>, vector<1x1x32xf32>
    %79 = vector.shape_cast %78 : vector<1x1x32xf32> to vector<1x32xf32>
    %80 = vector.broadcast %79 : vector<1x32xf32> to vector<160x32xf32>
    %81 = arith.mulf %77, %80 : vector<160x32xf32>
    %82 = vector.extract_strided_slice %20 {offsets = [0, 5], sizes = [160, 1], strides = [1, 1]} : vector<160x32xf32> to vector<160x1xf32>
    %83 = vector.broadcast %82 : vector<160x1xf32> to vector<160x32xf32>
    %84 = arith.mulf %81, %83 : vector<160x32xf32>
    %85 = arith.addf %74, %84 : vector<160x32xf32>
    %86 = vector.extract_strided_slice %19 {offsets = [147, 0], sizes = [13, 32], strides = [1, 1]} : vector<160x32xf32> to vector<13x32xf32>
    %87 = vector.extract_strided_slice %19 {offsets = [0, 0], sizes = [147, 32], strides = [1, 1]} : vector<160x32xf32> to vector<147x32xf32>
    %88 = tpu.concatenate %86, %87 in 0 : vector<13x32xf32>, vector<147x32xf32> -> vector<160x32xf32>
    %c6 = arith.constant 6 : index
    %c0_24 = arith.constant 0 : index
    %c0_25 = arith.constant 0 : index
    %89 = vector.load %arg4[%c6, %c0_24, %c0_25] : memref<27x1x32xf32, #tpu.memory_space<vmem>>, vector<1x1x32xf32>
    %90 = vector.shape_cast %89 : vector<1x1x32xf32> to vector<1x32xf32>
    %91 = vector.broadcast %90 : vector<1x32xf32> to vector<160x32xf32>
    %92 = arith.mulf %88, %91 : vector<160x32xf32>
    %93 = vector.extract_strided_slice %20 {offsets = [0, 6], sizes = [160, 1], strides = [1, 1]} : vector<160x32xf32> to vector<160x1xf32>
    %94 = vector.broadcast %93 : vector<160x1xf32> to vector<160x32xf32>
    %95 = arith.mulf %92, %94 : vector<160x32xf32>
    %96 = arith.addf %85, %95 : vector<160x32xf32>
    %97 = vector.extract_strided_slice %19 {offsets = [148, 0], sizes = [12, 32], strides = [1, 1]} : vector<160x32xf32> to vector<12x32xf32>
    %98 = vector.extract_strided_slice %19 {offsets = [0, 0], sizes = [148, 32], strides = [1, 1]} : vector<160x32xf32> to vector<148x32xf32>
    %99 = tpu.concatenate %97, %98 in 0 : vector<12x32xf32>, vector<148x32xf32> -> vector<160x32xf32>
    %c7 = arith.constant 7 : index
    %c0_26 = arith.constant 0 : index
    %c0_27 = arith.constant 0 : index
    %100 = vector.load %arg4[%c7, %c0_26, %c0_27] : memref<27x1x32xf32, #tpu.memory_space<vmem>>, vector<1x1x32xf32>
    %101 = vector.shape_cast %100 : vector<1x1x32xf32> to vector<1x32xf32>
    %102 = vector.broadcast %101 : vector<1x32xf32> to vector<160x32xf32>
    %103 = arith.mulf %99, %102 : vector<160x32xf32>
    %104 = vector.extract_strided_slice %20 {offsets = [0, 7], sizes = [160, 1], strides = [1, 1]} : vector<160x32xf32> to vector<160x1xf32>
    %105 = vector.broadcast %104 : vector<160x1xf32> to vector<160x32xf32>
    %106 = arith.mulf %103, %105 : vector<160x32xf32>
    %107 = arith.addf %96, %106 : vector<160x32xf32>
    %108 = vector.extract_strided_slice %19 {offsets = [149, 0], sizes = [11, 32], strides = [1, 1]} : vector<160x32xf32> to vector<11x32xf32>
    %109 = vector.extract_strided_slice %19 {offsets = [0, 0], sizes = [149, 32], strides = [1, 1]} : vector<160x32xf32> to vector<149x32xf32>
    %110 = tpu.concatenate %108, %109 in 0 : vector<11x32xf32>, vector<149x32xf32> -> vector<160x32xf32>
    %c8 = arith.constant 8 : index
    %c0_28 = arith.constant 0 : index
    %c0_29 = arith.constant 0 : index
    %111 = vector.load %arg4[%c8, %c0_28, %c0_29] : memref<27x1x32xf32, #tpu.memory_space<vmem>>, vector<1x1x32xf32>
    %112 = vector.shape_cast %111 : vector<1x1x32xf32> to vector<1x32xf32>
    %113 = vector.broadcast %112 : vector<1x32xf32> to vector<160x32xf32>
    %114 = arith.mulf %110, %113 : vector<160x32xf32>
    %115 = vector.extract_strided_slice %20 {offsets = [0, 8], sizes = [160, 1], strides = [1, 1]} : vector<160x32xf32> to vector<160x1xf32>
    %116 = vector.broadcast %115 : vector<160x1xf32> to vector<160x32xf32>
    %117 = arith.mulf %114, %116 : vector<160x32xf32>
    %118 = arith.addf %107, %117 : vector<160x32xf32>
    %119 = vector.extract_strided_slice %19 {offsets = [155, 0], sizes = [5, 32], strides = [1, 1]} : vector<160x32xf32> to vector<5x32xf32>
    %120 = vector.extract_strided_slice %19 {offsets = [0, 0], sizes = [155, 32], strides = [1, 1]} : vector<160x32xf32> to vector<155x32xf32>
    %121 = tpu.concatenate %119, %120 in 0 : vector<5x32xf32>, vector<155x32xf32> -> vector<160x32xf32>
    %c9 = arith.constant 9 : index
    %c0_30 = arith.constant 0 : index
    %c0_31 = arith.constant 0 : index
    %122 = vector.load %arg4[%c9, %c0_30, %c0_31] : memref<27x1x32xf32, #tpu.memory_space<vmem>>, vector<1x1x32xf32>
    %123 = vector.shape_cast %122 : vector<1x1x32xf32> to vector<1x32xf32>
    %124 = vector.broadcast %123 : vector<1x32xf32> to vector<160x32xf32>
    %125 = arith.mulf %121, %124 : vector<160x32xf32>
    %126 = vector.extract_strided_slice %20 {offsets = [0, 9], sizes = [160, 1], strides = [1, 1]} : vector<160x32xf32> to vector<160x1xf32>
    %127 = vector.broadcast %126 : vector<160x1xf32> to vector<160x32xf32>
    %128 = arith.mulf %125, %127 : vector<160x32xf32>
    %129 = arith.addf %118, %128 : vector<160x32xf32>
    %130 = vector.extract_strided_slice %19 {offsets = [156, 0], sizes = [4, 32], strides = [1, 1]} : vector<160x32xf32> to vector<4x32xf32>
    %131 = vector.extract_strided_slice %19 {offsets = [0, 0], sizes = [156, 32], strides = [1, 1]} : vector<160x32xf32> to vector<156x32xf32>
    %132 = tpu.concatenate %130, %131 in 0 : vector<4x32xf32>, vector<156x32xf32> -> vector<160x32xf32>
    %c10 = arith.constant 10 : index
    %c0_32 = arith.constant 0 : index
    %c0_33 = arith.constant 0 : index
    %133 = vector.load %arg4[%c10, %c0_32, %c0_33] : memref<27x1x32xf32, #tpu.memory_space<vmem>>, vector<1x1x32xf32>
    %134 = vector.shape_cast %133 : vector<1x1x32xf32> to vector<1x32xf32>
    %135 = vector.broadcast %134 : vector<1x32xf32> to vector<160x32xf32>
    %136 = arith.mulf %132, %135 : vector<160x32xf32>
    %137 = vector.extract_strided_slice %20 {offsets = [0, 10], sizes = [160, 1], strides = [1, 1]} : vector<160x32xf32> to vector<160x1xf32>
    %138 = vector.broadcast %137 : vector<160x1xf32> to vector<160x32xf32>
    %139 = arith.mulf %136, %138 : vector<160x32xf32>
    %140 = arith.addf %129, %139 : vector<160x32xf32>
    %141 = vector.extract_strided_slice %19 {offsets = [157, 0], sizes = [3, 32], strides = [1, 1]} : vector<160x32xf32> to vector<3x32xf32>
    %142 = vector.extract_strided_slice %19 {offsets = [0, 0], sizes = [157, 32], strides = [1, 1]} : vector<160x32xf32> to vector<157x32xf32>
    %143 = tpu.concatenate %141, %142 in 0 : vector<3x32xf32>, vector<157x32xf32> -> vector<160x32xf32>
    %c11 = arith.constant 11 : index
    %c0_34 = arith.constant 0 : index
    %c0_35 = arith.constant 0 : index
    %144 = vector.load %arg4[%c11, %c0_34, %c0_35] : memref<27x1x32xf32, #tpu.memory_space<vmem>>, vector<1x1x32xf32>
    %145 = vector.shape_cast %144 : vector<1x1x32xf32> to vector<1x32xf32>
    %146 = vector.broadcast %145 : vector<1x32xf32> to vector<160x32xf32>
    %147 = arith.mulf %143, %146 : vector<160x32xf32>
    %148 = vector.extract_strided_slice %20 {offsets = [0, 11], sizes = [160, 1], strides = [1, 1]} : vector<160x32xf32> to vector<160x1xf32>
    %149 = vector.broadcast %148 : vector<160x1xf32> to vector<160x32xf32>
    %150 = arith.mulf %147, %149 : vector<160x32xf32>
    %151 = arith.addf %140, %150 : vector<160x32xf32>
    %152 = vector.extract_strided_slice %19 {offsets = [159, 0], sizes = [1, 32], strides = [1, 1]} : vector<160x32xf32> to vector<1x32xf32>
    %153 = vector.extract_strided_slice %19 {offsets = [0, 0], sizes = [159, 32], strides = [1, 1]} : vector<160x32xf32> to vector<159x32xf32>
    %154 = tpu.concatenate %152, %153 in 0 : vector<1x32xf32>, vector<159x32xf32> -> vector<160x32xf32>
    %c12 = arith.constant 12 : index
    %c0_36 = arith.constant 0 : index
    %c0_37 = arith.constant 0 : index
    %155 = vector.load %arg4[%c12, %c0_36, %c0_37] : memref<27x1x32xf32, #tpu.memory_space<vmem>>, vector<1x1x32xf32>
    %156 = vector.shape_cast %155 : vector<1x1x32xf32> to vector<1x32xf32>
    %157 = vector.broadcast %156 : vector<1x32xf32> to vector<160x32xf32>
    %158 = arith.mulf %154, %157 : vector<160x32xf32>
    %159 = vector.extract_strided_slice %20 {offsets = [0, 12], sizes = [160, 1], strides = [1, 1]} : vector<160x32xf32> to vector<160x1xf32>
    %160 = vector.broadcast %159 : vector<160x1xf32> to vector<160x32xf32>
    %161 = arith.mulf %158, %160 : vector<160x32xf32>
    %162 = arith.addf %151, %161 : vector<160x32xf32>
    %c13 = arith.constant 13 : index
    %c0_38 = arith.constant 0 : index
    %c0_39 = arith.constant 0 : index
    %163 = vector.load %arg4[%c13, %c0_38, %c0_39] : memref<27x1x32xf32, #tpu.memory_space<vmem>>, vector<1x1x32xf32>
    %164 = vector.shape_cast %163 : vector<1x1x32xf32> to vector<1x32xf32>
    %165 = vector.broadcast %164 : vector<1x32xf32> to vector<160x32xf32>
    %166 = arith.mulf %19, %165 : vector<160x32xf32>
    %167 = arith.addf %162, %166 : vector<160x32xf32>
    %168 = vector.extract_strided_slice %19 {offsets = [1, 0], sizes = [159, 32], strides = [1, 1]} : vector<160x32xf32> to vector<159x32xf32>
    %169 = vector.extract_strided_slice %19 {offsets = [0, 0], sizes = [1, 32], strides = [1, 1]} : vector<160x32xf32> to vector<1x32xf32>
    %170 = tpu.concatenate %168, %169 in 0 : vector<159x32xf32>, vector<1x32xf32> -> vector<160x32xf32>
    %c14 = arith.constant 14 : index
    %c0_40 = arith.constant 0 : index
    %c0_41 = arith.constant 0 : index
    %171 = vector.load %arg4[%c14, %c0_40, %c0_41] : memref<27x1x32xf32, #tpu.memory_space<vmem>>, vector<1x1x32xf32>
    %172 = vector.shape_cast %171 : vector<1x1x32xf32> to vector<1x32xf32>
    %173 = vector.broadcast %172 : vector<1x32xf32> to vector<160x32xf32>
    %174 = arith.mulf %170, %173 : vector<160x32xf32>
    %175 = vector.extract_strided_slice %20 {offsets = [0, 14], sizes = [160, 1], strides = [1, 1]} : vector<160x32xf32> to vector<160x1xf32>
    %176 = vector.broadcast %175 : vector<160x1xf32> to vector<160x32xf32>
    %177 = arith.mulf %174, %176 : vector<160x32xf32>
    %178 = arith.addf %167, %177 : vector<160x32xf32>
    %179 = vector.extract_strided_slice %19 {offsets = [3, 0], sizes = [157, 32], strides = [1, 1]} : vector<160x32xf32> to vector<157x32xf32>
    %180 = vector.extract_strided_slice %19 {offsets = [0, 0], sizes = [3, 32], strides = [1, 1]} : vector<160x32xf32> to vector<3x32xf32>
    %181 = tpu.concatenate %179, %180 in 0 : vector<157x32xf32>, vector<3x32xf32> -> vector<160x32xf32>
    %c15 = arith.constant 15 : index
    %c0_42 = arith.constant 0 : index
    %c0_43 = arith.constant 0 : index
    %182 = vector.load %arg4[%c15, %c0_42, %c0_43] : memref<27x1x32xf32, #tpu.memory_space<vmem>>, vector<1x1x32xf32>
    %183 = vector.shape_cast %182 : vector<1x1x32xf32> to vector<1x32xf32>
    %184 = vector.broadcast %183 : vector<1x32xf32> to vector<160x32xf32>
    %185 = arith.mulf %181, %184 : vector<160x32xf32>
    %186 = vector.extract_strided_slice %20 {offsets = [0, 15], sizes = [160, 1], strides = [1, 1]} : vector<160x32xf32> to vector<160x1xf32>
    %187 = vector.broadcast %186 : vector<160x1xf32> to vector<160x32xf32>
    %188 = arith.mulf %185, %187 : vector<160x32xf32>
    %189 = arith.addf %178, %188 : vector<160x32xf32>
    %190 = vector.extract_strided_slice %19 {offsets = [4, 0], sizes = [156, 32], strides = [1, 1]} : vector<160x32xf32> to vector<156x32xf32>
    %191 = vector.extract_strided_slice %19 {offsets = [0, 0], sizes = [4, 32], strides = [1, 1]} : vector<160x32xf32> to vector<4x32xf32>
    %192 = tpu.concatenate %190, %191 in 0 : vector<156x32xf32>, vector<4x32xf32> -> vector<160x32xf32>
    %c16 = arith.constant 16 : index
    %c0_44 = arith.constant 0 : index
    %c0_45 = arith.constant 0 : index
    %193 = vector.load %arg4[%c16, %c0_44, %c0_45] : memref<27x1x32xf32, #tpu.memory_space<vmem>>, vector<1x1x32xf32>
    %194 = vector.shape_cast %193 : vector<1x1x32xf32> to vector<1x32xf32>
    %195 = vector.broadcast %194 : vector<1x32xf32> to vector<160x32xf32>
    %196 = arith.mulf %192, %195 : vector<160x32xf32>
    %197 = vector.extract_strided_slice %20 {offsets = [0, 16], sizes = [160, 1], strides = [1, 1]} : vector<160x32xf32> to vector<160x1xf32>
    %198 = vector.broadcast %197 : vector<160x1xf32> to vector<160x32xf32>
    %199 = arith.mulf %196, %198 : vector<160x32xf32>
    %200 = arith.addf %189, %199 : vector<160x32xf32>
    %201 = vector.extract_strided_slice %19 {offsets = [5, 0], sizes = [155, 32], strides = [1, 1]} : vector<160x32xf32> to vector<155x32xf32>
    %202 = vector.extract_strided_slice %19 {offsets = [0, 0], sizes = [5, 32], strides = [1, 1]} : vector<160x32xf32> to vector<5x32xf32>
    %203 = tpu.concatenate %201, %202 in 0 : vector<155x32xf32>, vector<5x32xf32> -> vector<160x32xf32>
    %c17 = arith.constant 17 : index
    %c0_46 = arith.constant 0 : index
    %c0_47 = arith.constant 0 : index
    %204 = vector.load %arg4[%c17, %c0_46, %c0_47] : memref<27x1x32xf32, #tpu.memory_space<vmem>>, vector<1x1x32xf32>
    %205 = vector.shape_cast %204 : vector<1x1x32xf32> to vector<1x32xf32>
    %206 = vector.broadcast %205 : vector<1x32xf32> to vector<160x32xf32>
    %207 = arith.mulf %203, %206 : vector<160x32xf32>
    %208 = vector.extract_strided_slice %20 {offsets = [0, 17], sizes = [160, 1], strides = [1, 1]} : vector<160x32xf32> to vector<160x1xf32>
    %209 = vector.broadcast %208 : vector<160x1xf32> to vector<160x32xf32>
    %210 = arith.mulf %207, %209 : vector<160x32xf32>
    %211 = arith.addf %200, %210 : vector<160x32xf32>
    %212 = vector.extract_strided_slice %19 {offsets = [11, 0], sizes = [149, 32], strides = [1, 1]} : vector<160x32xf32> to vector<149x32xf32>
    %213 = vector.extract_strided_slice %19 {offsets = [0, 0], sizes = [11, 32], strides = [1, 1]} : vector<160x32xf32> to vector<11x32xf32>
    %214 = tpu.concatenate %212, %213 in 0 : vector<149x32xf32>, vector<11x32xf32> -> vector<160x32xf32>
    %c18 = arith.constant 18 : index
    %c0_48 = arith.constant 0 : index
    %c0_49 = arith.constant 0 : index
    %215 = vector.load %arg4[%c18, %c0_48, %c0_49] : memref<27x1x32xf32, #tpu.memory_space<vmem>>, vector<1x1x32xf32>
    %216 = vector.shape_cast %215 : vector<1x1x32xf32> to vector<1x32xf32>
    %217 = vector.broadcast %216 : vector<1x32xf32> to vector<160x32xf32>
    %218 = arith.mulf %214, %217 : vector<160x32xf32>
    %219 = vector.extract_strided_slice %20 {offsets = [0, 18], sizes = [160, 1], strides = [1, 1]} : vector<160x32xf32> to vector<160x1xf32>
    %220 = vector.broadcast %219 : vector<160x1xf32> to vector<160x32xf32>
    %221 = arith.mulf %218, %220 : vector<160x32xf32>
    %222 = arith.addf %211, %221 : vector<160x32xf32>
    %223 = vector.extract_strided_slice %19 {offsets = [12, 0], sizes = [148, 32], strides = [1, 1]} : vector<160x32xf32> to vector<148x32xf32>
    %224 = vector.extract_strided_slice %19 {offsets = [0, 0], sizes = [12, 32], strides = [1, 1]} : vector<160x32xf32> to vector<12x32xf32>
    %225 = tpu.concatenate %223, %224 in 0 : vector<148x32xf32>, vector<12x32xf32> -> vector<160x32xf32>
    %c19 = arith.constant 19 : index
    %c0_50 = arith.constant 0 : index
    %c0_51 = arith.constant 0 : index
    %226 = vector.load %arg4[%c19, %c0_50, %c0_51] : memref<27x1x32xf32, #tpu.memory_space<vmem>>, vector<1x1x32xf32>
    %227 = vector.shape_cast %226 : vector<1x1x32xf32> to vector<1x32xf32>
    %228 = vector.broadcast %227 : vector<1x32xf32> to vector<160x32xf32>
    %229 = arith.mulf %225, %228 : vector<160x32xf32>
    %230 = vector.extract_strided_slice %20 {offsets = [0, 19], sizes = [160, 1], strides = [1, 1]} : vector<160x32xf32> to vector<160x1xf32>
    %231 = vector.broadcast %230 : vector<160x1xf32> to vector<160x32xf32>
    %232 = arith.mulf %229, %231 : vector<160x32xf32>
    %233 = arith.addf %222, %232 : vector<160x32xf32>
    %234 = vector.extract_strided_slice %19 {offsets = [13, 0], sizes = [147, 32], strides = [1, 1]} : vector<160x32xf32> to vector<147x32xf32>
    %235 = vector.extract_strided_slice %19 {offsets = [0, 0], sizes = [13, 32], strides = [1, 1]} : vector<160x32xf32> to vector<13x32xf32>
    %236 = tpu.concatenate %234, %235 in 0 : vector<147x32xf32>, vector<13x32xf32> -> vector<160x32xf32>
    %c20 = arith.constant 20 : index
    %c0_52 = arith.constant 0 : index
    %c0_53 = arith.constant 0 : index
    %237 = vector.load %arg4[%c20, %c0_52, %c0_53] : memref<27x1x32xf32, #tpu.memory_space<vmem>>, vector<1x1x32xf32>
    %238 = vector.shape_cast %237 : vector<1x1x32xf32> to vector<1x32xf32>
    %239 = vector.broadcast %238 : vector<1x32xf32> to vector<160x32xf32>
    %240 = arith.mulf %236, %239 : vector<160x32xf32>
    %241 = vector.extract_strided_slice %20 {offsets = [0, 20], sizes = [160, 1], strides = [1, 1]} : vector<160x32xf32> to vector<160x1xf32>
    %242 = vector.broadcast %241 : vector<160x1xf32> to vector<160x32xf32>
    %243 = arith.mulf %240, %242 : vector<160x32xf32>
    %244 = arith.addf %233, %243 : vector<160x32xf32>
    %245 = vector.extract_strided_slice %19 {offsets = [15, 0], sizes = [145, 32], strides = [1, 1]} : vector<160x32xf32> to vector<145x32xf32>
    %246 = vector.extract_strided_slice %19 {offsets = [0, 0], sizes = [15, 32], strides = [1, 1]} : vector<160x32xf32> to vector<15x32xf32>
    %247 = tpu.concatenate %245, %246 in 0 : vector<145x32xf32>, vector<15x32xf32> -> vector<160x32xf32>
    %c21 = arith.constant 21 : index
    %c0_54 = arith.constant 0 : index
    %c0_55 = arith.constant 0 : index
    %248 = vector.load %arg4[%c21, %c0_54, %c0_55] : memref<27x1x32xf32, #tpu.memory_space<vmem>>, vector<1x1x32xf32>
    %249 = vector.shape_cast %248 : vector<1x1x32xf32> to vector<1x32xf32>
    %250 = vector.broadcast %249 : vector<1x32xf32> to vector<160x32xf32>
    %251 = arith.mulf %247, %250 : vector<160x32xf32>
    %252 = vector.extract_strided_slice %20 {offsets = [0, 21], sizes = [160, 1], strides = [1, 1]} : vector<160x32xf32> to vector<160x1xf32>
    %253 = vector.broadcast %252 : vector<160x1xf32> to vector<160x32xf32>
    %254 = arith.mulf %251, %253 : vector<160x32xf32>
    %255 = arith.addf %244, %254 : vector<160x32xf32>
    %256 = vector.extract_strided_slice %19 {offsets = [16, 0], sizes = [144, 32], strides = [1, 1]} : vector<160x32xf32> to vector<144x32xf32>
    %257 = vector.extract_strided_slice %19 {offsets = [0, 0], sizes = [16, 32], strides = [1, 1]} : vector<160x32xf32> to vector<16x32xf32>
    %258 = tpu.concatenate %256, %257 in 0 : vector<144x32xf32>, vector<16x32xf32> -> vector<160x32xf32>
    %c22 = arith.constant 22 : index
    %c0_56 = arith.constant 0 : index
    %c0_57 = arith.constant 0 : index
    %259 = vector.load %arg4[%c22, %c0_56, %c0_57] : memref<27x1x32xf32, #tpu.memory_space<vmem>>, vector<1x1x32xf32>
    %260 = vector.shape_cast %259 : vector<1x1x32xf32> to vector<1x32xf32>
    %261 = vector.broadcast %260 : vector<1x32xf32> to vector<160x32xf32>
    %262 = arith.mulf %258, %261 : vector<160x32xf32>
    %263 = vector.extract_strided_slice %20 {offsets = [0, 22], sizes = [160, 1], strides = [1, 1]} : vector<160x32xf32> to vector<160x1xf32>
    %264 = vector.broadcast %263 : vector<160x1xf32> to vector<160x32xf32>
    %265 = arith.mulf %262, %264 : vector<160x32xf32>
    %266 = arith.addf %255, %265 : vector<160x32xf32>
    %267 = vector.extract_strided_slice %19 {offsets = [17, 0], sizes = [143, 32], strides = [1, 1]} : vector<160x32xf32> to vector<143x32xf32>
    %268 = vector.extract_strided_slice %19 {offsets = [0, 0], sizes = [17, 32], strides = [1, 1]} : vector<160x32xf32> to vector<17x32xf32>
    %269 = tpu.concatenate %267, %268 in 0 : vector<143x32xf32>, vector<17x32xf32> -> vector<160x32xf32>
    %c23 = arith.constant 23 : index
    %c0_58 = arith.constant 0 : index
    %c0_59 = arith.constant 0 : index
    %270 = vector.load %arg4[%c23, %c0_58, %c0_59] : memref<27x1x32xf32, #tpu.memory_space<vmem>>, vector<1x1x32xf32>
    %271 = vector.shape_cast %270 : vector<1x1x32xf32> to vector<1x32xf32>
    %272 = vector.broadcast %271 : vector<1x32xf32> to vector<160x32xf32>
    %273 = arith.mulf %269, %272 : vector<160x32xf32>
    %274 = vector.extract_strided_slice %20 {offsets = [0, 23], sizes = [160, 1], strides = [1, 1]} : vector<160x32xf32> to vector<160x1xf32>
    %275 = vector.broadcast %274 : vector<160x1xf32> to vector<160x32xf32>
    %276 = arith.mulf %273, %275 : vector<160x32xf32>
    %277 = arith.addf %266, %276 : vector<160x32xf32>
    %278 = vector.extract_strided_slice %19 {offsets = [19, 0], sizes = [141, 32], strides = [1, 1]} : vector<160x32xf32> to vector<141x32xf32>
    %279 = vector.extract_strided_slice %19 {offsets = [0, 0], sizes = [19, 32], strides = [1, 1]} : vector<160x32xf32> to vector<19x32xf32>
    %280 = tpu.concatenate %278, %279 in 0 : vector<141x32xf32>, vector<19x32xf32> -> vector<160x32xf32>
    %c24 = arith.constant 24 : index
    %c0_60 = arith.constant 0 : index
    %c0_61 = arith.constant 0 : index
    %281 = vector.load %arg4[%c24, %c0_60, %c0_61] : memref<27x1x32xf32, #tpu.memory_space<vmem>>, vector<1x1x32xf32>
    %282 = vector.shape_cast %281 : vector<1x1x32xf32> to vector<1x32xf32>
    %283 = vector.broadcast %282 : vector<1x32xf32> to vector<160x32xf32>
    %284 = arith.mulf %280, %283 : vector<160x32xf32>
    %285 = vector.extract_strided_slice %20 {offsets = [0, 24], sizes = [160, 1], strides = [1, 1]} : vector<160x32xf32> to vector<160x1xf32>
    %286 = vector.broadcast %285 : vector<160x1xf32> to vector<160x32xf32>
    %287 = arith.mulf %284, %286 : vector<160x32xf32>
    %288 = arith.addf %277, %287 : vector<160x32xf32>
    %289 = vector.extract_strided_slice %19 {offsets = [20, 0], sizes = [140, 32], strides = [1, 1]} : vector<160x32xf32> to vector<140x32xf32>
    %290 = vector.extract_strided_slice %19 {offsets = [0, 0], sizes = [20, 32], strides = [1, 1]} : vector<160x32xf32> to vector<20x32xf32>
    %291 = tpu.concatenate %289, %290 in 0 : vector<140x32xf32>, vector<20x32xf32> -> vector<160x32xf32>
    %c25 = arith.constant 25 : index
    %c0_62 = arith.constant 0 : index
    %c0_63 = arith.constant 0 : index
    %292 = vector.load %arg4[%c25, %c0_62, %c0_63] : memref<27x1x32xf32, #tpu.memory_space<vmem>>, vector<1x1x32xf32>
    %293 = vector.shape_cast %292 : vector<1x1x32xf32> to vector<1x32xf32>
    %294 = vector.broadcast %293 : vector<1x32xf32> to vector<160x32xf32>
    %295 = arith.mulf %291, %294 : vector<160x32xf32>
    %296 = vector.extract_strided_slice %20 {offsets = [0, 25], sizes = [160, 1], strides = [1, 1]} : vector<160x32xf32> to vector<160x1xf32>
    %297 = vector.broadcast %296 : vector<160x1xf32> to vector<160x32xf32>
    %298 = arith.mulf %295, %297 : vector<160x32xf32>
    %299 = arith.addf %288, %298 : vector<160x32xf32>
    %300 = vector.extract_strided_slice %19 {offsets = [21, 0], sizes = [139, 32], strides = [1, 1]} : vector<160x32xf32> to vector<139x32xf32>
    %301 = vector.extract_strided_slice %19 {offsets = [0, 0], sizes = [21, 32], strides = [1, 1]} : vector<160x32xf32> to vector<21x32xf32>
    %302 = tpu.concatenate %300, %301 in 0 : vector<139x32xf32>, vector<21x32xf32> -> vector<160x32xf32>
    %c26 = arith.constant 26 : index
    %c0_64 = arith.constant 0 : index
    %c0_65 = arith.constant 0 : index
    %303 = vector.load %arg4[%c26, %c0_64, %c0_65] : memref<27x1x32xf32, #tpu.memory_space<vmem>>, vector<1x1x32xf32>
    %304 = vector.shape_cast %303 : vector<1x1x32xf32> to vector<1x32xf32>
    %305 = vector.broadcast %304 : vector<1x32xf32> to vector<160x32xf32>
    %306 = arith.mulf %302, %305 : vector<160x32xf32>
    %307 = vector.extract_strided_slice %20 {offsets = [0, 26], sizes = [160, 1], strides = [1, 1]} : vector<160x32xf32> to vector<160x1xf32>
    %308 = vector.broadcast %307 : vector<160x1xf32> to vector<160x32xf32>
    %309 = arith.mulf %306, %308 : vector<160x32xf32>
    %310 = arith.addf %299, %309 : vector<160x32xf32>
    %c0_66 = arith.constant 0 : index
    %c0_67 = arith.constant 0 : index
    %311 = vector.load %arg5[%c0_66, %c0_67] : memref<1x32xf32, #tpu.memory_space<vmem>>, vector<1x32xf32>
    %312 = vector.broadcast %311 : vector<1x32xf32> to vector<160x32xf32>
    %313 = arith.addf %310, %312 : vector<160x32xf32>
    %c0_68 = arith.constant 0 : index
    %c0_69 = arith.constant 0 : index
    %314 = vector.load %arg6[%c0_68, %c0_69] : memref<1x32xf32, #tpu.memory_space<vmem>>, vector<1x32xf32>
    %c0_70 = arith.constant 0 : index
    %c0_71 = arith.constant 0 : index
    %315 = vector.load %arg7[%c0_70, %c0_71] : memref<1x32xf32, #tpu.memory_space<vmem>>, vector<1x32xf32>
    %cst_72 = arith.constant dense<0.000000e+00> : vector<160xf32>
    %316 = vector.multi_reduction <add>, %313, %cst_72 [1] : vector<160x32xf32> to vector<160xf32>
    %317 = vector.shape_cast %316 : vector<160xf32> to vector<160x1xf32>
    %cst_73 = arith.constant 3.200000e+01 : f32
    %318 = vector.broadcast %cst_73 : f32 to vector<160x1xf32>
    %319 = arith.divf %317, %318 : vector<160x1xf32>
    %320 = arith.mulf %313, %313 : vector<160x32xf32>
    %cst_74 = arith.constant dense<0.000000e+00> : vector<160xf32>
    %321 = vector.multi_reduction <add>, %320, %cst_74 [1] : vector<160x32xf32> to vector<160xf32>
    %322 = vector.shape_cast %321 : vector<160xf32> to vector<160x1xf32>
    %cst_75 = arith.constant 3.200000e+01 : f32
    %323 = vector.broadcast %cst_75 : f32 to vector<160x1xf32>
    %324 = arith.divf %322, %323 : vector<160x1xf32>
    %325 = arith.mulf %319, %319 : vector<160x1xf32>
    %326 = arith.subf %324, %325 : vector<160x1xf32>
    %327 = vector.broadcast %319 : vector<160x1xf32> to vector<160x32xf32>
    %328 = arith.subf %313, %327 : vector<160x32xf32>
    %cst_76 = arith.constant 9.99999974E-6 : f32
    %329 = vector.broadcast %cst_76 : f32 to vector<160x1xf32>
    %330 = arith.addf %326, %329 : vector<160x1xf32>
    %331 = math.rsqrt %330 : vector<160x1xf32>
    %332 = vector.broadcast %331 : vector<160x1xf32> to vector<160x32xf32>
    %333 = arith.mulf %328, %332 : vector<160x32xf32>
    %334 = vector.broadcast %314 : vector<1x32xf32> to vector<160x32xf32>
    %335 = arith.mulf %333, %334 : vector<160x32xf32>
    %336 = vector.broadcast %315 : vector<1x32xf32> to vector<160x32xf32>
    %337 = arith.addf %335, %336 : vector<160x32xf32>
    %338 = arith.truncf %337 : vector<160x32xf32> to vector<160x32xbf16>
    %c0_77 = arith.constant 0 : index
    %c0_78 = arith.constant 0 : index
    %339 = vector.load %arg8[%c0_77, %c0_78] : memref<32x128xbf16, #tpu.memory_space<vmem>>, vector<32x128xbf16>
    %cst_79 = arith.constant dense<0.000000e+00> : vector<160x128xf32>
    %340 = tpu.matmul %338, %339, %cst_79 {dimension_numbers = #tpu.dot_dimension_numbers<[1], [0], [0], [1], [0, 0, 1, 1], [], []>} : vector<160x32xbf16>, vector<32x128xbf16>, vector<160x128xf32> -> vector<160x128xf32>
    %c0_80 = arith.constant 0 : index
    %c0_81 = arith.constant 0 : index
    %341 = vector.load %arg9[%c0_80, %c0_81] : memref<1x128xf32, #tpu.memory_space<vmem>>, vector<1x128xf32>
    %342 = vector.broadcast %341 : vector<1x128xf32> to vector<160x128xf32>
    %343 = arith.addf %340, %342 : vector<160x128xf32>
    %cst_82 = arith.constant 5.000000e-01 : f32
    %344 = vector.broadcast %cst_82 : f32 to vector<160x128xf32>
    %345 = arith.mulf %344, %343 : vector<160x128xf32>
    %cst_83 = arith.constant 4.471500e-02 : f32
    %346 = vector.broadcast %cst_83 : f32 to vector<160x128xf32>
    %347 = arith.mulf %346, %343 : vector<160x128xf32>
    %348 = arith.mulf %347, %343 : vector<160x128xf32>
    %349 = arith.mulf %348, %343 : vector<160x128xf32>
    %350 = arith.addf %343, %349 : vector<160x128xf32>
    %cst_84 = arith.constant 0.797884583 : f32
    %351 = vector.broadcast %cst_84 : f32 to vector<160x128xf32>
    %352 = arith.mulf %351, %350 : vector<160x128xf32>
    %353 = math.tanh %352 : vector<160x128xf32>
    %cst_85 = arith.constant 1.000000e+00 : f32
    %354 = vector.broadcast %cst_85 : f32 to vector<160x128xf32>
    %355 = arith.addf %354, %353 : vector<160x128xf32>
    %356 = arith.mulf %345, %355 : vector<160x128xf32>
    %357 = arith.truncf %356 : vector<160x128xf32> to vector<160x128xbf16>
    %c0_86 = arith.constant 0 : index
    %c0_87 = arith.constant 0 : index
    %358 = vector.load %arg10[%c0_86, %c0_87] : memref<128x32xbf16, #tpu.memory_space<vmem>>, vector<128x32xbf16>
    %cst_88 = arith.constant dense<0.000000e+00> : vector<160x32xf32>
    %359 = tpu.matmul %357, %358, %cst_88 {dimension_numbers = #tpu.dot_dimension_numbers<[1], [0], [0], [1], [0, 0, 1, 1], [], []>} : vector<160x128xbf16>, vector<128x32xbf16>, vector<160x32xf32> -> vector<160x32xf32>
    %c0_89 = arith.constant 0 : index
    %c0_90 = arith.constant 0 : index
    %360 = vector.load %arg11[%c0_89, %c0_90] : memref<1x32xf32, #tpu.memory_space<vmem>>, vector<1x32xf32>
    %361 = vector.broadcast %360 : vector<1x32xf32> to vector<160x32xf32>
    %362 = arith.addf %359, %361 : vector<160x32xf32>
    %c0_91 = arith.constant 0 : index
    %c0_92 = arith.constant 0 : index
    %363 = vector.load %arg12[%c0_91, %c0_92] : memref<1x32xf32, #tpu.memory_space<vmem>>, vector<1x32xf32>
    %364 = vector.broadcast %363 : vector<1x32xf32> to vector<160x32xf32>
    %365 = arith.mulf %364, %362 : vector<160x32xf32>
    %366 = arith.addf %19, %365 : vector<160x32xf32>
    %c0_93 = arith.constant 0 : index
    %c0_94 = arith.constant 0 : index
    %367 = vector.load %arg13[%c0_93, %c0_94] : memref<128x160xbf16, #tpu.memory_space<vmem>>, vector<128x160xbf16>
    %368 = arith.truncf %366 : vector<160x32xf32> to vector<160x32xbf16>
    %cst_95 = arith.constant dense<0.000000e+00> : vector<128x32xf32>
    %369 = tpu.matmul %367, %368, %cst_95 {dimension_numbers = #tpu.dot_dimension_numbers<[1], [0], [0], [1], [0, 0, 1, 1], [], []>} : vector<128x160xbf16>, vector<160x32xbf16>, vector<128x32xf32> -> vector<128x32xf32>
    %370 = vector.extract_strided_slice %369 {offsets = [0, 0], sizes = [16, 32], strides = [1, 1]} : vector<128x32xf32> to vector<16x32xf32>
    %371 = arith.truncf %370 : vector<16x32xf32> to vector<16x32xbf16>
    %c0_96 = arith.constant 0 : index
    %c0_97 = arith.constant 0 : index
    %c0_98 = arith.constant 0 : index
    %372 = vector.load %arg14[%c0_96, %c0_97, %c0_98] : memref<8x32x64xbf16, #tpu.memory_space<vmem>>, vector<1x32x64xbf16>
    %373 = vector.shape_cast %372 : vector<1x32x64xbf16> to vector<32x64xbf16>
    %cst_99 = arith.constant dense<0.000000e+00> : vector<16x64xf32>
    %374 = tpu.matmul %371, %373, %cst_99 {dimension_numbers = #tpu.dot_dimension_numbers<[1], [0], [0], [1], [0, 0, 1, 1], [], []>} : vector<16x32xbf16>, vector<32x64xbf16>, vector<16x64xf32> -> vector<16x64xf32>
    %375 = vector.extract_strided_slice %369 {offsets = [16, 0], sizes = [16, 32], strides = [1, 1]} : vector<128x32xf32> to vector<16x32xf32>
    %376 = arith.truncf %375 : vector<16x32xf32> to vector<16x32xbf16>
    %c1_100 = arith.constant 1 : index
    %c0_101 = arith.constant 0 : index
    %c0_102 = arith.constant 0 : index
    %377 = vector.load %arg14[%c1_100, %c0_101, %c0_102] : memref<8x32x64xbf16, #tpu.memory_space<vmem>>, vector<1x32x64xbf16>
    %378 = vector.shape_cast %377 : vector<1x32x64xbf16> to vector<32x64xbf16>
    %cst_103 = arith.constant dense<0.000000e+00> : vector<16x64xf32>
    %379 = tpu.matmul %376, %378, %cst_103 {dimension_numbers = #tpu.dot_dimension_numbers<[1], [0], [0], [1], [0, 0, 1, 1], [], []>} : vector<16x32xbf16>, vector<32x64xbf16>, vector<16x64xf32> -> vector<16x64xf32>
    %380 = arith.addf %374, %379 : vector<16x64xf32>
    %381 = vector.extract_strided_slice %369 {offsets = [32, 0], sizes = [16, 32], strides = [1, 1]} : vector<128x32xf32> to vector<16x32xf32>
    %382 = arith.truncf %381 : vector<16x32xf32> to vector<16x32xbf16>
    %c2_104 = arith.constant 2 : index
    %c0_105 = arith.constant 0 : index
    %c0_106 = arith.constant 0 : index
    %383 = vector.load %arg14[%c2_104, %c0_105, %c0_106] : memref<8x32x64xbf16, #tpu.memory_space<vmem>>, vector<1x32x64xbf16>
    %384 = vector.shape_cast %383 : vector<1x32x64xbf16> to vector<32x64xbf16>
    %cst_107 = arith.constant dense<0.000000e+00> : vector<16x64xf32>
    %385 = tpu.matmul %382, %384, %cst_107 {dimension_numbers = #tpu.dot_dimension_numbers<[1], [0], [0], [1], [0, 0, 1, 1], [], []>} : vector<16x32xbf16>, vector<32x64xbf16>, vector<16x64xf32> -> vector<16x64xf32>
    %386 = arith.addf %380, %385 : vector<16x64xf32>
    %387 = vector.extract_strided_slice %369 {offsets = [48, 0], sizes = [16, 32], strides = [1, 1]} : vector<128x32xf32> to vector<16x32xf32>
    %388 = arith.truncf %387 : vector<16x32xf32> to vector<16x32xbf16>
    %c3_108 = arith.constant 3 : index
    %c0_109 = arith.constant 0 : index
    %c0_110 = arith.constant 0 : index
    %389 = vector.load %arg14[%c3_108, %c0_109, %c0_110] : memref<8x32x64xbf16, #tpu.memory_space<vmem>>, vector<1x32x64xbf16>
    %390 = vector.shape_cast %389 : vector<1x32x64xbf16> to vector<32x64xbf16>
    %cst_111 = arith.constant dense<0.000000e+00> : vector<16x64xf32>
    %391 = tpu.matmul %388, %390, %cst_111 {dimension_numbers = #tpu.dot_dimension_numbers<[1], [0], [0], [1], [0, 0, 1, 1], [], []>} : vector<16x32xbf16>, vector<32x64xbf16>, vector<16x64xf32> -> vector<16x64xf32>
    %392 = arith.addf %386, %391 : vector<16x64xf32>
    %393 = vector.extract_strided_slice %369 {offsets = [64, 0], sizes = [16, 32], strides = [1, 1]} : vector<128x32xf32> to vector<16x32xf32>
    %394 = arith.truncf %393 : vector<16x32xf32> to vector<16x32xbf16>
    %c4_112 = arith.constant 4 : index
    %c0_113 = arith.constant 0 : index
    %c0_114 = arith.constant 0 : index
    %395 = vector.load %arg14[%c4_112, %c0_113, %c0_114] : memref<8x32x64xbf16, #tpu.memory_space<vmem>>, vector<1x32x64xbf16>
    %396 = vector.shape_cast %395 : vector<1x32x64xbf16> to vector<32x64xbf16>
    %cst_115 = arith.constant dense<0.000000e+00> : vector<16x64xf32>
    %397 = tpu.matmul %394, %396, %cst_115 {dimension_numbers = #tpu.dot_dimension_numbers<[1], [0], [0], [1], [0, 0, 1, 1], [], []>} : vector<16x32xbf16>, vector<32x64xbf16>, vector<16x64xf32> -> vector<16x64xf32>
    %398 = arith.addf %392, %397 : vector<16x64xf32>
    %399 = vector.extract_strided_slice %369 {offsets = [80, 0], sizes = [16, 32], strides = [1, 1]} : vector<128x32xf32> to vector<16x32xf32>
    %400 = arith.truncf %399 : vector<16x32xf32> to vector<16x32xbf16>
    %c5_116 = arith.constant 5 : index
    %c0_117 = arith.constant 0 : index
    %c0_118 = arith.constant 0 : index
    %401 = vector.load %arg14[%c5_116, %c0_117, %c0_118] : memref<8x32x64xbf16, #tpu.memory_space<vmem>>, vector<1x32x64xbf16>
    %402 = vector.shape_cast %401 : vector<1x32x64xbf16> to vector<32x64xbf16>
    %cst_119 = arith.constant dense<0.000000e+00> : vector<16x64xf32>
    %403 = tpu.matmul %400, %402, %cst_119 {dimension_numbers = #tpu.dot_dimension_numbers<[1], [0], [0], [1], [0, 0, 1, 1], [], []>} : vector<16x32xbf16>, vector<32x64xbf16>, vector<16x64xf32> -> vector<16x64xf32>
    %404 = arith.addf %398, %403 : vector<16x64xf32>
    %405 = vector.extract_strided_slice %369 {offsets = [96, 0], sizes = [16, 32], strides = [1, 1]} : vector<128x32xf32> to vector<16x32xf32>
    %406 = arith.truncf %405 : vector<16x32xf32> to vector<16x32xbf16>
    %c6_120 = arith.constant 6 : index
    %c0_121 = arith.constant 0 : index
    %c0_122 = arith.constant 0 : index
    %407 = vector.load %arg14[%c6_120, %c0_121, %c0_122] : memref<8x32x64xbf16, #tpu.memory_space<vmem>>, vector<1x32x64xbf16>
    %408 = vector.shape_cast %407 : vector<1x32x64xbf16> to vector<32x64xbf16>
    %cst_123 = arith.constant dense<0.000000e+00> : vector<16x64xf32>
    %409 = tpu.matmul %406, %408, %cst_123 {dimension_numbers = #tpu.dot_dimension_numbers<[1], [0], [0], [1], [0, 0, 1, 1], [], []>} : vector<16x32xbf16>, vector<32x64xbf16>, vector<16x64xf32> -> vector<16x64xf32>
    %410 = arith.addf %404, %409 : vector<16x64xf32>
    %411 = vector.extract_strided_slice %369 {offsets = [112, 0], sizes = [16, 32], strides = [1, 1]} : vector<128x32xf32> to vector<16x32xf32>
    %412 = arith.truncf %411 : vector<16x32xf32> to vector<16x32xbf16>
    %c7_124 = arith.constant 7 : index
    %c0_125 = arith.constant 0 : index
    %c0_126 = arith.constant 0 : index
    %413 = vector.load %arg14[%c7_124, %c0_125, %c0_126] : memref<8x32x64xbf16, #tpu.memory_space<vmem>>, vector<1x32x64xbf16>
    %414 = vector.shape_cast %413 : vector<1x32x64xbf16> to vector<32x64xbf16>
    %cst_127 = arith.constant dense<0.000000e+00> : vector<16x64xf32>
    %415 = tpu.matmul %412, %414, %cst_127 {dimension_numbers = #tpu.dot_dimension_numbers<[1], [0], [0], [1], [0, 0, 1, 1], [], []>} : vector<16x32xbf16>, vector<32x64xbf16>, vector<16x64xf32> -> vector<16x64xf32>
    %416 = arith.addf %410, %415 : vector<16x64xf32>
    %c0_128 = arith.constant 0 : index
    %c0_129 = arith.constant 0 : index
    %417 = vector.load %arg15[%c0_128, %c0_129] : memref<1x64xf32, #tpu.memory_space<vmem>>, vector<1x64xf32>
    %418 = vector.broadcast %417 : vector<1x64xf32> to vector<16x64xf32>
    %419 = arith.addf %416, %418 : vector<16x64xf32>
    %cst_130 = arith.constant 5.000000e-01 : f32
    %420 = vector.broadcast %cst_130 : f32 to vector<16x64xf32>
    %421 = arith.mulf %420, %419 : vector<16x64xf32>
    %cst_131 = arith.constant 4.471500e-02 : f32
    %422 = vector.broadcast %cst_131 : f32 to vector<16x64xf32>
    %423 = arith.mulf %422, %419 : vector<16x64xf32>
    %424 = arith.mulf %423, %419 : vector<16x64xf32>
    %425 = arith.mulf %424, %419 : vector<16x64xf32>
    %426 = arith.addf %419, %425 : vector<16x64xf32>
    %cst_132 = arith.constant 0.797884583 : f32
    %427 = vector.broadcast %cst_132 : f32 to vector<16x64xf32>
    %428 = arith.mulf %427, %426 : vector<16x64xf32>
    %429 = math.tanh %428 : vector<16x64xf32>
    %cst_133 = arith.constant 1.000000e+00 : f32
    %430 = vector.broadcast %cst_133 : f32 to vector<16x64xf32>
    %431 = arith.addf %430, %429 : vector<16x64xf32>
    %432 = arith.mulf %421, %431 : vector<16x64xf32>
    %c0_134 = arith.constant 0 : index
    %c0_135 = arith.constant 0 : index
    %433 = vector.load %arg16[%c0_134, %c0_135] : memref<16x32xf32, #tpu.memory_space<vmem>>, vector<16x32xf32>
    %434 = vector.extract_strided_slice %432 {offsets = [9, 0], sizes = [7, 64], strides = [1, 1]} : vector<16x64xf32> to vector<7x64xf32>
    %435 = vector.extract_strided_slice %432 {offsets = [0, 0], sizes = [9, 64], strides = [1, 1]} : vector<16x64xf32> to vector<9x64xf32>
    %436 = tpu.concatenate %434, %435 in 0 : vector<7x64xf32>, vector<9x64xf32> -> vector<16x64xf32>
    %c0_136 = arith.constant 0 : index
    %c0_137 = arith.constant 0 : index
    %c0_138 = arith.constant 0 : index
    %437 = vector.load %arg17[%c0_136, %c0_137, %c0_138] : memref<27x1x64xf32, #tpu.memory_space<vmem>>, vector<1x1x64xf32>
    %438 = vector.shape_cast %437 : vector<1x1x64xf32> to vector<1x64xf32>
    %439 = vector.broadcast %438 : vector<1x64xf32> to vector<16x64xf32>
    %440 = arith.mulf %436, %439 : vector<16x64xf32>
    %441 = vector.extract_strided_slice %433 {offsets = [0, 0], sizes = [16, 1], strides = [1, 1]} : vector<16x32xf32> to vector<16x1xf32>
    %442 = vector.broadcast %441 : vector<16x1xf32> to vector<16x64xf32>
    %443 = arith.mulf %440, %442 : vector<16x64xf32>
    %444 = vector.extract_strided_slice %432 {offsets = [10, 0], sizes = [6, 64], strides = [1, 1]} : vector<16x64xf32> to vector<6x64xf32>
    %445 = vector.extract_strided_slice %432 {offsets = [0, 0], sizes = [10, 64], strides = [1, 1]} : vector<16x64xf32> to vector<10x64xf32>
    %446 = tpu.concatenate %444, %445 in 0 : vector<6x64xf32>, vector<10x64xf32> -> vector<16x64xf32>
    %c1_139 = arith.constant 1 : index
    %c0_140 = arith.constant 0 : index
    %c0_141 = arith.constant 0 : index
    %447 = vector.load %arg17[%c1_139, %c0_140, %c0_141] : memref<27x1x64xf32, #tpu.memory_space<vmem>>, vector<1x1x64xf32>
    %448 = vector.shape_cast %447 : vector<1x1x64xf32> to vector<1x64xf32>
    %449 = vector.broadcast %448 : vector<1x64xf32> to vector<16x64xf32>
    %450 = arith.mulf %446, %449 : vector<16x64xf32>
    %451 = vector.extract_strided_slice %433 {offsets = [0, 1], sizes = [16, 1], strides = [1, 1]} : vector<16x32xf32> to vector<16x1xf32>
    %452 = vector.broadcast %451 : vector<16x1xf32> to vector<16x64xf32>
    %453 = arith.mulf %450, %452 : vector<16x64xf32>
    %454 = arith.addf %443, %453 : vector<16x64xf32>
    %455 = vector.extract_strided_slice %432 {offsets = [11, 0], sizes = [5, 64], strides = [1, 1]} : vector<16x64xf32> to vector<5x64xf32>
    %456 = vector.extract_strided_slice %432 {offsets = [0, 0], sizes = [11, 64], strides = [1, 1]} : vector<16x64xf32> to vector<11x64xf32>
    %457 = tpu.concatenate %455, %456 in 0 : vector<5x64xf32>, vector<11x64xf32> -> vector<16x64xf32>
    %c2_142 = arith.constant 2 : index
    %c0_143 = arith.constant 0 : index
    %c0_144 = arith.constant 0 : index
    %458 = vector.load %arg17[%c2_142, %c0_143, %c0_144] : memref<27x1x64xf32, #tpu.memory_space<vmem>>, vector<1x1x64xf32>
    %459 = vector.shape_cast %458 : vector<1x1x64xf32> to vector<1x64xf32>
    %460 = vector.broadcast %459 : vector<1x64xf32> to vector<16x64xf32>
    %461 = arith.mulf %457, %460 : vector<16x64xf32>
    %462 = vector.extract_strided_slice %433 {offsets = [0, 2], sizes = [16, 1], strides = [1, 1]} : vector<16x32xf32> to vector<16x1xf32>
    %463 = vector.broadcast %462 : vector<16x1xf32> to vector<16x64xf32>
    %464 = arith.mulf %461, %463 : vector<16x64xf32>
    %465 = arith.addf %454, %464 : vector<16x64xf32>
    %466 = vector.extract_strided_slice %432 {offsets = [11, 0], sizes = [5, 64], strides = [1, 1]} : vector<16x64xf32> to vector<5x64xf32>
    %467 = vector.extract_strided_slice %432 {offsets = [0, 0], sizes = [11, 64], strides = [1, 1]} : vector<16x64xf32> to vector<11x64xf32>
    %468 = tpu.concatenate %466, %467 in 0 : vector<5x64xf32>, vector<11x64xf32> -> vector<16x64xf32>
    %c3_145 = arith.constant 3 : index
    %c0_146 = arith.constant 0 : index
    %c0_147 = arith.constant 0 : index
    %469 = vector.load %arg17[%c3_145, %c0_146, %c0_147] : memref<27x1x64xf32, #tpu.memory_space<vmem>>, vector<1x1x64xf32>
    %470 = vector.shape_cast %469 : vector<1x1x64xf32> to vector<1x64xf32>
    %471 = vector.broadcast %470 : vector<1x64xf32> to vector<16x64xf32>
    %472 = arith.mulf %468, %471 : vector<16x64xf32>
    %473 = vector.extract_strided_slice %433 {offsets = [0, 3], sizes = [16, 1], strides = [1, 1]} : vector<16x32xf32> to vector<16x1xf32>
    %474 = vector.broadcast %473 : vector<16x1xf32> to vector<16x64xf32>
    %475 = arith.mulf %472, %474 : vector<16x64xf32>
    %476 = arith.addf %465, %475 : vector<16x64xf32>
    %477 = vector.extract_strided_slice %432 {offsets = [12, 0], sizes = [4, 64], strides = [1, 1]} : vector<16x64xf32> to vector<4x64xf32>
    %478 = vector.extract_strided_slice %432 {offsets = [0, 0], sizes = [12, 64], strides = [1, 1]} : vector<16x64xf32> to vector<12x64xf32>
    %479 = tpu.concatenate %477, %478 in 0 : vector<4x64xf32>, vector<12x64xf32> -> vector<16x64xf32>
    %c4_148 = arith.constant 4 : index
    %c0_149 = arith.constant 0 : index
    %c0_150 = arith.constant 0 : index
    %480 = vector.load %arg17[%c4_148, %c0_149, %c0_150] : memref<27x1x64xf32, #tpu.memory_space<vmem>>, vector<1x1x64xf32>
    %481 = vector.shape_cast %480 : vector<1x1x64xf32> to vector<1x64xf32>
    %482 = vector.broadcast %481 : vector<1x64xf32> to vector<16x64xf32>
    %483 = arith.mulf %479, %482 : vector<16x64xf32>
    %484 = vector.extract_strided_slice %433 {offsets = [0, 4], sizes = [16, 1], strides = [1, 1]} : vector<16x32xf32> to vector<16x1xf32>
    %485 = vector.broadcast %484 : vector<16x1xf32> to vector<16x64xf32>
    %486 = arith.mulf %483, %485 : vector<16x64xf32>
    %487 = arith.addf %476, %486 : vector<16x64xf32>
    %488 = vector.extract_strided_slice %432 {offsets = [13, 0], sizes = [3, 64], strides = [1, 1]} : vector<16x64xf32> to vector<3x64xf32>
    %489 = vector.extract_strided_slice %432 {offsets = [0, 0], sizes = [13, 64], strides = [1, 1]} : vector<16x64xf32> to vector<13x64xf32>
    %490 = tpu.concatenate %488, %489 in 0 : vector<3x64xf32>, vector<13x64xf32> -> vector<16x64xf32>
    %c5_151 = arith.constant 5 : index
    %c0_152 = arith.constant 0 : index
    %c0_153 = arith.constant 0 : index
    %491 = vector.load %arg17[%c5_151, %c0_152, %c0_153] : memref<27x1x64xf32, #tpu.memory_space<vmem>>, vector<1x1x64xf32>
    %492 = vector.shape_cast %491 : vector<1x1x64xf32> to vector<1x64xf32>
    %493 = vector.broadcast %492 : vector<1x64xf32> to vector<16x64xf32>
    %494 = arith.mulf %490, %493 : vector<16x64xf32>
    %495 = vector.extract_strided_slice %433 {offsets = [0, 5], sizes = [16, 1], strides = [1, 1]} : vector<16x32xf32> to vector<16x1xf32>
    %496 = vector.broadcast %495 : vector<16x1xf32> to vector<16x64xf32>
    %497 = arith.mulf %494, %496 : vector<16x64xf32>
    %498 = arith.addf %487, %497 : vector<16x64xf32>
    %499 = vector.extract_strided_slice %432 {offsets = [13, 0], sizes = [3, 64], strides = [1, 1]} : vector<16x64xf32> to vector<3x64xf32>
    %500 = vector.extract_strided_slice %432 {offsets = [0, 0], sizes = [13, 64], strides = [1, 1]} : vector<16x64xf32> to vector<13x64xf32>
    %501 = tpu.concatenate %499, %500 in 0 : vector<3x64xf32>, vector<13x64xf32> -> vector<16x64xf32>
    %c6_154 = arith.constant 6 : index
    %c0_155 = arith.constant 0 : index
    %c0_156 = arith.constant 0 : index
    %502 = vector.load %arg17[%c6_154, %c0_155, %c0_156] : memref<27x1x64xf32, #tpu.memory_space<vmem>>, vector<1x1x64xf32>
    %503 = vector.shape_cast %502 : vector<1x1x64xf32> to vector<1x64xf32>
    %504 = vector.broadcast %503 : vector<1x64xf32> to vector<16x64xf32>
    %505 = arith.mulf %501, %504 : vector<16x64xf32>
    %506 = vector.extract_strided_slice %433 {offsets = [0, 6], sizes = [16, 1], strides = [1, 1]} : vector<16x32xf32> to vector<16x1xf32>
    %507 = vector.broadcast %506 : vector<16x1xf32> to vector<16x64xf32>
    %508 = arith.mulf %505, %507 : vector<16x64xf32>
    %509 = arith.addf %498, %508 : vector<16x64xf32>
    %510 = vector.extract_strided_slice %432 {offsets = [14, 0], sizes = [2, 64], strides = [1, 1]} : vector<16x64xf32> to vector<2x64xf32>
    %511 = vector.extract_strided_slice %432 {offsets = [0, 0], sizes = [14, 64], strides = [1, 1]} : vector<16x64xf32> to vector<14x64xf32>
    %512 = tpu.concatenate %510, %511 in 0 : vector<2x64xf32>, vector<14x64xf32> -> vector<16x64xf32>
    %c7_157 = arith.constant 7 : index
    %c0_158 = arith.constant 0 : index
    %c0_159 = arith.constant 0 : index
    %513 = vector.load %arg17[%c7_157, %c0_158, %c0_159] : memref<27x1x64xf32, #tpu.memory_space<vmem>>, vector<1x1x64xf32>
    %514 = vector.shape_cast %513 : vector<1x1x64xf32> to vector<1x64xf32>
    %515 = vector.broadcast %514 : vector<1x64xf32> to vector<16x64xf32>
    %516 = arith.mulf %512, %515 : vector<16x64xf32>
    %517 = vector.extract_strided_slice %433 {offsets = [0, 7], sizes = [16, 1], strides = [1, 1]} : vector<16x32xf32> to vector<16x1xf32>
    %518 = vector.broadcast %517 : vector<16x1xf32> to vector<16x64xf32>
    %519 = arith.mulf %516, %518 : vector<16x64xf32>
    %520 = arith.addf %509, %519 : vector<16x64xf32>
    %521 = vector.extract_strided_slice %432 {offsets = [15, 0], sizes = [1, 64], strides = [1, 1]} : vector<16x64xf32> to vector<1x64xf32>
    %522 = vector.extract_strided_slice %432 {offsets = [0, 0], sizes = [15, 64], strides = [1, 1]} : vector<16x64xf32> to vector<15x64xf32>
    %523 = tpu.concatenate %521, %522 in 0 : vector<1x64xf32>, vector<15x64xf32> -> vector<16x64xf32>
    %c8_160 = arith.constant 8 : index
    %c0_161 = arith.constant 0 : index
    %c0_162 = arith.constant 0 : index
    %524 = vector.load %arg17[%c8_160, %c0_161, %c0_162] : memref<27x1x64xf32, #tpu.memory_space<vmem>>, vector<1x1x64xf32>
    %525 = vector.shape_cast %524 : vector<1x1x64xf32> to vector<1x64xf32>
    %526 = vector.broadcast %525 : vector<1x64xf32> to vector<16x64xf32>
    %527 = arith.mulf %523, %526 : vector<16x64xf32>
    %528 = vector.extract_strided_slice %433 {offsets = [0, 8], sizes = [16, 1], strides = [1, 1]} : vector<16x32xf32> to vector<16x1xf32>
    %529 = vector.broadcast %528 : vector<16x1xf32> to vector<16x64xf32>
    %530 = arith.mulf %527, %529 : vector<16x64xf32>
    %531 = arith.addf %520, %530 : vector<16x64xf32>
    %532 = vector.extract_strided_slice %432 {offsets = [13, 0], sizes = [3, 64], strides = [1, 1]} : vector<16x64xf32> to vector<3x64xf32>
    %533 = vector.extract_strided_slice %432 {offsets = [0, 0], sizes = [13, 64], strides = [1, 1]} : vector<16x64xf32> to vector<13x64xf32>
    %534 = tpu.concatenate %532, %533 in 0 : vector<3x64xf32>, vector<13x64xf32> -> vector<16x64xf32>
    %c9_163 = arith.constant 9 : index
    %c0_164 = arith.constant 0 : index
    %c0_165 = arith.constant 0 : index
    %535 = vector.load %arg17[%c9_163, %c0_164, %c0_165] : memref<27x1x64xf32, #tpu.memory_space<vmem>>, vector<1x1x64xf32>
    %536 = vector.shape_cast %535 : vector<1x1x64xf32> to vector<1x64xf32>
    %537 = vector.broadcast %536 : vector<1x64xf32> to vector<16x64xf32>
    %538 = arith.mulf %534, %537 : vector<16x64xf32>
    %539 = vector.extract_strided_slice %433 {offsets = [0, 9], sizes = [16, 1], strides = [1, 1]} : vector<16x32xf32> to vector<16x1xf32>
    %540 = vector.broadcast %539 : vector<16x1xf32> to vector<16x64xf32>
    %541 = arith.mulf %538, %540 : vector<16x64xf32>
    %542 = arith.addf %531, %541 : vector<16x64xf32>
    %543 = vector.extract_strided_slice %432 {offsets = [14, 0], sizes = [2, 64], strides = [1, 1]} : vector<16x64xf32> to vector<2x64xf32>
    %544 = vector.extract_strided_slice %432 {offsets = [0, 0], sizes = [14, 64], strides = [1, 1]} : vector<16x64xf32> to vector<14x64xf32>
    %545 = tpu.concatenate %543, %544 in 0 : vector<2x64xf32>, vector<14x64xf32> -> vector<16x64xf32>
    %c10_166 = arith.constant 10 : index
    %c0_167 = arith.constant 0 : index
    %c0_168 = arith.constant 0 : index
    %546 = vector.load %arg17[%c10_166, %c0_167, %c0_168] : memref<27x1x64xf32, #tpu.memory_space<vmem>>, vector<1x1x64xf32>
    %547 = vector.shape_cast %546 : vector<1x1x64xf32> to vector<1x64xf32>
    %548 = vector.broadcast %547 : vector<1x64xf32> to vector<16x64xf32>
    %549 = arith.mulf %545, %548 : vector<16x64xf32>
    %550 = vector.extract_strided_slice %433 {offsets = [0, 10], sizes = [16, 1], strides = [1, 1]} : vector<16x32xf32> to vector<16x1xf32>
    %551 = vector.broadcast %550 : vector<16x1xf32> to vector<16x64xf32>
    %552 = arith.mulf %549, %551 : vector<16x64xf32>
    %553 = arith.addf %542, %552 : vector<16x64xf32>
    %554 = vector.extract_strided_slice %432 {offsets = [15, 0], sizes = [1, 64], strides = [1, 1]} : vector<16x64xf32> to vector<1x64xf32>
    %555 = vector.extract_strided_slice %432 {offsets = [0, 0], sizes = [15, 64], strides = [1, 1]} : vector<16x64xf32> to vector<15x64xf32>
    %556 = tpu.concatenate %554, %555 in 0 : vector<1x64xf32>, vector<15x64xf32> -> vector<16x64xf32>
    %c11_169 = arith.constant 11 : index
    %c0_170 = arith.constant 0 : index
    %c0_171 = arith.constant 0 : index
    %557 = vector.load %arg17[%c11_169, %c0_170, %c0_171] : memref<27x1x64xf32, #tpu.memory_space<vmem>>, vector<1x1x64xf32>
    %558 = vector.shape_cast %557 : vector<1x1x64xf32> to vector<1x64xf32>
    %559 = vector.broadcast %558 : vector<1x64xf32> to vector<16x64xf32>
    %560 = arith.mulf %556, %559 : vector<16x64xf32>
    %561 = vector.extract_strided_slice %433 {offsets = [0, 11], sizes = [16, 1], strides = [1, 1]} : vector<16x32xf32> to vector<16x1xf32>
    %562 = vector.broadcast %561 : vector<16x1xf32> to vector<16x64xf32>
    %563 = arith.mulf %560, %562 : vector<16x64xf32>
    %564 = arith.addf %553, %563 : vector<16x64xf32>
    %565 = vector.extract_strided_slice %432 {offsets = [15, 0], sizes = [1, 64], strides = [1, 1]} : vector<16x64xf32> to vector<1x64xf32>
    %566 = vector.extract_strided_slice %432 {offsets = [0, 0], sizes = [15, 64], strides = [1, 1]} : vector<16x64xf32> to vector<15x64xf32>
    %567 = tpu.concatenate %565, %566 in 0 : vector<1x64xf32>, vector<15x64xf32> -> vector<16x64xf32>
    %c12_172 = arith.constant 12 : index
    %c0_173 = arith.constant 0 : index
    %c0_174 = arith.constant 0 : index
    %568 = vector.load %arg17[%c12_172, %c0_173, %c0_174] : memref<27x1x64xf32, #tpu.memory_space<vmem>>, vector<1x1x64xf32>
    %569 = vector.shape_cast %568 : vector<1x1x64xf32> to vector<1x64xf32>
    %570 = vector.broadcast %569 : vector<1x64xf32> to vector<16x64xf32>
    %571 = arith.mulf %567, %570 : vector<16x64xf32>
    %572 = vector.extract_strided_slice %433 {offsets = [0, 12], sizes = [16, 1], strides = [1, 1]} : vector<16x32xf32> to vector<16x1xf32>
    %573 = vector.broadcast %572 : vector<16x1xf32> to vector<16x64xf32>
    %574 = arith.mulf %571, %573 : vector<16x64xf32>
    %575 = arith.addf %564, %574 : vector<16x64xf32>
    %c13_175 = arith.constant 13 : index
    %c0_176 = arith.constant 0 : index
    %c0_177 = arith.constant 0 : index
    %576 = vector.load %arg17[%c13_175, %c0_176, %c0_177] : memref<27x1x64xf32, #tpu.memory_space<vmem>>, vector<1x1x64xf32>
    %577 = vector.shape_cast %576 : vector<1x1x64xf32> to vector<1x64xf32>
    %578 = vector.broadcast %577 : vector<1x64xf32> to vector<16x64xf32>
    %579 = arith.mulf %432, %578 : vector<16x64xf32>
    %580 = arith.addf %575, %579 : vector<16x64xf32>
    %581 = vector.extract_strided_slice %432 {offsets = [1, 0], sizes = [15, 64], strides = [1, 1]} : vector<16x64xf32> to vector<15x64xf32>
    %582 = vector.extract_strided_slice %432 {offsets = [0, 0], sizes = [1, 64], strides = [1, 1]} : vector<16x64xf32> to vector<1x64xf32>
    %583 = tpu.concatenate %581, %582 in 0 : vector<15x64xf32>, vector<1x64xf32> -> vector<16x64xf32>
    %c14_178 = arith.constant 14 : index
    %c0_179 = arith.constant 0 : index
    %c0_180 = arith.constant 0 : index
    %584 = vector.load %arg17[%c14_178, %c0_179, %c0_180] : memref<27x1x64xf32, #tpu.memory_space<vmem>>, vector<1x1x64xf32>
    %585 = vector.shape_cast %584 : vector<1x1x64xf32> to vector<1x64xf32>
    %586 = vector.broadcast %585 : vector<1x64xf32> to vector<16x64xf32>
    %587 = arith.mulf %583, %586 : vector<16x64xf32>
    %588 = vector.extract_strided_slice %433 {offsets = [0, 14], sizes = [16, 1], strides = [1, 1]} : vector<16x32xf32> to vector<16x1xf32>
    %589 = vector.broadcast %588 : vector<16x1xf32> to vector<16x64xf32>
    %590 = arith.mulf %587, %589 : vector<16x64xf32>
    %591 = arith.addf %580, %590 : vector<16x64xf32>
    %592 = vector.extract_strided_slice %432 {offsets = [1, 0], sizes = [15, 64], strides = [1, 1]} : vector<16x64xf32> to vector<15x64xf32>
    %593 = vector.extract_strided_slice %432 {offsets = [0, 0], sizes = [1, 64], strides = [1, 1]} : vector<16x64xf32> to vector<1x64xf32>
    %594 = tpu.concatenate %592, %593 in 0 : vector<15x64xf32>, vector<1x64xf32> -> vector<16x64xf32>
    %c15_181 = arith.constant 15 : index
    %c0_182 = arith.constant 0 : index
    %c0_183 = arith.constant 0 : index
    %595 = vector.load %arg17[%c15_181, %c0_182, %c0_183] : memref<27x1x64xf32, #tpu.memory_space<vmem>>, vector<1x1x64xf32>
    %596 = vector.shape_cast %595 : vector<1x1x64xf32> to vector<1x64xf32>
    %597 = vector.broadcast %596 : vector<1x64xf32> to vector<16x64xf32>
    %598 = arith.mulf %594, %597 : vector<16x64xf32>
    %599 = vector.extract_strided_slice %433 {offsets = [0, 15], sizes = [16, 1], strides = [1, 1]} : vector<16x32xf32> to vector<16x1xf32>
    %600 = vector.broadcast %599 : vector<16x1xf32> to vector<16x64xf32>
    %601 = arith.mulf %598, %600 : vector<16x64xf32>
    %602 = arith.addf %591, %601 : vector<16x64xf32>
    %603 = vector.extract_strided_slice %432 {offsets = [2, 0], sizes = [14, 64], strides = [1, 1]} : vector<16x64xf32> to vector<14x64xf32>
    %604 = vector.extract_strided_slice %432 {offsets = [0, 0], sizes = [2, 64], strides = [1, 1]} : vector<16x64xf32> to vector<2x64xf32>
    %605 = tpu.concatenate %603, %604 in 0 : vector<14x64xf32>, vector<2x64xf32> -> vector<16x64xf32>
    %c16_184 = arith.constant 16 : index
    %c0_185 = arith.constant 0 : index
    %c0_186 = arith.constant 0 : index
    %606 = vector.load %arg17[%c16_184, %c0_185, %c0_186] : memref<27x1x64xf32, #tpu.memory_space<vmem>>, vector<1x1x64xf32>
    %607 = vector.shape_cast %606 : vector<1x1x64xf32> to vector<1x64xf32>
    %608 = vector.broadcast %607 : vector<1x64xf32> to vector<16x64xf32>
    %609 = arith.mulf %605, %608 : vector<16x64xf32>
    %610 = vector.extract_strided_slice %433 {offsets = [0, 16], sizes = [16, 1], strides = [1, 1]} : vector<16x32xf32> to vector<16x1xf32>
    %611 = vector.broadcast %610 : vector<16x1xf32> to vector<16x64xf32>
    %612 = arith.mulf %609, %611 : vector<16x64xf32>
    %613 = arith.addf %602, %612 : vector<16x64xf32>
    %614 = vector.extract_strided_slice %432 {offsets = [3, 0], sizes = [13, 64], strides = [1, 1]} : vector<16x64xf32> to vector<13x64xf32>
    %615 = vector.extract_strided_slice %432 {offsets = [0, 0], sizes = [3, 64], strides = [1, 1]} : vector<16x64xf32> to vector<3x64xf32>
    %616 = tpu.concatenate %614, %615 in 0 : vector<13x64xf32>, vector<3x64xf32> -> vector<16x64xf32>
    %c17_187 = arith.constant 17 : index
    %c0_188 = arith.constant 0 : index
    %c0_189 = arith.constant 0 : index
    %617 = vector.load %arg17[%c17_187, %c0_188, %c0_189] : memref<27x1x64xf32, #tpu.memory_space<vmem>>, vector<1x1x64xf32>
    %618 = vector.shape_cast %617 : vector<1x1x64xf32> to vector<1x64xf32>
    %619 = vector.broadcast %618 : vector<1x64xf32> to vector<16x64xf32>
    %620 = arith.mulf %616, %619 : vector<16x64xf32>
    %621 = vector.extract_strided_slice %433 {offsets = [0, 17], sizes = [16, 1], strides = [1, 1]} : vector<16x32xf32> to vector<16x1xf32>
    %622 = vector.broadcast %621 : vector<16x1xf32> to vector<16x64xf32>
    %623 = arith.mulf %620, %622 : vector<16x64xf32>
    %624 = arith.addf %613, %623 : vector<16x64xf32>
    %625 = vector.extract_strided_slice %432 {offsets = [1, 0], sizes = [15, 64], strides = [1, 1]} : vector<16x64xf32> to vector<15x64xf32>
    %626 = vector.extract_strided_slice %432 {offsets = [0, 0], sizes = [1, 64], strides = [1, 1]} : vector<16x64xf32> to vector<1x64xf32>
    %627 = tpu.concatenate %625, %626 in 0 : vector<15x64xf32>, vector<1x64xf32> -> vector<16x64xf32>
    %c18_190 = arith.constant 18 : index
    %c0_191 = arith.constant 0 : index
    %c0_192 = arith.constant 0 : index
    %628 = vector.load %arg17[%c18_190, %c0_191, %c0_192] : memref<27x1x64xf32, #tpu.memory_space<vmem>>, vector<1x1x64xf32>
    %629 = vector.shape_cast %628 : vector<1x1x64xf32> to vector<1x64xf32>
    %630 = vector.broadcast %629 : vector<1x64xf32> to vector<16x64xf32>
    %631 = arith.mulf %627, %630 : vector<16x64xf32>
    %632 = vector.extract_strided_slice %433 {offsets = [0, 18], sizes = [16, 1], strides = [1, 1]} : vector<16x32xf32> to vector<16x1xf32>
    %633 = vector.broadcast %632 : vector<16x1xf32> to vector<16x64xf32>
    %634 = arith.mulf %631, %633 : vector<16x64xf32>
    %635 = arith.addf %624, %634 : vector<16x64xf32>
    %636 = vector.extract_strided_slice %432 {offsets = [2, 0], sizes = [14, 64], strides = [1, 1]} : vector<16x64xf32> to vector<14x64xf32>
    %637 = vector.extract_strided_slice %432 {offsets = [0, 0], sizes = [2, 64], strides = [1, 1]} : vector<16x64xf32> to vector<2x64xf32>
    %638 = tpu.concatenate %636, %637 in 0 : vector<14x64xf32>, vector<2x64xf32> -> vector<16x64xf32>
    %c19_193 = arith.constant 19 : index
    %c0_194 = arith.constant 0 : index
    %c0_195 = arith.constant 0 : index
    %639 = vector.load %arg17[%c19_193, %c0_194, %c0_195] : memref<27x1x64xf32, #tpu.memory_space<vmem>>, vector<1x1x64xf32>
    %640 = vector.shape_cast %639 : vector<1x1x64xf32> to vector<1x64xf32>
    %641 = vector.broadcast %640 : vector<1x64xf32> to vector<16x64xf32>
    %642 = arith.mulf %638, %641 : vector<16x64xf32>
    %643 = vector.extract_strided_slice %433 {offsets = [0, 19], sizes = [16, 1], strides = [1, 1]} : vector<16x32xf32> to vector<16x1xf32>
    %644 = vector.broadcast %643 : vector<16x1xf32> to vector<16x64xf32>
    %645 = arith.mulf %642, %644 : vector<16x64xf32>
    %646 = arith.addf %635, %645 : vector<16x64xf32>
    %647 = vector.extract_strided_slice %432 {offsets = [3, 0], sizes = [13, 64], strides = [1, 1]} : vector<16x64xf32> to vector<13x64xf32>
    %648 = vector.extract_strided_slice %432 {offsets = [0, 0], sizes = [3, 64], strides = [1, 1]} : vector<16x64xf32> to vector<3x64xf32>
    %649 = tpu.concatenate %647, %648 in 0 : vector<13x64xf32>, vector<3x64xf32> -> vector<16x64xf32>
    %c20_196 = arith.constant 20 : index
    %c0_197 = arith.constant 0 : index
    %c0_198 = arith.constant 0 : index
    %650 = vector.load %arg17[%c20_196, %c0_197, %c0_198] : memref<27x1x64xf32, #tpu.memory_space<vmem>>, vector<1x1x64xf32>
    %651 = vector.shape_cast %650 : vector<1x1x64xf32> to vector<1x64xf32>
    %652 = vector.broadcast %651 : vector<1x64xf32> to vector<16x64xf32>
    %653 = arith.mulf %649, %652 : vector<16x64xf32>
    %654 = vector.extract_strided_slice %433 {offsets = [0, 20], sizes = [16, 1], strides = [1, 1]} : vector<16x32xf32> to vector<16x1xf32>
    %655 = vector.broadcast %654 : vector<16x1xf32> to vector<16x64xf32>
    %656 = arith.mulf %653, %655 : vector<16x64xf32>
    %657 = arith.addf %646, %656 : vector<16x64xf32>
    %658 = vector.extract_strided_slice %432 {offsets = [3, 0], sizes = [13, 64], strides = [1, 1]} : vector<16x64xf32> to vector<13x64xf32>
    %659 = vector.extract_strided_slice %432 {offsets = [0, 0], sizes = [3, 64], strides = [1, 1]} : vector<16x64xf32> to vector<3x64xf32>
    %660 = tpu.concatenate %658, %659 in 0 : vector<13x64xf32>, vector<3x64xf32> -> vector<16x64xf32>
    %c21_199 = arith.constant 21 : index
    %c0_200 = arith.constant 0 : index
    %c0_201 = arith.constant 0 : index
    %661 = vector.load %arg17[%c21_199, %c0_200, %c0_201] : memref<27x1x64xf32, #tpu.memory_space<vmem>>, vector<1x1x64xf32>
    %662 = vector.shape_cast %661 : vector<1x1x64xf32> to vector<1x64xf32>
    %663 = vector.broadcast %662 : vector<1x64xf32> to vector<16x64xf32>
    %664 = arith.mulf %660, %663 : vector<16x64xf32>
    %665 = vector.extract_strided_slice %433 {offsets = [0, 21], sizes = [16, 1], strides = [1, 1]} : vector<16x32xf32> to vector<16x1xf32>
    %666 = vector.broadcast %665 : vector<16x1xf32> to vector<16x64xf32>
    %667 = arith.mulf %664, %666 : vector<16x64xf32>
    %668 = arith.addf %657, %667 : vector<16x64xf32>
    %669 = vector.extract_strided_slice %432 {offsets = [4, 0], sizes = [12, 64], strides = [1, 1]} : vector<16x64xf32> to vector<12x64xf32>
    %670 = vector.extract_strided_slice %432 {offsets = [0, 0], sizes = [4, 64], strides = [1, 1]} : vector<16x64xf32> to vector<4x64xf32>
    %671 = tpu.concatenate %669, %670 in 0 : vector<12x64xf32>, vector<4x64xf32> -> vector<16x64xf32>
    %c22_202 = arith.constant 22 : index
    %c0_203 = arith.constant 0 : index
    %c0_204 = arith.constant 0 : index
    %672 = vector.load %arg17[%c22_202, %c0_203, %c0_204] : memref<27x1x64xf32, #tpu.memory_space<vmem>>, vector<1x1x64xf32>
    %673 = vector.shape_cast %672 : vector<1x1x64xf32> to vector<1x64xf32>
    %674 = vector.broadcast %673 : vector<1x64xf32> to vector<16x64xf32>
    %675 = arith.mulf %671, %674 : vector<16x64xf32>
    %676 = vector.extract_strided_slice %433 {offsets = [0, 22], sizes = [16, 1], strides = [1, 1]} : vector<16x32xf32> to vector<16x1xf32>
    %677 = vector.broadcast %676 : vector<16x1xf32> to vector<16x64xf32>
    %678 = arith.mulf %675, %677 : vector<16x64xf32>
    %679 = arith.addf %668, %678 : vector<16x64xf32>
    %680 = vector.extract_strided_slice %432 {offsets = [5, 0], sizes = [11, 64], strides = [1, 1]} : vector<16x64xf32> to vector<11x64xf32>
    %681 = vector.extract_strided_slice %432 {offsets = [0, 0], sizes = [5, 64], strides = [1, 1]} : vector<16x64xf32> to vector<5x64xf32>
    %682 = tpu.concatenate %680, %681 in 0 : vector<11x64xf32>, vector<5x64xf32> -> vector<16x64xf32>
    %c23_205 = arith.constant 23 : index
    %c0_206 = arith.constant 0 : index
    %c0_207 = arith.constant 0 : index
    %683 = vector.load %arg17[%c23_205, %c0_206, %c0_207] : memref<27x1x64xf32, #tpu.memory_space<vmem>>, vector<1x1x64xf32>
    %684 = vector.shape_cast %683 : vector<1x1x64xf32> to vector<1x64xf32>
    %685 = vector.broadcast %684 : vector<1x64xf32> to vector<16x64xf32>
    %686 = arith.mulf %682, %685 : vector<16x64xf32>
    %687 = vector.extract_strided_slice %433 {offsets = [0, 23], sizes = [16, 1], strides = [1, 1]} : vector<16x32xf32> to vector<16x1xf32>
    %688 = vector.broadcast %687 : vector<16x1xf32> to vector<16x64xf32>
    %689 = arith.mulf %686, %688 : vector<16x64xf32>
    %690 = arith.addf %679, %689 : vector<16x64xf32>
    %691 = vector.extract_strided_slice %432 {offsets = [5, 0], sizes = [11, 64], strides = [1, 1]} : vector<16x64xf32> to vector<11x64xf32>
    %692 = vector.extract_strided_slice %432 {offsets = [0, 0], sizes = [5, 64], strides = [1, 1]} : vector<16x64xf32> to vector<5x64xf32>
    %693 = tpu.concatenate %691, %692 in 0 : vector<11x64xf32>, vector<5x64xf32> -> vector<16x64xf32>
    %c24_208 = arith.constant 24 : index
    %c0_209 = arith.constant 0 : index
    %c0_210 = arith.constant 0 : index
    %694 = vector.load %arg17[%c24_208, %c0_209, %c0_210] : memref<27x1x64xf32, #tpu.memory_space<vmem>>, vector<1x1x64xf32>
    %695 = vector.shape_cast %694 : vector<1x1x64xf32> to vector<1x64xf32>
    %696 = vector.broadcast %695 : vector<1x64xf32> to vector<16x64xf32>
    %697 = arith.mulf %693, %696 : vector<16x64xf32>
    %698 = vector.extract_strided_slice %433 {offsets = [0, 24], sizes = [16, 1], strides = [1, 1]} : vector<16x32xf32> to vector<16x1xf32>
    %699 = vector.broadcast %698 : vector<16x1xf32> to vector<16x64xf32>
    %700 = arith.mulf %697, %699 : vector<16x64xf32>
    %701 = arith.addf %690, %700 : vector<16x64xf32>
    %702 = vector.extract_strided_slice %432 {offsets = [6, 0], sizes = [10, 64], strides = [1, 1]} : vector<16x64xf32> to vector<10x64xf32>
    %703 = vector.extract_strided_slice %432 {offsets = [0, 0], sizes = [6, 64], strides = [1, 1]} : vector<16x64xf32> to vector<6x64xf32>
    %704 = tpu.concatenate %702, %703 in 0 : vector<10x64xf32>, vector<6x64xf32> -> vector<16x64xf32>
    %c25_211 = arith.constant 25 : index
    %c0_212 = arith.constant 0 : index
    %c0_213 = arith.constant 0 : index
    %705 = vector.load %arg17[%c25_211, %c0_212, %c0_213] : memref<27x1x64xf32, #tpu.memory_space<vmem>>, vector<1x1x64xf32>
    %706 = vector.shape_cast %705 : vector<1x1x64xf32> to vector<1x64xf32>
    %707 = vector.broadcast %706 : vector<1x64xf32> to vector<16x64xf32>
    %708 = arith.mulf %704, %707 : vector<16x64xf32>
    %709 = vector.extract_strided_slice %433 {offsets = [0, 25], sizes = [16, 1], strides = [1, 1]} : vector<16x32xf32> to vector<16x1xf32>
    %710 = vector.broadcast %709 : vector<16x1xf32> to vector<16x64xf32>
    %711 = arith.mulf %708, %710 : vector<16x64xf32>
    %712 = arith.addf %701, %711 : vector<16x64xf32>
    %713 = vector.extract_strided_slice %432 {offsets = [7, 0], sizes = [9, 64], strides = [1, 1]} : vector<16x64xf32> to vector<9x64xf32>
    %714 = vector.extract_strided_slice %432 {offsets = [0, 0], sizes = [7, 64], strides = [1, 1]} : vector<16x64xf32> to vector<7x64xf32>
    %715 = tpu.concatenate %713, %714 in 0 : vector<9x64xf32>, vector<7x64xf32> -> vector<16x64xf32>
    %c26_214 = arith.constant 26 : index
    %c0_215 = arith.constant 0 : index
    %c0_216 = arith.constant 0 : index
    %716 = vector.load %arg17[%c26_214, %c0_215, %c0_216] : memref<27x1x64xf32, #tpu.memory_space<vmem>>, vector<1x1x64xf32>
    %717 = vector.shape_cast %716 : vector<1x1x64xf32> to vector<1x64xf32>
    %718 = vector.broadcast %717 : vector<1x64xf32> to vector<16x64xf32>
    %719 = arith.mulf %715, %718 : vector<16x64xf32>
    %720 = vector.extract_strided_slice %433 {offsets = [0, 26], sizes = [16, 1], strides = [1, 1]} : vector<16x32xf32> to vector<16x1xf32>
    %721 = vector.broadcast %720 : vector<16x1xf32> to vector<16x64xf32>
    %722 = arith.mulf %719, %721 : vector<16x64xf32>
    %723 = arith.addf %712, %722 : vector<16x64xf32>
    %c0_217 = arith.constant 0 : index
    %c0_218 = arith.constant 0 : index
    %724 = vector.load %arg18[%c0_217, %c0_218] : memref<1x64xf32, #tpu.memory_space<vmem>>, vector<1x64xf32>
    %725 = vector.broadcast %724 : vector<1x64xf32> to vector<16x64xf32>
    %726 = arith.addf %723, %725 : vector<16x64xf32>
    %c0_219 = arith.constant 0 : index
    %c0_220 = arith.constant 0 : index
    %727 = vector.load %arg19[%c0_219, %c0_220] : memref<1x64xf32, #tpu.memory_space<vmem>>, vector<1x64xf32>
    %c0_221 = arith.constant 0 : index
    %c0_222 = arith.constant 0 : index
    %728 = vector.load %arg20[%c0_221, %c0_222] : memref<1x64xf32, #tpu.memory_space<vmem>>, vector<1x64xf32>
    %cst_223 = arith.constant dense<0.000000e+00> : vector<16xf32>
    %729 = vector.multi_reduction <add>, %726, %cst_223 [1] : vector<16x64xf32> to vector<16xf32>
    %730 = vector.shape_cast %729 : vector<16xf32> to vector<16x1xf32>
    %cst_224 = arith.constant 6.400000e+01 : f32
    %731 = vector.broadcast %cst_224 : f32 to vector<16x1xf32>
    %732 = arith.divf %730, %731 : vector<16x1xf32>
    %733 = arith.mulf %726, %726 : vector<16x64xf32>
    %cst_225 = arith.constant dense<0.000000e+00> : vector<16xf32>
    %734 = vector.multi_reduction <add>, %733, %cst_225 [1] : vector<16x64xf32> to vector<16xf32>
    %735 = vector.shape_cast %734 : vector<16xf32> to vector<16x1xf32>
    %cst_226 = arith.constant 6.400000e+01 : f32
    %736 = vector.broadcast %cst_226 : f32 to vector<16x1xf32>
    %737 = arith.divf %735, %736 : vector<16x1xf32>
    %738 = arith.mulf %732, %732 : vector<16x1xf32>
    %739 = arith.subf %737, %738 : vector<16x1xf32>
    %740 = vector.broadcast %732 : vector<16x1xf32> to vector<16x64xf32>
    %741 = arith.subf %726, %740 : vector<16x64xf32>
    %cst_227 = arith.constant 9.99999974E-6 : f32
    %742 = vector.broadcast %cst_227 : f32 to vector<16x1xf32>
    %743 = arith.addf %739, %742 : vector<16x1xf32>
    %744 = math.rsqrt %743 : vector<16x1xf32>
    %745 = vector.broadcast %744 : vector<16x1xf32> to vector<16x64xf32>
    %746 = arith.mulf %741, %745 : vector<16x64xf32>
    %747 = vector.broadcast %727 : vector<1x64xf32> to vector<16x64xf32>
    %748 = arith.mulf %746, %747 : vector<16x64xf32>
    %749 = vector.broadcast %728 : vector<1x64xf32> to vector<16x64xf32>
    %750 = arith.addf %748, %749 : vector<16x64xf32>
    %751 = arith.truncf %750 : vector<16x64xf32> to vector<16x64xbf16>
    %c0_228 = arith.constant 0 : index
    %c0_229 = arith.constant 0 : index
    %752 = vector.load %arg21[%c0_228, %c0_229] : memref<64x256xbf16, #tpu.memory_space<vmem>>, vector<64x256xbf16>
    %cst_230 = arith.constant dense<0.000000e+00> : vector<16x256xf32>
    %753 = tpu.matmul %751, %752, %cst_230 {dimension_numbers = #tpu.dot_dimension_numbers<[1], [0], [0], [1], [0, 0, 1, 1], [], []>} : vector<16x64xbf16>, vector<64x256xbf16>, vector<16x256xf32> -> vector<16x256xf32>
    %c0_231 = arith.constant 0 : index
    %c0_232 = arith.constant 0 : index
    %754 = vector.load %arg22[%c0_231, %c0_232] : memref<1x256xf32, #tpu.memory_space<vmem>>, vector<1x256xf32>
    %755 = vector.broadcast %754 : vector<1x256xf32> to vector<16x256xf32>
    %756 = arith.addf %753, %755 : vector<16x256xf32>
    %cst_233 = arith.constant 5.000000e-01 : f32
    %757 = vector.broadcast %cst_233 : f32 to vector<16x256xf32>
    %758 = arith.mulf %757, %756 : vector<16x256xf32>
    %cst_234 = arith.constant 4.471500e-02 : f32
    %759 = vector.broadcast %cst_234 : f32 to vector<16x256xf32>
    %760 = arith.mulf %759, %756 : vector<16x256xf32>
    %761 = arith.mulf %760, %756 : vector<16x256xf32>
    %762 = arith.mulf %761, %756 : vector<16x256xf32>
    %763 = arith.addf %756, %762 : vector<16x256xf32>
    %cst_235 = arith.constant 0.797884583 : f32
    %764 = vector.broadcast %cst_235 : f32 to vector<16x256xf32>
    %765 = arith.mulf %764, %763 : vector<16x256xf32>
    %766 = math.tanh %765 : vector<16x256xf32>
    %cst_236 = arith.constant 1.000000e+00 : f32
    %767 = vector.broadcast %cst_236 : f32 to vector<16x256xf32>
    %768 = arith.addf %767, %766 : vector<16x256xf32>
    %769 = arith.mulf %758, %768 : vector<16x256xf32>
    %770 = arith.truncf %769 : vector<16x256xf32> to vector<16x256xbf16>
    %c0_237 = arith.constant 0 : index
    %c0_238 = arith.constant 0 : index
    %771 = vector.load %arg23[%c0_237, %c0_238] : memref<256x64xbf16, #tpu.memory_space<vmem>>, vector<256x64xbf16>
    %cst_239 = arith.constant dense<0.000000e+00> : vector<16x64xf32>
    %772 = tpu.matmul %770, %771, %cst_239 {dimension_numbers = #tpu.dot_dimension_numbers<[1], [0], [0], [1], [0, 0, 1, 1], [], []>} : vector<16x256xbf16>, vector<256x64xbf16>, vector<16x64xf32> -> vector<16x64xf32>
    %c0_240 = arith.constant 0 : index
    %c0_241 = arith.constant 0 : index
    %773 = vector.load %arg24[%c0_240, %c0_241] : memref<1x64xf32, #tpu.memory_space<vmem>>, vector<1x64xf32>
    %774 = vector.broadcast %773 : vector<1x64xf32> to vector<16x64xf32>
    %775 = arith.addf %772, %774 : vector<16x64xf32>
    %c0_242 = arith.constant 0 : index
    %c0_243 = arith.constant 0 : index
    %776 = vector.load %arg25[%c0_242, %c0_243] : memref<1x64xf32, #tpu.memory_space<vmem>>, vector<1x64xf32>
    %777 = vector.broadcast %776 : vector<1x64xf32> to vector<16x64xf32>
    %778 = arith.mulf %777, %775 : vector<16x64xf32>
    %779 = arith.addf %432, %778 : vector<16x64xf32>
    %c0_244 = arith.constant 0 : index
    %c0_245 = arith.constant 0 : index
    %780 = vector.load %arg26[%c0_244, %c0_245] : memref<16x16xbf16, #tpu.memory_space<vmem>>, vector<16x16xbf16>
    %781 = arith.truncf %779 : vector<16x64xf32> to vector<16x64xbf16>
    %cst_246 = arith.constant dense<0.000000e+00> : vector<16x64xf32>
    %782 = tpu.matmul %780, %781, %cst_246 {dimension_numbers = #tpu.dot_dimension_numbers<[1], [0], [0], [1], [0, 0, 1, 1], [], []>} : vector<16x16xbf16>, vector<16x64xbf16>, vector<16x64xf32> -> vector<16x64xf32>
    %783 = vector.extract_strided_slice %782 {offsets = [0, 0], sizes = [2, 64], strides = [1, 1]} : vector<16x64xf32> to vector<2x64xf32>
    %784 = arith.truncf %783 : vector<2x64xf32> to vector<2x64xbf16>
    %c0_247 = arith.constant 0 : index
    %c0_248 = arith.constant 0 : index
    %c0_249 = arith.constant 0 : index
    %785 = vector.load %arg27[%c0_247, %c0_248, %c0_249] : memref<8x64x128xbf16, #tpu.memory_space<vmem>>, vector<1x64x128xbf16>
    %786 = vector.shape_cast %785 : vector<1x64x128xbf16> to vector<64x128xbf16>
    %cst_250 = arith.constant dense<0.000000e+00> : vector<2x128xf32>
    %787 = tpu.matmul %784, %786, %cst_250 {dimension_numbers = #tpu.dot_dimension_numbers<[1], [0], [0], [1], [0, 0, 1, 1], [], []>} : vector<2x64xbf16>, vector<64x128xbf16>, vector<2x128xf32> -> vector<2x128xf32>
    %788 = vector.extract_strided_slice %782 {offsets = [2, 0], sizes = [2, 64], strides = [1, 1]} : vector<16x64xf32> to vector<2x64xf32>
    %789 = arith.truncf %788 : vector<2x64xf32> to vector<2x64xbf16>
    %c1_251 = arith.constant 1 : index
    %c0_252 = arith.constant 0 : index
    %c0_253 = arith.constant 0 : index
    %790 = vector.load %arg27[%c1_251, %c0_252, %c0_253] : memref<8x64x128xbf16, #tpu.memory_space<vmem>>, vector<1x64x128xbf16>
    %791 = vector.shape_cast %790 : vector<1x64x128xbf16> to vector<64x128xbf16>
    %cst_254 = arith.constant dense<0.000000e+00> : vector<2x128xf32>
    %792 = tpu.matmul %789, %791, %cst_254 {dimension_numbers = #tpu.dot_dimension_numbers<[1], [0], [0], [1], [0, 0, 1, 1], [], []>} : vector<2x64xbf16>, vector<64x128xbf16>, vector<2x128xf32> -> vector<2x128xf32>
    %793 = arith.addf %787, %792 : vector<2x128xf32>
    %794 = vector.extract_strided_slice %782 {offsets = [4, 0], sizes = [2, 64], strides = [1, 1]} : vector<16x64xf32> to vector<2x64xf32>
    %795 = arith.truncf %794 : vector<2x64xf32> to vector<2x64xbf16>
    %c2_255 = arith.constant 2 : index
    %c0_256 = arith.constant 0 : index
    %c0_257 = arith.constant 0 : index
    %796 = vector.load %arg27[%c2_255, %c0_256, %c0_257] : memref<8x64x128xbf16, #tpu.memory_space<vmem>>, vector<1x64x128xbf16>
    %797 = vector.shape_cast %796 : vector<1x64x128xbf16> to vector<64x128xbf16>
    %cst_258 = arith.constant dense<0.000000e+00> : vector<2x128xf32>
    %798 = tpu.matmul %795, %797, %cst_258 {dimension_numbers = #tpu.dot_dimension_numbers<[1], [0], [0], [1], [0, 0, 1, 1], [], []>} : vector<2x64xbf16>, vector<64x128xbf16>, vector<2x128xf32> -> vector<2x128xf32>
    %799 = arith.addf %793, %798 : vector<2x128xf32>
    %800 = vector.extract_strided_slice %782 {offsets = [6, 0], sizes = [2, 64], strides = [1, 1]} : vector<16x64xf32> to vector<2x64xf32>
    %801 = arith.truncf %800 : vector<2x64xf32> to vector<2x64xbf16>
    %c3_259 = arith.constant 3 : index
    %c0_260 = arith.constant 0 : index
    %c0_261 = arith.constant 0 : index
    %802 = vector.load %arg27[%c3_259, %c0_260, %c0_261] : memref<8x64x128xbf16, #tpu.memory_space<vmem>>, vector<1x64x128xbf16>
    %803 = vector.shape_cast %802 : vector<1x64x128xbf16> to vector<64x128xbf16>
    %cst_262 = arith.constant dense<0.000000e+00> : vector<2x128xf32>
    %804 = tpu.matmul %801, %803, %cst_262 {dimension_numbers = #tpu.dot_dimension_numbers<[1], [0], [0], [1], [0, 0, 1, 1], [], []>} : vector<2x64xbf16>, vector<64x128xbf16>, vector<2x128xf32> -> vector<2x128xf32>
    %805 = arith.addf %799, %804 : vector<2x128xf32>
    %806 = vector.extract_strided_slice %782 {offsets = [8, 0], sizes = [2, 64], strides = [1, 1]} : vector<16x64xf32> to vector<2x64xf32>
    %807 = arith.truncf %806 : vector<2x64xf32> to vector<2x64xbf16>
    %c4_263 = arith.constant 4 : index
    %c0_264 = arith.constant 0 : index
    %c0_265 = arith.constant 0 : index
    %808 = vector.load %arg27[%c4_263, %c0_264, %c0_265] : memref<8x64x128xbf16, #tpu.memory_space<vmem>>, vector<1x64x128xbf16>
    %809 = vector.shape_cast %808 : vector<1x64x128xbf16> to vector<64x128xbf16>
    %cst_266 = arith.constant dense<0.000000e+00> : vector<2x128xf32>
    %810 = tpu.matmul %807, %809, %cst_266 {dimension_numbers = #tpu.dot_dimension_numbers<[1], [0], [0], [1], [0, 0, 1, 1], [], []>} : vector<2x64xbf16>, vector<64x128xbf16>, vector<2x128xf32> -> vector<2x128xf32>
    %811 = arith.addf %805, %810 : vector<2x128xf32>
    %812 = vector.extract_strided_slice %782 {offsets = [10, 0], sizes = [2, 64], strides = [1, 1]} : vector<16x64xf32> to vector<2x64xf32>
    %813 = arith.truncf %812 : vector<2x64xf32> to vector<2x64xbf16>
    %c5_267 = arith.constant 5 : index
    %c0_268 = arith.constant 0 : index
    %c0_269 = arith.constant 0 : index
    %814 = vector.load %arg27[%c5_267, %c0_268, %c0_269] : memref<8x64x128xbf16, #tpu.memory_space<vmem>>, vector<1x64x128xbf16>
    %815 = vector.shape_cast %814 : vector<1x64x128xbf16> to vector<64x128xbf16>
    %cst_270 = arith.constant dense<0.000000e+00> : vector<2x128xf32>
    %816 = tpu.matmul %813, %815, %cst_270 {dimension_numbers = #tpu.dot_dimension_numbers<[1], [0], [0], [1], [0, 0, 1, 1], [], []>} : vector<2x64xbf16>, vector<64x128xbf16>, vector<2x128xf32> -> vector<2x128xf32>
    %817 = arith.addf %811, %816 : vector<2x128xf32>
    %818 = vector.extract_strided_slice %782 {offsets = [12, 0], sizes = [2, 64], strides = [1, 1]} : vector<16x64xf32> to vector<2x64xf32>
    %819 = arith.truncf %818 : vector<2x64xf32> to vector<2x64xbf16>
    %c6_271 = arith.constant 6 : index
    %c0_272 = arith.constant 0 : index
    %c0_273 = arith.constant 0 : index
    %820 = vector.load %arg27[%c6_271, %c0_272, %c0_273] : memref<8x64x128xbf16, #tpu.memory_space<vmem>>, vector<1x64x128xbf16>
    %821 = vector.shape_cast %820 : vector<1x64x128xbf16> to vector<64x128xbf16>
    %cst_274 = arith.constant dense<0.000000e+00> : vector<2x128xf32>
    %822 = tpu.matmul %819, %821, %cst_274 {dimension_numbers = #tpu.dot_dimension_numbers<[1], [0], [0], [1], [0, 0, 1, 1], [], []>} : vector<2x64xbf16>, vector<64x128xbf16>, vector<2x128xf32> -> vector<2x128xf32>
    %823 = arith.addf %817, %822 : vector<2x128xf32>
    %824 = vector.extract_strided_slice %782 {offsets = [14, 0], sizes = [2, 64], strides = [1, 1]} : vector<16x64xf32> to vector<2x64xf32>
    %825 = arith.truncf %824 : vector<2x64xf32> to vector<2x64xbf16>
    %c7_275 = arith.constant 7 : index
    %c0_276 = arith.constant 0 : index
    %c0_277 = arith.constant 0 : index
    %826 = vector.load %arg27[%c7_275, %c0_276, %c0_277] : memref<8x64x128xbf16, #tpu.memory_space<vmem>>, vector<1x64x128xbf16>
    %827 = vector.shape_cast %826 : vector<1x64x128xbf16> to vector<64x128xbf16>
    %cst_278 = arith.constant dense<0.000000e+00> : vector<2x128xf32>
    %828 = tpu.matmul %825, %827, %cst_278 {dimension_numbers = #tpu.dot_dimension_numbers<[1], [0], [0], [1], [0, 0, 1, 1], [], []>} : vector<2x64xbf16>, vector<64x128xbf16>, vector<2x128xf32> -> vector<2x128xf32>
    %829 = arith.addf %823, %828 : vector<2x128xf32>
    %c0_279 = arith.constant 0 : index
    %c0_280 = arith.constant 0 : index
    %830 = vector.load %arg28[%c0_279, %c0_280] : memref<1x128xf32, #tpu.memory_space<vmem>>, vector<1x128xf32>
    %831 = vector.broadcast %830 : vector<1x128xf32> to vector<2x128xf32>
    %832 = arith.addf %829, %831 : vector<2x128xf32>
    %cst_281 = arith.constant 5.000000e-01 : f32
    %833 = vector.broadcast %cst_281 : f32 to vector<2x128xf32>
    %834 = arith.mulf %833, %832 : vector<2x128xf32>
    %cst_282 = arith.constant 4.471500e-02 : f32
    %835 = vector.broadcast %cst_282 : f32 to vector<2x128xf32>
    %836 = arith.mulf %835, %832 : vector<2x128xf32>
    %837 = arith.mulf %836, %832 : vector<2x128xf32>
    %838 = arith.mulf %837, %832 : vector<2x128xf32>
    %839 = arith.addf %832, %838 : vector<2x128xf32>
    %cst_283 = arith.constant 0.797884583 : f32
    %840 = vector.broadcast %cst_283 : f32 to vector<2x128xf32>
    %841 = arith.mulf %840, %839 : vector<2x128xf32>
    %842 = math.tanh %841 : vector<2x128xf32>
    %cst_284 = arith.constant 1.000000e+00 : f32
    %843 = vector.broadcast %cst_284 : f32 to vector<2x128xf32>
    %844 = arith.addf %843, %842 : vector<2x128xf32>
    %845 = arith.mulf %834, %844 : vector<2x128xf32>
    %c13_285 = arith.constant 13 : index
    %c0_286 = arith.constant 0 : index
    %c0_287 = arith.constant 0 : index
    %846 = vector.load %arg30[%c13_285, %c0_286, %c0_287] : memref<27x1x128xf32, #tpu.memory_space<vmem>>, vector<1x1x128xf32>
    %847 = vector.shape_cast %846 : vector<1x1x128xf32> to vector<1x128xf32>
    %848 = vector.broadcast %847 : vector<1x128xf32> to vector<2x128xf32>
    %849 = arith.mulf %845, %848 : vector<2x128xf32>
    %c0_288 = arith.constant 0 : index
    %c0_289 = arith.constant 0 : index
    %850 = vector.load %arg31[%c0_288, %c0_289] : memref<1x128xf32, #tpu.memory_space<vmem>>, vector<1x128xf32>
    %851 = vector.broadcast %850 : vector<1x128xf32> to vector<2x128xf32>
    %852 = arith.addf %849, %851 : vector<2x128xf32>
    %c0_290 = arith.constant 0 : index
    %c0_291 = arith.constant 0 : index
    %853 = vector.load %arg32[%c0_290, %c0_291] : memref<1x128xf32, #tpu.memory_space<vmem>>, vector<1x128xf32>
    %c0_292 = arith.constant 0 : index
    %c0_293 = arith.constant 0 : index
    %854 = vector.load %arg33[%c0_292, %c0_293] : memref<1x128xf32, #tpu.memory_space<vmem>>, vector<1x128xf32>
    %cst_294 = arith.constant dense<0.000000e+00> : vector<2xf32>
    %855 = vector.multi_reduction <add>, %852, %cst_294 [1] : vector<2x128xf32> to vector<2xf32>
    %856 = vector.shape_cast %855 : vector<2xf32> to vector<2x1xf32>
    %cst_295 = arith.constant 1.280000e+02 : f32
    %857 = vector.broadcast %cst_295 : f32 to vector<2x1xf32>
    %858 = arith.divf %856, %857 : vector<2x1xf32>
    %859 = arith.mulf %852, %852 : vector<2x128xf32>
    %cst_296 = arith.constant dense<0.000000e+00> : vector<2xf32>
    %860 = vector.multi_reduction <add>, %859, %cst_296 [1] : vector<2x128xf32> to vector<2xf32>
    %861 = vector.shape_cast %860 : vector<2xf32> to vector<2x1xf32>
    %cst_297 = arith.constant 1.280000e+02 : f32
    %862 = vector.broadcast %cst_297 : f32 to vector<2x1xf32>
    %863 = arith.divf %861, %862 : vector<2x1xf32>
    %864 = arith.mulf %858, %858 : vector<2x1xf32>
    %865 = arith.subf %863, %864 : vector<2x1xf32>
    %866 = vector.broadcast %858 : vector<2x1xf32> to vector<2x128xf32>
    %867 = arith.subf %852, %866 : vector<2x128xf32>
    %cst_298 = arith.constant 9.99999974E-6 : f32
    %868 = vector.broadcast %cst_298 : f32 to vector<2x1xf32>
    %869 = arith.addf %865, %868 : vector<2x1xf32>
    %870 = math.rsqrt %869 : vector<2x1xf32>
    %871 = vector.broadcast %870 : vector<2x1xf32> to vector<2x128xf32>
    %872 = arith.mulf %867, %871 : vector<2x128xf32>
    %873 = vector.broadcast %853 : vector<1x128xf32> to vector<2x128xf32>
    %874 = arith.mulf %872, %873 : vector<2x128xf32>
    %875 = vector.broadcast %854 : vector<1x128xf32> to vector<2x128xf32>
    %876 = arith.addf %874, %875 : vector<2x128xf32>
    %877 = arith.truncf %876 : vector<2x128xf32> to vector<2x128xbf16>
    %c0_299 = arith.constant 0 : index
    %c0_300 = arith.constant 0 : index
    %878 = vector.load %arg34[%c0_299, %c0_300] : memref<128x512xbf16, #tpu.memory_space<vmem>>, vector<128x512xbf16>
    %cst_301 = arith.constant dense<0.000000e+00> : vector<2x512xf32>
    %879 = tpu.matmul %877, %878, %cst_301 {dimension_numbers = #tpu.dot_dimension_numbers<[1], [0], [0], [1], [0, 0, 1, 1], [], []>} : vector<2x128xbf16>, vector<128x512xbf16>, vector<2x512xf32> -> vector<2x512xf32>
    %c0_302 = arith.constant 0 : index
    %c0_303 = arith.constant 0 : index
    %880 = vector.load %arg35[%c0_302, %c0_303] : memref<1x512xf32, #tpu.memory_space<vmem>>, vector<1x512xf32>
    %881 = vector.broadcast %880 : vector<1x512xf32> to vector<2x512xf32>
    %882 = arith.addf %879, %881 : vector<2x512xf32>
    %cst_304 = arith.constant 5.000000e-01 : f32
    %883 = vector.broadcast %cst_304 : f32 to vector<2x512xf32>
    %884 = arith.mulf %883, %882 : vector<2x512xf32>
    %cst_305 = arith.constant 4.471500e-02 : f32
    %885 = vector.broadcast %cst_305 : f32 to vector<2x512xf32>
    %886 = arith.mulf %885, %882 : vector<2x512xf32>
    %887 = arith.mulf %886, %882 : vector<2x512xf32>
    %888 = arith.mulf %887, %882 : vector<2x512xf32>
    %889 = arith.addf %882, %888 : vector<2x512xf32>
    %cst_306 = arith.constant 0.797884583 : f32
    %890 = vector.broadcast %cst_306 : f32 to vector<2x512xf32>
    %891 = arith.mulf %890, %889 : vector<2x512xf32>
    %892 = math.tanh %891 : vector<2x512xf32>
    %cst_307 = arith.constant 1.000000e+00 : f32
    %893 = vector.broadcast %cst_307 : f32 to vector<2x512xf32>
    %894 = arith.addf %893, %892 : vector<2x512xf32>
    %895 = arith.mulf %884, %894 : vector<2x512xf32>
    %896 = arith.truncf %895 : vector<2x512xf32> to vector<2x512xbf16>
    %c0_308 = arith.constant 0 : index
    %c0_309 = arith.constant 0 : index
    %897 = vector.load %arg36[%c0_308, %c0_309] : memref<512x128xbf16, #tpu.memory_space<vmem>>, vector<512x128xbf16>
    %cst_310 = arith.constant dense<0.000000e+00> : vector<2x128xf32>
    %898 = tpu.matmul %896, %897, %cst_310 {dimension_numbers = #tpu.dot_dimension_numbers<[1], [0], [0], [1], [0, 0, 1, 1], [], []>} : vector<2x512xbf16>, vector<512x128xbf16>, vector<2x128xf32> -> vector<2x128xf32>
    %c0_311 = arith.constant 0 : index
    %c0_312 = arith.constant 0 : index
    %899 = vector.load %arg37[%c0_311, %c0_312] : memref<1x128xf32, #tpu.memory_space<vmem>>, vector<1x128xf32>
    %900 = vector.broadcast %899 : vector<1x128xf32> to vector<2x128xf32>
    %901 = arith.addf %898, %900 : vector<2x128xf32>
    %c0_313 = arith.constant 0 : index
    %c0_314 = arith.constant 0 : index
    %902 = vector.load %arg38[%c0_313, %c0_314] : memref<1x128xf32, #tpu.memory_space<vmem>>, vector<1x128xf32>
    %903 = vector.broadcast %902 : vector<1x128xf32> to vector<2x128xf32>
    %904 = arith.mulf %903, %901 : vector<2x128xf32>
    %905 = arith.addf %845, %904 : vector<2x128xf32>
    %c0_315 = arith.constant 0 : index
    %c0_316 = arith.constant 0 : index
    %906 = vector.load %arg39[%c0_315, %c0_316] : memref<2x2xf32, #tpu.memory_space<vmem>>, vector<2x2xf32>
    %cst_317 = arith.constant dense<0.000000e+00> : vector<2x128xf32>
    %907 = tpu.matmul %906, %905, %cst_317 {dimension_numbers = #tpu.dot_dimension_numbers<[1], [0], [0], [1], [0, 0, 1, 1], [], []>} : vector<2x2xf32>, vector<2x128xf32>, vector<2x128xf32> -> vector<2x128xf32>
    %908 = arith.truncf %907 : vector<2x128xf32> to vector<2x128xbf16>
    %c0_318 = arith.constant 0 : index
    %c0_319 = arith.constant 0 : index
    %909 = vector.load %arg40[%c0_318, %c0_319] : memref<128x128xbf16, #tpu.memory_space<vmem>>, vector<128x128xbf16>
    %cst_320 = arith.constant dense<0.000000e+00> : vector<2x128xf32>
    %910 = tpu.matmul %908, %909, %cst_320 {dimension_numbers = #tpu.dot_dimension_numbers<[1], [0], [0], [1], [0, 0, 1, 1], [], []>} : vector<2x128xbf16>, vector<128x128xbf16>, vector<2x128xf32> -> vector<2x128xf32>
    %c0_321 = arith.constant 0 : index
    %c0_322 = arith.constant 0 : index
    %911 = vector.load %arg41[%c0_321, %c0_322] : memref<1x128xf32, #tpu.memory_space<vmem>>, vector<1x128xf32>
    %912 = vector.broadcast %911 : vector<1x128xf32> to vector<2x128xf32>
    %913 = arith.addf %910, %912 : vector<2x128xf32>
    %c0_323 = arith.constant 0 : index
    %c0_324 = arith.constant 0 : index
    %914 = vector.load %arg42[%c0_323, %c0_324] : memref<2x128xf32, #tpu.memory_space<vmem>>, vector<2x128xf32>
    tpu.vector_store %arg42[%c0_323, %c0_324], %913 {strides = array<i32>} : memref<2x128xf32, #tpu.memory_space<vmem>>, vector<2x128xf32>,
    return
  }
}

</mosaic_0001>

<llo_original>
// kernel: convnext3d_forward.1
$region0: #{convnext3d_forward.1}
  #allocation0 [shape = 'u32[]', space=smem, size = 0x4, offset = 0x4, fixed_abs, tag = 'smem constant byte address 0x4 - core index']
  #allocation1 [shape = 'u32[144,128]{1,0:T(1,128)}', space=vmem, size = 0x12000, scoped, tag = 'internal scratch']
  %s0 = inlined_call_operand.smem [shape: u32[43], index: -1, kind: input, shape index: {}]
  %s1 = sld [smem:[%s0]]
  %s2 = scalar_lea.smem %s0, 1
  %s3 = sld [smem:[%s2]]
  %s4 = scalar_lea.smem %s0, 2
  %s5 = sld [smem:[%s4]]
  %s6 = scalar_lea.smem %s0, 3
  %s7 = sld [smem:[%s6]]
  %s8 = scalar_lea.smem %s0, 4
  %s9 = sld [smem:[%s8]]
  %s10 = scalar_lea.smem %s0, 5
  %s11 = sld [smem:[%s10]]
  %s12 = scalar_lea.smem %s0, 6
  %s13 = sld [smem:[%s12]]
  %s14 = scalar_lea.smem %s0, 7
  %s15 = sld [smem:[%s14]]
  %s16 = scalar_lea.smem %s0, 8
  %s17 = sld [smem:[%s16]]
  %s18 = scalar_lea.smem %s0, 9
  %s19 = sld [smem:[%s18]]
  %s20 = scalar_lea.smem %s0, 10
  %s21 = sld [smem:[%s20]]
  %s22 = scalar_lea.smem %s0, 11
  %s23 = sld [smem:[%s22]]
  %s24 = scalar_lea.smem %s0, 12
  %s25 = sld [smem:[%s24]]
  %s26 = scalar_lea.smem %s0, 13
  %s27 = sld [smem:[%s26]]
  %s28 = scalar_lea.smem %s0, 14
  %s29 = sld [smem:[%s28]]
  %s30 = scalar_lea.smem %s0, 15
  %s31 = sld [smem:[%s30]]
  %s32 = scalar_lea.smem %s0, 16
  %s33 = sld [smem:[%s32]]
  %s34 = scalar_lea.smem %s0, 17
  %s35 = sld [smem:[%s34]]
  %s36 = scalar_lea.smem %s0, 18
  %s37 = sld [smem:[%s36]]
  %s38 = scalar_lea.smem %s0, 19
  %s39 = sld [smem:[%s38]]
  %s40 = scalar_lea.smem %s0, 20
  %s41 = sld [smem:[%s40]]
  %s42 = scalar_lea.smem %s0, 21
  %s43 = sld [smem:[%s42]]
  %s44 = scalar_lea.smem %s0, 22
  %s45 = sld [smem:[%s44]]
  %s46 = scalar_lea.smem %s0, 23
  %s47 = sld [smem:[%s46]]
  %s48 = scalar_lea.smem %s0, 24
  %s49 = sld [smem:[%s48]]
  %s50 = scalar_lea.smem %s0, 25
  %s51 = sld [smem:[%s50]]
  %s52 = scalar_lea.smem %s0, 26
  %s53 = sld [smem:[%s52]]
  %s54 = scalar_lea.smem %s0, 27
  %s55 = sld [smem:[%s54]]
  %s56 = scalar_lea.smem %s0, 28
  %s57 = sld [smem:[%s56]]
  %s58 = scalar_lea.smem %s0, 29
  %s59 = sld [smem:[%s58]]
  %s60 = scalar_lea.smem %s0, 30
  %s61 = sld [smem:[%s60]]
  %s62 = scalar_lea.smem %s0, 31
  %s63 = sld [smem:[%s62]]
  %s64 = scalar_lea.smem %s0, 32
  %s65 = sld [smem:[%s64]]
  %s66 = scalar_lea.smem %s0, 33
  %s67 = sld [smem:[%s66]]
  %s68 = scalar_lea.smem %s0, 34
  %s69 = sld [smem:[%s68]]
  %s70 = scalar_lea.smem %s0, 35
  %s71 = sld [smem:[%s70]]
  %s72 = scalar_lea.smem %s0, 36
  %s73 = sld [smem:[%s72]]
  %s74 = scalar_lea.smem %s0, 37
  %s75 = sld [smem:[%s74]]
  %s76 = scalar_lea.smem %s0, 38
  %s77 = sld [smem:[%s76]]
  %s78 = scalar_lea.smem %s0, 39
  %s79 = sld [smem:[%s78]]
  %s80 = scalar_lea.smem %s0, 40
  %s81 = sld [smem:[%s80]]
  %s82 = scalar_lea.smem %s0, 41
  %s83 = sld [smem:[%s82]]
  %s84 = scalar_lea.smem %s0, 42
  %s85 = sld [smem:[%s84]]
  %s86 = sld [smem:[#allocation0]]
  $region182: #{convnext3d_forward.1} parent=0
    _
  %s88 = ssub.s32 1, %s86
  %s89 = scalar_select 0, %s88, %s86
  $region1: #{convnext3d_forward.1} parent=0
    #allocation2 [shape = 'u8[512]{0}', space=vmem, size = 0x400, scoped, tag = 'input window, operand 41, single buffered']
    #allocation3 [shape = 's32[1]{0}', space=sflag, size = 0x4, scoped, tag = 'scoped memory for convnext3d_forward.1']
    #allocation4 [shape = 's32[1]{0}', space=sflag, size = 0x4, scoped, tag = 'scoped memory for convnext3d_forward.1']
    #allocation5 [shape = 'u8[1024]{0}', space=vmem, size = 0x400, scoped, tag = 'output window, operand 0, single buffered']
    %90 = vsyncpa [#allocation3], 0
    %91 = vsyncpa [#allocation4], 0
    // Predicated region
    $region2: #{convnext3d_forward.1} parent=1 // pred_check
      _
    $region3: #{convnext3d_forward.1} parent=1 // pred_check_branch
      %93 = sbr.rel (0) target = $region5
    $region4: #{convnext3d_forward.1} parent=1 // pred_region
      _
    $region5: #{convnext3d_forward.1} parent=1 // pred_fallthru
      _
    // Predicated region
    $region6: #{convnext3d_forward.1} parent=1 // pred_check
      _
    $region7: #{convnext3d_forward.1} parent=1 // pred_check_branch
      %95 = sbr.rel (0) target = $region9
    $region8: #{convnext3d_forward.1} parent=1 // pred_region
      _
    $region9: #{convnext3d_forward.1} parent=1 // pred_fallthru
      _
    // Predicated region
    $region10: #{convnext3d_forward.1} parent=1 // pred_check
      _
    $region11: #{convnext3d_forward.1} parent=1 // pred_check_branch
      %97 = sbr.rel (0) target = $region13
    $region12: #{convnext3d_forward.1} parent=1 // pred_region
      _
    $region13: #{convnext3d_forward.1} parent=1 // pred_fallthru
      _
    // Predicated region
    $region14: #{convnext3d_forward.1} parent=1 // pred_check
      _
    $region15: #{convnext3d_forward.1} parent=1 // pred_check_branch
      %99 = sbr.rel (0) target = $region17
    $region16: #{convnext3d_forward.1} parent=1 // pred_region
      _
    $region17: #{convnext3d_forward.1} parent=1 // pred_fallthru
      _
    // Predicated region
    $region18: #{convnext3d_forward.1} parent=1 // pred_check
      _
    $region19: #{convnext3d_forward.1} parent=1 // pred_check_branch
      %101 = sbr.rel (0) target = $region21
    $region20: #{convnext3d_forward.1} parent=1 // pred_region
      _
    $region21: #{convnext3d_forward.1} parent=1 // pred_fallthru
      _
    // Predicated region
    $region22: #{convnext3d_forward.1} parent=1 // pred_check
      _
    $region23: #{convnext3d_forward.1} parent=1 // pred_check_branch
      %103 = sbr.rel (0) target = $region25
    $region24: #{convnext3d_forward.1} parent=1 // pred_region
      _
    $region25: #{convnext3d_forward.1} parent=1 // pred_fallthru
      _
    // Predicated region
    $region26: #{convnext3d_forward.1} parent=1 // pred_check
      _
    $region27: #{convnext3d_forward.1} parent=1 // pred_check_branch
      %105 = sbr.rel (0) target = $region29
    $region28: #{convnext3d_forward.1} parent=1 // pred_region
      _
    $region29: #{convnext3d_forward.1} parent=1 // pred_fallthru
      _
    // Predicated region
    $region30: #{convnext3d_forward.1} parent=1 // pred_check
      _
    $region31: #{convnext3d_forward.1} parent=1 // pred_check_branch
      %107 = sbr.rel (0) target = $region33
    $region32: #{convnext3d_forward.1} parent=1 // pred_region
      _
    $region33: #{convnext3d_forward.1} parent=1 // pred_fallthru
      _
    // Predicated region
    $region34: #{convnext3d_forward.1} parent=1 // pred_check
      _
    $region35: #{convnext3d_forward.1} parent=1 // pred_check_branch
      %109 = sbr.rel (0) target = $region37
    $region36: #{convnext3d_forward.1} parent=1 // pred_region
      _
    $region37: #{convnext3d_forward.1} parent=1 // pred_fallthru
      _
    // Predicated region
    $region38: #{convnext3d_forward.1} parent=1 // pred_check
      _
    $region39: #{convnext3d_forward.1} parent=1 // pred_check_branch
      %111 = sbr.rel (0) target = $region41
    $region40: #{convnext3d_forward.1} parent=1 // pred_region
      _
    $region41: #{convnext3d_forward.1} parent=1 // pred_fallthru
      _
    // Predicated region
    $region42: #{convnext3d_forward.1} parent=1 // pred_check
      _
    $region43: #{convnext3d_forward.1} parent=1 // pred_check_branch
      %113 = sbr.rel (0) target = $region45
    $region44: #{convnext3d_forward.1} parent=1 // pred_region
      _
    $region45: #{convnext3d_forward.1} parent=1 // pred_fallthru
      _
    // Predicated region
    $region46: #{convnext3d_forward.1} parent=1 // pred_check
      _
    $region47: #{convnext3d_forward.1} parent=1 // pred_check_branch
      %115 = sbr.rel (0) target = $region49
    $region48: #{convnext3d_forward.1} parent=1 // pred_region
      _
    $region49: #{convnext3d_forward.1} parent=1 // pred_fallthru
      _
    // Predicated region
    $region50: #{convnext3d_forward.1} parent=1 // pred_check
      _
    $region51: #{convnext3d_forward.1} parent=1 // pred_check_branch
      %117 = sbr.rel (0) target = $region53
    $region52: #{convnext3d_forward.1} parent=1 // pred_region
      _
    $region53: #{convnext3d_forward.1} parent=1 // pred_fallthru
      _
    // Predicated region
    $region54: #{convnext3d_forward.1} parent=1 // pred_check
      _
    $region55: #{convnext3d_forward.1} parent=1 // pred_check_branch
      %119 = sbr.rel (0) target = $region57
    $region56: #{convnext3d_forward.1} parent=1 // pred_region
      _
    $region57: #{convnext3d_forward.1} parent=1 // pred_fallthru
      _
    // Predicated region
    $region58: #{convnext3d_forward.1} parent=1 // pred_check
      _
    $region59: #{convnext3d_forward.1} parent=1 // pred_check_branch
      %121 = sbr.rel (0) target = $region61
    $region60: #{convnext3d_forward.1} parent=1 // pred_region
      _
    $region61: #{convnext3d_forward.1} parent=1 // pred_fallthru
      _
    // Predicated region
    $region62: #{convnext3d_forward.1} parent=1 // pred_check
      _
    $region63: #{convnext3d_forward.1} parent=1 // pred_check_branch
      %123 = sbr.rel (0) target = $region65
    $region64: #{convnext3d_forward.1} parent=1 // pred_region
      _
    $region65: #{convnext3d_forward.1} parent=1 // pred_fallthru
      _
    // Predicated region
    $region66: #{convnext3d_forward.1} parent=1 // pred_check
      _
    $region67: #{convnext3d_forward.1} parent=1 // pred_check_branch
      %125 = sbr.rel (0) target = $region69
    $region68: #{convnext3d_forward.1} parent=1 // pred_region
      _
    $region69: #{convnext3d_forward.1} parent=1 // pred_fallthru
      _
    // Predicated region
    $region70: #{convnext3d_forward.1} parent=1 // pred_check
      _
    $region71: #{convnext3d_forward.1} parent=1 // pred_check_branch
      %127 = sbr.rel (0) target = $region73
    $region72: #{convnext3d_forward.1} parent=1 // pred_region
      _
    $region73: #{convnext3d_forward.1} parent=1 // pred_fallthru
      _
    // Predicated region
    $region74: #{convnext3d_forward.1} parent=1 // pred_check
      _
    $region75: #{convnext3d_forward.1} parent=1 // pred_check_branch
      %129 = sbr.rel (0) target = $region77
    $region76: #{convnext3d_forward.1} parent=1 // pred_region
      _
    $region77: #{convnext3d_forward.1} parent=1 // pred_fallthru
      _
    // Predicated region
    $region78: #{convnext3d_forward.1} parent=1 // pred_check
      _
    $region79: #{convnext3d_forward.1} parent=1 // pred_check_branch
      %131 = sbr.rel (0) target = $region81
    $region80: #{convnext3d_forward.1} parent=1 // pred_region
      _
    $region81: #{convnext3d_forward.1} parent=1 // pred_fallthru
      _
    // Predicated region
    $region82: #{convnext3d_forward.1} parent=1 // pred_check
      _
    $region83: #{convnext3d_forward.1} parent=1 // pred_check_branch
      %133 = sbr.rel (0) target = $region85
    $region84: #{convnext3d_forward.1} parent=1 // pred_region
      _
    $region85: #{convnext3d_forward.1} parent=1 // pred_fallthru
      _
    // Predicated region
    $region86: #{convnext3d_forward.1} parent=1 // pred_check
      _
    $region87: #{convnext3d_forward.1} parent=1 // pred_check_branch
      %135 = sbr.rel (0) target = $region89
    $region88: #{convnext3d_forward.1} parent=1 // pred_region
      _
    $region89: #{convnext3d_forward.1} parent=1 // pred_fallthru
      _
    // Predicated region
    $region90: #{convnext3d_forward.1} parent=1 // pred_check
      _
    $region91: #{convnext3d_forward.1} parent=1 // pred_check_branch
      %137 = sbr.rel (0) target = $region93
    $region92: #{convnext3d_forward.1} parent=1 // pred_region
      _
    $region93: #{convnext3d_forward.1} parent=1 // pred_fallthru
      _
    // Predicated region
    $region94: #{convnext3d_forward.1} parent=1 // pred_check
      _
    $region95: #{convnext3d_forward.1} parent=1 // pred_check_branch
      %139 = sbr.rel (0) target = $region97
    $region96: #{convnext3d_forward.1} parent=1 // pred_region
      _
    $region97: #{convnext3d_forward.1} parent=1 // pred_fallthru
      _
    // Predicated region
    $region98: #{convnext3d_forward.1} parent=1 // pred_check
      _
    $region99: #{convnext3d_forward.1} parent=1 // pred_check_branch
      %141 = sbr.rel (0) target = $region101
    $region100: #{convnext3d_forward.1} parent=1 // pred_region
      _
    $region101: #{convnext3d_forward.1} parent=1 // pred_fallthru
      _
    // Predicated region
    $region102: #{convnext3d_forward.1} parent=1 // pred_check
      _
    $region103: #{convnext3d_forward.1} parent=1 // pred_check_branch
      %143 = sbr.rel (0) target = $region105
    $region104: #{convnext3d_forward.1} parent=1 // pred_region
      _
    $region105: #{convnext3d_forward.1} parent=1 // pred_fallthru
      _
    // Predicated region
    $region106: #{convnext3d_forward.1} parent=1 // pred_check
      _
    $region107: #{convnext3d_forward.1} parent=1 // pred_check_branch
      %145 = sbr.rel (0) target = $region109
    $region108: #{convnext3d_forward.1} parent=1 // pred_region
      _
    $region109: #{convnext3d_forward.1} parent=1 // pred_fallthru
      _
    // Predicated region
    $region110: #{convnext3d_forward.1} parent=1 // pred_check
      _
    $region111: #{convnext3d_forward.1} parent=1 // pred_check_branch
      %147 = sbr.rel (0) target = $region113
    $region112: #{convnext3d_forward.1} parent=1 // pred_region
      _
    $region113: #{convnext3d_forward.1} parent=1 // pred_fallthru
      _
    // Predicated region
    $region114: #{convnext3d_forward.1} parent=1 // pred_check
      _
    $region115: #{convnext3d_forward.1} parent=1 // pred_check_branch
      %149 = sbr.rel (0) target = $region117
    $region116: #{convnext3d_forward.1} parent=1 // pred_region
      _
    $region117: #{convnext3d_forward.1} parent=1 // pred_fallthru
      _
    // Predicated region
    $region118: #{convnext3d_forward.1} parent=1 // pred_check
      _
    $region119: #{convnext3d_forward.1} parent=1 // pred_check_branch
      %151 = sbr.rel (0) target = $region121
    $region120: #{convnext3d_forward.1} parent=1 // pred_region
      _
    $region121: #{convnext3d_forward.1} parent=1 // pred_fallthru
      _
    // Predicated region
    $region122: #{convnext3d_forward.1} parent=1 // pred_check
      _
    $region123: #{convnext3d_forward.1} parent=1 // pred_check_branch
      %153 = sbr.rel (0) target = $region125
    $region124: #{convnext3d_forward.1} parent=1 // pred_region
      _
    $region125: #{convnext3d_forward.1} parent=1 // pred_fallthru
      _
    // Predicated region
    $region126: #{convnext3d_forward.1} parent=1 // pred_check
      _
    $region127: #{convnext3d_forward.1} parent=1 // pred_check_branch
      %155 = sbr.rel (0) target = $region129
    $region128: #{convnext3d_forward.1} parent=1 // pred_region
      _
    $region129: #{convnext3d_forward.1} parent=1 // pred_fallthru
      _
    // Predicated region
    $region130: #{convnext3d_forward.1} parent=1 // pred_check
      _
    $region131: #{convnext3d_forward.1} parent=1 // pred_check_branch
      %157 = sbr.rel (0) target = $region133
    $region132: #{convnext3d_forward.1} parent=1 // pred_region
      _
    $region133: #{convnext3d_forward.1} parent=1 // pred_fallthru
      _
    // Predicated region
    $region134: #{convnext3d_forward.1} parent=1 // pred_check
      _
    $region135: #{convnext3d_forward.1} parent=1 // pred_check_branch
      %159 = sbr.rel (0) target = $region137
    $region136: #{convnext3d_forward.1} parent=1 // pred_region
      _
    $region137: #{convnext3d_forward.1} parent=1 // pred_fallthru
      _
    // Predicated region
    $region138: #{convnext3d_forward.1} parent=1 // pred_check
      _
    $region139: #{convnext3d_forward.1} parent=1 // pred_check_branch
      %161 = sbr.rel (0) target = $region141
    $region140: #{convnext3d_forward.1} parent=1 // pred_region
      _
    $region141: #{convnext3d_forward.1} parent=1 // pred_fallthru
      _
    // Predicated region
    $region142: #{convnext3d_forward.1} parent=1 // pred_check
      _
    $region143: #{convnext3d_forward.1} parent=1 // pred_check_branch
      %163 = sbr.rel (0) target = $region145
    $region144: #{convnext3d_forward.1} parent=1 // pred_region
      _
    $region145: #{convnext3d_forward.1} parent=1 // pred_fallthru
      _
    // Predicated region
    $region146: #{convnext3d_forward.1} parent=1 // pred_check
      _
    $region147: #{convnext3d_forward.1} parent=1 // pred_check_branch
      %165 = sbr.rel (0) target = $region149
    $region148: #{convnext3d_forward.1} parent=1 // pred_region
      _
    $region149: #{convnext3d_forward.1} parent=1 // pred_fallthru
      _
    // Predicated region
    $region150: #{convnext3d_forward.1} parent=1 // pred_check
      _
    $region151: #{convnext3d_forward.1} parent=1 // pred_check_branch
      %167 = sbr.rel (0) target = $region153
    $region152: #{convnext3d_forward.1} parent=1 // pred_region
      _
    $region153: #{convnext3d_forward.1} parent=1 // pred_fallthru
      _
    // Predicated region
    $region154: #{convnext3d_forward.1} parent=1 // pred_check
      _
    $region155: #{convnext3d_forward.1} parent=1 // pred_check_branch
      %169 = sbr.rel (0) target = $region157
    $region156: #{convnext3d_forward.1} parent=1 // pred_region
      _
    $region157: #{convnext3d_forward.1} parent=1 // pred_fallthru
      _
    // Predicated region
    $region158: #{convnext3d_forward.1} parent=1 // pred_check
      _
    $region159: #{convnext3d_forward.1} parent=1 // pred_check_branch
      %171 = sbr.rel (0) target = $region161
    $region160: #{convnext3d_forward.1} parent=1 // pred_region
      _
    $region161: #{convnext3d_forward.1} parent=1 // pred_fallthru
      _
    // Predicated region
    $region162: #{convnext3d_forward.1} parent=1 // pred_check
      _
    $region163: #{convnext3d_forward.1} parent=1 // pred_check_branch
      %173 = sbr.rel (0) target = $region165
    $region164: #{convnext3d_forward.1} parent=1 // pred_region
      _
    $region165: #{convnext3d_forward.1} parent=1 // pred_fallthru
      _
    // Predicated region
    $region166: #{convnext3d_forward.1} parent=1 // pred_check
      _
    $region167: #{convnext3d_forward.1} parent=1 // pred_check_branch
      %175 = sbr.rel (0) target = $region169
    $region168: #{convnext3d_forward.1} parent=1 // pred_region
      %s177 = ssub.s32 16, 16
      %178 = vsyncadd [#allocation3], %s177
      %s180 = sshll.u32 [#allocation2], 4
      %s181 = int_to_ptr.vmem [resolvable:$true] %s180
      %183 = dma.hbm_to_vmem [thread:$0]  %s83, 16, %s181, [#allocation3]
    $region169: #{convnext3d_forward.1} parent=1 // pred_fallthru
      _
    // Predicated region
    $region170: #{convnext3d_forward.1} parent=1 // pred_check
      _
    $region171: #{convnext3d_forward.1} parent=1 // pred_check_branch
      %185 = sbr.rel (0) target = $region173
    $region172: #{convnext3d_forward.1} parent=1 // pred_region
      %186 = dma.done [#allocation3], 16
    $region173: #{convnext3d_forward.1} parent=1 // pred_fallthru
      _
    %v188 = vld [vmem:[%s1] sm:$0xff]
    %v189 = vld [vmem:[%s1 + $0x8] sm:$0xff]
    %v190 = vld [vmem:[%s1 + $0x10] sm:$0xff]
    %v191 = vld [vmem:[%s1 + $0x18] sm:$0xff]
    %v192 = vld [vmem:[%s1 + $0x20] sm:$0xff]
    %v193 = vld [vmem:[%s1 + $0x28] sm:$0xff]
    %v194 = vld [vmem:[%s1 + $0x30] sm:$0xff]
    %v195 = vld [vmem:[%s1 + $0x38] sm:$0xff]
    %v196 = vld [vmem:[%s1 + $0x40] sm:$0xff]
    %v197 = vld [vmem:[%s1 + $0x48] sm:$0xff]
    %v198 = vld [vmem:[%s1 + $0x50] sm:$0xff]
    %v199 = vld [vmem:[%s1 + $0x58] sm:$0xff]
    %v200 = vld [vmem:[%s1 + $0x60] sm:$0xff]
    %v201 = vld [vmem:[%s1 + $0x68] sm:$0xff]
    %v202 = vld [vmem:[%s1 + $0x70] sm:$0xff]
    %v203 = vld [vmem:[%s1 + $0x78] sm:$0xff]
    %v204 = vld [vmem:[%s1 + $0x80] sm:$0xff]
    %v205 = vld [vmem:[%s1 + $0x88] sm:$0xff]
    %v206 = vld [vmem:[%s1 + $0x90] sm:$0xff]
    %v207 = vld [vmem:[%s1 + $0x98] sm:$0xff]
    %v208 = vpack.c.bf16 %v189, %v188
    %v209 = vpack.c.bf16 %v191, %v190
    %v210 = vpack.c.bf16 %v193, %v192
    %v211 = vpack.c.bf16 %v195, %v194
    %v212 = vpack.c.bf16 %v197, %v196
    %v213 = vpack.c.bf16 %v199, %v198
    %v214 = vpack.c.bf16 %v201, %v200
    %v215 = vpack.c.bf16 %v203, %v202
    %v216 = vpack.c.bf16 %v205, %v204
    %v217 = vpack.c.bf16 %v207, %v206
    %v218 = vld [vmem:[%s3] sm:$0xf]
    %v219 = vld [vmem:[%s3 + $0x4] sm:$0xf]
    %v220 = vld [vmem:[%s3 + $0x8] sm:$0xf]
    %v221 = vld [vmem:[%s3 + $0xc] sm:$0xf]
    %v222 = vld [vmem:[%s3 + $0x10] sm:$0xf]
    %v223 = vld [vmem:[%s3 + $0x14] sm:$0xf]
    %v224 = vld [vmem:[%s5] sm:$0x1]
    %v226 = vlaneseq
    %v227 = vshrl.u32 %v226, 7
    %v228 = vsub.s32 0, %v227
    %v229 = vrot.slane %v224, %v228
    %v237 = vunpack.c.l.b16 %v218
    %v238 = vunpack.c.l.b16 %v219
    %v239 = vunpack.c.l.b16 %v220
    %v240 = vunpack.c.l.b16 %v221
    %v241 = vunpack.c.l.b16 %v222
    %v242 = vunpack.c.l.b16 %v223
    %v243 = vpack.c.b16 %v238, %v237
    %v244 = vpack.c.b16 %v240, %v239
    %v245 = vpack.c.b16 %v242, %v241
    %vm249 = vcmask 392192
    %v251 = vsel %vm249, %v208, 0
    %v254 = vsel %vm249, %v209, 0
    %v257 = vsel %vm249, %v210, 0
    %v260 = vsel %vm249, %v211, 0
    %v263 = vsel %vm249, %v212, 0
    %v266 = vsel %vm249, %v213, 0
    %v269 = vsel %vm249, %v214, 0
    %v272 = vsel %vm249, %v215, 0
    %v275 = vsel %vm249, %v216, 0
    %v278 = vsel %vm249, %v217, 0
    %280 = vmatprep.subr.bf16.mxu0 0
    %281 = vmatpush1.bf16.msra.mxu0 %v243
    %282 = vmatprep.subr.bf16.mxu0 0
    %283 = vmatpush1.bf16.msra.mxu0 %v244
    %284 = vmatprep.subr.bf16.mxu0 0
    %285 = vmatpush1.bf16.msra.mxu0 %v245
    %286 = vmatprep.subr.bf16.mxu0 0
    %287 = vmatpush1.bf16.msra.mxu0 0
    %288 = vmatprep.subr.bf16.mxu0 0
    %289 = vmatpush1.bf16.msra.mxu0 0
    %290 = vmatprep.subr.bf16.mxu0 0
    %291 = vmatpush1.bf16.msra.mxu0 0
    %292 = vmatprep.subr.bf16.mxu0 0
    %293 = vmatpush1.bf16.msra.mxu0 0
    %294 = vmatprep.subr.bf16.mxu0 0
    %295 = vmatpush1.bf16.msra.mxu0 0
    %296 = vmatprep.subr.bf16.mxu0 0
    %297 = vmatpush1.bf16.msra.mxu0 0
    %298 = vmatprep.subr.bf16.mxu0 0
    %299 = vmatpush1.bf16.msra.mxu0 0
    %300 = vmatprep.subr.bf16.mxu0 0
    %301 = vmatpush1.bf16.msra.mxu0 0
    %302 = vmatprep.subr.bf16.mxu0 0
    %303 = vmatpush1.bf16.msra.mxu0 0
    %304 = vmatprep.subr.bf16.mxu0 0
    %305 = vmatpush1.bf16.msra.mxu0 0
    %306 = vmatprep.subr.bf16.mxu0 0
    %307 = vmatpush1.bf16.msra.mxu0 0
    %308 = vmatprep.subr.bf16.mxu0 0
    %309 = vmatpush1.bf16.msra.mxu0 0
    %310 = vmatprep.subr.bf16.mxu0 0
    %311 = vmatpush1.bf16.msra.mxu0 0
    %312 = vmatprep.mubr.bf16.mxu0 0
    %313 = vmatmul.mubr.bf16.gmra.mrb[0].mxu0 %v251
    %v314 = vpop.f32.mrb[0].mxu0
    %v315 = vadd.f32 %v229, %v314
    %v316 = vpop.f32.mrb[0].mxu0
    %v317 = vpop.f32.mrb[0].mxu0
    %v318 = vadd.f32 %v229, %v317
    %v319 = vpop.f32.mrb[0].mxu0
    %320 = vmatprep.mubr.bf16.mxu0 0
    %321 = vmatmul.mubr.bf16.gmra.mrb[0].mxu0 %v254
    %v322 = vpop.f32.mrb[0].mxu0
    %v323 = vadd.f32 %v229, %v322
    %v324 = vpop.f32.mrb[0].mxu0
    %v325 = vpop.f32.mrb[0].mxu0
    %v326 = vadd.f32 %v229, %v325
    %v327 = vpop.f32.mrb[0].mxu0
    %328 = vmatprep.mubr.bf16.mxu0 0
    %329 = vmatmul.mubr.bf16.gmra.mrb[0].mxu0 %v257
    %v330 = vpop.f32.mrb[0].mxu0
    %v331 = vadd.f32 %v229, %v330
    %v332 = vpop.f32.mrb[0].mxu0
    %v333 = vpop.f32.mrb[0].mxu0
    %v334 = vadd.f32 %v229, %v333
    %v335 = vpop.f32.mrb[0].mxu0
    %336 = vmatprep.mubr.bf16.mxu0 0
    %337 = vmatmul.mubr.bf16.gmra.mrb[0].mxu0 %v260
    %v338 = vpop.f32.mrb[0].mxu0
    %v339 = vadd.f32 %v229, %v338
    %v340 = vpop.f32.mrb[0].mxu0
    %v341 = vpop.f32.mrb[0].mxu0
    %v342 = vadd.f32 %v229, %v341
    %v343 = vpop.f32.mrb[0].mxu0
    %344 = vmatprep.mubr.bf16.mxu0 0
    %345 = vmatmul.mubr.bf16.gmra.mrb[0].mxu0 %v263
    %v346 = vpop.f32.mrb[0].mxu0
    %v347 = vadd.f32 %v229, %v346
    %v348 = vpop.f32.mrb[0].mxu0
    %v349 = vpop.f32.mrb[0].mxu0
    %v350 = vadd.f32 %v229, %v349
    %v351 = vpop.f32.mrb[0].mxu0
    %352 = vmatprep.mubr.bf16.mxu0 0
    %353 = vmatmul.mubr.bf16.gmra.mrb[0].mxu0 %v266
    %v354 = vpop.f32.mrb[0].mxu0
    %v355 = vadd.f32 %v229, %v354
    %v356 = vpop.f32.mrb[0].mxu0
    %v357 = vpop.f32.mrb[0].mxu0
    %v358 = vadd.f32 %v229, %v357
    %v359 = vpop.f32.mrb[0].mxu0
    %360 = vmatprep.mubr.bf16.mxu0 0
    %361 = vmatmul.mubr.bf16.gmra.mrb[0].mxu0 %v269
    %v362 = vpop.f32.mrb[0].mxu0
    %v363 = vadd.f32 %v229, %v362
    %v364 = vpop.f32.mrb[0].mxu0
    %v365 = vpop.f32.mrb[0].mxu0
    %v366 = vadd.f32 %v229, %v365
    %v367 = vpop.f32.mrb[0].mxu0
    %368 = vmatprep.mubr.bf16.mxu0 0
    %369 = vmatmul.mubr.bf16.gmra.mrb[0].mxu0 %v272
    %v370 = vpop.f32.mrb[0].mxu0
    %v371 = vadd.f32 %v229, %v370
    %v372 = vpop.f32.mrb[0].mxu0
    %v373 = vpop.f32.mrb[0].mxu0
    %v374 = vadd.f32 %v229, %v373
    %v375 = vpop.f32.mrb[0].mxu0
    %376 = vmatprep.mubr.bf16.mxu0 0
    %377 = vmatmul.mubr.bf16.gmra.mrb[0].mxu0 %v275
    %v378 = vpop.f32.mrb[0].mxu0
    %v379 = vadd.f32 %v229, %v378
    %v380 = vpop.f32.mrb[0].mxu0
    %v381 = vpop.f32.mrb[0].mxu0
    %v382 = vadd.f32 %v229, %v381
    %v383 = vpop.f32.mrb[0].mxu0
    %384 = vmatprep.mubr.bf16.mxu0 0
    %385 = vmatmul.mubr.bf16.gmra.mrb[0].mxu0 %v278
    %v386 = vpop.f32.mrb[0].mxu0
    %v387 = vadd.f32 %v229, %v386
    %v388 = vpop.f32.mrb[0].mxu0
    %v389 = vpop.f32.mrb[0].mxu0
    %v390 = vadd.f32 %v229, %v389
    %v391 = vpop.f32.mrb[0].mxu0
    %392 = vdwg.mxu0
    %v393 = vmul.f32 %v315, 0.5
    %v394 = vmul.f32 %v318, 0.5
    %v395 = vmul.f32 %v323, 0.5
    %v396 = vmul.f32 %v326, 0.5
    %v397 = vmul.f32 %v331, 0.5
    %v398 = vmul.f32 %v334, 0.5
    %v399 = vmul.f32 %v339, 0.5
    %v400 = vmul.f32 %v342, 0.5
    %v401 = vmul.f32 %v347, 0.5
    %v402 = vmul.f32 %v350, 0.5
    %v403 = vmul.f32 %v355, 0.5
    %v404 = vmul.f32 %v358, 0.5
    %v405 = vmul.f32 %v363, 0.5
    %v406 = vmul.f32 %v366, 0.5
    %v407 = vmul.f32 %v371, 0.5
    %v408 = vmul.f32 %v374, 0.5
    %v409 = vmul.f32 %v379, 0.5
    %v410 = vmul.f32 %v382, 0.5
    %v411 = vmul.f32 %v387, 0.5
    %v412 = vmul.f32 %v390, 0.5
    %v413 = vmul.f32 %v315, 0.044715
    %v414 = vmul.f32 %v318, 0.044715
    %v415 = vmul.f32 %v323, 0.044715
    %v416 = vmul.f32 %v326, 0.044715
    %v417 = vmul.f32 %v331, 0.044715
    %v418 = vmul.f32 %v334, 0.044715
    %v419 = vmul.f32 %v339, 0.044715
    %v420 = vmul.f32 %v342, 0.044715
    %v421 = vmul.f32 %v347, 0.044715
    %v422 = vmul.f32 %v350, 0.044715
    %v423 = vmul.f32 %v355, 0.044715
    %v424 = vmul.f32 %v358, 0.044715
    %v425 = vmul.f32 %v363, 0.044715
    %v426 = vmul.f32 %v366, 0.044715
    %v427 = vmul.f32 %v371, 0.044715
    %v428 = vmul.f32 %v374, 0.044715
    %v429 = vmul.f32 %v379, 0.044715
    %v430 = vmul.f32 %v382, 0.044715
    %v431 = vmul.f32 %v387, 0.044715
    %v432 = vmul.f32 %v390, 0.044715
    %v433 = vmul.f32 %v413, %v315
    %v434 = vmul.f32 %v414, %v318
    %v435 = vmul.f32 %v415, %v323
    %v436 = vmul.f32 %v416, %v326
    %v437 = vmul.f32 %v417, %v331
    %v438 = vmul.f32 %v418, %v334
    %v439 = vmul.f32 %v419, %v339
    %v440 = vmul.f32 %v420, %v342
    %v441 = vmul.f32 %v421, %v347
    %v442 = vmul.f32 %v422, %v350
    %v443 = vmul.f32 %v423, %v355
    %v444 = vmul.f32 %v424, %v358
    %v445 = vmul.f32 %v425, %v363
    %v446 = vmul.f32 %v426, %v366
    %v447 = vmul.f32 %v427, %v371
    %v448 = vmul.f32 %v428, %v374
    %v449 = vmul.f32 %v429, %v379
    %v450 = vmul.f32 %v430, %v382
    %v451 = vmul.f32 %v431, %v387
    %v452 = vmul.f32 %v432, %v390
    %v453 = vmul.f32 %v433, %v315
    %v454 = vmul.f32 %v434, %v318
    %v455 = vmul.f32 %v435, %v323
    %v456 = vmul.f32 %v436, %v326
    %v457 = vmul.f32 %v437, %v331
    %v458 = vmul.f32 %v438, %v334
    %v459 = vmul.f32 %v439, %v339
    %v460 = vmul.f32 %v440, %v342
    %v461 = vmul.f32 %v441, %v347
    %v462 = vmul.f32 %v442, %v350
    %v463 = vmul.f32 %v443, %v355
    %v464 = vmul.f32 %v444, %v358
    %v465 = vmul.f32 %v445, %v363
    %v466 = vmul.f32 %v446, %v366
    %v467 = vmul.f32 %v447, %v371
    %v468 = vmul.f32 %v448, %v374
    %v469 = vmul.f32 %v449, %v379
    %v470 = vmul.f32 %v450, %v382
    %v471 = vmul.f32 %v451, %v387
    %v472 = vmul.f32 %v452, %v390
    %v473 = vadd.f32 %v315, %v453
    %v474 = vadd.f32 %v318, %v454
    %v475 = vadd.f32 %v323, %v455
    %v476 = vadd.f32 %v326, %v456
    %v477 = vadd.f32 %v331, %v457
    %v478 = vadd.f32 %v334, %v458
    %v479 = vadd.f32 %v339, %v459
    %v480 = vadd.f32 %v342, %v460
    %v481 = vadd.f32 %v347, %v461
    %v482 = vadd.f32 %v350, %v462
    %v483 = vadd.f32 %v355, %v463
    %v484 = vadd.f32 %v358, %v464
    %v485 = vadd.f32 %v363, %v465
    %v486 = vadd.f32 %v366, %v466
    %v487 = vadd.f32 %v371, %v467
    %v488 = vadd.f32 %v374, %v468
    %v489 = vadd.f32 %v379, %v469
    %v490 = vadd.f32 %v382, %v470
    %v491 = vadd.f32 %v387, %v471
    %v492 = vadd.f32 %v390, %v472
    %v493 = vmul.f32 %v473, 0.7978846
    %v494 = vmul.f32 %v474, 0.7978846
    %v495 = vmul.f32 %v475, 0.7978846
    %v496 = vmul.f32 %v476, 0.7978846
    %v497 = vmul.f32 %v477, 0.7978846
    %v498 = vmul.f32 %v478, 0.7978846
    %v499 = vmul.f32 %v479, 0.7978846
    %v500 = vmul.f32 %v480, 0.7978846
    %v501 = vmul.f32 %v481, 0.7978846
    %v502 = vmul.f32 %v482, 0.7978846
    %v503 = vmul.f32 %v483, 0.7978846
    %v504 = vmul.f32 %v484, 0.7978846
    %v505 = vmul.f32 %v485, 0.7978846
    %v506 = vmul.f32 %v486, 0.7978846
    %v507 = vmul.f32 %v487, 0.7978846
    %v508 = vmul.f32 %v488, 0.7978846
    %v509 = vmul.f32 %v489, 0.7978846
    %v510 = vmul.f32 %v490, 0.7978846
    %v511 = vmul.f32 %v491, 0.7978846
    %v512 = vmul.f32 %v492, 0.7978846
    %v513 = vtanh.pop %v493
    %v514 = vtanh.pop %v494
    %v515 = vtanh.pop %v495
    %v516 = vtanh.pop %v496
    %v517 = vtanh.pop %v497
    %v518 = vtanh.pop %v498
    %v519 = vtanh.pop %v499
    %v520 = vtanh.pop %v500
    %v521 = vtanh.pop %v501
    %v522 = vtanh.pop %v502
    %v523 = vtanh.pop %v503
    %v524 = vtanh.pop %v504
    %v525 = vtanh.pop %v505
    %v526 = vtanh.pop %v506
    %v527 = vtanh.pop %v507
    %v528 = vtanh.pop %v508
    %v529 = vtanh.pop %v509
    %v530 = vtanh.pop %v510
    %v531 = vtanh.pop %v511
    %v532 = vtanh.pop %v512
    %v533 = vadd.f32 %v513, 1.0
    %v534 = vadd.f32 %v514, 1.0
    %v535 = vadd.f32 %v515, 1.0
    %v536 = vadd.f32 %v516, 1.0
    %v537 = vadd.f32 %v517, 1.0
    %v538 = vadd.f32 %v518, 1.0
    %v539 = vadd.f32 %v519, 1.0
    %v540 = vadd.f32 %v520, 1.0
    %v541 = vadd.f32 %v521, 1.0
    %v542 = vadd.f32 %v522, 1.0
    %v543 = vadd.f32 %v523, 1.0
    %v544 = vadd.f32 %v524, 1.0
    %v545 = vadd.f32 %v525, 1.0
    %v546 = vadd.f32 %v526, 1.0
    %v547 = vadd.f32 %v527, 1.0
    %v548 = vadd.f32 %v528, 1.0
    %v549 = vadd.f32 %v529, 1.0
    %v550 = vadd.f32 %v530, 1.0
    %v551 = vadd.f32 %v531, 1.0
    %v552 = vadd.f32 %v532, 1.0
    %v553 = vmul.f32 %v393, %v533
    %v554 = vmul.f32 %v394, %v534
    %v555 = vmul.f32 %v395, %v535
    %v556 = vmul.f32 %v396, %v536
    %v557 = vmul.f32 %v397, %v537
    %v558 = vmul.f32 %v398, %v538
    %v559 = vmul.f32 %v399, %v539
    %v560 = vmul.f32 %v400, %v540
    %v561 = vmul.f32 %v401, %v541
    %v562 = vmul.f32 %v402, %v542
    %v563 = vmul.f32 %v403, %v543
    %v564 = vmul.f32 %v404, %v544
    %v565 = vmul.f32 %v405, %v545
    %v566 = vmul.f32 %v406, %v546
    %v567 = vmul.f32 %v407, %v547
    %v568 = vmul.f32 %v408, %v548
    %v569 = vmul.f32 %v409, %v549
    %v570 = vmul.f32 %v410, %v550
    %v571 = vmul.f32 %v411, %v551
    %v572 = vmul.f32 %v412, %v552
    %v573 = vld [vmem:[%s7] sm:$0xff]
    %v574 = vld [vmem:[%s7 + $0x8] sm:$0xff]
    %v575 = vld [vmem:[%s7 + $0x10] sm:$0xff]
    %v576 = vld [vmem:[%s7 + $0x18] sm:$0xff]
    %v577 = vld [vmem:[%s7 + $0x20] sm:$0xff]
    %v578 = vld [vmem:[%s7 + $0x28] sm:$0xff]
    %v579 = vld [vmem:[%s7 + $0x30] sm:$0xff]
    %v580 = vld [vmem:[%s7 + $0x38] sm:$0xff]
    %v581 = vld [vmem:[%s7 + $0x40] sm:$0xff]
    %v582 = vld [vmem:[%s7 + $0x48] sm:$0xff]
    %v583 = vld [vmem:[%s7 + $0x50] sm:$0xff]
    %v584 = vld [vmem:[%s7 + $0x58] sm:$0xff]
    %v585 = vld [vmem:[%s7 + $0x60] sm:$0xff]
    %v586 = vld [vmem:[%s7 + $0x68] sm:$0xff]
    %v587 = vld [vmem:[%s7 + $0x70] sm:$0xff]
    %v588 = vld [vmem:[%s7 + $0x78] sm:$0xff]
    %v589 = vld [vmem:[%s7 + $0x80] sm:$0xff]
    %v590 = vld [vmem:[%s7 + $0x88] sm:$0xff]
    %v591 = vld [vmem:[%s7 + $0x90] sm:$0xff]
    %v592 = vld [vmem:[%s7 + $0x98] sm:$0xff]
    %vm596 = vcmask 1044480
    %v597 = vrot.slane %v570, 3
    %v598 = vrot.slane %v571, 3
    %v599 = vsel %vm596, %v597, %v598
    %v600 = vrot.slane %v572, 3
    %v601 = vsel %vm596, %v598, %v600
    %v622 = vrot.slane %v553, 3
    %v623 = vrot.slane %v554, 3
    %v624 = vsel %vm596, %v622, %v623
    %v625 = vrot.slane %v555, 3
    %v626 = vsel %vm596, %v623, %v625
    %v627 = vrot.slane %v556, 3
    %v628 = vsel %vm596, %v625, %v627
    %v629 = vrot.slane %v557, 3
    %v630 = vsel %vm596, %v627, %v629
    %v631 = vrot.slane %v558, 3
    %v632 = vsel %vm596, %v629, %v631
    %v633 = vrot.slane %v559, 3
    %v634 = vsel %vm596, %v631, %v633
    %v635 = vrot.slane %v560, 3
    %v636 = vsel %vm596, %v633, %v635
    %v637 = vrot.slane %v561, 3
    %v638 = vsel %vm596, %v635, %v637
    %v639 = vrot.slane %v562, 3
    %v640 = vsel %vm596, %v637, %v639
    %v641 = vrot.slane %v563, 3
    %v642 = vsel %vm596, %v639, %v641
    %v643 = vrot.slane %v564, 3
    %v644 = vsel %vm596, %v641, %v643
    %v645 = vrot.slane %v565, 3
    %v646 = vsel %vm596, %v643, %v645
    %v647 = vrot.slane %v566, 3
    %v648 = vsel %vm596, %v645, %v647
    %v649 = vrot.slane %v567, 3
    %v650 = vsel %vm596, %v647, %v649
    %v651 = vrot.slane %v568, 3
    %v652 = vsel %vm596, %v649, %v651
    %v653 = vrot.slane %v569, 3
    %v654 = vsel %vm596, %v651, %v653
    %v655 = vsel %vm596, %v653, %v597
    %v674 = vsel %vm596, %v600, %v622
    %v675 = vld [vmem:[%s9] sm:$0x1]
    %v677 = vlaneseq
    %v678 = vshrl.u32 %v677, 7
    %v679 = vsub.s32 0, %v678
    %v680 = vrot.slane %v675, %v679
    %v682 = vmul.f32 %v599, %v680
    %v683 = vmul.f32 %v601, %v680
    %v684 = vmul.f32 %v674, %v680
    %v685 = vmul.f32 %v624, %v680
    %v686 = vmul.f32 %v626, %v680
    %v687 = vmul.f32 %v628, %v680
    %v688 = vmul.f32 %v630, %v680
    %v689 = vmul.f32 %v632, %v680
    %v690 = vmul.f32 %v634, %v680
    %v691 = vmul.f32 %v636, %v680
    %v692 = vmul.f32 %v638, %v680
    %v693 = vmul.f32 %v640, %v680
    %v694 = vmul.f32 %v642, %v680
    %v695 = vmul.f32 %v644, %v680
    %v696 = vmul.f32 %v646, %v680
    %v697 = vmul.f32 %v648, %v680
    %v698 = vmul.f32 %v650, %v680
    %v699 = vmul.f32 %v652, %v680
    %v700 = vmul.f32 %v654, %v680
    %v701 = vmul.f32 %v655, %v680
    %703 = vset.pattern.permute.xlu0 0
    %704 = vperm.xlu0 %703, %v573
    %v705 = vpop.permute.xlu0 %704
    %708 = vset.pattern.permute.xlu0 0
    %709 = vperm.xlu0 %708, %v574
    %v710 = vpop.permute.xlu0 %709
    %713 = vset.pattern.permute.xlu0 0
    %714 = vperm.xlu0 %713, %v575
    %v715 = vpop.permute.xlu0 %714
    %718 = vset.pattern.permute.xlu0 0
    %719 = vperm.xlu0 %718, %v576
    %v720 = vpop.permute.xlu0 %719
    %723 = vset.pattern.permute.xlu0 0
    %724 = vperm.xlu0 %723, %v577
    %v725 = vpop.permute.xlu0 %724
    %728 = vset.pattern.permute.xlu0 0
    %729 = vperm.xlu0 %728, %v578
    %v730 = vpop.permute.xlu0 %729
    %733 = vset.pattern.permute.xlu0 0
    %734 = vperm.xlu0 %733, %v579
    %v735 = vpop.permute.xlu0 %734
    %738 = vset.pattern.permute.xlu0 0
    %739 = vperm.xlu0 %738, %v580
    %v740 = vpop.permute.xlu0 %739
    %743 = vset.pattern.permute.xlu0 0
    %744 = vperm.xlu0 %743, %v581
    %v745 = vpop.permute.xlu0 %744
    %748 = vset.pattern.permute.xlu0 0
    %749 = vperm.xlu0 %748, %v582
    %v750 = vpop.permute.xlu0 %749
    %753 = vset.pattern.permute.xlu0 0
    %754 = vperm.xlu0 %753, %v583
    %v755 = vpop.permute.xlu0 %754
    %758 = vset.pattern.permute.xlu0 0
    %759 = vperm.xlu0 %758, %v584
    %v760 = vpop.permute.xlu0 %759
    %763 = vset.pattern.permute.xlu0 0
    %764 = vperm.xlu0 %763, %v585
    %v765 = vpop.permute.xlu0 %764
    %768 = vset.pattern.permute.xlu0 0
    %769 = vperm.xlu0 %768, %v586
    %v770 = vpop.permute.xlu0 %769
    %773 = vset.pattern.permute.xlu0 0
    %774 = vperm.xlu0 %773, %v587
    %v775 = vpop.permute.xlu0 %774
    %778 = vset.pattern.permute.xlu0 0
    %779 = vperm.xlu0 %778, %v588
    %v780 = vpop.permute.xlu0 %779
    %783 = vset.pattern.permute.xlu0 0
    %784 = vperm.xlu0 %783, %v589
    %v785 = vpop.permute.xlu0 %784
    %788 = vset.pattern.permute.xlu0 0
    %789 = vperm.xlu0 %788, %v590
    %v790 = vpop.permute.xlu0 %789
    %793 = vset.pattern.permute.xlu0 0
    %794 = vperm.xlu0 %793, %v591
    %v795 = vpop.permute.xlu0 %794
    %798 = vset.pattern.permute.xlu0 0
    %799 = vperm.xlu0 %798, %v592
    %v800 = vpop.permute.xlu0 %799
    %v802 = vmul.f32 %v682, %v705
    %v803 = vmul.f32 %v683, %v710
    %v804 = vmul.f32 %v684, %v715
    %v805 = vmul.f32 %v685, %v720
    %v806 = vmul.f32 %v686, %v725
    %v807 = vmul.f32 %v687, %v730
    %v808 = vmul.f32 %v688, %v735
    %v809 = vmul.f32 %v689, %v740
    %v810 = vmul.f32 %v690, %v745
    %v811 = vmul.f32 %v691, %v750
    %v812 = vmul.f32 %v692, %v755
    %v813 = vmul.f32 %v693, %v760
    %v814 = vmul.f32 %v694, %v765
    %v815 = vmul.f32 %v695, %v770
    %v816 = vmul.f32 %v696, %v775
    %v817 = vmul.f32 %v697, %v780
    %v818 = vmul.f32 %v698, %v785
    %v819 = vmul.f32 %v699, %v790
    %v820 = vmul.f32 %v700, %v795
    %v821 = vmul.f32 %v701, %v800
    %vm822 = vcmask 1043456
    %v823 = vrot.slane %v570, 4
    %v824 = vrot.slane %v571, 4
    %v825 = vsel %vm822, %v823, %v824
    %v826 = vrot.slane %v572, 4
    %v827 = vsel %vm822, %v824, %v826
    %v831 = vrot.slane %v553, 4
    %v832 = vrot.slane %v554, 4
    %v833 = vsel %vm822, %v831, %v832
    %v834 = vrot.slane %v555, 4
    %v835 = vsel %vm822, %v832, %v834
    %v836 = vrot.slane %v556, 4
    %v837 = vsel %vm822, %v834, %v836
    %v838 = vrot.slane %v557, 4
    %v839 = vsel %vm822, %v836, %v838
    %v840 = vrot.slane %v558, 4
    %v841 = vsel %vm822, %v838, %v840
    %v842 = vrot.slane %v559, 4
    %v843 = vsel %vm822, %v840, %v842
    %v844 = vrot.slane %v560, 4
    %v845 = vsel %vm822, %v842, %v844
    %v846 = vrot.slane %v561, 4
    %v847 = vsel %vm822, %v844, %v846
    %v848 = vrot.slane %v562, 4
    %v849 = vsel %vm822, %v846, %v848
    %v850 = vrot.slane %v563, 4
    %v851 = vsel %vm822, %v848, %v850
    %v852 = vrot.slane %v564, 4
    %v853 = vsel %vm822, %v850, %v852
    %v854 = vrot.slane %v565, 4
    %v855 = vsel %vm822, %v852, %v854
    %v856 = vrot.slane %v566, 4
    %v857 = vsel %vm822, %v854, %v856
    %v858 = vrot.slane %v567, 4
    %v859 = vsel %vm822, %v856, %v858
    %v860 = vrot.slane %v568, 4
    %v861 = vsel %vm822, %v858, %v860
    %v862 = vrot.slane %v569, 4
    %v863 = vsel %vm822, %v860, %v862
    %v864 = vsel %vm822, %v862, %v823
    %v883 = vsel %vm822, %v826, %v831
    %s884 = scalar_lea.vmem %s9, 1
    %v885 = vld [vmem:[%s884] sm:$0x1]
    %v887 = vlaneseq
    %v888 = vshrl.u32 %v887, 7
    %v889 = vsub.s32 0, %v888
    %v890 = vrot.slane %v885, %v889
    %v892 = vmul.f32 %v825, %v890
    %v893 = vmul.f32 %v827, %v890
    %v894 = vmul.f32 %v883, %v890
    %v895 = vmul.f32 %v833, %v890
    %v896 = vmul.f32 %v835, %v890
    %v897 = vmul.f32 %v837, %v890
    %v898 = vmul.f32 %v839, %v890
    %v899 = vmul.f32 %v841, %v890
    %v900 = vmul.f32 %v843, %v890
    %v901 = vmul.f32 %v845, %v890
    %v902 = vmul.f32 %v847, %v890
    %v903 = vmul.f32 %v849, %v890
    %v904 = vmul.f32 %v851, %v890
    %v905 = vmul.f32 %v853, %v890
    %v906 = vmul.f32 %v855, %v890
    %v907 = vmul.f32 %v857, %v890
    %v908 = vmul.f32 %v859, %v890
    %v909 = vmul.f32 %v861, %v890
    %v910 = vmul.f32 %v863, %v890
    %v911 = vmul.f32 %v864, %v890
    %912 = vset.pattern.permute.xlu0 1
    %913 = vperm.xlu0 %912, %v573
    %v914 = vpop.permute.xlu0 %913
    %916 = vset.pattern.permute.xlu0 1
    %917 = vperm.xlu0 %916, %v574
    %v918 = vpop.permute.xlu0 %917
    %920 = vset.pattern.permute.xlu0 1
    %921 = vperm.xlu0 %920, %v575
    %v922 = vpop.permute.xlu0 %921
    %924 = vset.pattern.permute.xlu0 1
    %925 = vperm.xlu0 %924, %v576
    %v926 = vpop.permute.xlu0 %925
    %928 = vset.pattern.permute.xlu0 1
    %929 = vperm.xlu0 %928, %v577
    %v930 = vpop.permute.xlu0 %929
    %932 = vset.pattern.permute.xlu0 1
    %933 = vperm.xlu0 %932, %v578
    %v934 = vpop.permute.xlu0 %933
    %936 = vset.pattern.permute.xlu0 1
    %937 = vperm.xlu0 %936, %v579
    %v938 = vpop.permute.xlu0 %937
    %940 = vset.pattern.permute.xlu0 1
    %941 = vperm.xlu0 %940, %v580
    %v942 = vpop.permute.xlu0 %941
    %944 = vset.pattern.permute.xlu0 1
    %945 = vperm.xlu0 %944, %v581
    %v946 = vpop.permute.xlu0 %945
    %948 = vset.pattern.permute.xlu0 1
    %949 = vperm.xlu0 %948, %v582
    %v950 = vpop.permute.xlu0 %949
    %952 = vset.pattern.permute.xlu0 1
    %953 = vperm.xlu0 %952, %v583
    %v954 = vpop.permute.xlu0 %953
    %956 = vset.pattern.permute.xlu0 1
    %957 = vperm.xlu0 %956, %v584
    %v958 = vpop.permute.xlu0 %957
    %960 = vset.pattern.permute.xlu0 1
    %961 = vperm.xlu0 %960, %v585
    %v962 = vpop.permute.xlu0 %961
    %964 = vset.pattern.permute.xlu0 1
    %965 = vperm.xlu0 %964, %v586
    %v966 = vpop.permute.xlu0 %965
    %968 = vset.pattern.permute.xlu0 1
    %969 = vperm.xlu0 %968, %v587
    %v970 = vpop.permute.xlu0 %969
    %972 = vset.pattern.permute.xlu0 1
    %973 = vperm.xlu0 %972, %v588
    %v974 = vpop.permute.xlu0 %973
    %976 = vset.pattern.permute.xlu0 1
    %977 = vperm.xlu0 %976, %v589
    %v978 = vpop.permute.xlu0 %977
    %980 = vset.pattern.permute.xlu0 1
    %981 = vperm.xlu0 %980, %v590
    %v982 = vpop.permute.xlu0 %981
    %984 = vset.pattern.permute.xlu0 1
    %985 = vperm.xlu0 %984, %v591
    %v986 = vpop.permute.xlu0 %985
    %988 = vset.pattern.permute.xlu0 1
    %989 = vperm.xlu0 %988, %v592
    %v990 = vpop.permute.xlu0 %989
    %v992 = vmul.f32 %v892, %v914
    %v993 = vmul.f32 %v893, %v918
    %v994 = vmul.f32 %v894, %v922
    %v995 = vmul.f32 %v895, %v926
    %v996 = vmul.f32 %v896, %v930
    %v997 = vmul.f32 %v897, %v934
    %v998 = vmul.f32 %v898, %v938
    %v999 = vmul.f32 %v899, %v942
    %v1000 = vmul.f32 %v900, %v946
    %v1001 = vmul.f32 %v901, %v950
    %v1002 = vmul.f32 %v902, %v954
    %v1003 = vmul.f32 %v903, %v958
    %v1004 = vmul.f32 %v904, %v962
    %v1005 = vmul.f32 %v905, %v966
    %v1006 = vmul.f32 %v906, %v970
    %v1007 = vmul.f32 %v907, %v974
    %v1008 = vmul.f32 %v908, %v978
    %v1009 = vmul.f32 %v909, %v982
    %v1010 = vmul.f32 %v910, %v986
    %v1011 = vmul.f32 %v911, %v990
    %v1012 = vadd.f32 %v802, %v992
    %v1013 = vadd.f32 %v803, %v993
    %v1014 = vadd.f32 %v804, %v994
    %v1015 = vadd.f32 %v805, %v995
    %v1016 = vadd.f32 %v806, %v996
    %v1017 = vadd.f32 %v807, %v997
    %v1018 = vadd.f32 %v808, %v998
    %v1019 = vadd.f32 %v809, %v999
    %v1020 = vadd.f32 %v810, %v1000
    %v1021 = vadd.f32 %v811, %v1001
    %v1022 = vadd.f32 %v812, %v1002
    %v1023 = vadd.f32 %v813, %v1003
    %v1024 = vadd.f32 %v814, %v1004
    %v1025 = vadd.f32 %v815, %v1005
    %v1026 = vadd.f32 %v816, %v1006
    %v1027 = vadd.f32 %v817, %v1007
    %v1028 = vadd.f32 %v818, %v1008
    %v1029 = vadd.f32 %v819, %v1009
    %v1030 = vadd.f32 %v820, %v1010
    %v1031 = vadd.f32 %v821, %v1011
    %vm1032 = vcmask 1042432
    %v1033 = vrot.slane %v570, 5
    %v1034 = vrot.slane %v571, 5
    %v1035 = vsel %vm1032, %v1033, %v1034
    %v1036 = vrot.slane %v572, 5
    %v1037 = vsel %vm1032, %v1034, %v1036
    %v1041 = vrot.slane %v553, 5
    %v1042 = vrot.slane %v554, 5
    %v1043 = vsel %vm1032, %v1041, %v1042
    %v1044 = vrot.slane %v555, 5
    %v1045 = vsel %vm1032, %v1042, %v1044
    %v1046 = vrot.slane %v556, 5
    %v1047 = vsel %vm1032, %v1044, %v1046
    %v1048 = vrot.slane %v557, 5
    %v1049 = vsel %vm1032, %v1046, %v1048
    %v1050 = vrot.slane %v558, 5
    %v1051 = vsel %vm1032, %v1048, %v1050
    %v1052 = vrot.slane %v559, 5
    %v1053 = vsel %vm1032, %v1050, %v1052
    %v1054 = vrot.slane %v560, 5
    %v1055 = vsel %vm1032, %v1052, %v1054
    %v1056 = vrot.slane %v561, 5
    %v1057 = vsel %vm1032, %v1054, %v1056
    %v1058 = vrot.slane %v562, 5
    %v1059 = vsel %vm1032, %v1056, %v1058
    %v1060 = vrot.slane %v563, 5
    %v1061 = vsel %vm1032, %v1058, %v1060
    %v1062 = vrot.slane %v564, 5
    %v1063 = vsel %vm1032, %v1060, %v1062
    %v1064 = vrot.slane %v565, 5
    %v1065 = vsel %vm1032, %v1062, %v1064
    %v1066 = vrot.slane %v566, 5
    %v1067 = vsel %vm1032, %v1064, %v1066
    %v1068 = vrot.slane %v567, 5
    %v1069 = vsel %vm1032, %v1066, %v1068
    %v1070 = vrot.slane %v568, 5
    %v1071 = vsel %vm1032, %v1068, %v1070
    %v1072 = vrot.slane %v569, 5
    %v1073 = vsel %vm1032, %v1070, %v1072
    %v1074 = vsel %vm1032, %v1072, %v1033
    %v1093 = vsel %vm1032, %v1036, %v1041
    %s1094 = scalar_lea.vmem %s9, 2
    %v1095 = vld [vmem:[%s1094] sm:$0x1]
    %v1097 = vlaneseq
    %v1098 = vshrl.u32 %v1097, 7
    %v1099 = vsub.s32 0, %v1098
    %v1100 = vrot.slane %v1095, %v1099
    %v1102 = vmul.f32 %v1035, %v1100
    %v1103 = vmul.f32 %v1037, %v1100
    %v1104 = vmul.f32 %v1093, %v1100
    %v1105 = vmul.f32 %v1043, %v1100
    %v1106 = vmul.f32 %v1045, %v1100
    %v1107 = vmul.f32 %v1047, %v1100
    %v1108 = vmul.f32 %v1049, %v1100
    %v1109 = vmul.f32 %v1051, %v1100
    %v1110 = vmul.f32 %v1053, %v1100
    %v1111 = vmul.f32 %v1055, %v1100
    %v1112 = vmul.f32 %v1057, %v1100
    %v1113 = vmul.f32 %v1059, %v1100
    %v1114 = vmul.f32 %v1061, %v1100
    %v1115 = vmul.f32 %v1063, %v1100
    %v1116 = vmul.f32 %v1065, %v1100
    %v1117 = vmul.f32 %v1067, %v1100
    %v1118 = vmul.f32 %v1069, %v1100
    %v1119 = vmul.f32 %v1071, %v1100
    %v1120 = vmul.f32 %v1073, %v1100
    %v1121 = vmul.f32 %v1074, %v1100
    %1122 = vset.pattern.permute.xlu0 2
    %1123 = vperm.xlu0 %1122, %v573
    %v1124 = vpop.permute.xlu0 %1123
    %1126 = vset.pattern.permute.xlu0 2
    %1127 = vperm.xlu0 %1126, %v574
    %v1128 = vpop.permute.xlu0 %1127
    %1130 = vset.pattern.permute.xlu0 2
    %1131 = vperm.xlu0 %1130, %v575
    %v1132 = vpop.permute.xlu0 %1131
    %1134 = vset.pattern.permute.xlu0 2
    %1135 = vperm.xlu0 %1134, %v576
    %v1136 = vpop.permute.xlu0 %1135
    %1138 = vset.pattern.permute.xlu0 2
    %1139 = vperm.xlu0 %1138, %v577
    %v1140 = vpop.permute.xlu0 %1139
    %1142 = vset.pattern.permute.xlu0 2
    %1143 = vperm.xlu0 %1142, %v578
    %v1144 = vpop.permute.xlu0 %1143
    %1146 = vset.pattern.permute.xlu0 2
    %1147 = vperm.xlu0 %1146, %v579
    %v1148 = vpop.permute.xlu0 %1147
    %1150 = vset.pattern.permute.xlu0 2
    %1151 = vperm.xlu0 %1150, %v580
    %v1152 = vpop.permute.xlu0 %1151
    %1154 = vset.pattern.permute.xlu0 2
    %1155 = vperm.xlu0 %1154, %v581
    %v1156 = vpop.permute.xlu0 %1155
    %1158 = vset.pattern.permute.xlu0 2
    %1159 = vperm.xlu0 %1158, %v582
    %v1160 = vpop.permute.xlu0 %1159
    %1162 = vset.pattern.permute.xlu0 2
    %1163 = vperm.xlu0 %1162, %v583
    %v1164 = vpop.permute.xlu0 %1163
    %1166 = vset.pattern.permute.xlu0 2
    %1167 = vperm.xlu0 %1166, %v584
    %v1168 = vpop.permute.xlu0 %1167
    %1170 = vset.pattern.permute.xlu0 2
    %1171 = vperm.xlu0 %1170, %v585
    %v1172 = vpop.permute.xlu0 %1171
    %1174 = vset.pattern.permute.xlu0 2
    %1175 = vperm.xlu0 %1174, %v586
    %v1176 = vpop.permute.xlu0 %1175
    %1178 = vset.pattern.permute.xlu0 2
    %1179 = vperm.xlu0 %1178, %v587
    %v1180 = vpop.permute.xlu0 %1179
    %1182 = vset.pattern.permute.xlu0 2
    %1183 = vperm.xlu0 %1182, %v588
    %v1184 = vpop.permute.xlu0 %1183
    %1186 = vset.pattern.permute.xlu0 2
    %1187 = vperm.xlu0 %1186, %v589
    %v1188 = vpop.permute.xlu0 %1187
    %1190 = vset.pattern.permute.xlu0 2
    %1191 = vperm.xlu0 %1190, %v590
    %v1192 = vpop.permute.xlu0 %1191
    %1194 = vset.pattern.permute.xlu0 2
    %1195 = vperm.xlu0 %1194, %v591
    %v1196 = vpop.permute.xlu0 %1195
    %1198 = vset.pattern.permute.xlu0 2
    %1199 = vperm.xlu0 %1198, %v592
    %v1200 = vpop.permute.xlu0 %1199
    %v1202 = vmul.f32 %v1102, %v1124
    %v1203 = vmul.f32 %v1103, %v1128
    %v1204 = vmul.f32 %v1104, %v1132
    %v1205 = vmul.f32 %v1105, %v1136
    %v1206 = vmul.f32 %v1106, %v1140
    %v1207 = vmul.f32 %v1107, %v1144
    %v1208 = vmul.f32 %v1108, %v1148
    %v1209 = vmul.f32 %v1109, %v1152
    %v1210 = vmul.f32 %v1110, %v1156
    %v1211 = vmul.f32 %v1111, %v1160
    %v1212 = vmul.f32 %v1112, %v1164
    %v1213 = vmul.f32 %v1113, %v1168
    %v1214 = vmul.f32 %v1114, %v1172
    %v1215 = vmul.f32 %v1115, %v1176
    %v1216 = vmul.f32 %v1116, %v1180
    %v1217 = vmul.f32 %v1117, %v1184
    %v1218 = vmul.f32 %v1118, %v1188
    %v1219 = vmul.f32 %v1119, %v1192
    %v1220 = vmul.f32 %v1120, %v1196
    %v1221 = vmul.f32 %v1121, %v1200
    %v1222 = vadd.f32 %v1012, %v1202
    %v1223 = vadd.f32 %v1013, %v1203
    %v1224 = vadd.f32 %v1014, %v1204
    %v1225 = vadd.f32 %v1015, %v1205
    %v1226 = vadd.f32 %v1016, %v1206
    %v1227 = vadd.f32 %v1017, %v1207
    %v1228 = vadd.f32 %v1018, %v1208
    %v1229 = vadd.f32 %v1019, %v1209
    %v1230 = vadd.f32 %v1020, %v1210
    %v1231 = vadd.f32 %v1021, %v1211
    %v1232 = vadd.f32 %v1022, %v1212
    %v1233 = vadd.f32 %v1023, %v1213
    %v1234 = vadd.f32 %v1024, %v1214
    %v1235 = vadd.f32 %v1025, %v1215
    %v1236 = vadd.f32 %v1026, %v1216
    %v1237 = vadd.f32 %v1027, %v1217
    %v1238 = vadd.f32 %v1028, %v1218
    %v1239 = vadd.f32 %v1029, %v1219
    %v1240 = vadd.f32 %v1030, %v1220
    %v1241 = vadd.f32 %v1031, %v1221
    %vm1242 = vcmask 1040384
    %v1243 = vrot.slane %v570, 7
    %v1244 = vrot.slane %v571, 7
    %v1245 = vsel %vm1242, %v1243, %v1244
    %v1246 = vrot.slane %v572, 7
    %v1247 = vsel %vm1242, %v1244, %v1246
    %v1251 = vrot.slane %v553, 7
    %v1252 = vrot.slane %v554, 7
    %v1253 = vsel %vm1242, %v1251, %v1252
    %v1254 = vrot.slane %v555, 7
    %v1255 = vsel %vm1242, %v1252, %v1254
    %v1256 = vrot.slane %v556, 7
    %v1257 = vsel %vm1242, %v1254, %v1256
    %v1258 = vrot.slane %v557, 7
    %v1259 = vsel %vm1242, %v1256, %v1258
    %v1260 = vrot.slane %v558, 7
    %v1261 = vsel %vm1242, %v1258, %v1260
    %v1262 = vrot.slane %v559, 7
    %v1263 = vsel %vm1242, %v1260, %v1262
    %v1264 = vrot.slane %v560, 7
    %v1265 = vsel %vm1242, %v1262, %v1264
    %v1266 = vrot.slane %v561, 7
    %v1267 = vsel %vm1242, %v1264, %v1266
    %v1268 = vrot.slane %v562, 7
    %v1269 = vsel %vm1242, %v1266, %v1268
    %v1270 = vrot.slane %v563, 7
    %v1271 = vsel %vm1242, %v1268, %v1270
    %v1272 = vrot.slane %v564, 7
    %v1273 = vsel %vm1242, %v1270, %v1272
    %v1274 = vrot.slane %v565, 7
    %v1275 = vsel %vm1242, %v1272, %v1274
    %v1276 = vrot.slane %v566, 7
    %v1277 = vsel %vm1242, %v1274, %v1276
    %v1278 = vrot.slane %v567, 7
    %v1279 = vsel %vm1242, %v1276, %v1278
    %v1280 = vrot.slane %v568, 7
    %v1281 = vsel %vm1242, %v1278, %v1280
    %v1282 = vrot.slane %v569, 7
    %v1283 = vsel %vm1242, %v1280, %v1282
    %v1284 = vsel %vm1242, %v1282, %v1243
    %v1303 = vsel %vm1242, %v1246, %v1251
    %s1304 = scalar_lea.vmem %s9, 3
    %v1305 = vld [vmem:[%s1304] sm:$0x1]
    %v1307 = vlaneseq
    %v1308 = vshrl.u32 %v1307, 7
    %v1309 = vsub.s32 0, %v1308
    %v1310 = vrot.slane %v1305, %v1309
    %v1312 = vmul.f32 %v1245, %v1310
    %v1313 = vmul.f32 %v1247, %v1310
    %v1314 = vmul.f32 %v1303, %v1310
    %v1315 = vmul.f32 %v1253, %v1310
    %v1316 = vmul.f32 %v1255, %v1310
    %v1317 = vmul.f32 %v1257, %v1310
    %v1318 = vmul.f32 %v1259, %v1310
    %v1319 = vmul.f32 %v1261, %v1310
    %v1320 = vmul.f32 %v1263, %v1310
    %v1321 = vmul.f32 %v1265, %v1310
    %v1322 = vmul.f32 %v1267, %v1310
    %v1323 = vmul.f32 %v1269, %v1310
    %v1324 = vmul.f32 %v1271, %v1310
    %v1325 = vmul.f32 %v1273, %v1310
    %v1326 = vmul.f32 %v1275, %v1310
    %v1327 = vmul.f32 %v1277, %v1310
    %v1328 = vmul.f32 %v1279, %v1310
    %v1329 = vmul.f32 %v1281, %v1310
    %v1330 = vmul.f32 %v1283, %v1310
    %v1331 = vmul.f32 %v1284, %v1310
    %1332 = vset.pattern.permute.xlu0 3
    %1333 = vperm.xlu0 %1332, %v573
    %v1334 = vpop.permute.xlu0 %1333
    %1336 = vset.pattern.permute.xlu0 3
    %1337 = vperm.xlu0 %1336, %v574
    %v1338 = vpop.permute.xlu0 %1337
    %1340 = vset.pattern.permute.xlu0 3
    %1341 = vperm.xlu0 %1340, %v575
    %v1342 = vpop.permute.xlu0 %1341
    %1344 = vset.pattern.permute.xlu0 3
    %1345 = vperm.xlu0 %1344, %v576
    %v1346 = vpop.permute.xlu0 %1345
    %1348 = vset.pattern.permute.xlu0 3
    %1349 = vperm.xlu0 %1348, %v577
    %v1350 = vpop.permute.xlu0 %1349
    %1352 = vset.pattern.permute.xlu0 3
    %1353 = vperm.xlu0 %1352, %v578
    %v1354 = vpop.permute.xlu0 %1353
    %1356 = vset.pattern.permute.xlu0 3
    %1357 = vperm.xlu0 %1356, %v579
    %v1358 = vpop.permute.xlu0 %1357
    %1360 = vset.pattern.permute.xlu0 3
    %1361 = vperm.xlu0 %1360, %v580
    %v1362 = vpop.permute.xlu0 %1361
    %1364 = vset.pattern.permute.xlu0 3
    %1365 = vperm.xlu0 %1364, %v581
    %v1366 = vpop.permute.xlu0 %1365
    %1368 = vset.pattern.permute.xlu0 3
    %1369 = vperm.xlu0 %1368, %v582
    %v1370 = vpop.permute.xlu0 %1369
    %1372 = vset.pattern.permute.xlu0 3
    %1373 = vperm.xlu0 %1372, %v583
    %v1374 = vpop.permute.xlu0 %1373
    %1376 = vset.pattern.permute.xlu0 3
    %1377 = vperm.xlu0 %1376, %v584
    %v1378 = vpop.permute.xlu0 %1377
    %1380 = vset.pattern.permute.xlu0 3
    %1381 = vperm.xlu0 %1380, %v585
    %v1382 = vpop.permute.xlu0 %1381
    %1384 = vset.pattern.permute.xlu0 3
    %1385 = vperm.xlu0 %1384, %v586
    %v1386 = vpop.permute.xlu0 %1385
    %1388 = vset.pattern.permute.xlu0 3
    %1389 = vperm.xlu0 %1388, %v587
    %v1390 = vpop.permute.xlu0 %1389
    %1392 = vset.pattern.permute.xlu0 3
    %1393 = vperm.xlu0 %1392, %v588
    %v1394 = vpop.permute.xlu0 %1393
    %1396 = vset.pattern.permute.xlu0 3
    %1397 = vperm.xlu0 %1396, %v589
    %v1398 = vpop.permute.xlu0 %1397
    %1400 = vset.pattern.permute.xlu0 3
    %1401 = vperm.xlu0 %1400, %v590
    %v1402 = vpop.permute.xlu0 %1401
    %1404 = vset.pattern.permute.xlu0 3
    %1405 = vperm.xlu0 %1404, %v591
    %v1406 = vpop.permute.xlu0 %1405
    %1408 = vset.pattern.permute.xlu0 3
    %1409 = vperm.xlu0 %1408, %v592
    %v1410 = vpop.permute.xlu0 %1409
    %v1412 = vmul.f32 %v1312, %v1334
    %v1413 = vmul.f32 %v1313, %v1338
    %v1414 = vmul.f32 %v1314, %v1342
    %v1415 = vmul.f32 %v1315, %v1346
    %v1416 = vmul.f32 %v1316, %v1350
    %v1417 = vmul.f32 %v1317, %v1354
    %v1418 = vmul.f32 %v1318, %v1358
    %v1419 = vmul.f32 %v1319, %v1362
    %v1420 = vmul.f32 %v1320, %v1366
    %v1421 = vmul.f32 %v1321, %v1370
    %v1422 = vmul.f32 %v1322, %v1374
    %v1423 = vmul.f32 %v1323, %v1378
    %v1424 = vmul.f32 %v1324, %v1382
    %v1425 = vmul.f32 %v1325, %v1386
    %v1426 = vmul.f32 %v1326, %v1390
    %v1427 = vmul.f32 %v1327, %v1394
    %v1428 = vmul.f32 %v1328, %v1398
    %v1429 = vmul.f32 %v1329, %v1402
    %v1430 = vmul.f32 %v1330, %v1406
    %v1431 = vmul.f32 %v1331, %v1410
    %v1432 = vadd.f32 %v1222, %v1412
    %v1433 = vadd.f32 %v1223, %v1413
    %v1434 = vadd.f32 %v1224, %v1414
    %v1435 = vadd.f32 %v1225, %v1415
    %v1436 = vadd.f32 %v1226, %v1416
    %v1437 = vadd.f32 %v1227, %v1417
    %v1438 = vadd.f32 %v1228, %v1418
    %v1439 = vadd.f32 %v1229, %v1419
    %v1440 = vadd.f32 %v1230, %v1420
    %v1441 = vadd.f32 %v1231, %v1421
    %v1442 = vadd.f32 %v1232, %v1422
    %v1443 = vadd.f32 %v1233, %v1423
    %v1444 = vadd.f32 %v1234, %v1424
    %v1445 = vadd.f32 %v1235, %v1425
    %v1446 = vadd.f32 %v1236, %v1426
    %v1447 = vadd.f32 %v1237, %v1427
    %v1448 = vadd.f32 %v1238, %v1428
    %v1449 = vadd.f32 %v1239, %v1429
    %v1450 = vadd.f32 %v1240, %v1430
    %v1451 = vadd.f32 %v1241, %v1431
    %s1452 = scalar_lea.vmem %s9, 4
    %v1453 = vld [vmem:[%s1452] sm:$0x1]
    %v1455 = vlaneseq
    %v1456 = vshrl.u32 %v1455, 7
    %v1457 = vsub.s32 0, %v1456
    %v1458 = vrot.slane %v1453, %v1457
    %v1460 = vmul.f32 %v571, %v1458
    %v1461 = vmul.f32 %v572, %v1458
    %v1462 = vmul.f32 %v553, %v1458
    %v1463 = vmul.f32 %v554, %v1458
    %v1464 = vmul.f32 %v555, %v1458
    %v1465 = vmul.f32 %v556, %v1458
    %v1466 = vmul.f32 %v557, %v1458
    %v1467 = vmul.f32 %v558, %v1458
    %v1468 = vmul.f32 %v559, %v1458
    %v1469 = vmul.f32 %v560, %v1458
    %v1470 = vmul.f32 %v561, %v1458
    %v1471 = vmul.f32 %v562, %v1458
    %v1472 = vmul.f32 %v563, %v1458
    %v1473 = vmul.f32 %v564, %v1458
    %v1474 = vmul.f32 %v565, %v1458
    %v1475 = vmul.f32 %v566, %v1458
    %v1476 = vmul.f32 %v567, %v1458
    %v1477 = vmul.f32 %v568, %v1458
    %v1478 = vmul.f32 %v569, %v1458
    %v1479 = vmul.f32 %v570, %v1458
    %1480 = vset.pattern.permute.xlu0 4
    %1481 = vperm.xlu0 %1480, %v573
    %v1482 = vpop.permute.xlu0 %1481
    %1484 = vset.pattern.permute.xlu0 4
    %1485 = vperm.xlu0 %1484, %v574
    %v1486 = vpop.permute.xlu0 %1485
    %1488 = vset.pattern.permute.xlu0 4
    %1489 = vperm.xlu0 %1488, %v575
    %v1490 = vpop.permute.xlu0 %1489
    %1492 = vset.pattern.permute.xlu0 4
    %1493 = vperm.xlu0 %1492, %v576
    %v1494 = vpop.permute.xlu0 %1493
    %1496 = vset.pattern.permute.xlu0 4
    %1497 = vperm.xlu0 %1496, %v577
    %v1498 = vpop.permute.xlu0 %1497
    %1500 = vset.pattern.permute.xlu0 4
    %1501 = vperm.xlu0 %1500, %v578
    %v1502 = vpop.permute.xlu0 %1501
    %1504 = vset.pattern.permute.xlu0 4
    %1505 = vperm.xlu0 %1504, %v579
    %v1506 = vpop.permute.xlu0 %1505
    %1508 = vset.pattern.permute.xlu0 4
    %1509 = vperm.xlu0 %1508, %v580
    %v1510 = vpop.permute.xlu0 %1509
    %1512 = vset.pattern.permute.xlu0 4
    %1513 = vperm.xlu0 %1512, %v581
    %v1514 = vpop.permute.xlu0 %1513
    %1516 = vset.pattern.permute.xlu0 4
    %1517 = vperm.xlu0 %1516, %v582
    %v1518 = vpop.permute.xlu0 %1517
    %1520 = vset.pattern.permute.xlu0 4
    %1521 = vperm.xlu0 %1520, %v583
    %v1522 = vpop.permute.xlu0 %1521
    %1524 = vset.pattern.permute.xlu0 4
    %1525 = vperm.xlu0 %1524, %v584
    %v1526 = vpop.permute.xlu0 %1525
    %1528 = vset.pattern.permute.xlu0 4
    %1529 = vperm.xlu0 %1528, %v585
    %v1530 = vpop.permute.xlu0 %1529
    %1532 = vset.pattern.permute.xlu0 4
    %1533 = vperm.xlu0 %1532, %v586
    %v1534 = vpop.permute.xlu0 %1533
    %1536 = vset.pattern.permute.xlu0 4
    %1537 = vperm.xlu0 %1536, %v587
    %v1538 = vpop.permute.xlu0 %1537
    %1540 = vset.pattern.permute.xlu0 4
    %1541 = vperm.xlu0 %1540, %v588
    %v1542 = vpop.permute.xlu0 %1541
    %1544 = vset.pattern.permute.xlu0 4
    %1545 = vperm.xlu0 %1544, %v589
    %v1546 = vpop.permute.xlu0 %1545
    %1548 = vset.pattern.permute.xlu0 4
    %1549 = vperm.xlu0 %1548, %v590
    %v1550 = vpop.permute.xlu0 %1549
    %1552 = vset.pattern.permute.xlu0 4
    %1553 = vperm.xlu0 %1552, %v591
    %v1554 = vpop.permute.xlu0 %1553
    %1556 = vset.pattern.permute.xlu0 4
    %1557 = vperm.xlu0 %1556, %v592
    %v1558 = vpop.permute.xlu0 %1557
    %v1560 = vmul.f32 %v1460, %v1482
    %v1561 = vmul.f32 %v1461, %v1486
    %v1562 = vmul.f32 %v1462, %v1490
    %v1563 = vmul.f32 %v1463, %v1494
    %v1564 = vmul.f32 %v1464, %v1498
    %v1565 = vmul.f32 %v1465, %v1502
    %v1566 = vmul.f32 %v1466, %v1506
    %v1567 = vmul.f32 %v1467, %v1510
    %v1568 = vmul.f32 %v1468, %v1514
    %v1569 = vmul.f32 %v1469, %v1518
    %v1570 = vmul.f32 %v1470, %v1522
    %v1571 = vmul.f32 %v1471, %v1526
    %v1572 = vmul.f32 %v1472, %v1530
    %v1573 = vmul.f32 %v1473, %v1534
    %v1574 = vmul.f32 %v1474, %v1538
    %v1575 = vmul.f32 %v1475, %v1542
    %v1576 = vmul.f32 %v1476, %v1546
    %v1577 = vmul.f32 %v1477, %v1550
    %v1578 = vmul.f32 %v1478, %v1554
    %v1579 = vmul.f32 %v1479, %v1558
    %v1580 = vadd.f32 %v1432, %v1560
    %v1581 = vadd.f32 %v1433, %v1561
    %v1582 = vadd.f32 %v1434, %v1562
    %v1583 = vadd.f32 %v1435, %v1563
    %v1584 = vadd.f32 %v1436, %v1564
    %v1585 = vadd.f32 %v1437, %v1565
    %v1586 = vadd.f32 %v1438, %v1566
    %v1587 = vadd.f32 %v1439, %v1567
    %v1588 = vadd.f32 %v1440, %v1568
    %v1589 = vadd.f32 %v1441, %v1569
    %v1590 = vadd.f32 %v1442, %v1570
    %v1591 = vadd.f32 %v1443, %v1571
    %v1592 = vadd.f32 %v1444, %v1572
    %v1593 = vadd.f32 %v1445, %v1573
    %v1594 = vadd.f32 %v1446, %v1574
    %v1595 = vadd.f32 %v1447, %v1575
    %v1596 = vadd.f32 %v1448, %v1576
    %v1597 = vadd.f32 %v1449, %v1577
    %v1598 = vadd.f32 %v1450, %v1578
    %v1599 = vadd.f32 %v1451, %v1579
    %vm1600 = vcmask 1046528
    %v1601 = vrot.slane %v571, 1
    %v1602 = vrot.slane %v572, 1
    %v1603 = vsel %vm1600, %v1601, %v1602
    %v1606 = vrot.slane %v553, 1
    %v1607 = vrot.slane %v554, 1
    %v1608 = vsel %vm1600, %v1606, %v1607
    %v1609 = vrot.slane %v555, 1
    %v1610 = vsel %vm1600, %v1607, %v1609
    %v1611 = vrot.slane %v556, 1
    %v1612 = vsel %vm1600, %v1609, %v1611
    %v1613 = vrot.slane %v557, 1
    %v1614 = vsel %vm1600, %v1611, %v1613
    %v1615 = vrot.slane %v558, 1
    %v1616 = vsel %vm1600, %v1613, %v1615
    %v1617 = vrot.slane %v559, 1
    %v1618 = vsel %vm1600, %v1615, %v1617
    %v1619 = vrot.slane %v560, 1
    %v1620 = vsel %vm1600, %v1617, %v1619
    %v1621 = vrot.slane %v561, 1
    %v1622 = vsel %vm1600, %v1619, %v1621
    %v1623 = vrot.slane %v562, 1
    %v1624 = vsel %vm1600, %v1621, %v1623
    %v1625 = vrot.slane %v563, 1
    %v1626 = vsel %vm1600, %v1623, %v1625
    %v1627 = vrot.slane %v564, 1
    %v1628 = vsel %vm1600, %v1625, %v1627
    %v1629 = vrot.slane %v565, 1
    %v1630 = vsel %vm1600, %v1627, %v1629
    %v1631 = vrot.slane %v566, 1
    %v1632 = vsel %vm1600, %v1629, %v1631
    %v1633 = vrot.slane %v567, 1
    %v1634 = vsel %vm1600, %v1631, %v1633
    %v1635 = vrot.slane %v568, 1
    %v1636 = vsel %vm1600, %v1633, %v1635
    %v1637 = vrot.slane %v569, 1
    %v1638 = vsel %vm1600, %v1635, %v1637
    %v1639 = vrot.slane %v570, 1
    %v1640 = vsel %vm1600, %v1637, %v1639
    %v1641 = vsel %vm1600, %v1639, %v1601
    %v1661 = vsel %vm1600, %v1602, %v1606
    %s1662 = scalar_lea.vmem %s9, 5
    %v1663 = vld [vmem:[%s1662] sm:$0x1]
    %v1665 = vlaneseq
    %v1666 = vshrl.u32 %v1665, 7
    %v1667 = vsub.s32 0, %v1666
    %v1668 = vrot.slane %v1663, %v1667
    %v1670 = vmul.f32 %v1603, %v1668
    %v1671 = vmul.f32 %v1661, %v1668
    %v1672 = vmul.f32 %v1608, %v1668
    %v1673 = vmul.f32 %v1610, %v1668
    %v1674 = vmul.f32 %v1612, %v1668
    %v1675 = vmul.f32 %v1614, %v1668
    %v1676 = vmul.f32 %v1616, %v1668
    %v1677 = vmul.f32 %v1618, %v1668
    %v1678 = vmul.f32 %v1620, %v1668
    %v1679 = vmul.f32 %v1622, %v1668
    %v1680 = vmul.f32 %v1624, %v1668
    %v1681 = vmul.f32 %v1626, %v1668
    %v1682 = vmul.f32 %v1628, %v1668
    %v1683 = vmul.f32 %v1630, %v1668
    %v1684 = vmul.f32 %v1632, %v1668
    %v1685 = vmul.f32 %v1634, %v1668
    %v1686 = vmul.f32 %v1636, %v1668
    %v1687 = vmul.f32 %v1638, %v1668
    %v1688 = vmul.f32 %v1640, %v1668
    %v1689 = vmul.f32 %v1641, %v1668
    %1690 = vset.pattern.permute.xlu0 5
    %1691 = vperm.xlu0 %1690, %v573
    %v1692 = vpop.permute.xlu0 %1691
    %1694 = vset.pattern.permute.xlu0 5
    %1695 = vperm.xlu0 %1694, %v574
    %v1696 = vpop.permute.xlu0 %1695
    %1698 = vset.pattern.permute.xlu0 5
    %1699 = vperm.xlu0 %1698, %v575
    %v1700 = vpop.permute.xlu0 %1699
    %1702 = vset.pattern.permute.xlu0 5
    %1703 = vperm.xlu0 %1702, %v576
    %v1704 = vpop.permute.xlu0 %1703
    %1706 = vset.pattern.permute.xlu0 5
    %1707 = vperm.xlu0 %1706, %v577
    %v1708 = vpop.permute.xlu0 %1707
    %1710 = vset.pattern.permute.xlu0 5
    %1711 = vperm.xlu0 %1710, %v578
    %v1712 = vpop.permute.xlu0 %1711
    %1714 = vset.pattern.permute.xlu0 5
    %1715 = vperm.xlu0 %1714, %v579
    %v1716 = vpop.permute.xlu0 %1715
    %1718 = vset.pattern.permute.xlu0 5
    %1719 = vperm.xlu0 %1718, %v580
    %v1720 = vpop.permute.xlu0 %1719
    %1722 = vset.pattern.permute.xlu0 5
    %1723 = vperm.xlu0 %1722, %v581
    %v1724 = vpop.permute.xlu0 %1723
    %1726 = vset.pattern.permute.xlu0 5
    %1727 = vperm.xlu0 %1726, %v582
    %v1728 = vpop.permute.xlu0 %1727
    %1730 = vset.pattern.permute.xlu0 5
    %1731 = vperm.xlu0 %1730, %v583
    %v1732 = vpop.permute.xlu0 %1731
    %1734 = vset.pattern.permute.xlu0 5
    %1735 = vperm.xlu0 %1734, %v584
    %v1736 = vpop.permute.xlu0 %1735
    %1738 = vset.pattern.permute.xlu0 5
    %1739 = vperm.xlu0 %1738, %v585
    %v1740 = vpop.permute.xlu0 %1739
    %1742 = vset.pattern.permute.xlu0 5
    %1743 = vperm.xlu0 %1742, %v586
    %v1744 = vpop.permute.xlu0 %1743
    %1746 = vset.pattern.permute.xlu0 5
    %1747 = vperm.xlu0 %1746, %v587
    %v1748 = vpop.permute.xlu0 %1747
    %1750 = vset.pattern.permute.xlu0 5
    %1751 = vperm.xlu0 %1750, %v588
    %v1752 = vpop.permute.xlu0 %1751
    %1754 = vset.pattern.permute.xlu0 5
    %1755 = vperm.xlu0 %1754, %v589
    %v1756 = vpop.permute.xlu0 %1755
    %1758 = vset.pattern.permute.xlu0 5
    %1759 = vperm.xlu0 %1758, %v590
    %v1760 = vpop.permute.xlu0 %1759
    %1762 = vset.pattern.permute.xlu0 5
    %1763 = vperm.xlu0 %1762, %v591
    %v1764 = vpop.permute.xlu0 %1763
    %1766 = vset.pattern.permute.xlu0 5
    %1767 = vperm.xlu0 %1766, %v592
    %v1768 = vpop.permute.xlu0 %1767
    %v1770 = vmul.f32 %v1670, %v1692
    %v1771 = vmul.f32 %v1671, %v1696
    %v1772 = vmul.f32 %v1672, %v1700
    %v1773 = vmul.f32 %v1673, %v1704
    %v1774 = vmul.f32 %v1674, %v1708
    %v1775 = vmul.f32 %v1675, %v1712
    %v1776 = vmul.f32 %v1676, %v1716
    %v1777 = vmul.f32 %v1677, %v1720
    %v1778 = vmul.f32 %v1678, %v1724
    %v1779 = vmul.f32 %v1679, %v1728
    %v1780 = vmul.f32 %v1680, %v1732
    %v1781 = vmul.f32 %v1681, %v1736
    %v1782 = vmul.f32 %v1682, %v1740
    %v1783 = vmul.f32 %v1683, %v1744
    %v1784 = vmul.f32 %v1684, %v1748
    %v1785 = vmul.f32 %v1685, %v1752
    %v1786 = vmul.f32 %v1686, %v1756
    %v1787 = vmul.f32 %v1687, %v1760
    %v1788 = vmul.f32 %v1688, %v1764
    %v1789 = vmul.f32 %v1689, %v1768
    %v1790 = vadd.f32 %v1580, %v1770
    %v1791 = vadd.f32 %v1581, %v1771
    %v1792 = vadd.f32 %v1582, %v1772
    %v1793 = vadd.f32 %v1583, %v1773
    %v1794 = vadd.f32 %v1584, %v1774
    %v1795 = vadd.f32 %v1585, %v1775
    %v1796 = vadd.f32 %v1586, %v1776
    %v1797 = vadd.f32 %v1587, %v1777
    %v1798 = vadd.f32 %v1588, %v1778
    %v1799 = vadd.f32 %v1589, %v1779
    %v1800 = vadd.f32 %v1590, %v1780
    %v1801 = vadd.f32 %v1591, %v1781
    %v1802 = vadd.f32 %v1592, %v1782
    %v1803 = vadd.f32 %v1593, %v1783
    %v1804 = vadd.f32 %v1594, %v1784
    %v1805 = vadd.f32 %v1595, %v1785
    %v1806 = vadd.f32 %v1596, %v1786
    %v1807 = vadd.f32 %v1597, %v1787
    %v1808 = vadd.f32 %v1598, %v1788
    %v1809 = vadd.f32 %v1599, %v1789
    %s1810 = scalar_lea.vmem %s9, 6
    %v1811 = vld [vmem:[%s1810] sm:$0x1]
    %v1813 = vlaneseq
    %v1814 = vshrl.u32 %v1813, 7
    %v1815 = vsub.s32 0, %v1814
    %v1816 = vrot.slane %v1811, %v1815
    %v1818 = vmul.f32 %v601, %v1816
    %v1819 = vmul.f32 %v674, %v1816
    %v1820 = vmul.f32 %v624, %v1816
    %v1821 = vmul.f32 %v626, %v1816
    %v1822 = vmul.f32 %v628, %v1816
    %v1823 = vmul.f32 %v630, %v1816
    %v1824 = vmul.f32 %v632, %v1816
    %v1825 = vmul.f32 %v634, %v1816
    %v1826 = vmul.f32 %v636, %v1816
    %v1827 = vmul.f32 %v638, %v1816
    %v1828 = vmul.f32 %v640, %v1816
    %v1829 = vmul.f32 %v642, %v1816
    %v1830 = vmul.f32 %v644, %v1816
    %v1831 = vmul.f32 %v646, %v1816
    %v1832 = vmul.f32 %v648, %v1816
    %v1833 = vmul.f32 %v650, %v1816
    %v1834 = vmul.f32 %v652, %v1816
    %v1835 = vmul.f32 %v654, %v1816
    %v1836 = vmul.f32 %v655, %v1816
    %v1837 = vmul.f32 %v599, %v1816
    %1838 = vset.pattern.permute.xlu0 6
    %1839 = vperm.xlu0 %1838, %v573
    %v1840 = vpop.permute.xlu0 %1839
    %1842 = vset.pattern.permute.xlu0 6
    %1843 = vperm.xlu0 %1842, %v574
    %v1844 = vpop.permute.xlu0 %1843
    %1846 = vset.pattern.permute.xlu0 6
    %1847 = vperm.xlu0 %1846, %v575
    %v1848 = vpop.permute.xlu0 %1847
    %1850 = vset.pattern.permute.xlu0 6
    %1851 = vperm.xlu0 %1850, %v576
    %v1852 = vpop.permute.xlu0 %1851
    %1854 = vset.pattern.permute.xlu0 6
    %1855 = vperm.xlu0 %1854, %v577
    %v1856 = vpop.permute.xlu0 %1855
    %1858 = vset.pattern.permute.xlu0 6
    %1859 = vperm.xlu0 %1858, %v578
    %v1860 = vpop.permute.xlu0 %1859
    %1862 = vset.pattern.permute.xlu0 6
    %1863 = vperm.xlu0 %1862, %v579
    %v1864 = vpop.permute.xlu0 %1863
    %1866 = vset.pattern.permute.xlu0 6
    %1867 = vperm.xlu0 %1866, %v580
    %v1868 = vpop.permute.xlu0 %1867
    %1870 = vset.pattern.permute.xlu0 6
    %1871 = vperm.xlu0 %1870, %v581
    %v1872 = vpop.permute.xlu0 %1871
    %1874 = vset.pattern.permute.xlu0 6
    %1875 = vperm.xlu0 %1874, %v582
    %v1876 = vpop.permute.xlu0 %1875
    %1878 = vset.pattern.permute.xlu0 6
    %1879 = vperm.xlu0 %1878, %v583
    %v1880 = vpop.permute.xlu0 %1879
    %1882 = vset.pattern.permute.xlu0 6
    %1883 = vperm.xlu0 %1882, %v584
    %v1884 = vpop.permute.xlu0 %1883
    %1886 = vset.pattern.permute.xlu0 6
    %1887 = vperm.xlu0 %1886, %v585
    %v1888 = vpop.permute.xlu0 %1887
    %1890 = vset.pattern.permute.xlu0 6
    %1891 = vperm.xlu0 %1890, %v586
    %v1892 = vpop.permute.xlu0 %1891
    %1894 = vset.pattern.permute.xlu0 6
    %1895 = vperm.xlu0 %1894, %v587
    %v1896 = vpop.permute.xlu0 %1895
    %1898 = vset.pattern.permute.xlu0 6
    %1899 = vperm.xlu0 %1898, %v588
    %v1900 = vpop.permute.xlu0 %1899
    %1902 = vset.pattern.permute.xlu0 6
    %1903 = vperm.xlu0 %1902, %v589
    %v1904 = vpop.permute.xlu0 %1903
    %1906 = vset.pattern.permute.xlu0 6
    %1907 = vperm.xlu0 %1906, %v590
    %v1908 = vpop.permute.xlu0 %1907
    %1910 = vset.pattern.permute.xlu0 6
    %1911 = vperm.xlu0 %1910, %v591
    %v1912 = vpop.permute.xlu0 %1911
    %1914 = vset.pattern.permute.xlu0 6
    %1915 = vperm.xlu0 %1914, %v592
    %v1916 = vpop.permute.xlu0 %1915
    %v1918 = vmul.f32 %v1818, %v1840
    %v1919 = vmul.f32 %v1819, %v1844
    %v1920 = vmul.f32 %v1820, %v1848
    %v1921 = vmul.f32 %v1821, %v1852
    %v1922 = vmul.f32 %v1822, %v1856
    %v1923 = vmul.f32 %v1823, %v1860
    %v1924 = vmul.f32 %v1824, %v1864
    %v1925 = vmul.f32 %v1825, %v1868
    %v1926 = vmul.f32 %v1826, %v1872
    %v1927 = vmul.f32 %v1827, %v1876
    %v1928 = vmul.f32 %v1828, %v1880
    %v1929 = vmul.f32 %v1829, %v1884
    %v1930 = vmul.f32 %v1830, %v1888
    %v1931 = vmul.f32 %v1831, %v1892
    %v1932 = vmul.f32 %v1832, %v1896
    %v1933 = vmul.f32 %v1833, %v1900
    %v1934 = vmul.f32 %v1834, %v1904
    %v1935 = vmul.f32 %v1835, %v1908
    %v1936 = vmul.f32 %v1836, %v1912
    %v1937 = vmul.f32 %v1837, %v1916
    %v1938 = vadd.f32 %v1790, %v1918
    %v1939 = vadd.f32 %v1791, %v1919
    %v1940 = vadd.f32 %v1792, %v1920
    %v1941 = vadd.f32 %v1793, %v1921
    %v1942 = vadd.f32 %v1794, %v1922
    %v1943 = vadd.f32 %v1795, %v1923
    %v1944 = vadd.f32 %v1796, %v1924
    %v1945 = vadd.f32 %v1797, %v1925
    %v1946 = vadd.f32 %v1798, %v1926
    %v1947 = vadd.f32 %v1799, %v1927
    %v1948 = vadd.f32 %v1800, %v1928
    %v1949 = vadd.f32 %v1801, %v1929
    %v1950 = vadd.f32 %v1802, %v1930
    %v1951 = vadd.f32 %v1803, %v1931
    %v1952 = vadd.f32 %v1804, %v1932
    %v1953 = vadd.f32 %v1805, %v1933
    %v1954 = vadd.f32 %v1806, %v1934
    %v1955 = vadd.f32 %v1807, %v1935
    %v1956 = vadd.f32 %v1808, %v1936
    %v1957 = vadd.f32 %v1809, %v1937
    %s1958 = scalar_lea.vmem %s9, 7
    %v1959 = vld [vmem:[%s1958] sm:$0x1]
    %v1961 = vlaneseq
    %v1962 = vshrl.u32 %v1961, 7
    %v1963 = vsub.s32 0, %v1962
    %v1964 = vrot.slane %v1959, %v1963
    %v1966 = vmul.f32 %v827, %v1964
    %v1967 = vmul.f32 %v883, %v1964
    %v1968 = vmul.f32 %v833, %v1964
    %v1969 = vmul.f32 %v835, %v1964
    %v1970 = vmul.f32 %v837, %v1964
    %v1971 = vmul.f32 %v839, %v1964
    %v1972 = vmul.f32 %v841, %v1964
    %v1973 = vmul.f32 %v843, %v1964
    %v1974 = vmul.f32 %v845, %v1964
    %v1975 = vmul.f32 %v847, %v1964
    %v1976 = vmul.f32 %v849, %v1964
    %v1977 = vmul.f32 %v851, %v1964
    %v1978 = vmul.f32 %v853, %v1964
    %v1979 = vmul.f32 %v855, %v1964
    %v1980 = vmul.f32 %v857, %v1964
    %v1981 = vmul.f32 %v859, %v1964
    %v1982 = vmul.f32 %v861, %v1964
    %v1983 = vmul.f32 %v863, %v1964
    %v1984 = vmul.f32 %v864, %v1964
    %v1985 = vmul.f32 %v825, %v1964
    %1986 = vset.pattern.permute.xlu0 7
    %1987 = vperm.xlu0 %1986, %v573
    %v1988 = vpop.permute.xlu0 %1987
    %1990 = vset.pattern.permute.xlu0 7
    %1991 = vperm.xlu0 %1990, %v574
    %v1992 = vpop.permute.xlu0 %1991
    %1994 = vset.pattern.permute.xlu0 7
    %1995 = vperm.xlu0 %1994, %v575
    %v1996 = vpop.permute.xlu0 %1995
    %1998 = vset.pattern.permute.xlu0 7
    %1999 = vperm.xlu0 %1998, %v576
    %v2000 = vpop.permute.xlu0 %1999
    %2002 = vset.pattern.permute.xlu0 7
    %2003 = vperm.xlu0 %2002, %v577
    %v2004 = vpop.permute.xlu0 %2003
    %2006 = vset.pattern.permute.xlu0 7
    %2007 = vperm.xlu0 %2006, %v578
    %v2008 = vpop.permute.xlu0 %2007
    %2010 = vset.pattern.permute.xlu0 7
    %2011 = vperm.xlu0 %2010, %v579
    %v2012 = vpop.permute.xlu0 %2011
    %2014 = vset.pattern.permute.xlu0 7
    %2015 = vperm.xlu0 %2014, %v580
    %v2016 = vpop.permute.xlu0 %2015
    %2018 = vset.pattern.permute.xlu0 7
    %2019 = vperm.xlu0 %2018, %v581
    %v2020 = vpop.permute.xlu0 %2019
    %2022 = vset.pattern.permute.xlu0 7
    %2023 = vperm.xlu0 %2022, %v582
    %v2024 = vpop.permute.xlu0 %2023
    %2026 = vset.pattern.permute.xlu0 7
    %2027 = vperm.xlu0 %2026, %v583
    %v2028 = vpop.permute.xlu0 %2027
    %2030 = vset.pattern.permute.xlu0 7
    %2031 = vperm.xlu0 %2030, %v584
    %v2032 = vpop.permute.xlu0 %2031
    %2034 = vset.pattern.permute.xlu0 7
    %2035 = vperm.xlu0 %2034, %v585
    %v2036 = vpop.permute.xlu0 %2035
    %2038 = vset.pattern.permute.xlu0 7
    %2039 = vperm.xlu0 %2038, %v586
    %v2040 = vpop.permute.xlu0 %2039
    %2042 = vset.pattern.permute.xlu0 7
    %2043 = vperm.xlu0 %2042, %v587
    %v2044 = vpop.permute.xlu0 %2043
    %2046 = vset.pattern.permute.xlu0 7
    %2047 = vperm.xlu0 %2046, %v588
    %v2048 = vpop.permute.xlu0 %2047
    %2050 = vset.pattern.permute.xlu0 7
    %2051 = vperm.xlu0 %2050, %v589
    %v2052 = vpop.permute.xlu0 %2051
    %2054 = vset.pattern.permute.xlu0 7
    %2055 = vperm.xlu0 %2054, %v590
    %v2056 = vpop.permute.xlu0 %2055
    %2058 = vset.pattern.permute.xlu0 7
    %2059 = vperm.xlu0 %2058, %v591
    %v2060 = vpop.permute.xlu0 %2059
    %2062 = vset.pattern.permute.xlu0 7
    %2063 = vperm.xlu0 %2062, %v592
    %v2064 = vpop.permute.xlu0 %2063
    %v2066 = vmul.f32 %v1966, %v1988
    %v2067 = vmul.f32 %v1967, %v1992
    %v2068 = vmul.f32 %v1968, %v1996
    %v2069 = vmul.f32 %v1969, %v2000
    %v2070 = vmul.f32 %v1970, %v2004
    %v2071 = vmul.f32 %v1971, %v2008
    %v2072 = vmul.f32 %v1972, %v2012
    %v2073 = vmul.f32 %v1973, %v2016
    %v2074 = vmul.f32 %v1974, %v2020
    %v2075 = vmul.f32 %v1975, %v2024
    %v2076 = vmul.f32 %v1976, %v2028
    %v2077 = vmul.f32 %v1977, %v2032
    %v2078 = vmul.f32 %v1978, %v2036
    %v2079 = vmul.f32 %v1979, %v2040
    %v2080 = vmul.f32 %v1980, %v2044
    %v2081 = vmul.f32 %v1981, %v2048
    %v2082 = vmul.f32 %v1982, %v2052
    %v2083 = vmul.f32 %v1983, %v2056
    %v2084 = vmul.f32 %v1984, %v2060
    %v2085 = vmul.f32 %v1985, %v2064
    %v2086 = vadd.f32 %v1938, %v2066
    %v2087 = vadd.f32 %v1939, %v2067
    %v2088 = vadd.f32 %v1940, %v2068
    %v2089 = vadd.f32 %v1941, %v2069
    %v2090 = vadd.f32 %v1942, %v2070
    %v2091 = vadd.f32 %v1943, %v2071
    %v2092 = vadd.f32 %v1944, %v2072
    %v2093 = vadd.f32 %v1945, %v2073
    %v2094 = vadd.f32 %v1946, %v2074
    %v2095 = vadd.f32 %v1947, %v2075
    %v2096 = vadd.f32 %v1948, %v2076
    %v2097 = vadd.f32 %v1949, %v2077
    %v2098 = vadd.f32 %v1950, %v2078
    %v2099 = vadd.f32 %v1951, %v2079
    %v2100 = vadd.f32 %v1952, %v2080
    %v2101 = vadd.f32 %v1953, %v2081
    %v2102 = vadd.f32 %v1954, %v2082
    %v2103 = vadd.f32 %v1955, %v2083
    %v2104 = vadd.f32 %v1956, %v2084
    %v2105 = vadd.f32 %v1957, %v2085
    %s2106 = scalar_lea.vmem %s9, 8
    %v2107 = vld [vmem:[%s2106] sm:$0x1]
    %v2109 = vlaneseq
    %v2110 = vshrl.u32 %v2109, 7
    %v2111 = vsub.s32 0, %v2110
    %v2112 = vrot.slane %v2107, %v2111
    %v2114 = vmul.f32 %v1037, %v2112
    %v2115 = vmul.f32 %v1093, %v2112
    %v2116 = vmul.f32 %v1043, %v2112
    %v2117 = vmul.f32 %v1045, %v2112
    %v2118 = vmul.f32 %v1047, %v2112
    %v2119 = vmul.f32 %v1049, %v2112
    %v2120 = vmul.f32 %v1051, %v2112
    %v2121 = vmul.f32 %v1053, %v2112
    %v2122 = vmul.f32 %v1055, %v2112
    %v2123 = vmul.f32 %v1057, %v2112
    %v2124 = vmul.f32 %v1059, %v2112
    %v2125 = vmul.f32 %v1061, %v2112
    %v2126 = vmul.f32 %v1063, %v2112
    %v2127 = vmul.f32 %v1065, %v2112
    %v2128 = vmul.f32 %v1067, %v2112
    %v2129 = vmul.f32 %v1069, %v2112
    %v2130 = vmul.f32 %v1071, %v2112
    %v2131 = vmul.f32 %v1073, %v2112
    %v2132 = vmul.f32 %v1074, %v2112
    %v2133 = vmul.f32 %v1035, %v2112
    %2134 = vset.pattern.permute.xlu0 8
    %2135 = vperm.xlu0 %2134, %v573
    %v2136 = vpop.permute.xlu0 %2135
    %2138 = vset.pattern.permute.xlu0 8
    %2139 = vperm.xlu0 %2138, %v574
    %v2140 = vpop.permute.xlu0 %2139
    %2142 = vset.pattern.permute.xlu0 8
    %2143 = vperm.xlu0 %2142, %v575
    %v2144 = vpop.permute.xlu0 %2143
    %2146 = vset.pattern.permute.xlu0 8
    %2147 = vperm.xlu0 %2146, %v576
    %v2148 = vpop.permute.xlu0 %2147
    %2150 = vset.pattern.permute.xlu0 8
    %2151 = vperm.xlu0 %2150, %v577
    %v2152 = vpop.permute.xlu0 %2151
    %2154 = vset.pattern.permute.xlu0 8
    %2155 = vperm.xlu0 %2154, %v578
    %v2156 = vpop.permute.xlu0 %2155
    %2158 = vset.pattern.permute.xlu0 8
    %2159 = vperm.xlu0 %2158, %v579
    %v2160 = vpop.permute.xlu0 %2159
    %2162 = vset.pattern.permute.xlu0 8
    %2163 = vperm.xlu0 %2162, %v580
    %v2164 = vpop.permute.xlu0 %2163
    %2166 = vset.pattern.permute.xlu0 8
    %2167 = vperm.xlu0 %2166, %v581
    %v2168 = vpop.permute.xlu0 %2167
    %2170 = vset.pattern.permute.xlu0 8
    %2171 = vperm.xlu0 %2170, %v582
    %v2172 = vpop.permute.xlu0 %2171
    %2174 = vset.pattern.permute.xlu0 8
    %2175 = vperm.xlu0 %2174, %v583
    %v2176 = vpop.permute.xlu0 %2175
    %2178 = vset.pattern.permute.xlu0 8
    %2179 = vperm.xlu0 %2178, %v584
    %v2180 = vpop.permute.xlu0 %2179
    %2182 = vset.pattern.permute.xlu0 8
    %2183 = vperm.xlu0 %2182, %v585
    %v2184 = vpop.permute.xlu0 %2183
    %2186 = vset.pattern.permute.xlu0 8
    %2187 = vperm.xlu0 %2186, %v586
    %v2188 = vpop.permute.xlu0 %2187
    %2190 = vset.pattern.permute.xlu0 8
    %2191 = vperm.xlu0 %2190, %v587
    %v2192 = vpop.permute.xlu0 %2191
    %2194 = vset.pattern.permute.xlu0 8
    %2195 = vperm.xlu0 %2194, %v588
    %v2196 = vpop.permute.xlu0 %2195
    %2198 = vset.pattern.permute.xlu0 8
    %2199 = vperm.xlu0 %2198, %v589
    %v2200 = vpop.permute.xlu0 %2199
    %2202 = vset.pattern.permute.xlu0 8
    %2203 = vperm.xlu0 %2202, %v590
    %v2204 = vpop.permute.xlu0 %2203
    %2206 = vset.pattern.permute.xlu0 8
    %2207 = vperm.xlu0 %2206, %v591
    %v2208 = vpop.permute.xlu0 %2207
    %2210 = vset.pattern.permute.xlu0 8
    %2211 = vperm.xlu0 %2210, %v592
    %v2212 = vpop.permute.xlu0 %2211
    %v2214 = vmul.f32 %v2114, %v2136
    %v2215 = vmul.f32 %v2115, %v2140
    %v2216 = vmul.f32 %v2116, %v2144
    %v2217 = vmul.f32 %v2117, %v2148
    %v2218 = vmul.f32 %v2118, %v2152
    %v2219 = vmul.f32 %v2119, %v2156
    %v2220 = vmul.f32 %v2120, %v2160
    %v2221 = vmul.f32 %v2121, %v2164
    %v2222 = vmul.f32 %v2122, %v2168
    %v2223 = vmul.f32 %v2123, %v2172
    %v2224 = vmul.f32 %v2124, %v2176
    %v2225 = vmul.f32 %v2125, %v2180
    %v2226 = vmul.f32 %v2126, %v2184
    %v2227 = vmul.f32 %v2127, %v2188
    %v2228 = vmul.f32 %v2128, %v2192
    %v2229 = vmul.f32 %v2129, %v2196
    %v2230 = vmul.f32 %v2130, %v2200
    %v2231 = vmul.f32 %v2131, %v2204
    %v2232 = vmul.f32 %v2132, %v2208
    %v2233 = vmul.f32 %v2133, %v2212
    %v2234 = vadd.f32 %v2086, %v2214
    %v2235 = vadd.f32 %v2087, %v2215
    %v2236 = vadd.f32 %v2088, %v2216
    %v2237 = vadd.f32 %v2089, %v2217
    %v2238 = vadd.f32 %v2090, %v2218
    %v2239 = vadd.f32 %v2091, %v2219
    %v2240 = vadd.f32 %v2092, %v2220
    %v2241 = vadd.f32 %v2093, %v2221
    %v2242 = vadd.f32 %v2094, %v2222
    %v2243 = vadd.f32 %v2095, %v2223
    %v2244 = vadd.f32 %v2096, %v2224
    %v2245 = vadd.f32 %v2097, %v2225
    %v2246 = vadd.f32 %v2098, %v2226
    %v2247 = vadd.f32 %v2099, %v2227
    %v2248 = vadd.f32 %v2100, %v2228
    %v2249 = vadd.f32 %v2101, %v2229
    %v2250 = vadd.f32 %v2102, %v2230
    %v2251 = vadd.f32 %v2103, %v2231
    %v2252 = vadd.f32 %v2104, %v2232
    %v2253 = vadd.f32 %v2105, %v2233
    %s2254 = scalar_lea.vmem %s9, 9
    %v2255 = vld [vmem:[%s2254] sm:$0x1]
    %v2257 = vlaneseq
    %v2258 = vshrl.u32 %v2257, 7
    %v2259 = vsub.s32 0, %v2258
    %v2260 = vrot.slane %v2255, %v2259
    %v2262 = vmul.f32 %v674, %v2260
    %v2263 = vmul.f32 %v624, %v2260
    %v2264 = vmul.f32 %v626, %v2260
    %v2265 = vmul.f32 %v628, %v2260
    %v2266 = vmul.f32 %v630, %v2260
    %v2267 = vmul.f32 %v632, %v2260
    %v2268 = vmul.f32 %v634, %v2260
    %v2269 = vmul.f32 %v636, %v2260
    %v2270 = vmul.f32 %v638, %v2260
    %v2271 = vmul.f32 %v640, %v2260
    %v2272 = vmul.f32 %v642, %v2260
    %v2273 = vmul.f32 %v644, %v2260
    %v2274 = vmul.f32 %v646, %v2260
    %v2275 = vmul.f32 %v648, %v2260
    %v2276 = vmul.f32 %v650, %v2260
    %v2277 = vmul.f32 %v652, %v2260
    %v2278 = vmul.f32 %v654, %v2260
    %v2279 = vmul.f32 %v655, %v2260
    %v2280 = vmul.f32 %v599, %v2260
    %v2281 = vmul.f32 %v601, %v2260
    %2282 = vset.pattern.permute.xlu0 9
    %2283 = vperm.xlu0 %2282, %v573
    %v2284 = vpop.permute.xlu0 %2283
    %2286 = vset.pattern.permute.xlu0 9
    %2287 = vperm.xlu0 %2286, %v574
    %v2288 = vpop.permute.xlu0 %2287
    %2290 = vset.pattern.permute.xlu0 9
    %2291 = vperm.xlu0 %2290, %v575
    %v2292 = vpop.permute.xlu0 %2291
    %2294 = vset.pattern.permute.xlu0 9
    %2295 = vperm.xlu0 %2294, %v576
    %v2296 = vpop.permute.xlu0 %2295
    %2298 = vset.pattern.permute.xlu0 9
    %2299 = vperm.xlu0 %2298, %v577
    %v2300 = vpop.permute.xlu0 %2299
    %2302 = vset.pattern.permute.xlu0 9
    %2303 = vperm.xlu0 %2302, %v578
    %v2304 = vpop.permute.xlu0 %2303
    %2306 = vset.pattern.permute.xlu0 9
    %2307 = vperm.xlu0 %2306, %v579
    %v2308 = vpop.permute.xlu0 %2307
    %2310 = vset.pattern.permute.xlu0 9
    %2311 = vperm.xlu0 %2310, %v580
    %v2312 = vpop.permute.xlu0 %2311
    %2314 = vset.pattern.permute.xlu0 9
    %2315 = vperm.xlu0 %2314, %v581
    %v2316 = vpop.permute.xlu0 %2315
    %2318 = vset.pattern.permute.xlu0 9
    %2319 = vperm.xlu0 %2318, %v582
    %v2320 = vpop.permute.xlu0 %2319
    %2322 = vset.pattern.permute.xlu0 9
    %2323 = vperm.xlu0 %2322, %v583
    %v2324 = vpop.permute.xlu0 %2323
    %2326 = vset.pattern.permute.xlu0 9
    %2327 = vperm.xlu0 %2326, %v584
    %v2328 = vpop.permute.xlu0 %2327
    %2330 = vset.pattern.permute.xlu0 9
    %2331 = vperm.xlu0 %2330, %v585
    %v2332 = vpop.permute.xlu0 %2331
    %2334 = vset.pattern.permute.xlu0 9
    %2335 = vperm.xlu0 %2334, %v586
    %v2336 = vpop.permute.xlu0 %2335
    %2338 = vset.pattern.permute.xlu0 9
    %2339 = vperm.xlu0 %2338, %v587
    %v2340 = vpop.permute.xlu0 %2339
    %2342 = vset.pattern.permute.xlu0 9
    %2343 = vperm.xlu0 %2342, %v588
    %v2344 = vpop.permute.xlu0 %2343
    %2346 = vset.pattern.permute.xlu0 9
    %2347 = vperm.xlu0 %2346, %v589
    %v2348 = vpop.permute.xlu0 %2347
    %2350 = vset.pattern.permute.xlu0 9
    %2351 = vperm.xlu0 %2350, %v590
    %v2352 = vpop.permute.xlu0 %2351
    %2354 = vset.pattern.permute.xlu0 9
    %2355 = vperm.xlu0 %2354, %v591
    %v2356 = vpop.permute.xlu0 %2355
    %2358 = vset.pattern.permute.xlu0 9
    %2359 = vperm.xlu0 %2358, %v592
    %v2360 = vpop.permute.xlu0 %2359
    %v2362 = vmul.f32 %v2262, %v2284
    %v2363 = vmul.f32 %v2263, %v2288
    %v2364 = vmul.f32 %v2264, %v2292
    %v2365 = vmul.f32 %v2265, %v2296
    %v2366 = vmul.f32 %v2266, %v2300
    %v2367 = vmul.f32 %v2267, %v2304
    %v2368 = vmul.f32 %v2268, %v2308
    %v2369 = vmul.f32 %v2269, %v2312
    %v2370 = vmul.f32 %v2270, %v2316
    %v2371 = vmul.f32 %v2271, %v2320
    %v2372 = vmul.f32 %v2272, %v2324
    %v2373 = vmul.f32 %v2273, %v2328
    %v2374 = vmul.f32 %v2274, %v2332
    %v2375 = vmul.f32 %v2275, %v2336
    %v2376 = vmul.f32 %v2276, %v2340
    %v2377 = vmul.f32 %v2277, %v2344
    %v2378 = vmul.f32 %v2278, %v2348
    %v2379 = vmul.f32 %v2279, %v2352
    %v2380 = vmul.f32 %v2280, %v2356
    %v2381 = vmul.f32 %v2281, %v2360
    %v2382 = vadd.f32 %v2234, %v2362
    %v2383 = vadd.f32 %v2235, %v2363
    %v2384 = vadd.f32 %v2236, %v2364
    %v2385 = vadd.f32 %v2237, %v2365
    %v2386 = vadd.f32 %v2238, %v2366
    %v2387 = vadd.f32 %v2239, %v2367
    %v2388 = vadd.f32 %v2240, %v2368
    %v2389 = vadd.f32 %v2241, %v2369
    %v2390 = vadd.f32 %v2242, %v2370
    %v2391 = vadd.f32 %v2243, %v2371
    %v2392 = vadd.f32 %v2244, %v2372
    %v2393 = vadd.f32 %v2245, %v2373
    %v2394 = vadd.f32 %v2246, %v2374
    %v2395 = vadd.f32 %v2247, %v2375
    %v2396 = vadd.f32 %v2248, %v2376
    %v2397 = vadd.f32 %v2249, %v2377
    %v2398 = vadd.f32 %v2250, %v2378
    %v2399 = vadd.f32 %v2251, %v2379
    %v2400 = vadd.f32 %v2252, %v2380
    %v2401 = vadd.f32 %v2253, %v2381
    %s2402 = scalar_lea.vmem %s9, 10
    %v2403 = vld [vmem:[%s2402] sm:$0x1]
    %v2405 = vlaneseq
    %v2406 = vshrl.u32 %v2405, 7
    %v2407 = vsub.s32 0, %v2406
    %v2408 = vrot.slane %v2403, %v2407
    %v2410 = vmul.f32 %v883, %v2408
    %v2411 = vmul.f32 %v833, %v2408
    %v2412 = vmul.f32 %v835, %v2408
    %v2413 = vmul.f32 %v837, %v2408
    %v2414 = vmul.f32 %v839, %v2408
    %v2415 = vmul.f32 %v841, %v2408
    %v2416 = vmul.f32 %v843, %v2408
    %v2417 = vmul.f32 %v845, %v2408
    %v2418 = vmul.f32 %v847, %v2408
    %v2419 = vmul.f32 %v849, %v2408
    %v2420 = vmul.f32 %v851, %v2408
    %v2421 = vmul.f32 %v853, %v2408
    %v2422 = vmul.f32 %v855, %v2408
    %v2423 = vmul.f32 %v857, %v2408
    %v2424 = vmul.f32 %v859, %v2408
    %v2425 = vmul.f32 %v861, %v2408
    %v2426 = vmul.f32 %v863, %v2408
    %v2427 = vmul.f32 %v864, %v2408
    %v2428 = vmul.f32 %v825, %v2408
    %v2429 = vmul.f32 %v827, %v2408
    %2430 = vset.pattern.permute.xlu0 10
    %2431 = vperm.xlu0 %2430, %v573
    %v2432 = vpop.permute.xlu0 %2431
    %2434 = vset.pattern.permute.xlu0 10
    %2435 = vperm.xlu0 %2434, %v574
    %v2436 = vpop.permute.xlu0 %2435
    %2438 = vset.pattern.permute.xlu0 10
    %2439 = vperm.xlu0 %2438, %v575
    %v2440 = vpop.permute.xlu0 %2439
    %2442 = vset.pattern.permute.xlu0 10
    %2443 = vperm.xlu0 %2442, %v576
    %v2444 = vpop.permute.xlu0 %2443
    %2446 = vset.pattern.permute.xlu0 10
    %2447 = vperm.xlu0 %2446, %v577
    %v2448 = vpop.permute.xlu0 %2447
    %2450 = vset.pattern.permute.xlu0 10
    %2451 = vperm.xlu0 %2450, %v578
    %v2452 = vpop.permute.xlu0 %2451
    %2454 = vset.pattern.permute.xlu0 10
    %2455 = vperm.xlu0 %2454, %v579
    %v2456 = vpop.permute.xlu0 %2455
    %2458 = vset.pattern.permute.xlu0 10
    %2459 = vperm.xlu0 %2458, %v580
    %v2460 = vpop.permute.xlu0 %2459
    %2462 = vset.pattern.permute.xlu0 10
    %2463 = vperm.xlu0 %2462, %v581
    %v2464 = vpop.permute.xlu0 %2463
    %2466 = vset.pattern.permute.xlu0 10
    %2467 = vperm.xlu0 %2466, %v582
    %v2468 = vpop.permute.xlu0 %2467
    %2470 = vset.pattern.permute.xlu0 10
    %2471 = vperm.xlu0 %2470, %v583
    %v2472 = vpop.permute.xlu0 %2471
    %2474 = vset.pattern.permute.xlu0 10
    %2475 = vperm.xlu0 %2474, %v584
    %v2476 = vpop.permute.xlu0 %2475
    %2478 = vset.pattern.permute.xlu0 10
    %2479 = vperm.xlu0 %2478, %v585
    %v2480 = vpop.permute.xlu0 %2479
    %2482 = vset.pattern.permute.xlu0 10
    %2483 = vperm.xlu0 %2482, %v586
    %v2484 = vpop.permute.xlu0 %2483
    %2486 = vset.pattern.permute.xlu0 10
    %2487 = vperm.xlu0 %2486, %v587
    %v2488 = vpop.permute.xlu0 %2487
    %2490 = vset.pattern.permute.xlu0 10
    %2491 = vperm.xlu0 %2490, %v588
    %v2492 = vpop.permute.xlu0 %2491
    %2494 = vset.pattern.permute.xlu0 10
    %2495 = vperm.xlu0 %2494, %v589
    %v2496 = vpop.permute.xlu0 %2495
    %2498 = vset.pattern.permute.xlu0 10
    %2499 = vperm.xlu0 %2498, %v590
    %v2500 = vpop.permute.xlu0 %2499
    %2502 = vset.pattern.permute.xlu0 10
    %2503 = vperm.xlu0 %2502, %v591
    %v2504 = vpop.permute.xlu0 %2503
    %2506 = vset.pattern.permute.xlu0 10
    %2507 = vperm.xlu0 %2506, %v592
    %v2508 = vpop.permute.xlu0 %2507
    %v2510 = vmul.f32 %v2410, %v2432
    %v2511 = vmul.f32 %v2411, %v2436
    %v2512 = vmul.f32 %v2412, %v2440
    %v2513 = vmul.f32 %v2413, %v2444
    %v2514 = vmul.f32 %v2414, %v2448
    %v2515 = vmul.f32 %v2415, %v2452
    %v2516 = vmul.f32 %v2416, %v2456
    %v2517 = vmul.f32 %v2417, %v2460
    %v2518 = vmul.f32 %v2418, %v2464
    %v2519 = vmul.f32 %v2419, %v2468
    %v2520 = vmul.f32 %v2420, %v2472
    %v2521 = vmul.f32 %v2421, %v2476
    %v2522 = vmul.f32 %v2422, %v2480
    %v2523 = vmul.f32 %v2423, %v2484
    %v2524 = vmul.f32 %v2424, %v2488
    %v2525 = vmul.f32 %v2425, %v2492
    %v2526 = vmul.f32 %v2426, %v2496
    %v2527 = vmul.f32 %v2427, %v2500
    %v2528 = vmul.f32 %v2428, %v2504
    %v2529 = vmul.f32 %v2429, %v2508
    %v2530 = vadd.f32 %v2382, %v2510
    %v2531 = vadd.f32 %v2383, %v2511
    %v2532 = vadd.f32 %v2384, %v2512
    %v2533 = vadd.f32 %v2385, %v2513
    %v2534 = vadd.f32 %v2386, %v2514
    %v2535 = vadd.f32 %v2387, %v2515
    %v2536 = vadd.f32 %v2388, %v2516
    %v2537 = vadd.f32 %v2389, %v2517
    %v2538 = vadd.f32 %v2390, %v2518
    %v2539 = vadd.f32 %v2391, %v2519
    %v2540 = vadd.f32 %v2392, %v2520
    %v2541 = vadd.f32 %v2393, %v2521
    %v2542 = vadd.f32 %v2394, %v2522
    %v2543 = vadd.f32 %v2395, %v2523
    %v2544 = vadd.f32 %v2396, %v2524
    %v2545 = vadd.f32 %v2397, %v2525
    %v2546 = vadd.f32 %v2398, %v2526
    %v2547 = vadd.f32 %v2399, %v2527
    %v2548 = vadd.f32 %v2400, %v2528
    %v2549 = vadd.f32 %v2401, %v2529
    %s2550 = scalar_lea.vmem %s9, 11
    %v2551 = vld [vmem:[%s2550] sm:$0x1]
    %v2553 = vlaneseq
    %v2554 = vshrl.u32 %v2553, 7
    %v2555 = vsub.s32 0, %v2554
    %v2556 = vrot.slane %v2551, %v2555
    %v2558 = vmul.f32 %v1093, %v2556
    %v2559 = vmul.f32 %v1043, %v2556
    %v2560 = vmul.f32 %v1045, %v2556
    %v2561 = vmul.f32 %v1047, %v2556
    %v2562 = vmul.f32 %v1049, %v2556
    %v2563 = vmul.f32 %v1051, %v2556
    %v2564 = vmul.f32 %v1053, %v2556
    %v2565 = vmul.f32 %v1055, %v2556
    %v2566 = vmul.f32 %v1057, %v2556
    %v2567 = vmul.f32 %v1059, %v2556
    %v2568 = vmul.f32 %v1061, %v2556
    %v2569 = vmul.f32 %v1063, %v2556
    %v2570 = vmul.f32 %v1065, %v2556
    %v2571 = vmul.f32 %v1067, %v2556
    %v2572 = vmul.f32 %v1069, %v2556
    %v2573 = vmul.f32 %v1071, %v2556
    %v2574 = vmul.f32 %v1073, %v2556
    %v2575 = vmul.f32 %v1074, %v2556
    %v2576 = vmul.f32 %v1035, %v2556
    %v2577 = vmul.f32 %v1037, %v2556
    %2578 = vset.pattern.permute.xlu0 11
    %2579 = vperm.xlu0 %2578, %v573
    %v2580 = vpop.permute.xlu0 %2579
    %2582 = vset.pattern.permute.xlu0 11
    %2583 = vperm.xlu0 %2582, %v574
    %v2584 = vpop.permute.xlu0 %2583
    %2586 = vset.pattern.permute.xlu0 11
    %2587 = vperm.xlu0 %2586, %v575
    %v2588 = vpop.permute.xlu0 %2587
    %2590 = vset.pattern.permute.xlu0 11
    %2591 = vperm.xlu0 %2590, %v576
    %v2592 = vpop.permute.xlu0 %2591
    %2594 = vset.pattern.permute.xlu0 11
    %2595 = vperm.xlu0 %2594, %v577
    %v2596 = vpop.permute.xlu0 %2595
    %2598 = vset.pattern.permute.xlu0 11
    %2599 = vperm.xlu0 %2598, %v578
    %v2600 = vpop.permute.xlu0 %2599
    %2602 = vset.pattern.permute.xlu0 11
    %2603 = vperm.xlu0 %2602, %v579
    %v2604 = vpop.permute.xlu0 %2603
    %2606 = vset.pattern.permute.xlu0 11
    %2607 = vperm.xlu0 %2606, %v580
    %v2608 = vpop.permute.xlu0 %2607
    %2610 = vset.pattern.permute.xlu0 11
    %2611 = vperm.xlu0 %2610, %v581
    %v2612 = vpop.permute.xlu0 %2611
    %2614 = vset.pattern.permute.xlu0 11
    %2615 = vperm.xlu0 %2614, %v582
    %v2616 = vpop.permute.xlu0 %2615
    %2618 = vset.pattern.permute.xlu0 11
    %2619 = vperm.xlu0 %2618, %v583
    %v2620 = vpop.permute.xlu0 %2619
    %2622 = vset.pattern.permute.xlu0 11
    %2623 = vperm.xlu0 %2622, %v584
    %v2624 = vpop.permute.xlu0 %2623
    %2626 = vset.pattern.permute.xlu0 11
    %2627 = vperm.xlu0 %2626, %v585
    %v2628 = vpop.permute.xlu0 %2627
    %2630 = vset.pattern.permute.xlu0 11
    %2631 = vperm.xlu0 %2630, %v586
    %v2632 = vpop.permute.xlu0 %2631
    %2634 = vset.pattern.permute.xlu0 11
    %2635 = vperm.xlu0 %2634, %v587
    %v2636 = vpop.permute.xlu0 %2635
    %2638 = vset.pattern.permute.xlu0 11
    %2639 = vperm.xlu0 %2638, %v588
    %v2640 = vpop.permute.xlu0 %2639
    %2642 = vset.pattern.permute.xlu0 11
    %2643 = vperm.xlu0 %2642, %v589
    %v2644 = vpop.permute.xlu0 %2643
    %2646 = vset.pattern.permute.xlu0 11
    %2647 = vperm.xlu0 %2646, %v590
    %v2648 = vpop.permute.xlu0 %2647
    %2650 = vset.pattern.permute.xlu0 11
    %2651 = vperm.xlu0 %2650, %v591
    %v2652 = vpop.permute.xlu0 %2651
    %2654 = vset.pattern.permute.xlu0 11
    %2655 = vperm.xlu0 %2654, %v592
    %v2656 = vpop.permute.xlu0 %2655
    %v2658 = vmul.f32 %v2558, %v2580
    %v2659 = vmul.f32 %v2559, %v2584
    %v2660 = vmul.f32 %v2560, %v2588
    %v2661 = vmul.f32 %v2561, %v2592
    %v2662 = vmul.f32 %v2562, %v2596
    %v2663 = vmul.f32 %v2563, %v2600
    %v2664 = vmul.f32 %v2564, %v2604
    %v2665 = vmul.f32 %v2565, %v2608
    %v2666 = vmul.f32 %v2566, %v2612
    %v2667 = vmul.f32 %v2567, %v2616
    %v2668 = vmul.f32 %v2568, %v2620
    %v2669 = vmul.f32 %v2569, %v2624
    %v2670 = vmul.f32 %v2570, %v2628
    %v2671 = vmul.f32 %v2571, %v2632
    %v2672 = vmul.f32 %v2572, %v2636
    %v2673 = vmul.f32 %v2573, %v2640
    %v2674 = vmul.f32 %v2574, %v2644
    %v2675 = vmul.f32 %v2575, %v2648
    %v2676 = vmul.f32 %v2576, %v2652
    %v2677 = vmul.f32 %v2577, %v2656
    %v2678 = vadd.f32 %v2530, %v2658
    %v2679 = vadd.f32 %v2531, %v2659
    %v2680 = vadd.f32 %v2532, %v2660
    %v2681 = vadd.f32 %v2533, %v2661
    %v2682 = vadd.f32 %v2534, %v2662
    %v2683 = vadd.f32 %v2535, %v2663
    %v2684 = vadd.f32 %v2536, %v2664
    %v2685 = vadd.f32 %v2537, %v2665
    %v2686 = vadd.f32 %v2538, %v2666
    %v2687 = vadd.f32 %v2539, %v2667
    %v2688 = vadd.f32 %v2540, %v2668
    %v2689 = vadd.f32 %v2541, %v2669
    %v2690 = vadd.f32 %v2542, %v2670
    %v2691 = vadd.f32 %v2543, %v2671
    %v2692 = vadd.f32 %v2544, %v2672
    %v2693 = vadd.f32 %v2545, %v2673
    %v2694 = vadd.f32 %v2546, %v2674
    %v2695 = vadd.f32 %v2547, %v2675
    %v2696 = vadd.f32 %v2548, %v2676
    %v2697 = vadd.f32 %v2549, %v2677
    %s2698 = scalar_lea.vmem %s9, 12
    %v2699 = vld [vmem:[%s2698] sm:$0x1]
    %v2701 = vlaneseq
    %v2702 = vshrl.u32 %v2701, 7
    %v2703 = vsub.s32 0, %v2702
    %v2704 = vrot.slane %v2699, %v2703
    %v2706 = vmul.f32 %v1303, %v2704
    %v2707 = vmul.f32 %v1253, %v2704
    %v2708 = vmul.f32 %v1255, %v2704
    %v2709 = vmul.f32 %v1257, %v2704
    %v2710 = vmul.f32 %v1259, %v2704
    %v2711 = vmul.f32 %v1261, %v2704
    %v2712 = vmul.f32 %v1263, %v2704
    %v2713 = vmul.f32 %v1265, %v2704
    %v2714 = vmul.f32 %v1267, %v2704
    %v2715 = vmul.f32 %v1269, %v2704
    %v2716 = vmul.f32 %v1271, %v2704
    %v2717 = vmul.f32 %v1273, %v2704
    %v2718 = vmul.f32 %v1275, %v2704
    %v2719 = vmul.f32 %v1277, %v2704
    %v2720 = vmul.f32 %v1279, %v2704
    %v2721 = vmul.f32 %v1281, %v2704
    %v2722 = vmul.f32 %v1283, %v2704
    %v2723 = vmul.f32 %v1284, %v2704
    %v2724 = vmul.f32 %v1245, %v2704
    %v2725 = vmul.f32 %v1247, %v2704
    %2726 = vset.pattern.permute.xlu0 12
    %2727 = vperm.xlu0 %2726, %v573
    %v2728 = vpop.permute.xlu0 %2727
    %2730 = vset.pattern.permute.xlu0 12
    %2731 = vperm.xlu0 %2730, %v574
    %v2732 = vpop.permute.xlu0 %2731
    %2734 = vset.pattern.permute.xlu0 12
    %2735 = vperm.xlu0 %2734, %v575
    %v2736 = vpop.permute.xlu0 %2735
    %2738 = vset.pattern.permute.xlu0 12
    %2739 = vperm.xlu0 %2738, %v576
    %v2740 = vpop.permute.xlu0 %2739
    %2742 = vset.pattern.permute.xlu0 12
    %2743 = vperm.xlu0 %2742, %v577
    %v2744 = vpop.permute.xlu0 %2743
    %2746 = vset.pattern.permute.xlu0 12
    %2747 = vperm.xlu0 %2746, %v578
    %v2748 = vpop.permute.xlu0 %2747
    %2750 = vset.pattern.permute.xlu0 12
    %2751 = vperm.xlu0 %2750, %v579
    %v2752 = vpop.permute.xlu0 %2751
    %2754 = vset.pattern.permute.xlu0 12
    %2755 = vperm.xlu0 %2754, %v580
    %v2756 = vpop.permute.xlu0 %2755
    %2758 = vset.pattern.permute.xlu0 12
    %2759 = vperm.xlu0 %2758, %v581
    %v2760 = vpop.permute.xlu0 %2759
    %2762 = vset.pattern.permute.xlu0 12
    %2763 = vperm.xlu0 %2762, %v582
    %v2764 = vpop.permute.xlu0 %2763
    %2766 = vset.pattern.permute.xlu0 12
    %2767 = vperm.xlu0 %2766, %v583
    %v2768 = vpop.permute.xlu0 %2767
    %2770 = vset.pattern.permute.xlu0 12
    %2771 = vperm.xlu0 %2770, %v584
    %v2772 = vpop.permute.xlu0 %2771
    %2774 = vset.pattern.permute.xlu0 12
    %2775 = vperm.xlu0 %2774, %v585
    %v2776 = vpop.permute.xlu0 %2775
    %2778 = vset.pattern.permute.xlu0 12
    %2779 = vperm.xlu0 %2778, %v586
    %v2780 = vpop.permute.xlu0 %2779
    %2782 = vset.pattern.permute.xlu0 12
    %2783 = vperm.xlu0 %2782, %v587
    %v2784 = vpop.permute.xlu0 %2783
    %2786 = vset.pattern.permute.xlu0 12
    %2787 = vperm.xlu0 %2786, %v588
    %v2788 = vpop.permute.xlu0 %2787
    %2790 = vset.pattern.permute.xlu0 12
    %2791 = vperm.xlu0 %2790, %v589
    %v2792 = vpop.permute.xlu0 %2791
    %2794 = vset.pattern.permute.xlu0 12
    %2795 = vperm.xlu0 %2794, %v590
    %v2796 = vpop.permute.xlu0 %2795
    %2798 = vset.pattern.permute.xlu0 12
    %2799 = vperm.xlu0 %2798, %v591
    %v2800 = vpop.permute.xlu0 %2799
    %2802 = vset.pattern.permute.xlu0 12
    %2803 = vperm.xlu0 %2802, %v592
    %v2804 = vpop.permute.xlu0 %2803
    %v2806 = vmul.f32 %v2706, %v2728
    %v2807 = vmul.f32 %v2707, %v2732
    %v2808 = vmul.f32 %v2708, %v2736
    %v2809 = vmul.f32 %v2709, %v2740
    %v2810 = vmul.f32 %v2710, %v2744
    %v2811 = vmul.f32 %v2711, %v2748
    %v2812 = vmul.f32 %v2712, %v2752
    %v2813 = vmul.f32 %v2713, %v2756
    %v2814 = vmul.f32 %v2714, %v2760
    %v2815 = vmul.f32 %v2715, %v2764
    %v2816 = vmul.f32 %v2716, %v2768
    %v2817 = vmul.f32 %v2717, %v2772
    %v2818 = vmul.f32 %v2718, %v2776
    %v2819 = vmul.f32 %v2719, %v2780
    %v2820 = vmul.f32 %v2720, %v2784
    %v2821 = vmul.f32 %v2721, %v2788
    %v2822 = vmul.f32 %v2722, %v2792
    %v2823 = vmul.f32 %v2723, %v2796
    %v2824 = vmul.f32 %v2724, %v2800
    %v2825 = vmul.f32 %v2725, %v2804
    %v2826 = vadd.f32 %v2678, %v2806
    %v2827 = vadd.f32 %v2679, %v2807
    %v2828 = vadd.f32 %v2680, %v2808
    %v2829 = vadd.f32 %v2681, %v2809
    %v2830 = vadd.f32 %v2682, %v2810
    %v2831 = vadd.f32 %v2683, %v2811
    %v2832 = vadd.f32 %v2684, %v2812
    %v2833 = vadd.f32 %v2685, %v2813
    %v2834 = vadd.f32 %v2686, %v2814
    %v2835 = vadd.f32 %v2687, %v2815
    %v2836 = vadd.f32 %v2688, %v2816
    %v2837 = vadd.f32 %v2689, %v2817
    %v2838 = vadd.f32 %v2690, %v2818
    %v2839 = vadd.f32 %v2691, %v2819
    %v2840 = vadd.f32 %v2692, %v2820
    %v2841 = vadd.f32 %v2693, %v2821
    %v2842 = vadd.f32 %v2694, %v2822
    %v2843 = vadd.f32 %v2695, %v2823
    %v2844 = vadd.f32 %v2696, %v2824
    %v2845 = vadd.f32 %v2697, %v2825
    %s2846 = scalar_lea.vmem %s9, 13
    %v2847 = vld [vmem:[%s2846] sm:$0x1]
    %v2849 = vlaneseq
    %v2850 = vshrl.u32 %v2849, 7
    %v2851 = vsub.s32 0, %v2850
    %v2852 = vrot.slane %v2847, %v2851
    %v2854 = vmul.f32 %v553, %v2852
    %v2855 = vmul.f32 %v554, %v2852
    %v2856 = vmul.f32 %v555, %v2852
    %v2857 = vmul.f32 %v556, %v2852
    %v2858 = vmul.f32 %v557, %v2852
    %v2859 = vmul.f32 %v558, %v2852
    %v2860 = vmul.f32 %v559, %v2852
    %v2861 = vmul.f32 %v560, %v2852
    %v2862 = vmul.f32 %v561, %v2852
    %v2863 = vmul.f32 %v562, %v2852
    %v2864 = vmul.f32 %v563, %v2852
    %v2865 = vmul.f32 %v564, %v2852
    %v2866 = vmul.f32 %v565, %v2852
    %v2867 = vmul.f32 %v566, %v2852
    %v2868 = vmul.f32 %v567, %v2852
    %v2869 = vmul.f32 %v568, %v2852
    %v2870 = vmul.f32 %v569, %v2852
    %v2871 = vmul.f32 %v570, %v2852
    %v2872 = vmul.f32 %v571, %v2852
    %v2873 = vmul.f32 %v572, %v2852
    %v2874 = vadd.f32 %v2826, %v2854
    %v2875 = vadd.f32 %v2827, %v2855
    %v2876 = vadd.f32 %v2828, %v2856
    %v2877 = vadd.f32 %v2829, %v2857
    %v2878 = vadd.f32 %v2830, %v2858
    %v2879 = vadd.f32 %v2831, %v2859
    %v2880 = vadd.f32 %v2832, %v2860
    %v2881 = vadd.f32 %v2833, %v2861
    %v2882 = vadd.f32 %v2834, %v2862
    %v2883 = vadd.f32 %v2835, %v2863
    %v2884 = vadd.f32 %v2836, %v2864
    %v2885 = vadd.f32 %v2837, %v2865
    %v2886 = vadd.f32 %v2838, %v2866
    %v2887 = vadd.f32 %v2839, %v2867
    %v2888 = vadd.f32 %v2840, %v2868
    %v2889 = vadd.f32 %v2841, %v2869
    %v2890 = vadd.f32 %v2842, %v2870
    %v2891 = vadd.f32 %v2843, %v2871
    %v2892 = vadd.f32 %v2844, %v2872
    %v2893 = vadd.f32 %v2845, %v2873
    %s2894 = scalar_lea.vmem %s9, 14
    %v2895 = vld [vmem:[%s2894] sm:$0x1]
    %v2897 = vlaneseq
    %v2898 = vshrl.u32 %v2897, 7
    %v2899 = vsub.s32 0, %v2898
    %v2900 = vrot.slane %v2895, %v2899
    %v2902 = vmul.f32 %v1608, %v2900
    %v2903 = vmul.f32 %v1610, %v2900
    %v2904 = vmul.f32 %v1612, %v2900
    %v2905 = vmul.f32 %v1614, %v2900
    %v2906 = vmul.f32 %v1616, %v2900
    %v2907 = vmul.f32 %v1618, %v2900
    %v2908 = vmul.f32 %v1620, %v2900
    %v2909 = vmul.f32 %v1622, %v2900
    %v2910 = vmul.f32 %v1624, %v2900
    %v2911 = vmul.f32 %v1626, %v2900
    %v2912 = vmul.f32 %v1628, %v2900
    %v2913 = vmul.f32 %v1630, %v2900
    %v2914 = vmul.f32 %v1632, %v2900
    %v2915 = vmul.f32 %v1634, %v2900
    %v2916 = vmul.f32 %v1636, %v2900
    %v2917 = vmul.f32 %v1638, %v2900
    %v2918 = vmul.f32 %v1640, %v2900
    %v2919 = vmul.f32 %v1641, %v2900
    %v2920 = vmul.f32 %v1603, %v2900
    %v2921 = vmul.f32 %v1661, %v2900
    %2922 = vset.pattern.permute.xlu0 14
    %2923 = vperm.xlu0 %2922, %v573
    %v2924 = vpop.permute.xlu0 %2923
    %2926 = vset.pattern.permute.xlu0 14
    %2927 = vperm.xlu0 %2926, %v574
    %v2928 = vpop.permute.xlu0 %2927
    %2930 = vset.pattern.permute.xlu0 14
    %2931 = vperm.xlu0 %2930, %v575
    %v2932 = vpop.permute.xlu0 %2931
    %2934 = vset.pattern.permute.xlu0 14
    %2935 = vperm.xlu0 %2934, %v576
    %v2936 = vpop.permute.xlu0 %2935
    %2938 = vset.pattern.permute.xlu0 14
    %2939 = vperm.xlu0 %2938, %v577
    %v2940 = vpop.permute.xlu0 %2939
    %2942 = vset.pattern.permute.xlu0 14
    %2943 = vperm.xlu0 %2942, %v578
    %v2944 = vpop.permute.xlu0 %2943
    %2946 = vset.pattern.permute.xlu0 14
    %2947 = vperm.xlu0 %2946, %v579
    %v2948 = vpop.permute.xlu0 %2947
    %2950 = vset.pattern.permute.xlu0 14
    %2951 = vperm.xlu0 %2950, %v580
    %v2952 = vpop.permute.xlu0 %2951
    %2954 = vset.pattern.permute.xlu0 14
    %2955 = vperm.xlu0 %2954, %v581
    %v2956 = vpop.permute.xlu0 %2955
    %2958 = vset.pattern.permute.xlu0 14
    %2959 = vperm.xlu0 %2958, %v582
    %v2960 = vpop.permute.xlu0 %2959
    %2962 = vset.pattern.permute.xlu0 14
    %2963 = vperm.xlu0 %2962, %v583
    %v2964 = vpop.permute.xlu0 %2963
    %2966 = vset.pattern.permute.xlu0 14
    %2967 = vperm.xlu0 %2966, %v584
    %v2968 = vpop.permute.xlu0 %2967
    %2970 = vset.pattern.permute.xlu0 14
    %2971 = vperm.xlu0 %2970, %v585
    %v2972 = vpop.permute.xlu0 %2971
    %2974 = vset.pattern.permute.xlu0 14
    %2975 = vperm.xlu0 %2974, %v586
    %v2976 = vpop.permute.xlu0 %2975
    %2978 = vset.pattern.permute.xlu0 14
    %2979 = vperm.xlu0 %2978, %v587
    %v2980 = vpop.permute.xlu0 %2979
    %2982 = vset.pattern.permute.xlu0 14
    %2983 = vperm.xlu0 %2982, %v588
    %v2984 = vpop.permute.xlu0 %2983
    %2986 = vset.pattern.permute.xlu0 14
    %2987 = vperm.xlu0 %2986, %v589
    %v2988 = vpop.permute.xlu0 %2987
    %2990 = vset.pattern.permute.xlu0 14
    %2991 = vperm.xlu0 %2990, %v590
    %v2992 = vpop.permute.xlu0 %2991
    %2994 = vset.pattern.permute.xlu0 14
    %2995 = vperm.xlu0 %2994, %v591
    %v2996 = vpop.permute.xlu0 %2995
    %2998 = vset.pattern.permute.xlu0 14
    %2999 = vperm.xlu0 %2998, %v592
    %v3000 = vpop.permute.xlu0 %2999
    %v3002 = vmul.f32 %v2902, %v2924
    %v3003 = vmul.f32 %v2903, %v2928
    %v3004 = vmul.f32 %v2904, %v2932
    %v3005 = vmul.f32 %v2905, %v2936
    %v3006 = vmul.f32 %v2906, %v2940
    %v3007 = vmul.f32 %v2907, %v2944
    %v3008 = vmul.f32 %v2908, %v2948
    %v3009 = vmul.f32 %v2909, %v2952
    %v3010 = vmul.f32 %v2910, %v2956
    %v3011 = vmul.f32 %v2911, %v2960
    %v3012 = vmul.f32 %v2912, %v2964
    %v3013 = vmul.f32 %v2913, %v2968
    %v3014 = vmul.f32 %v2914, %v2972
    %v3015 = vmul.f32 %v2915, %v2976
    %v3016 = vmul.f32 %v2916, %v2980
    %v3017 = vmul.f32 %v2917, %v2984
    %v3018 = vmul.f32 %v2918, %v2988
    %v3019 = vmul.f32 %v2919, %v2992
    %v3020 = vmul.f32 %v2920, %v2996
    %v3021 = vmul.f32 %v2921, %v3000
    %v3022 = vadd.f32 %v2874, %v3002
    %v3023 = vadd.f32 %v2875, %v3003
    %v3024 = vadd.f32 %v2876, %v3004
    %v3025 = vadd.f32 %v2877, %v3005
    %v3026 = vadd.f32 %v2878, %v3006
    %v3027 = vadd.f32 %v2879, %v3007
    %v3028 = vadd.f32 %v2880, %v3008
    %v3029 = vadd.f32 %v2881, %v3009
    %v3030 = vadd.f32 %v2882, %v3010
    %v3031 = vadd.f32 %v2883, %v3011
    %v3032 = vadd.f32 %v2884, %v3012
    %v3033 = vadd.f32 %v2885, %v3013
    %v3034 = vadd.f32 %v2886, %v3014
    %v3035 = vadd.f32 %v2887, %v3015
    %v3036 = vadd.f32 %v2888, %v3016
    %v3037 = vadd.f32 %v2889, %v3017
    %v3038 = vadd.f32 %v2890, %v3018
    %v3039 = vadd.f32 %v2891, %v3019
    %v3040 = vadd.f32 %v2892, %v3020
    %v3041 = vadd.f32 %v2893, %v3021
    %s3042 = scalar_lea.vmem %s9, 15
    %v3043 = vld [vmem:[%s3042] sm:$0x1]
    %v3045 = vlaneseq
    %v3046 = vshrl.u32 %v3045, 7
    %v3047 = vsub.s32 0, %v3046
    %v3048 = vrot.slane %v3043, %v3047
    %v3050 = vmul.f32 %v624, %v3048
    %v3051 = vmul.f32 %v626, %v3048
    %v3052 = vmul.f32 %v628, %v3048
    %v3053 = vmul.f32 %v630, %v3048
    %v3054 = vmul.f32 %v632, %v3048
    %v3055 = vmul.f32 %v634, %v3048
    %v3056 = vmul.f32 %v636, %v3048
    %v3057 = vmul.f32 %v638, %v3048
    %v3058 = vmul.f32 %v640, %v3048
    %v3059 = vmul.f32 %v642, %v3048
    %v3060 = vmul.f32 %v644, %v3048
    %v3061 = vmul.f32 %v646, %v3048
    %v3062 = vmul.f32 %v648, %v3048
    %v3063 = vmul.f32 %v650, %v3048
    %v3064 = vmul.f32 %v652, %v3048
    %v3065 = vmul.f32 %v654, %v3048
    %v3066 = vmul.f32 %v655, %v3048
    %v3067 = vmul.f32 %v599, %v3048
    %v3068 = vmul.f32 %v601, %v3048
    %v3069 = vmul.f32 %v674, %v3048
    %3070 = vset.pattern.permute.xlu0 15
    %3071 = vperm.xlu0 %3070, %v573
    %v3072 = vpop.permute.xlu0 %3071
    %3074 = vset.pattern.permute.xlu0 15
    %3075 = vperm.xlu0 %3074, %v574
    %v3076 = vpop.permute.xlu0 %3075
    %3078 = vset.pattern.permute.xlu0 15
    %3079 = vperm.xlu0 %3078, %v575
    %v3080 = vpop.permute.xlu0 %3079
    %3082 = vset.pattern.permute.xlu0 15
    %3083 = vperm.xlu0 %3082, %v576
    %v3084 = vpop.permute.xlu0 %3083
    %3086 = vset.pattern.permute.xlu0 15
    %3087 = vperm.xlu0 %3086, %v577
    %v3088 = vpop.permute.xlu0 %3087
    %3090 = vset.pattern.permute.xlu0 15
    %3091 = vperm.xlu0 %3090, %v578
    %v3092 = vpop.permute.xlu0 %3091
    %3094 = vset.pattern.permute.xlu0 15
    %3095 = vperm.xlu0 %3094, %v579
    %v3096 = vpop.permute.xlu0 %3095
    %3098 = vset.pattern.permute.xlu0 15
    %3099 = vperm.xlu0 %3098, %v580
    %v3100 = vpop.permute.xlu0 %3099
    %3102 = vset.pattern.permute.xlu0 15
    %3103 = vperm.xlu0 %3102, %v581
    %v3104 = vpop.permute.xlu0 %3103
    %3106 = vset.pattern.permute.xlu0 15
    %3107 = vperm.xlu0 %3106, %v582
    %v3108 = vpop.permute.xlu0 %3107
    %3110 = vset.pattern.permute.xlu0 15
    %3111 = vperm.xlu0 %3110, %v583
    %v3112 = vpop.permute.xlu0 %3111
    %3114 = vset.pattern.permute.xlu0 15
    %3115 = vperm.xlu0 %3114, %v584
    %v3116 = vpop.permute.xlu0 %3115
    %3118 = vset.pattern.permute.xlu0 15
    %3119 = vperm.xlu0 %3118, %v585
    %v3120 = vpop.permute.xlu0 %3119
    %3122 = vset.pattern.permute.xlu0 15
    %3123 = vperm.xlu0 %3122, %v586
    %v3124 = vpop.permute.xlu0 %3123
    %3126 = vset.pattern.permute.xlu0 15
    %3127 = vperm.xlu0 %3126, %v587
    %v3128 = vpop.permute.xlu0 %3127
    %3130 = vset.pattern.permute.xlu0 15
    %3131 = vperm.xlu0 %3130, %v588
    %v3132 = vpop.permute.xlu0 %3131
    %3134 = vset.pattern.permute.xlu0 15
    %3135 = vperm.xlu0 %3134, %v589
    %v3136 = vpop.permute.xlu0 %3135
    %3138 = vset.pattern.permute.xlu0 15
    %3139 = vperm.xlu0 %3138, %v590
    %v3140 = vpop.permute.xlu0 %3139
    %3142 = vset.pattern.permute.xlu0 15
    %3143 = vperm.xlu0 %3142, %v591
    %v3144 = vpop.permute.xlu0 %3143
    %3146 = vset.pattern.permute.xlu0 15
    %3147 = vperm.xlu0 %3146, %v592
    %v3148 = vpop.permute.xlu0 %3147
    %v3150 = vmul.f32 %v3050, %v3072
    %v3151 = vmul.f32 %v3051, %v3076
    %v3152 = vmul.f32 %v3052, %v3080
    %v3153 = vmul.f32 %v3053, %v3084
    %v3154 = vmul.f32 %v3054, %v3088
    %v3155 = vmul.f32 %v3055, %v3092
    %v3156 = vmul.f32 %v3056, %v3096
    %v3157 = vmul.f32 %v3057, %v3100
    %v3158 = vmul.f32 %v3058, %v3104
    %v3159 = vmul.f32 %v3059, %v3108
    %v3160 = vmul.f32 %v3060, %v3112
    %v3161 = vmul.f32 %v3061, %v3116
    %v3162 = vmul.f32 %v3062, %v3120
    %v3163 = vmul.f32 %v3063, %v3124
    %v3164 = vmul.f32 %v3064, %v3128
    %v3165 = vmul.f32 %v3065, %v3132
    %v3166 = vmul.f32 %v3066, %v3136
    %v3167 = vmul.f32 %v3067, %v3140
    %v3168 = vmul.f32 %v3068, %v3144
    %v3169 = vmul.f32 %v3069, %v3148
    %v3170 = vadd.f32 %v3022, %v3150
    %v3171 = vadd.f32 %v3023, %v3151
    %v3172 = vadd.f32 %v3024, %v3152
    %v3173 = vadd.f32 %v3025, %v3153
    %v3174 = vadd.f32 %v3026, %v3154
    %v3175 = vadd.f32 %v3027, %v3155
    %v3176 = vadd.f32 %v3028, %v3156
    %v3177 = vadd.f32 %v3029, %v3157
    %v3178 = vadd.f32 %v3030, %v3158
    %v3179 = vadd.f32 %v3031, %v3159
    %v3180 = vadd.f32 %v3032, %v3160
    %v3181 = vadd.f32 %v3033, %v3161
    %v3182 = vadd.f32 %v3034, %v3162
    %v3183 = vadd.f32 %v3035, %v3163
    %v3184 = vadd.f32 %v3036, %v3164
    %v3185 = vadd.f32 %v3037, %v3165
    %v3186 = vadd.f32 %v3038, %v3166
    %v3187 = vadd.f32 %v3039, %v3167
    %v3188 = vadd.f32 %v3040, %v3168
    %v3189 = vadd.f32 %v3041, %v3169
    %s3190 = scalar_lea.vmem %s9, 16
    %v3191 = vld [vmem:[%s3190] sm:$0x1]
    %v3193 = vlaneseq
    %v3194 = vshrl.u32 %v3193, 7
    %v3195 = vsub.s32 0, %v3194
    %v3196 = vrot.slane %v3191, %v3195
    %v3198 = vmul.f32 %v833, %v3196
    %v3199 = vmul.f32 %v835, %v3196
    %v3200 = vmul.f32 %v837, %v3196
    %v3201 = vmul.f32 %v839, %v3196
    %v3202 = vmul.f32 %v841, %v3196
    %v3203 = vmul.f32 %v843, %v3196
    %v3204 = vmul.f32 %v845, %v3196
    %v3205 = vmul.f32 %v847, %v3196
    %v3206 = vmul.f32 %v849, %v3196
    %v3207 = vmul.f32 %v851, %v3196
    %v3208 = vmul.f32 %v853, %v3196
    %v3209 = vmul.f32 %v855, %v3196
    %v3210 = vmul.f32 %v857, %v3196
    %v3211 = vmul.f32 %v859, %v3196
    %v3212 = vmul.f32 %v861, %v3196
    %v3213 = vmul.f32 %v863, %v3196
    %v3214 = vmul.f32 %v864, %v3196
    %v3215 = vmul.f32 %v825, %v3196
    %v3216 = vmul.f32 %v827, %v3196
    %v3217 = vmul.f32 %v883, %v3196
    %3218 = vset.pattern.permute.xlu0 16
    %3219 = vperm.xlu0 %3218, %v573
    %v3220 = vpop.permute.xlu0 %3219
    %3222 = vset.pattern.permute.xlu0 16
    %3223 = vperm.xlu0 %3222, %v574
    %v3224 = vpop.permute.xlu0 %3223
    %3226 = vset.pattern.permute.xlu0 16
    %3227 = vperm.xlu0 %3226, %v575
    %v3228 = vpop.permute.xlu0 %3227
    %3230 = vset.pattern.permute.xlu0 16
    %3231 = vperm.xlu0 %3230, %v576
    %v3232 = vpop.permute.xlu0 %3231
    %3234 = vset.pattern.permute.xlu0 16
    %3235 = vperm.xlu0 %3234, %v577
    %v3236 = vpop.permute.xlu0 %3235
    %3238 = vset.pattern.permute.xlu0 16
    %3239 = vperm.xlu0 %3238, %v578
    %v3240 = vpop.permute.xlu0 %3239
    %3242 = vset.pattern.permute.xlu0 16
    %3243 = vperm.xlu0 %3242, %v579
    %v3244 = vpop.permute.xlu0 %3243
    %3246 = vset.pattern.permute.xlu0 16
    %3247 = vperm.xlu0 %3246, %v580
    %v3248 = vpop.permute.xlu0 %3247
    %3250 = vset.pattern.permute.xlu0 16
    %3251 = vperm.xlu0 %3250, %v581
    %v3252 = vpop.permute.xlu0 %3251
    %3254 = vset.pattern.permute.xlu0 16
    %3255 = vperm.xlu0 %3254, %v582
    %v3256 = vpop.permute.xlu0 %3255
    %3258 = vset.pattern.permute.xlu0 16
    %3259 = vperm.xlu0 %3258, %v583
    %v3260 = vpop.permute.xlu0 %3259
    %3262 = vset.pattern.permute.xlu0 16
    %3263 = vperm.xlu0 %3262, %v584
    %v3264 = vpop.permute.xlu0 %3263
    %3266 = vset.pattern.permute.xlu0 16
    %3267 = vperm.xlu0 %3266, %v585
    %v3268 = vpop.permute.xlu0 %3267
    %3270 = vset.pattern.permute.xlu0 16
    %3271 = vperm.xlu0 %3270, %v586
    %v3272 = vpop.permute.xlu0 %3271
    %3274 = vset.pattern.permute.xlu0 16
    %3275 = vperm.xlu0 %3274, %v587
    %v3276 = vpop.permute.xlu0 %3275
    %3278 = vset.pattern.permute.xlu0 16
    %3279 = vperm.xlu0 %3278, %v588
    %v3280 = vpop.permute.xlu0 %3279
    %3282 = vset.pattern.permute.xlu0 16
    %3283 = vperm.xlu0 %3282, %v589
    %v3284 = vpop.permute.xlu0 %3283
    %3286 = vset.pattern.permute.xlu0 16
    %3287 = vperm.xlu0 %3286, %v590
    %v3288 = vpop.permute.xlu0 %3287
    %3290 = vset.pattern.permute.xlu0 16
    %3291 = vperm.xlu0 %3290, %v591
    %v3292 = vpop.permute.xlu0 %3291
    %3294 = vset.pattern.permute.xlu0 16
    %3295 = vperm.xlu0 %3294, %v592
    %v3296 = vpop.permute.xlu0 %3295
    %v3298 = vmul.f32 %v3198, %v3220
    %v3299 = vmul.f32 %v3199, %v3224
    %v3300 = vmul.f32 %v3200, %v3228
    %v3301 = vmul.f32 %v3201, %v3232
    %v3302 = vmul.f32 %v3202, %v3236
    %v3303 = vmul.f32 %v3203, %v3240
    %v3304 = vmul.f32 %v3204, %v3244
    %v3305 = vmul.f32 %v3205, %v3248
    %v3306 = vmul.f32 %v3206, %v3252
    %v3307 = vmul.f32 %v3207, %v3256
    %v3308 = vmul.f32 %v3208, %v3260
    %v3309 = vmul.f32 %v3209, %v3264
    %v3310 = vmul.f32 %v3210, %v3268
    %v3311 = vmul.f32 %v3211, %v3272
    %v3312 = vmul.f32 %v3212, %v3276
    %v3313 = vmul.f32 %v3213, %v3280
    %v3314 = vmul.f32 %v3214, %v3284
    %v3315 = vmul.f32 %v3215, %v3288
    %v3316 = vmul.f32 %v3216, %v3292
    %v3317 = vmul.f32 %v3217, %v3296
    %v3318 = vadd.f32 %v3170, %v3298
    %v3319 = vadd.f32 %v3171, %v3299
    %v3320 = vadd.f32 %v3172, %v3300
    %v3321 = vadd.f32 %v3173, %v3301
    %v3322 = vadd.f32 %v3174, %v3302
    %v3323 = vadd.f32 %v3175, %v3303
    %v3324 = vadd.f32 %v3176, %v3304
    %v3325 = vadd.f32 %v3177, %v3305
    %v3326 = vadd.f32 %v3178, %v3306
    %v3327 = vadd.f32 %v3179, %v3307
    %v3328 = vadd.f32 %v3180, %v3308
    %v3329 = vadd.f32 %v3181, %v3309
    %v3330 = vadd.f32 %v3182, %v3310
    %v3331 = vadd.f32 %v3183, %v3311
    %v3332 = vadd.f32 %v3184, %v3312
    %v3333 = vadd.f32 %v3185, %v3313
    %v3334 = vadd.f32 %v3186, %v3314
    %v3335 = vadd.f32 %v3187, %v3315
    %v3336 = vadd.f32 %v3188, %v3316
    %v3337 = vadd.f32 %v3189, %v3317
    %s3338 = scalar_lea.vmem %s9, 17
    %v3339 = vld [vmem:[%s3338] sm:$0x1]
    %v3341 = vlaneseq
    %v3342 = vshrl.u32 %v3341, 7
    %v3343 = vsub.s32 0, %v3342
    %v3344 = vrot.slane %v3339, %v3343
    %v3346 = vmul.f32 %v1043, %v3344
    %v3347 = vmul.f32 %v1045, %v3344
    %v3348 = vmul.f32 %v1047, %v3344
    %v3349 = vmul.f32 %v1049, %v3344
    %v3350 = vmul.f32 %v1051, %v3344
    %v3351 = vmul.f32 %v1053, %v3344
    %v3352 = vmul.f32 %v1055, %v3344
    %v3353 = vmul.f32 %v1057, %v3344
    %v3354 = vmul.f32 %v1059, %v3344
    %v3355 = vmul.f32 %v1061, %v3344
    %v3356 = vmul.f32 %v1063, %v3344
    %v3357 = vmul.f32 %v1065, %v3344
    %v3358 = vmul.f32 %v1067, %v3344
    %v3359 = vmul.f32 %v1069, %v3344
    %v3360 = vmul.f32 %v1071, %v3344
    %v3361 = vmul.f32 %v1073, %v3344
    %v3362 = vmul.f32 %v1074, %v3344
    %v3363 = vmul.f32 %v1035, %v3344
    %v3364 = vmul.f32 %v1037, %v3344
    %v3365 = vmul.f32 %v1093, %v3344
    %3366 = vset.pattern.permute.xlu0 17
    %3367 = vperm.xlu0 %3366, %v573
    %v3368 = vpop.permute.xlu0 %3367
    %3370 = vset.pattern.permute.xlu0 17
    %3371 = vperm.xlu0 %3370, %v574
    %v3372 = vpop.permute.xlu0 %3371
    %3374 = vset.pattern.permute.xlu0 17
    %3375 = vperm.xlu0 %3374, %v575
    %v3376 = vpop.permute.xlu0 %3375
    %3378 = vset.pattern.permute.xlu0 17
    %3379 = vperm.xlu0 %3378, %v576
    %v3380 = vpop.permute.xlu0 %3379
    %3382 = vset.pattern.permute.xlu0 17
    %3383 = vperm.xlu0 %3382, %v577
    %v3384 = vpop.permute.xlu0 %3383
    %3386 = vset.pattern.permute.xlu0 17
    %3387 = vperm.xlu0 %3386, %v578
    %v3388 = vpop.permute.xlu0 %3387
    %3390 = vset.pattern.permute.xlu0 17
    %3391 = vperm.xlu0 %3390, %v579
    %v3392 = vpop.permute.xlu0 %3391
    %3394 = vset.pattern.permute.xlu0 17
    %3395 = vperm.xlu0 %3394, %v580
    %v3396 = vpop.permute.xlu0 %3395
    %3398 = vset.pattern.permute.xlu0 17
    %3399 = vperm.xlu0 %3398, %v581
    %v3400 = vpop.permute.xlu0 %3399
    %3402 = vset.pattern.permute.xlu0 17
    %3403 = vperm.xlu0 %3402, %v582
    %v3404 = vpop.permute.xlu0 %3403
    %3406 = vset.pattern.permute.xlu0 17
    %3407 = vperm.xlu0 %3406, %v583
    %v3408 = vpop.permute.xlu0 %3407
    %3410 = vset.pattern.permute.xlu0 17
    %3411 = vperm.xlu0 %3410, %v584
    %v3412 = vpop.permute.xlu0 %3411
    %3414 = vset.pattern.permute.xlu0 17
    %3415 = vperm.xlu0 %3414, %v585
    %v3416 = vpop.permute.xlu0 %3415
    %3418 = vset.pattern.permute.xlu0 17
    %3419 = vperm.xlu0 %3418, %v586
    %v3420 = vpop.permute.xlu0 %3419
    %3422 = vset.pattern.permute.xlu0 17
    %3423 = vperm.xlu0 %3422, %v587
    %v3424 = vpop.permute.xlu0 %3423
    %3426 = vset.pattern.permute.xlu0 17
    %3427 = vperm.xlu0 %3426, %v588
    %v3428 = vpop.permute.xlu0 %3427
    %3430 = vset.pattern.permute.xlu0 17
    %3431 = vperm.xlu0 %3430, %v589
    %v3432 = vpop.permute.xlu0 %3431
    %3434 = vset.pattern.permute.xlu0 17
    %3435 = vperm.xlu0 %3434, %v590
    %v3436 = vpop.permute.xlu0 %3435
    %3438 = vset.pattern.permute.xlu0 17
    %3439 = vperm.xlu0 %3438, %v591
    %v3440 = vpop.permute.xlu0 %3439
    %3442 = vset.pattern.permute.xlu0 17
    %3443 = vperm.xlu0 %3442, %v592
    %v3444 = vpop.permute.xlu0 %3443
    %v3446 = vmul.f32 %v3346, %v3368
    %v3447 = vmul.f32 %v3347, %v3372
    %v3448 = vmul.f32 %v3348, %v3376
    %v3449 = vmul.f32 %v3349, %v3380
    %v3450 = vmul.f32 %v3350, %v3384
    %v3451 = vmul.f32 %v3351, %v3388
    %v3452 = vmul.f32 %v3352, %v3392
    %v3453 = vmul.f32 %v3353, %v3396
    %v3454 = vmul.f32 %v3354, %v3400
    %v3455 = vmul.f32 %v3355, %v3404
    %v3456 = vmul.f32 %v3356, %v3408
    %v3457 = vmul.f32 %v3357, %v3412
    %v3458 = vmul.f32 %v3358, %v3416
    %v3459 = vmul.f32 %v3359, %v3420
    %v3460 = vmul.f32 %v3360, %v3424
    %v3461 = vmul.f32 %v3361, %v3428
    %v3462 = vmul.f32 %v3362, %v3432
    %v3463 = vmul.f32 %v3363, %v3436
    %v3464 = vmul.f32 %v3364, %v3440
    %v3465 = vmul.f32 %v3365, %v3444
    %v3466 = vadd.f32 %v3318, %v3446
    %v3467 = vadd.f32 %v3319, %v3447
    %v3468 = vadd.f32 %v3320, %v3448
    %v3469 = vadd.f32 %v3321, %v3449
    %v3470 = vadd.f32 %v3322, %v3450
    %v3471 = vadd.f32 %v3323, %v3451
    %v3472 = vadd.f32 %v3324, %v3452
    %v3473 = vadd.f32 %v3325, %v3453
    %v3474 = vadd.f32 %v3326, %v3454
    %v3475 = vadd.f32 %v3327, %v3455
    %v3476 = vadd.f32 %v3328, %v3456
    %v3477 = vadd.f32 %v3329, %v3457
    %v3478 = vadd.f32 %v3330, %v3458
    %v3479 = vadd.f32 %v3331, %v3459
    %v3480 = vadd.f32 %v3332, %v3460
    %v3481 = vadd.f32 %v3333, %v3461
    %v3482 = vadd.f32 %v3334, %v3462
    %v3483 = vadd.f32 %v3335, %v3463
    %v3484 = vadd.f32 %v3336, %v3464
    %v3485 = vadd.f32 %v3337, %v3465
    %s3486 = scalar_lea.vmem %s9, 18
    %v3487 = vld [vmem:[%s3486] sm:$0x1]
    %v3489 = vlaneseq
    %v3490 = vshrl.u32 %v3489, 7
    %v3491 = vsub.s32 0, %v3490
    %v3492 = vrot.slane %v3487, %v3491
    %v3494 = vmul.f32 %v626, %v3492
    %v3495 = vmul.f32 %v628, %v3492
    %v3496 = vmul.f32 %v630, %v3492
    %v3497 = vmul.f32 %v632, %v3492
    %v3498 = vmul.f32 %v634, %v3492
    %v3499 = vmul.f32 %v636, %v3492
    %v3500 = vmul.f32 %v638, %v3492
    %v3501 = vmul.f32 %v640, %v3492
    %v3502 = vmul.f32 %v642, %v3492
    %v3503 = vmul.f32 %v644, %v3492
    %v3504 = vmul.f32 %v646, %v3492
    %v3505 = vmul.f32 %v648, %v3492
    %v3506 = vmul.f32 %v650, %v3492
    %v3507 = vmul.f32 %v652, %v3492
    %v3508 = vmul.f32 %v654, %v3492
    %v3509 = vmul.f32 %v655, %v3492
    %v3510 = vmul.f32 %v599, %v3492
    %v3511 = vmul.f32 %v601, %v3492
    %v3512 = vmul.f32 %v674, %v3492
    %v3513 = vmul.f32 %v624, %v3492
    %3514 = vset.pattern.permute.xlu0 18
    %3515 = vperm.xlu0 %3514, %v573
    %v3516 = vpop.permute.xlu0 %3515
    %3518 = vset.pattern.permute.xlu0 18
    %3519 = vperm.xlu0 %3518, %v574
    %v3520 = vpop.permute.xlu0 %3519
    %3522 = vset.pattern.permute.xlu0 18
    %3523 = vperm.xlu0 %3522, %v575
    %v3524 = vpop.permute.xlu0 %3523
    %3526 = vset.pattern.permute.xlu0 18
    %3527 = vperm.xlu0 %3526, %v576
    %v3528 = vpop.permute.xlu0 %3527
    %3530 = vset.pattern.permute.xlu0 18
    %3531 = vperm.xlu0 %3530, %v577
    %v3532 = vpop.permute.xlu0 %3531
    %3534 = vset.pattern.permute.xlu0 18
    %3535 = vperm.xlu0 %3534, %v578
    %v3536 = vpop.permute.xlu0 %3535
    %3538 = vset.pattern.permute.xlu0 18
    %3539 = vperm.xlu0 %3538, %v579
    %v3540 = vpop.permute.xlu0 %3539
    %3542 = vset.pattern.permute.xlu0 18
    %3543 = vperm.xlu0 %3542, %v580
    %v3544 = vpop.permute.xlu0 %3543
    %3546 = vset.pattern.permute.xlu0 18
    %3547 = vperm.xlu0 %3546, %v581
    %v3548 = vpop.permute.xlu0 %3547
    %3550 = vset.pattern.permute.xlu0 18
    %3551 = vperm.xlu0 %3550, %v582
    %v3552 = vpop.permute.xlu0 %3551
    %3554 = vset.pattern.permute.xlu0 18
    %3555 = vperm.xlu0 %3554, %v583
    %v3556 = vpop.permute.xlu0 %3555
    %3558 = vset.pattern.permute.xlu0 18
    %3559 = vperm.xlu0 %3558, %v584
    %v3560 = vpop.permute.xlu0 %3559
    %3562 = vset.pattern.permute.xlu0 18
    %3563 = vperm.xlu0 %3562, %v585
    %v3564 = vpop.permute.xlu0 %3563
    %3566 = vset.pattern.permute.xlu0 18
    %3567 = vperm.xlu0 %3566, %v586
    %v3568 = vpop.permute.xlu0 %3567
    %3570 = vset.pattern.permute.xlu0 18
    %3571 = vperm.xlu0 %3570, %v587
    %v3572 = vpop.permute.xlu0 %3571
    %3574 = vset.pattern.permute.xlu0 18
    %3575 = vperm.xlu0 %3574, %v588
    %v3576 = vpop.permute.xlu0 %3575
    %3578 = vset.pattern.permute.xlu0 18
    %3579 = vperm.xlu0 %3578, %v589
    %v3580 = vpop.permute.xlu0 %3579
    %3582 = vset.pattern.permute.xlu0 18
    %3583 = vperm.xlu0 %3582, %v590
    %v3584 = vpop.permute.xlu0 %3583
    %3586 = vset.pattern.permute.xlu0 18
    %3587 = vperm.xlu0 %3586, %v591
    %v3588 = vpop.permute.xlu0 %3587
    %3590 = vset.pattern.permute.xlu0 18
    %3591 = vperm.xlu0 %3590, %v592
    %v3592 = vpop.permute.xlu0 %3591
    %v3594 = vmul.f32 %v3494, %v3516
    %v3595 = vmul.f32 %v3495, %v3520
    %v3596 = vmul.f32 %v3496, %v3524
    %v3597 = vmul.f32 %v3497, %v3528
    %v3598 = vmul.f32 %v3498, %v3532
    %v3599 = vmul.f32 %v3499, %v3536
    %v3600 = vmul.f32 %v3500, %v3540
    %v3601 = vmul.f32 %v3501, %v3544
    %v3602 = vmul.f32 %v3502, %v3548
    %v3603 = vmul.f32 %v3503, %v3552
    %v3604 = vmul.f32 %v3504, %v3556
    %v3605 = vmul.f32 %v3505, %v3560
    %v3606 = vmul.f32 %v3506, %v3564
    %v3607 = vmul.f32 %v3507, %v3568
    %v3608 = vmul.f32 %v3508, %v3572
    %v3609 = vmul.f32 %v3509, %v3576
    %v3610 = vmul.f32 %v3510, %v3580
    %v3611 = vmul.f32 %v3511, %v3584
    %v3612 = vmul.f32 %v3512, %v3588
    %v3613 = vmul.f32 %v3513, %v3592
    %v3614 = vadd.f32 %v3466, %v3594
    %v3615 = vadd.f32 %v3467, %v3595
    %v3616 = vadd.f32 %v3468, %v3596
    %v3617 = vadd.f32 %v3469, %v3597
    %v3618 = vadd.f32 %v3470, %v3598
    %v3619 = vadd.f32 %v3471, %v3599
    %v3620 = vadd.f32 %v3472, %v3600
    %v3621 = vadd.f32 %v3473, %v3601
    %v3622 = vadd.f32 %v3474, %v3602
    %v3623 = vadd.f32 %v3475, %v3603
    %v3624 = vadd.f32 %v3476, %v3604
    %v3625 = vadd.f32 %v3477, %v3605
    %v3626 = vadd.f32 %v3478, %v3606
    %v3627 = vadd.f32 %v3479, %v3607
    %v3628 = vadd.f32 %v3480, %v3608
    %v3629 = vadd.f32 %v3481, %v3609
    %v3630 = vadd.f32 %v3482, %v3610
    %v3631 = vadd.f32 %v3483, %v3611
    %v3632 = vadd.f32 %v3484, %v3612
    %v3633 = vadd.f32 %v3485, %v3613
    %s3634 = scalar_lea.vmem %s9, 19
    %v3635 = vld [vmem:[%s3634] sm:$0x1]
    %v3637 = vlaneseq
    %v3638 = vshrl.u32 %v3637, 7
    %v3639 = vsub.s32 0, %v3638
    %v3640 = vrot.slane %v3635, %v3639
    %v3642 = vmul.f32 %v835, %v3640
    %v3643 = vmul.f32 %v837, %v3640
    %v3644 = vmul.f32 %v839, %v3640
    %v3645 = vmul.f32 %v841, %v3640
    %v3646 = vmul.f32 %v843, %v3640
    %v3647 = vmul.f32 %v845, %v3640
    %v3648 = vmul.f32 %v847, %v3640
    %v3649 = vmul.f32 %v849, %v3640
    %v3650 = vmul.f32 %v851, %v3640
    %v3651 = vmul.f32 %v853, %v3640
    %v3652 = vmul.f32 %v855, %v3640
    %v3653 = vmul.f32 %v857, %v3640
    %v3654 = vmul.f32 %v859, %v3640
    %v3655 = vmul.f32 %v861, %v3640
    %v3656 = vmul.f32 %v863, %v3640
    %v3657 = vmul.f32 %v864, %v3640
    %v3658 = vmul.f32 %v825, %v3640
    %v3659 = vmul.f32 %v827, %v3640
    %v3660 = vmul.f32 %v883, %v3640
    %v3661 = vmul.f32 %v833, %v3640
    %3662 = vset.pattern.permute.xlu0 19
    %3663 = vperm.xlu0 %3662, %v573
    %v3664 = vpop.permute.xlu0 %3663
    %3666 = vset.pattern.permute.xlu0 19
    %3667 = vperm.xlu0 %3666, %v574
    %v3668 = vpop.permute.xlu0 %3667
    %3670 = vset.pattern.permute.xlu0 19
    %3671 = vperm.xlu0 %3670, %v575
    %v3672 = vpop.permute.xlu0 %3671
    %3674 = vset.pattern.permute.xlu0 19
    %3675 = vperm.xlu0 %3674, %v576
    %v3676 = vpop.permute.xlu0 %3675
    %3678 = vset.pattern.permute.xlu0 19
    %3679 = vperm.xlu0 %3678, %v577
    %v3680 = vpop.permute.xlu0 %3679
    %3682 = vset.pattern.permute.xlu0 19
    %3683 = vperm.xlu0 %3682, %v578
    %v3684 = vpop.permute.xlu0 %3683
    %3686 = vset.pattern.permute.xlu0 19
    %3687 = vperm.xlu0 %3686, %v579
    %v3688 = vpop.permute.xlu0 %3687
    %3690 = vset.pattern.permute.xlu0 19
    %3691 = vperm.xlu0 %3690, %v580
    %v3692 = vpop.permute.xlu0 %3691
    %3694 = vset.pattern.permute.xlu0 19
    %3695 = vperm.xlu0 %3694, %v581
    %v3696 = vpop.permute.xlu0 %3695
    %3698 = vset.pattern.permute.xlu0 19
    %3699 = vperm.xlu0 %3698, %v582
    %v3700 = vpop.permute.xlu0 %3699
    %3702 = vset.pattern.permute.xlu0 19
    %3703 = vperm.xlu0 %3702, %v583
    %v3704 = vpop.permute.xlu0 %3703
    %3706 = vset.pattern.permute.xlu0 19
    %3707 = vperm.xlu0 %3706, %v584
    %v3708 = vpop.permute.xlu0 %3707
    %3710 = vset.pattern.permute.xlu0 19
    %3711 = vperm.xlu0 %3710, %v585
    %v3712 = vpop.permute.xlu0 %3711
    %3714 = vset.pattern.permute.xlu0 19
    %3715 = vperm.xlu0 %3714, %v586
    %v3716 = vpop.permute.xlu0 %3715
    %3718 = vset.pattern.permute.xlu0 19
    %3719 = vperm.xlu0 %3718, %v587
    %v3720 = vpop.permute.xlu0 %3719
    %3722 = vset.pattern.permute.xlu0 19
    %3723 = vperm.xlu0 %3722, %v588
    %v3724 = vpop.permute.xlu0 %3723
    %3726 = vset.pattern.permute.xlu0 19
    %3727 = vperm.xlu0 %3726, %v589
    %v3728 = vpop.permute.xlu0 %3727
    %3730 = vset.pattern.permute.xlu0 19
    %3731 = vperm.xlu0 %3730, %v590
    %v3732 = vpop.permute.xlu0 %3731
    %3734 = vset.pattern.permute.xlu0 19
    %3735 = vperm.xlu0 %3734, %v591
    %v3736 = vpop.permute.xlu0 %3735
    %3738 = vset.pattern.permute.xlu0 19
    %3739 = vperm.xlu0 %3738, %v592
    %v3740 = vpop.permute.xlu0 %3739
    %v3742 = vmul.f32 %v3642, %v3664
    %v3743 = vmul.f32 %v3643, %v3668
    %v3744 = vmul.f32 %v3644, %v3672
    %v3745 = vmul.f32 %v3645, %v3676
    %v3746 = vmul.f32 %v3646, %v3680
    %v3747 = vmul.f32 %v3647, %v3684
    %v3748 = vmul.f32 %v3648, %v3688
    %v3749 = vmul.f32 %v3649, %v3692
    %v3750 = vmul.f32 %v3650, %v3696
    %v3751 = vmul.f32 %v3651, %v3700
    %v3752 = vmul.f32 %v3652, %v3704
    %v3753 = vmul.f32 %v3653, %v3708
    %v3754 = vmul.f32 %v3654, %v3712
    %v3755 = vmul.f32 %v3655, %v3716
    %v3756 = vmul.f32 %v3656, %v3720
    %v3757 = vmul.f32 %v3657, %v3724
    %v3758 = vmul.f32 %v3658, %v3728
    %v3759 = vmul.f32 %v3659, %v3732
    %v3760 = vmul.f32 %v3660, %v3736
    %v3761 = vmul.f32 %v3661, %v3740
    %v3762 = vadd.f32 %v3614, %v3742
    %v3763 = vadd.f32 %v3615, %v3743
    %v3764 = vadd.f32 %v3616, %v3744
    %v3765 = vadd.f32 %v3617, %v3745
    %v3766 = vadd.f32 %v3618, %v3746
    %v3767 = vadd.f32 %v3619, %v3747
    %v3768 = vadd.f32 %v3620, %v3748
    %v3769 = vadd.f32 %v3621, %v3749
    %v3770 = vadd.f32 %v3622, %v3750
    %v3771 = vadd.f32 %v3623, %v3751
    %v3772 = vadd.f32 %v3624, %v3752
    %v3773 = vadd.f32 %v3625, %v3753
    %v3774 = vadd.f32 %v3626, %v3754
    %v3775 = vadd.f32 %v3627, %v3755
    %v3776 = vadd.f32 %v3628, %v3756
    %v3777 = vadd.f32 %v3629, %v3757
    %v3778 = vadd.f32 %v3630, %v3758
    %v3779 = vadd.f32 %v3631, %v3759
    %v3780 = vadd.f32 %v3632, %v3760
    %v3781 = vadd.f32 %v3633, %v3761
    %s3782 = scalar_lea.vmem %s9, 20
    %v3783 = vld [vmem:[%s3782] sm:$0x1]
    %v3785 = vlaneseq
    %v3786 = vshrl.u32 %v3785, 7
    %v3787 = vsub.s32 0, %v3786
    %v3788 = vrot.slane %v3783, %v3787
    %v3790 = vmul.f32 %v1045, %v3788
    %v3791 = vmul.f32 %v1047, %v3788
    %v3792 = vmul.f32 %v1049, %v3788
    %v3793 = vmul.f32 %v1051, %v3788
    %v3794 = vmul.f32 %v1053, %v3788
    %v3795 = vmul.f32 %v1055, %v3788
    %v3796 = vmul.f32 %v1057, %v3788
    %v3797 = vmul.f32 %v1059, %v3788
    %v3798 = vmul.f32 %v1061, %v3788
    %v3799 = vmul.f32 %v1063, %v3788
    %v3800 = vmul.f32 %v1065, %v3788
    %v3801 = vmul.f32 %v1067, %v3788
    %v3802 = vmul.f32 %v1069, %v3788
    %v3803 = vmul.f32 %v1071, %v3788
    %v3804 = vmul.f32 %v1073, %v3788
    %v3805 = vmul.f32 %v1074, %v3788
    %v3806 = vmul.f32 %v1035, %v3788
    %v3807 = vmul.f32 %v1037, %v3788
    %v3808 = vmul.f32 %v1093, %v3788
    %v3809 = vmul.f32 %v1043, %v3788
    %3810 = vset.pattern.permute.xlu0 20
    %3811 = vperm.xlu0 %3810, %v573
    %v3812 = vpop.permute.xlu0 %3811
    %3814 = vset.pattern.permute.xlu0 20
    %3815 = vperm.xlu0 %3814, %v574
    %v3816 = vpop.permute.xlu0 %3815
    %3818 = vset.pattern.permute.xlu0 20
    %3819 = vperm.xlu0 %3818, %v575
    %v3820 = vpop.permute.xlu0 %3819
    %3822 = vset.pattern.permute.xlu0 20
    %3823 = vperm.xlu0 %3822, %v576
    %v3824 = vpop.permute.xlu0 %3823
    %3826 = vset.pattern.permute.xlu0 20
    %3827 = vperm.xlu0 %3826, %v577
    %v3828 = vpop.permute.xlu0 %3827
    %3830 = vset.pattern.permute.xlu0 20
    %3831 = vperm.xlu0 %3830, %v578
    %v3832 = vpop.permute.xlu0 %3831
    %3834 = vset.pattern.permute.xlu0 20
    %3835 = vperm.xlu0 %3834, %v579
    %v3836 = vpop.permute.xlu0 %3835
    %3838 = vset.pattern.permute.xlu0 20
    %3839 = vperm.xlu0 %3838, %v580
    %v3840 = vpop.permute.xlu0 %3839
    %3842 = vset.pattern.permute.xlu0 20
    %3843 = vperm.xlu0 %3842, %v581
    %v3844 = vpop.permute.xlu0 %3843
    %3846 = vset.pattern.permute.xlu0 20
    %3847 = vperm.xlu0 %3846, %v582
    %v3848 = vpop.permute.xlu0 %3847
    %3850 = vset.pattern.permute.xlu0 20
    %3851 = vperm.xlu0 %3850, %v583
    %v3852 = vpop.permute.xlu0 %3851
    %3854 = vset.pattern.permute.xlu0 20
    %3855 = vperm.xlu0 %3854, %v584
    %v3856 = vpop.permute.xlu0 %3855
    %3858 = vset.pattern.permute.xlu0 20
    %3859 = vperm.xlu0 %3858, %v585
    %v3860 = vpop.permute.xlu0 %3859
    %3862 = vset.pattern.permute.xlu0 20
    %3863 = vperm.xlu0 %3862, %v586
    %v3864 = vpop.permute.xlu0 %3863
    %3866 = vset.pattern.permute.xlu0 20
    %3867 = vperm.xlu0 %3866, %v587
    %v3868 = vpop.permute.xlu0 %3867
    %3870 = vset.pattern.permute.xlu0 20
    %3871 = vperm.xlu0 %3870, %v588
    %v3872 = vpop.permute.xlu0 %3871
    %3874 = vset.pattern.permute.xlu0 20
    %3875 = vperm.xlu0 %3874, %v589
    %v3876 = vpop.permute.xlu0 %3875
    %3878 = vset.pattern.permute.xlu0 20
    %3879 = vperm.xlu0 %3878, %v590
    %v3880 = vpop.permute.xlu0 %3879
    %3882 = vset.pattern.permute.xlu0 20
    %3883 = vperm.xlu0 %3882, %v591
    %v3884 = vpop.permute.xlu0 %3883
    %3886 = vset.pattern.permute.xlu0 20
    %3887 = vperm.xlu0 %3886, %v592
    %v3888 = vpop.permute.xlu0 %3887
    %v3890 = vmul.f32 %v3790, %v3812
    %v3891 = vmul.f32 %v3791, %v3816
    %v3892 = vmul.f32 %v3792, %v3820
    %v3893 = vmul.f32 %v3793, %v3824
    %v3894 = vmul.f32 %v3794, %v3828
    %v3895 = vmul.f32 %v3795, %v3832
    %v3896 = vmul.f32 %v3796, %v3836
    %v3897 = vmul.f32 %v3797, %v3840
    %v3898 = vmul.f32 %v3798, %v3844
    %v3899 = vmul.f32 %v3799, %v3848
    %v3900 = vmul.f32 %v3800, %v3852
    %v3901 = vmul.f32 %v3801, %v3856
    %v3902 = vmul.f32 %v3802, %v3860
    %v3903 = vmul.f32 %v3803, %v3864
    %v3904 = vmul.f32 %v3804, %v3868
    %v3905 = vmul.f32 %v3805, %v3872
    %v3906 = vmul.f32 %v3806, %v3876
    %v3907 = vmul.f32 %v3807, %v3880
    %v3908 = vmul.f32 %v3808, %v3884
    %v3909 = vmul.f32 %v3809, %v3888
    %v3910 = vadd.f32 %v3762, %v3890
    %v3911 = vadd.f32 %v3763, %v3891
    %v3912 = vadd.f32 %v3764, %v3892
    %v3913 = vadd.f32 %v3765, %v3893
    %v3914 = vadd.f32 %v3766, %v3894
    %v3915 = vadd.f32 %v3767, %v3895
    %v3916 = vadd.f32 %v3768, %v3896
    %v3917 = vadd.f32 %v3769, %v3897
    %v3918 = vadd.f32 %v3770, %v3898
    %v3919 = vadd.f32 %v3771, %v3899
    %v3920 = vadd.f32 %v3772, %v3900
    %v3921 = vadd.f32 %v3773, %v3901
    %v3922 = vadd.f32 %v3774, %v3902
    %v3923 = vadd.f32 %v3775, %v3903
    %v3924 = vadd.f32 %v3776, %v3904
    %v3925 = vadd.f32 %v3777, %v3905
    %v3926 = vadd.f32 %v3778, %v3906
    %v3927 = vadd.f32 %v3779, %v3907
    %v3928 = vadd.f32 %v3780, %v3908
    %v3929 = vadd.f32 %v3781, %v3909
    %s3930 = scalar_lea.vmem %s9, 21
    %v3931 = vld [vmem:[%s3930] sm:$0x1]
    %v3933 = vlaneseq
    %v3934 = vshrl.u32 %v3933, 7
    %v3935 = vsub.s32 0, %v3934
    %v3936 = vrot.slane %v3931, %v3935
    %v3938 = vmul.f32 %v1255, %v3936
    %v3939 = vmul.f32 %v1257, %v3936
    %v3940 = vmul.f32 %v1259, %v3936
    %v3941 = vmul.f32 %v1261, %v3936
    %v3942 = vmul.f32 %v1263, %v3936
    %v3943 = vmul.f32 %v1265, %v3936
    %v3944 = vmul.f32 %v1267, %v3936
    %v3945 = vmul.f32 %v1269, %v3936
    %v3946 = vmul.f32 %v1271, %v3936
    %v3947 = vmul.f32 %v1273, %v3936
    %v3948 = vmul.f32 %v1275, %v3936
    %v3949 = vmul.f32 %v1277, %v3936
    %v3950 = vmul.f32 %v1279, %v3936
    %v3951 = vmul.f32 %v1281, %v3936
    %v3952 = vmul.f32 %v1283, %v3936
    %v3953 = vmul.f32 %v1284, %v3936
    %v3954 = vmul.f32 %v1245, %v3936
    %v3955 = vmul.f32 %v1247, %v3936
    %v3956 = vmul.f32 %v1303, %v3936
    %v3957 = vmul.f32 %v1253, %v3936
    %3958 = vset.pattern.permute.xlu0 21
    %3959 = vperm.xlu0 %3958, %v573
    %v3960 = vpop.permute.xlu0 %3959
    %3962 = vset.pattern.permute.xlu0 21
    %3963 = vperm.xlu0 %3962, %v574
    %v3964 = vpop.permute.xlu0 %3963
    %3966 = vset.pattern.permute.xlu0 21
    %3967 = vperm.xlu0 %3966, %v575
    %v3968 = vpop.permute.xlu0 %3967
    %3970 = vset.pattern.permute.xlu0 21
    %3971 = vperm.xlu0 %3970, %v576
    %v3972 = vpop.permute.xlu0 %3971
    %3974 = vset.pattern.permute.xlu0 21
    %3975 = vperm.xlu0 %3974, %v577
    %v3976 = vpop.permute.xlu0 %3975
    %3978 = vset.pattern.permute.xlu0 21
    %3979 = vperm.xlu0 %3978, %v578
    %v3980 = vpop.permute.xlu0 %3979
    %3982 = vset.pattern.permute.xlu0 21
    %3983 = vperm.xlu0 %3982, %v579
    %v3984 = vpop.permute.xlu0 %3983
    %3986 = vset.pattern.permute.xlu0 21
    %3987 = vperm.xlu0 %3986, %v580
    %v3988 = vpop.permute.xlu0 %3987
    %3990 = vset.pattern.permute.xlu0 21
    %3991 = vperm.xlu0 %3990, %v581
    %v3992 = vpop.permute.xlu0 %3991
    %3994 = vset.pattern.permute.xlu0 21
    %3995 = vperm.xlu0 %3994, %v582
    %v3996 = vpop.permute.xlu0 %3995
    %3998 = vset.pattern.permute.xlu0 21
    %3999 = vperm.xlu0 %3998, %v583
    %v4000 = vpop.permute.xlu0 %3999
    %4002 = vset.pattern.permute.xlu0 21
    %4003 = vperm.xlu0 %4002, %v584
    %v4004 = vpop.permute.xlu0 %4003
    %4006 = vset.pattern.permute.xlu0 21
    %4007 = vperm.xlu0 %4006, %v585
    %v4008 = vpop.permute.xlu0 %4007
    %4010 = vset.pattern.permute.xlu0 21
    %4011 = vperm.xlu0 %4010, %v586
    %v4012 = vpop.permute.xlu0 %4011
    %4014 = vset.pattern.permute.xlu0 21
    %4015 = vperm.xlu0 %4014, %v587
    %v4016 = vpop.permute.xlu0 %4015
    %4018 = vset.pattern.permute.xlu0 21
    %4019 = vperm.xlu0 %4018, %v588
    %v4020 = vpop.permute.xlu0 %4019
    %4022 = vset.pattern.permute.xlu0 21
    %4023 = vperm.xlu0 %4022, %v589
    %v4024 = vpop.permute.xlu0 %4023
    %4026 = vset.pattern.permute.xlu0 21
    %4027 = vperm.xlu0 %4026, %v590
    %v4028 = vpop.permute.xlu0 %4027
    %4030 = vset.pattern.permute.xlu0 21
    %4031 = vperm.xlu0 %4030, %v591
    %v4032 = vpop.permute.xlu0 %4031
    %4034 = vset.pattern.permute.xlu0 21
    %4035 = vperm.xlu0 %4034, %v592
    %v4036 = vpop.permute.xlu0 %4035
    %v4038 = vmul.f32 %v3938, %v3960
    %v4039 = vmul.f32 %v3939, %v3964
    %v4040 = vmul.f32 %v3940, %v3968
    %v4041 = vmul.f32 %v3941, %v3972
    %v4042 = vmul.f32 %v3942, %v3976
    %v4043 = vmul.f32 %v3943, %v3980
    %v4044 = vmul.f32 %v3944, %v3984
    %v4045 = vmul.f32 %v3945, %v3988
    %v4046 = vmul.f32 %v3946, %v3992
    %v4047 = vmul.f32 %v3947, %v3996
    %v4048 = vmul.f32 %v3948, %v4000
    %v4049 = vmul.f32 %v3949, %v4004
    %v4050 = vmul.f32 %v3950, %v4008
    %v4051 = vmul.f32 %v3951, %v4012
    %v4052 = vmul.f32 %v3952, %v4016
    %v4053 = vmul.f32 %v3953, %v4020
    %v4054 = vmul.f32 %v3954, %v4024
    %v4055 = vmul.f32 %v3955, %v4028
    %v4056 = vmul.f32 %v3956, %v4032
    %v4057 = vmul.f32 %v3957, %v4036
    %v4058 = vadd.f32 %v3910, %v4038
    %v4059 = vadd.f32 %v3911, %v4039
    %v4060 = vadd.f32 %v3912, %v4040
    %v4061 = vadd.f32 %v3913, %v4041
    %v4062 = vadd.f32 %v3914, %v4042
    %v4063 = vadd.f32 %v3915, %v4043
    %v4064 = vadd.f32 %v3916, %v4044
    %v4065 = vadd.f32 %v3917, %v4045
    %v4066 = vadd.f32 %v3918, %v4046
    %v4067 = vadd.f32 %v3919, %v4047
    %v4068 = vadd.f32 %v3920, %v4048
    %v4069 = vadd.f32 %v3921, %v4049
    %v4070 = vadd.f32 %v3922, %v4050
    %v4071 = vadd.f32 %v3923, %v4051
    %v4072 = vadd.f32 %v3924, %v4052
    %v4073 = vadd.f32 %v3925, %v4053
    %v4074 = vadd.f32 %v3926, %v4054
    %v4075 = vadd.f32 %v3927, %v4055
    %v4076 = vadd.f32 %v3928, %v4056
    %v4077 = vadd.f32 %v3929, %v4057
    %s4078 = scalar_lea.vmem %s9, 22
    %v4079 = vld [vmem:[%s4078] sm:$0x1]
    %v4081 = vlaneseq
    %v4082 = vshrl.u32 %v4081, 7
    %v4083 = vsub.s32 0, %v4082
    %v4084 = vrot.slane %v4079, %v4083
    %v4086 = vmul.f32 %v555, %v4084
    %v4087 = vmul.f32 %v556, %v4084
    %v4088 = vmul.f32 %v557, %v4084
    %v4089 = vmul.f32 %v558, %v4084
    %v4090 = vmul.f32 %v559, %v4084
    %v4091 = vmul.f32 %v560, %v4084
    %v4092 = vmul.f32 %v561, %v4084
    %v4093 = vmul.f32 %v562, %v4084
    %v4094 = vmul.f32 %v563, %v4084
    %v4095 = vmul.f32 %v564, %v4084
    %v4096 = vmul.f32 %v565, %v4084
    %v4097 = vmul.f32 %v566, %v4084
    %v4098 = vmul.f32 %v567, %v4084
    %v4099 = vmul.f32 %v568, %v4084
    %v4100 = vmul.f32 %v569, %v4084
    %v4101 = vmul.f32 %v570, %v4084
    %v4102 = vmul.f32 %v571, %v4084
    %v4103 = vmul.f32 %v572, %v4084
    %v4104 = vmul.f32 %v553, %v4084
    %v4105 = vmul.f32 %v554, %v4084
    %4106 = vset.pattern.permute.xlu0 22
    %4107 = vperm.xlu0 %4106, %v573
    %v4108 = vpop.permute.xlu0 %4107
    %4110 = vset.pattern.permute.xlu0 22
    %4111 = vperm.xlu0 %4110, %v574
    %v4112 = vpop.permute.xlu0 %4111
    %4114 = vset.pattern.permute.xlu0 22
    %4115 = vperm.xlu0 %4114, %v575
    %v4116 = vpop.permute.xlu0 %4115
    %4118 = vset.pattern.permute.xlu0 22
    %4119 = vperm.xlu0 %4118, %v576
    %v4120 = vpop.permute.xlu0 %4119
    %4122 = vset.pattern.permute.xlu0 22
    %4123 = vperm.xlu0 %4122, %v577
    %v4124 = vpop.permute.xlu0 %4123
    %4126 = vset.pattern.permute.xlu0 22
    %4127 = vperm.xlu0 %4126, %v578
    %v4128 = vpop.permute.xlu0 %4127
    %4130 = vset.pattern.permute.xlu0 22
    %4131 = vperm.xlu0 %4130, %v579
    %v4132 = vpop.permute.xlu0 %4131
    %4134 = vset.pattern.permute.xlu0 22
    %4135 = vperm.xlu0 %4134, %v580
    %v4136 = vpop.permute.xlu0 %4135
    %4138 = vset.pattern.permute.xlu0 22
    %4139 = vperm.xlu0 %4138, %v581
    %v4140 = vpop.permute.xlu0 %4139
    %4142 = vset.pattern.permute.xlu0 22
    %4143 = vperm.xlu0 %4142, %v582
    %v4144 = vpop.permute.xlu0 %4143
    %4146 = vset.pattern.permute.xlu0 22
    %4147 = vperm.xlu0 %4146, %v583
    %v4148 = vpop.permute.xlu0 %4147
    %4150 = vset.pattern.permute.xlu0 22
    %4151 = vperm.xlu0 %4150, %v584
    %v4152 = vpop.permute.xlu0 %4151
    %4154 = vset.pattern.permute.xlu0 22
    %4155 = vperm.xlu0 %4154, %v585
    %v4156 = vpop.permute.xlu0 %4155
    %4158 = vset.pattern.permute.xlu0 22
    %4159 = vperm.xlu0 %4158, %v586
    %v4160 = vpop.permute.xlu0 %4159
    %4162 = vset.pattern.permute.xlu0 22
    %4163 = vperm.xlu0 %4162, %v587
    %v4164 = vpop.permute.xlu0 %4163
    %4166 = vset.pattern.permute.xlu0 22
    %4167 = vperm.xlu0 %4166, %v588
    %v4168 = vpop.permute.xlu0 %4167
    %4170 = vset.pattern.permute.xlu0 22
    %4171 = vperm.xlu0 %4170, %v589
    %v4172 = vpop.permute.xlu0 %4171
    %4174 = vset.pattern.permute.xlu0 22
    %4175 = vperm.xlu0 %4174, %v590
    %v4176 = vpop.permute.xlu0 %4175
    %4178 = vset.pattern.permute.xlu0 22
    %4179 = vperm.xlu0 %4178, %v591
    %v4180 = vpop.permute.xlu0 %4179
    %4182 = vset.pattern.permute.xlu0 22
    %4183 = vperm.xlu0 %4182, %v592
    %v4184 = vpop.permute.xlu0 %4183
    %v4186 = vmul.f32 %v4086, %v4108
    %v4187 = vmul.f32 %v4087, %v4112
    %v4188 = vmul.f32 %v4088, %v4116
    %v4189 = vmul.f32 %v4089, %v4120
    %v4190 = vmul.f32 %v4090, %v4124
    %v4191 = vmul.f32 %v4091, %v4128
    %v4192 = vmul.f32 %v4092, %v4132
    %v4193 = vmul.f32 %v4093, %v4136
    %v4194 = vmul.f32 %v4094, %v4140
    %v4195 = vmul.f32 %v4095, %v4144
    %v4196 = vmul.f32 %v4096, %v4148
    %v4197 = vmul.f32 %v4097, %v4152
    %v4198 = vmul.f32 %v4098, %v4156
    %v4199 = vmul.f32 %v4099, %v4160
    %v4200 = vmul.f32 %v4100, %v4164
    %v4201 = vmul.f32 %v4101, %v4168
    %v4202 = vmul.f32 %v4102, %v4172
    %v4203 = vmul.f32 %v4103, %v4176
    %v4204 = vmul.f32 %v4104, %v4180
    %v4205 = vmul.f32 %v4105, %v4184
    %v4206 = vadd.f32 %v4058, %v4186
    %v4207 = vadd.f32 %v4059, %v4187
    %v4208 = vadd.f32 %v4060, %v4188
    %v4209 = vadd.f32 %v4061, %v4189
    %v4210 = vadd.f32 %v4062, %v4190
    %v4211 = vadd.f32 %v4063, %v4191
    %v4212 = vadd.f32 %v4064, %v4192
    %v4213 = vadd.f32 %v4065, %v4193
    %v4214 = vadd.f32 %v4066, %v4194
    %v4215 = vadd.f32 %v4067, %v4195
    %v4216 = vadd.f32 %v4068, %v4196
    %v4217 = vadd.f32 %v4069, %v4197
    %v4218 = vadd.f32 %v4070, %v4198
    %v4219 = vadd.f32 %v4071, %v4199
    %v4220 = vadd.f32 %v4072, %v4200
    %v4221 = vadd.f32 %v4073, %v4201
    %v4222 = vadd.f32 %v4074, %v4202
    %v4223 = vadd.f32 %v4075, %v4203
    %v4224 = vadd.f32 %v4076, %v4204
    %v4225 = vadd.f32 %v4077, %v4205
    %s4226 = scalar_lea.vmem %s9, 23
    %v4227 = vld [vmem:[%s4226] sm:$0x1]
    %v4229 = vlaneseq
    %v4230 = vshrl.u32 %v4229, 7
    %v4231 = vsub.s32 0, %v4230
    %v4232 = vrot.slane %v4227, %v4231
    %v4234 = vmul.f32 %v1612, %v4232
    %v4235 = vmul.f32 %v1614, %v4232
    %v4236 = vmul.f32 %v1616, %v4232
    %v4237 = vmul.f32 %v1618, %v4232
    %v4238 = vmul.f32 %v1620, %v4232
    %v4239 = vmul.f32 %v1622, %v4232
    %v4240 = vmul.f32 %v1624, %v4232
    %v4241 = vmul.f32 %v1626, %v4232
    %v4242 = vmul.f32 %v1628, %v4232
    %v4243 = vmul.f32 %v1630, %v4232
    %v4244 = vmul.f32 %v1632, %v4232
    %v4245 = vmul.f32 %v1634, %v4232
    %v4246 = vmul.f32 %v1636, %v4232
    %v4247 = vmul.f32 %v1638, %v4232
    %v4248 = vmul.f32 %v1640, %v4232
    %v4249 = vmul.f32 %v1641, %v4232
    %v4250 = vmul.f32 %v1603, %v4232
    %v4251 = vmul.f32 %v1661, %v4232
    %v4252 = vmul.f32 %v1608, %v4232
    %v4253 = vmul.f32 %v1610, %v4232
    %4254 = vset.pattern.permute.xlu0 23
    %4255 = vperm.xlu0 %4254, %v573
    %v4256 = vpop.permute.xlu0 %4255
    %4258 = vset.pattern.permute.xlu0 23
    %4259 = vperm.xlu0 %4258, %v574
    %v4260 = vpop.permute.xlu0 %4259
    %4262 = vset.pattern.permute.xlu0 23
    %4263 = vperm.xlu0 %4262, %v575
    %v4264 = vpop.permute.xlu0 %4263
    %4266 = vset.pattern.permute.xlu0 23
    %4267 = vperm.xlu0 %4266, %v576
    %v4268 = vpop.permute.xlu0 %4267
    %4270 = vset.pattern.permute.xlu0 23
    %4271 = vperm.xlu0 %4270, %v577
    %v4272 = vpop.permute.xlu0 %4271
    %4274 = vset.pattern.permute.xlu0 23
    %4275 = vperm.xlu0 %4274, %v578
    %v4276 = vpop.permute.xlu0 %4275
    %4278 = vset.pattern.permute.xlu0 23
    %4279 = vperm.xlu0 %4278, %v579
    %v4280 = vpop.permute.xlu0 %4279
    %4282 = vset.pattern.permute.xlu0 23
    %4283 = vperm.xlu0 %4282, %v580
    %v4284 = vpop.permute.xlu0 %4283
    %4286 = vset.pattern.permute.xlu0 23
    %4287 = vperm.xlu0 %4286, %v581
    %v4288 = vpop.permute.xlu0 %4287
    %4290 = vset.pattern.permute.xlu0 23
    %4291 = vperm.xlu0 %4290, %v582
    %v4292 = vpop.permute.xlu0 %4291
    %4294 = vset.pattern.permute.xlu0 23
    %4295 = vperm.xlu0 %4294, %v583
    %v4296 = vpop.permute.xlu0 %4295
    %4298 = vset.pattern.permute.xlu0 23
    %4299 = vperm.xlu0 %4298, %v584
    %v4300 = vpop.permute.xlu0 %4299
    %4302 = vset.pattern.permute.xlu0 23
    %4303 = vperm.xlu0 %4302, %v585
    %v4304 = vpop.permute.xlu0 %4303
    %4306 = vset.pattern.permute.xlu0 23
    %4307 = vperm.xlu0 %4306, %v586
    %v4308 = vpop.permute.xlu0 %4307
    %4310 = vset.pattern.permute.xlu0 23
    %4311 = vperm.xlu0 %4310, %v587
    %v4312 = vpop.permute.xlu0 %4311
    %4314 = vset.pattern.permute.xlu0 23
    %4315 = vperm.xlu0 %4314, %v588
    %v4316 = vpop.permute.xlu0 %4315
    %4318 = vset.pattern.permute.xlu0 23
    %4319 = vperm.xlu0 %4318, %v589
    %v4320 = vpop.permute.xlu0 %4319
    %4322 = vset.pattern.permute.xlu0 23
    %4323 = vperm.xlu0 %4322, %v590
    %v4324 = vpop.permute.xlu0 %4323
    %4326 = vset.pattern.permute.xlu0 23
    %4327 = vperm.xlu0 %4326, %v591
    %v4328 = vpop.permute.xlu0 %4327
    %4330 = vset.pattern.permute.xlu0 23
    %4331 = vperm.xlu0 %4330, %v592
    %v4332 = vpop.permute.xlu0 %4331
    %v4334 = vmul.f32 %v4234, %v4256
    %v4335 = vmul.f32 %v4235, %v4260
    %v4336 = vmul.f32 %v4236, %v4264
    %v4337 = vmul.f32 %v4237, %v4268
    %v4338 = vmul.f32 %v4238, %v4272
    %v4339 = vmul.f32 %v4239, %v4276
    %v4340 = vmul.f32 %v4240, %v4280
    %v4341 = vmul.f32 %v4241, %v4284
    %v4342 = vmul.f32 %v4242, %v4288
    %v4343 = vmul.f32 %v4243, %v4292
    %v4344 = vmul.f32 %v4244, %v4296
    %v4345 = vmul.f32 %v4245, %v4300
    %v4346 = vmul.f32 %v4246, %v4304
    %v4347 = vmul.f32 %v4247, %v4308
    %v4348 = vmul.f32 %v4248, %v4312
    %v4349 = vmul.f32 %v4249, %v4316
    %v4350 = vmul.f32 %v4250, %v4320
    %v4351 = vmul.f32 %v4251, %v4324
    %v4352 = vmul.f32 %v4252, %v4328
    %v4353 = vmul.f32 %v4253, %v4332
    %v4354 = vadd.f32 %v4206, %v4334
    %v4355 = vadd.f32 %v4207, %v4335
    %v4356 = vadd.f32 %v4208, %v4336
    %v4357 = vadd.f32 %v4209, %v4337
    %v4358 = vadd.f32 %v4210, %v4338
    %v4359 = vadd.f32 %v4211, %v4339
    %v4360 = vadd.f32 %v4212, %v4340
    %v4361 = vadd.f32 %v4213, %v4341
    %v4362 = vadd.f32 %v4214, %v4342
    %v4363 = vadd.f32 %v4215, %v4343
    %v4364 = vadd.f32 %v4216, %v4344
    %v4365 = vadd.f32 %v4217, %v4345
    %v4366 = vadd.f32 %v4218, %v4346
    %v4367 = vadd.f32 %v4219, %v4347
    %v4368 = vadd.f32 %v4220, %v4348
    %v4369 = vadd.f32 %v4221, %v4349
    %v4370 = vadd.f32 %v4222, %v4350
    %v4371 = vadd.f32 %v4223, %v4351
    %v4372 = vadd.f32 %v4224, %v4352
    %v4373 = vadd.f32 %v4225, %v4353
    %s4374 = scalar_lea.vmem %s9, 24
    %v4375 = vld [vmem:[%s4374] sm:$0x1]
    %v4377 = vlaneseq
    %v4378 = vshrl.u32 %v4377, 7
    %v4379 = vsub.s32 0, %v4378
    %v4380 = vrot.slane %v4375, %v4379
    %v4382 = vmul.f32 %v628, %v4380
    %v4383 = vmul.f32 %v630, %v4380
    %v4384 = vmul.f32 %v632, %v4380
    %v4385 = vmul.f32 %v634, %v4380
    %v4386 = vmul.f32 %v636, %v4380
    %v4387 = vmul.f32 %v638, %v4380
    %v4388 = vmul.f32 %v640, %v4380
    %v4389 = vmul.f32 %v642, %v4380
    %v4390 = vmul.f32 %v644, %v4380
    %v4391 = vmul.f32 %v646, %v4380
    %v4392 = vmul.f32 %v648, %v4380
    %v4393 = vmul.f32 %v650, %v4380
    %v4394 = vmul.f32 %v652, %v4380
    %v4395 = vmul.f32 %v654, %v4380
    %v4396 = vmul.f32 %v655, %v4380
    %v4397 = vmul.f32 %v599, %v4380
    %v4398 = vmul.f32 %v601, %v4380
    %v4399 = vmul.f32 %v674, %v4380
    %v4400 = vmul.f32 %v624, %v4380
    %v4401 = vmul.f32 %v626, %v4380
    %4402 = vset.pattern.permute.xlu0 24
    %4403 = vperm.xlu0 %4402, %v573
    %v4404 = vpop.permute.xlu0 %4403
    %4406 = vset.pattern.permute.xlu0 24
    %4407 = vperm.xlu0 %4406, %v574
    %v4408 = vpop.permute.xlu0 %4407
    %4410 = vset.pattern.permute.xlu0 24
    %4411 = vperm.xlu0 %4410, %v575
    %v4412 = vpop.permute.xlu0 %4411
    %4414 = vset.pattern.permute.xlu0 24
    %4415 = vperm.xlu0 %4414, %v576
    %v4416 = vpop.permute.xlu0 %4415
    %4418 = vset.pattern.permute.xlu0 24
    %4419 = vperm.xlu0 %4418, %v577
    %v4420 = vpop.permute.xlu0 %4419
    %4422 = vset.pattern.permute.xlu0 24
    %4423 = vperm.xlu0 %4422, %v578
    %v4424 = vpop.permute.xlu0 %4423
    %4426 = vset.pattern.permute.xlu0 24
    %4427 = vperm.xlu0 %4426, %v579
    %v4428 = vpop.permute.xlu0 %4427
    %4430 = vset.pattern.permute.xlu0 24
    %4431 = vperm.xlu0 %4430, %v580
    %v4432 = vpop.permute.xlu0 %4431
    %4434 = vset.pattern.permute.xlu0 24
    %4435 = vperm.xlu0 %4434, %v581
    %v4436 = vpop.permute.xlu0 %4435
    %4438 = vset.pattern.permute.xlu0 24
    %4439 = vperm.xlu0 %4438, %v582
    %v4440 = vpop.permute.xlu0 %4439
    %4442 = vset.pattern.permute.xlu0 24
    %4443 = vperm.xlu0 %4442, %v583
    %v4444 = vpop.permute.xlu0 %4443
    %4446 = vset.pattern.permute.xlu0 24
    %4447 = vperm.xlu0 %4446, %v584
    %v4448 = vpop.permute.xlu0 %4447
    %4450 = vset.pattern.permute.xlu0 24
    %4451 = vperm.xlu0 %4450, %v585
    %v4452 = vpop.permute.xlu0 %4451
    %4454 = vset.pattern.permute.xlu0 24
    %4455 = vperm.xlu0 %4454, %v586
    %v4456 = vpop.permute.xlu0 %4455
    %4458 = vset.pattern.permute.xlu0 24
    %4459 = vperm.xlu0 %4458, %v587
    %v4460 = vpop.permute.xlu0 %4459
    %4462 = vset.pattern.permute.xlu0 24
    %4463 = vperm.xlu0 %4462, %v588
    %v4464 = vpop.permute.xlu0 %4463
    %4466 = vset.pattern.permute.xlu0 24
    %4467 = vperm.xlu0 %4466, %v589
    %v4468 = vpop.permute.xlu0 %4467
    %4470 = vset.pattern.permute.xlu0 24
    %4471 = vperm.xlu0 %4470, %v590
    %v4472 = vpop.permute.xlu0 %4471
    %4474 = vset.pattern.permute.xlu0 24
    %4475 = vperm.xlu0 %4474, %v591
    %v4476 = vpop.permute.xlu0 %4475
    %4478 = vset.pattern.permute.xlu0 24
    %4479 = vperm.xlu0 %4478, %v592
    %v4480 = vpop.permute.xlu0 %4479
    %v4482 = vmul.f32 %v4382, %v4404
    %v4483 = vmul.f32 %v4383, %v4408
    %v4484 = vmul.f32 %v4384, %v4412
    %v4485 = vmul.f32 %v4385, %v4416
    %v4486 = vmul.f32 %v4386, %v4420
    %v4487 = vmul.f32 %v4387, %v4424
    %v4488 = vmul.f32 %v4388, %v4428
    %v4489 = vmul.f32 %v4389, %v4432
    %v4490 = vmul.f32 %v4390, %v4436
    %v4491 = vmul.f32 %v4391, %v4440
    %v4492 = vmul.f32 %v4392, %v4444
    %v4493 = vmul.f32 %v4393, %v4448
    %v4494 = vmul.f32 %v4394, %v4452
    %v4495 = vmul.f32 %v4395, %v4456
    %v4496 = vmul.f32 %v4396, %v4460
    %v4497 = vmul.f32 %v4397, %v4464
    %v4498 = vmul.f32 %v4398, %v4468
    %v4499 = vmul.f32 %v4399, %v4472
    %v4500 = vmul.f32 %v4400, %v4476
    %v4501 = vmul.f32 %v4401, %v4480
    %v4502 = vadd.f32 %v4354, %v4482
    %v4503 = vadd.f32 %v4355, %v4483
    %v4504 = vadd.f32 %v4356, %v4484
    %v4505 = vadd.f32 %v4357, %v4485
    %v4506 = vadd.f32 %v4358, %v4486
    %v4507 = vadd.f32 %v4359, %v4487
    %v4508 = vadd.f32 %v4360, %v4488
    %v4509 = vadd.f32 %v4361, %v4489
    %v4510 = vadd.f32 %v4362, %v4490
    %v4511 = vadd.f32 %v4363, %v4491
    %v4512 = vadd.f32 %v4364, %v4492
    %v4513 = vadd.f32 %v4365, %v4493
    %v4514 = vadd.f32 %v4366, %v4494
    %v4515 = vadd.f32 %v4367, %v4495
    %v4516 = vadd.f32 %v4368, %v4496
    %v4517 = vadd.f32 %v4369, %v4497
    %v4518 = vadd.f32 %v4370, %v4498
    %v4519 = vadd.f32 %v4371, %v4499
    %v4520 = vadd.f32 %v4372, %v4500
    %v4521 = vadd.f32 %v4373, %v4501
    %s4522 = scalar_lea.vmem %s9, 25
    %v4523 = vld [vmem:[%s4522] sm:$0x1]
    %v4525 = vlaneseq
    %v4526 = vshrl.u32 %v4525, 7
    %v4527 = vsub.s32 0, %v4526
    %v4528 = vrot.slane %v4523, %v4527
    %v4530 = vmul.f32 %v837, %v4528
    %v4531 = vmul.f32 %v839, %v4528
    %v4532 = vmul.f32 %v841, %v4528
    %v4533 = vmul.f32 %v843, %v4528
    %v4534 = vmul.f32 %v845, %v4528
    %v4535 = vmul.f32 %v847, %v4528
    %v4536 = vmul.f32 %v849, %v4528
    %v4537 = vmul.f32 %v851, %v4528
    %v4538 = vmul.f32 %v853, %v4528
    %v4539 = vmul.f32 %v855, %v4528
    %v4540 = vmul.f32 %v857, %v4528
    %v4541 = vmul.f32 %v859, %v4528
    %v4542 = vmul.f32 %v861, %v4528
    %v4543 = vmul.f32 %v863, %v4528
    %v4544 = vmul.f32 %v864, %v4528
    %v4545 = vmul.f32 %v825, %v4528
    %v4546 = vmul.f32 %v827, %v4528
    %v4547 = vmul.f32 %v883, %v4528
    %v4548 = vmul.f32 %v833, %v4528
    %v4549 = vmul.f32 %v835, %v4528
    %4550 = vset.pattern.permute.xlu0 25
    %4551 = vperm.xlu0 %4550, %v573
    %v4552 = vpop.permute.xlu0 %4551
    %4554 = vset.pattern.permute.xlu0 25
    %4555 = vperm.xlu0 %4554, %v574
    %v4556 = vpop.permute.xlu0 %4555
    %4558 = vset.pattern.permute.xlu0 25
    %4559 = vperm.xlu0 %4558, %v575
    %v4560 = vpop.permute.xlu0 %4559
    %4562 = vset.pattern.permute.xlu0 25
    %4563 = vperm.xlu0 %4562, %v576
    %v4564 = vpop.permute.xlu0 %4563
    %4566 = vset.pattern.permute.xlu0 25
    %4567 = vperm.xlu0 %4566, %v577
    %v4568 = vpop.permute.xlu0 %4567
    %4570 = vset.pattern.permute.xlu0 25
    %4571 = vperm.xlu0 %4570, %v578
    %v4572 = vpop.permute.xlu0 %4571
    %4574 = vset.pattern.permute.xlu0 25
    %4575 = vperm.xlu0 %4574, %v579
    %v4576 = vpop.permute.xlu0 %4575
    %4578 = vset.pattern.permute.xlu0 25
    %4579 = vperm.xlu0 %4578, %v580
    %v4580 = vpop.permute.xlu0 %4579
    %4582 = vset.pattern.permute.xlu0 25
    %4583 = vperm.xlu0 %4582, %v581
    %v4584 = vpop.permute.xlu0 %4583
    %4586 = vset.pattern.permute.xlu0 25
    %4587 = vperm.xlu0 %4586, %v582
    %v4588 = vpop.permute.xlu0 %4587
    %4590 = vset.pattern.permute.xlu0 25
    %4591 = vperm.xlu0 %4590, %v583
    %v4592 = vpop.permute.xlu0 %4591
    %4594 = vset.pattern.permute.xlu0 25
    %4595 = vperm.xlu0 %4594, %v584
    %v4596 = vpop.permute.xlu0 %4595
    %4598 = vset.pattern.permute.xlu0 25
    %4599 = vperm.xlu0 %4598, %v585
    %v4600 = vpop.permute.xlu0 %4599
    %4602 = vset.pattern.permute.xlu0 25
    %4603 = vperm.xlu0 %4602, %v586
    %v4604 = vpop.permute.xlu0 %4603
    %4606 = vset.pattern.permute.xlu0 25
    %4607 = vperm.xlu0 %4606, %v587
    %v4608 = vpop.permute.xlu0 %4607
    %4610 = vset.pattern.permute.xlu0 25
    %4611 = vperm.xlu0 %4610, %v588
    %v4612 = vpop.permute.xlu0 %4611
    %4614 = vset.pattern.permute.xlu0 25
    %4615 = vperm.xlu0 %4614, %v589
    %v4616 = vpop.permute.xlu0 %4615
    %4618 = vset.pattern.permute.xlu0 25
    %4619 = vperm.xlu0 %4618, %v590
    %v4620 = vpop.permute.xlu0 %4619
    %4622 = vset.pattern.permute.xlu0 25
    %4623 = vperm.xlu0 %4622, %v591
    %v4624 = vpop.permute.xlu0 %4623
    %4626 = vset.pattern.permute.xlu0 25
    %4627 = vperm.xlu0 %4626, %v592
    %v4628 = vpop.permute.xlu0 %4627
    %v4630 = vmul.f32 %v4530, %v4552
    %v4631 = vmul.f32 %v4531, %v4556
    %v4632 = vmul.f32 %v4532, %v4560
    %v4633 = vmul.f32 %v4533, %v4564
    %v4634 = vmul.f32 %v4534, %v4568
    %v4635 = vmul.f32 %v4535, %v4572
    %v4636 = vmul.f32 %v4536, %v4576
    %v4637 = vmul.f32 %v4537, %v4580
    %v4638 = vmul.f32 %v4538, %v4584
    %v4639 = vmul.f32 %v4539, %v4588
    %v4640 = vmul.f32 %v4540, %v4592
    %v4641 = vmul.f32 %v4541, %v4596
    %v4642 = vmul.f32 %v4542, %v4600
    %v4643 = vmul.f32 %v4543, %v4604
    %v4644 = vmul.f32 %v4544, %v4608
    %v4645 = vmul.f32 %v4545, %v4612
    %v4646 = vmul.f32 %v4546, %v4616
    %v4647 = vmul.f32 %v4547, %v4620
    %v4648 = vmul.f32 %v4548, %v4624
    %v4649 = vmul.f32 %v4549, %v4628
    %v4650 = vadd.f32 %v4502, %v4630
    %v4651 = vadd.f32 %v4503, %v4631
    %v4652 = vadd.f32 %v4504, %v4632
    %v4653 = vadd.f32 %v4505, %v4633
    %v4654 = vadd.f32 %v4506, %v4634
    %v4655 = vadd.f32 %v4507, %v4635
    %v4656 = vadd.f32 %v4508, %v4636
    %v4657 = vadd.f32 %v4509, %v4637
    %v4658 = vadd.f32 %v4510, %v4638
    %v4659 = vadd.f32 %v4511, %v4639
    %v4660 = vadd.f32 %v4512, %v4640
    %v4661 = vadd.f32 %v4513, %v4641
    %v4662 = vadd.f32 %v4514, %v4642
    %v4663 = vadd.f32 %v4515, %v4643
    %v4664 = vadd.f32 %v4516, %v4644
    %v4665 = vadd.f32 %v4517, %v4645
    %v4666 = vadd.f32 %v4518, %v4646
    %v4667 = vadd.f32 %v4519, %v4647
    %v4668 = vadd.f32 %v4520, %v4648
    %v4669 = vadd.f32 %v4521, %v4649
    %s4670 = scalar_lea.vmem %s9, 26
    %v4671 = vld [vmem:[%s4670] sm:$0x1]
    %v4673 = vlaneseq
    %v4674 = vshrl.u32 %v4673, 7
    %v4675 = vsub.s32 0, %v4674
    %v4676 = vrot.slane %v4671, %v4675
    %v4678 = vmul.f32 %v1047, %v4676
    %v4679 = vmul.f32 %v1049, %v4676
    %v4680 = vmul.f32 %v1051, %v4676
    %v4681 = vmul.f32 %v1053, %v4676
    %v4682 = vmul.f32 %v1055, %v4676
    %v4683 = vmul.f32 %v1057, %v4676
    %v4684 = vmul.f32 %v1059, %v4676
    %v4685 = vmul.f32 %v1061, %v4676
    %v4686 = vmul.f32 %v1063, %v4676
    %v4687 = vmul.f32 %v1065, %v4676
    %v4688 = vmul.f32 %v1067, %v4676
    %v4689 = vmul.f32 %v1069, %v4676
    %v4690 = vmul.f32 %v1071, %v4676
    %v4691 = vmul.f32 %v1073, %v4676
    %v4692 = vmul.f32 %v1074, %v4676
    %v4693 = vmul.f32 %v1035, %v4676
    %v4694 = vmul.f32 %v1037, %v4676
    %v4695 = vmul.f32 %v1093, %v4676
    %v4696 = vmul.f32 %v1043, %v4676
    %v4697 = vmul.f32 %v1045, %v4676
    %4698 = vset.pattern.permute.xlu0 26
    %4699 = vperm.xlu0 %4698, %v573
    %v4700 = vpop.permute.xlu0 %4699
    %4702 = vset.pattern.permute.xlu0 26
    %4703 = vperm.xlu0 %4702, %v574
    %v4704 = vpop.permute.xlu0 %4703
    %4706 = vset.pattern.permute.xlu0 26
    %4707 = vperm.xlu0 %4706, %v575
    %v4708 = vpop.permute.xlu0 %4707
    %4710 = vset.pattern.permute.xlu0 26
    %4711 = vperm.xlu0 %4710, %v576
    %v4712 = vpop.permute.xlu0 %4711
    %4714 = vset.pattern.permute.xlu0 26
    %4715 = vperm.xlu0 %4714, %v577
    %v4716 = vpop.permute.xlu0 %4715
    %4718 = vset.pattern.permute.xlu0 26
    %4719 = vperm.xlu0 %4718, %v578
    %v4720 = vpop.permute.xlu0 %4719
    %4722 = vset.pattern.permute.xlu0 26
    %4723 = vperm.xlu0 %4722, %v579
    %v4724 = vpop.permute.xlu0 %4723
    %4726 = vset.pattern.permute.xlu0 26
    %4727 = vperm.xlu0 %4726, %v580
    %v4728 = vpop.permute.xlu0 %4727
    %4730 = vset.pattern.permute.xlu0 26
    %4731 = vperm.xlu0 %4730, %v581
    %v4732 = vpop.permute.xlu0 %4731
    %4734 = vset.pattern.permute.xlu0 26
    %4735 = vperm.xlu0 %4734, %v582
    %v4736 = vpop.permute.xlu0 %4735
    %4738 = vset.pattern.permute.xlu0 26
    %4739 = vperm.xlu0 %4738, %v583
    %v4740 = vpop.permute.xlu0 %4739
    %4742 = vset.pattern.permute.xlu0 26
    %4743 = vperm.xlu0 %4742, %v584
    %v4744 = vpop.permute.xlu0 %4743
    %4746 = vset.pattern.permute.xlu0 26
    %4747 = vperm.xlu0 %4746, %v585
    %v4748 = vpop.permute.xlu0 %4747
    %4750 = vset.pattern.permute.xlu0 26
    %4751 = vperm.xlu0 %4750, %v586
    %v4752 = vpop.permute.xlu0 %4751
    %4754 = vset.pattern.permute.xlu0 26
    %4755 = vperm.xlu0 %4754, %v587
    %v4756 = vpop.permute.xlu0 %4755
    %4758 = vset.pattern.permute.xlu0 26
    %4759 = vperm.xlu0 %4758, %v588
    %v4760 = vpop.permute.xlu0 %4759
    %4762 = vset.pattern.permute.xlu0 26
    %4763 = vperm.xlu0 %4762, %v589
    %v4764 = vpop.permute.xlu0 %4763
    %4766 = vset.pattern.permute.xlu0 26
    %4767 = vperm.xlu0 %4766, %v590
    %v4768 = vpop.permute.xlu0 %4767
    %4770 = vset.pattern.permute.xlu0 26
    %4771 = vperm.xlu0 %4770, %v591
    %v4772 = vpop.permute.xlu0 %4771
    %4774 = vset.pattern.permute.xlu0 26
    %4775 = vperm.xlu0 %4774, %v592
    %v4776 = vpop.permute.xlu0 %4775
    %v4778 = vmul.f32 %v4678, %v4700
    %v4779 = vmul.f32 %v4679, %v4704
    %v4780 = vmul.f32 %v4680, %v4708
    %v4781 = vmul.f32 %v4681, %v4712
    %v4782 = vmul.f32 %v4682, %v4716
    %v4783 = vmul.f32 %v4683, %v4720
    %v4784 = vmul.f32 %v4684, %v4724
    %v4785 = vmul.f32 %v4685, %v4728
    %v4786 = vmul.f32 %v4686, %v4732
    %v4787 = vmul.f32 %v4687, %v4736
    %v4788 = vmul.f32 %v4688, %v4740
    %v4789 = vmul.f32 %v4689, %v4744
    %v4790 = vmul.f32 %v4690, %v4748
    %v4791 = vmul.f32 %v4691, %v4752
    %v4792 = vmul.f32 %v4692, %v4756
    %v4793 = vmul.f32 %v4693, %v4760
    %v4794 = vmul.f32 %v4694, %v4764
    %v4795 = vmul.f32 %v4695, %v4768
    %v4796 = vmul.f32 %v4696, %v4772
    %v4797 = vmul.f32 %v4697, %v4776
    %v4798 = vadd.f32 %v4650, %v4778
    %v4799 = vadd.f32 %v4651, %v4779
    %v4800 = vadd.f32 %v4652, %v4780
    %v4801 = vadd.f32 %v4653, %v4781
    %v4802 = vadd.f32 %v4654, %v4782
    %v4803 = vadd.f32 %v4655, %v4783
    %v4804 = vadd.f32 %v4656, %v4784
    %v4805 = vadd.f32 %v4657, %v4785
    %v4806 = vadd.f32 %v4658, %v4786
    %v4807 = vadd.f32 %v4659, %v4787
    %v4808 = vadd.f32 %v4660, %v4788
    %v4809 = vadd.f32 %v4661, %v4789
    %v4810 = vadd.f32 %v4662, %v4790
    %v4811 = vadd.f32 %v4663, %v4791
    %v4812 = vadd.f32 %v4664, %v4792
    %v4813 = vadd.f32 %v4665, %v4793
    %v4814 = vadd.f32 %v4666, %v4794
    %v4815 = vadd.f32 %v4667, %v4795
    %v4816 = vadd.f32 %v4668, %v4796
    %v4817 = vadd.f32 %v4669, %v4797
    %v4818 = vld [vmem:[%s11] sm:$0x1]
    %v4820 = vlaneseq
    %v4821 = vshrl.u32 %v4820, 7
    %v4822 = vsub.s32 0, %v4821
    %v4823 = vrot.slane %v4818, %v4822
    %v4825 = vadd.f32 %v4798, %v4823
    %v4826 = vadd.f32 %v4799, %v4823
    %v4827 = vadd.f32 %v4800, %v4823
    %v4828 = vadd.f32 %v4801, %v4823
    %v4829 = vadd.f32 %v4802, %v4823
    %v4830 = vadd.f32 %v4803, %v4823
    %v4831 = vadd.f32 %v4804, %v4823
    %v4832 = vadd.f32 %v4805, %v4823
    %v4833 = vadd.f32 %v4806, %v4823
    %v4834 = vadd.f32 %v4807, %v4823
    %v4835 = vadd.f32 %v4808, %v4823
    %v4836 = vadd.f32 %v4809, %v4823
    %v4837 = vadd.f32 %v4810, %v4823
    %v4838 = vadd.f32 %v4811, %v4823
    %v4839 = vadd.f32 %v4812, %v4823
    %v4840 = vadd.f32 %v4813, %v4823
    %v4841 = vadd.f32 %v4814, %v4823
    %v4842 = vadd.f32 %v4815, %v4823
    %v4843 = vadd.f32 %v4816, %v4823
    %v4844 = vadd.f32 %v4817, %v4823
    %v4845 = vld [vmem:[%s13] sm:$0x1]
    %v4846 = vld [vmem:[%s15] sm:$0x1]
    %vm4847 = vcmask 261120
    %v4848 = vsel %vm4847, %v4825, 0.0
    %4849 = vadd.xlane.f32.xlu0 %v4848
    %v4850 = vpop.xlane.xlu0 %4849
    %v4851 = vsel %vm4847, %v4826, 0.0
    %4852 = vadd.xlane.f32.xlu0 %v4851
    %v4853 = vpop.xlane.xlu0 %4852
    %v4854 = vsel %vm4847, %v4827, 0.0
    %4855 = vadd.xlane.f32.xlu0 %v4854
    %v4856 = vpop.xlane.xlu0 %4855
    %v4857 = vsel %vm4847, %v4828, 0.0
    %4858 = vadd.xlane.f32.xlu0 %v4857
    %v4859 = vpop.xlane.xlu0 %4858
    %v4860 = vsel %vm4847, %v4829, 0.0
    %4861 = vadd.xlane.f32.xlu0 %v4860
    %v4862 = vpop.xlane.xlu0 %4861
    %v4863 = vsel %vm4847, %v4830, 0.0
    %4864 = vadd.xlane.f32.xlu0 %v4863
    %v4865 = vpop.xlane.xlu0 %4864
    %v4866 = vsel %vm4847, %v4831, 0.0
    %4867 = vadd.xlane.f32.xlu0 %v4866
    %v4868 = vpop.xlane.xlu0 %4867
    %v4869 = vsel %vm4847, %v4832, 0.0
    %4870 = vadd.xlane.f32.xlu0 %v4869
    %v4871 = vpop.xlane.xlu0 %4870
    %v4872 = vsel %vm4847, %v4833, 0.0
    %4873 = vadd.xlane.f32.xlu0 %v4872
    %v4874 = vpop.xlane.xlu0 %4873
    %v4875 = vsel %vm4847, %v4834, 0.0
    %4876 = vadd.xlane.f32.xlu0 %v4875
    %v4877 = vpop.xlane.xlu0 %4876
    %v4878 = vsel %vm4847, %v4835, 0.0
    %4879 = vadd.xlane.f32.xlu0 %v4878
    %v4880 = vpop.xlane.xlu0 %4879
    %v4881 = vsel %vm4847, %v4836, 0.0
    %4882 = vadd.xlane.f32.xlu0 %v4881
    %v4883 = vpop.xlane.xlu0 %4882
    %v4884 = vsel %vm4847, %v4837, 0.0
    %4885 = vadd.xlane.f32.xlu0 %v4884
    %v4886 = vpop.xlane.xlu0 %4885
    %v4887 = vsel %vm4847, %v4838, 0.0
    %4888 = vadd.xlane.f32.xlu0 %v4887
    %v4889 = vpop.xlane.xlu0 %4888
    %v4890 = vsel %vm4847, %v4839, 0.0
    %4891 = vadd.xlane.f32.xlu0 %v4890
    %v4892 = vpop.xlane.xlu0 %4891
    %v4893 = vsel %vm4847, %v4840, 0.0
    %4894 = vadd.xlane.f32.xlu0 %v4893
    %v4895 = vpop.xlane.xlu0 %4894
    %v4896 = vsel %vm4847, %v4841, 0.0
    %4897 = vadd.xlane.f32.xlu0 %v4896
    %v4898 = vpop.xlane.xlu0 %4897
    %v4899 = vsel %vm4847, %v4842, 0.0
    %4900 = vadd.xlane.f32.xlu0 %v4899
    %v4901 = vpop.xlane.xlu0 %4900
    %v4902 = vsel %vm4847, %v4843, 0.0
    %4903 = vadd.xlane.f32.xlu0 %v4902
    %v4904 = vpop.xlane.xlu0 %4903
    %v4905 = vsel %vm4847, %v4844, 0.0
    %4906 = vadd.xlane.f32.xlu0 %v4905
    %v4907 = vpop.xlane.xlu0 %4906
    %v4908 = vrcp.pop 32.0
    %v4909 = vmul.f32 %v4850, %v4908
    %v4910 = vmul.f32 %v4853, %v4908
    %v4911 = vmul.f32 %v4856, %v4908
    %v4912 = vmul.f32 %v4859, %v4908
    %v4913 = vmul.f32 %v4862, %v4908
    %v4914 = vmul.f32 %v4865, %v4908
    %v4915 = vmul.f32 %v4868, %v4908
    %v4916 = vmul.f32 %v4871, %v4908
    %v4917 = vmul.f32 %v4874, %v4908
    %v4918 = vmul.f32 %v4877, %v4908
    %v4919 = vmul.f32 %v4880, %v4908
    %v4920 = vmul.f32 %v4883, %v4908
    %v4921 = vmul.f32 %v4886, %v4908
    %v4922 = vmul.f32 %v4889, %v4908
    %v4923 = vmul.f32 %v4892, %v4908
    %v4924 = vmul.f32 %v4895, %v4908
    %v4925 = vmul.f32 %v4898, %v4908
    %v4926 = vmul.f32 %v4901, %v4908
    %v4927 = vmul.f32 %v4904, %v4908
    %v4928 = vmul.f32 %v4907, %v4908
    %v4929 = vmul.f32 %v4825, %v4825
    %v4930 = vmul.f32 %v4826, %v4826
    %v4931 = vmul.f32 %v4827, %v4827
    %v4932 = vmul.f32 %v4828, %v4828
    %v4933 = vmul.f32 %v4829, %v4829
    %v4934 = vmul.f32 %v4830, %v4830
    %v4935 = vmul.f32 %v4831, %v4831
    %v4936 = vmul.f32 %v4832, %v4832
    %v4937 = vmul.f32 %v4833, %v4833
    %v4938 = vmul.f32 %v4834, %v4834
    %v4939 = vmul.f32 %v4835, %v4835
    %v4940 = vmul.f32 %v4836, %v4836
    %v4941 = vmul.f32 %v4837, %v4837
    %v4942 = vmul.f32 %v4838, %v4838
    %v4943 = vmul.f32 %v4839, %v4839
    %v4944 = vmul.f32 %v4840, %v4840
    %v4945 = vmul.f32 %v4841, %v4841
    %v4946 = vmul.f32 %v4842, %v4842
    %v4947 = vmul.f32 %v4843, %v4843
    %v4948 = vmul.f32 %v4844, %v4844
    %v4949 = vsel %vm4847, %v4929, 0.0
    %4950 = vadd.xlane.f32.xlu0 %v4949
    %v4951 = vpop.xlane.xlu0 %4950
    %v4952 = vsel %vm4847, %v4930, 0.0
    %4953 = vadd.xlane.f32.xlu0 %v4952
    %v4954 = vpop.xlane.xlu0 %4953
    %v4955 = vsel %vm4847, %v4931, 0.0
    %4956 = vadd.xlane.f32.xlu0 %v4955
    %v4957 = vpop.xlane.xlu0 %4956
    %v4958 = vsel %vm4847, %v4932, 0.0
    %4959 = vadd.xlane.f32.xlu0 %v4958
    %v4960 = vpop.xlane.xlu0 %4959
    %v4961 = vsel %vm4847, %v4933, 0.0
    %4962 = vadd.xlane.f32.xlu0 %v4961
    %v4963 = vpop.xlane.xlu0 %4962
    %v4964 = vsel %vm4847, %v4934, 0.0
    %4965 = vadd.xlane.f32.xlu0 %v4964
    %v4966 = vpop.xlane.xlu0 %4965
    %v4967 = vsel %vm4847, %v4935, 0.0
    %4968 = vadd.xlane.f32.xlu0 %v4967
    %v4969 = vpop.xlane.xlu0 %4968
    %v4970 = vsel %vm4847, %v4936, 0.0
    %4971 = vadd.xlane.f32.xlu0 %v4970
    %v4972 = vpop.xlane.xlu0 %4971
    %v4973 = vsel %vm4847, %v4937, 0.0
    %4974 = vadd.xlane.f32.xlu0 %v4973
    %v4975 = vpop.xlane.xlu0 %4974
    %v4976 = vsel %vm4847, %v4938, 0.0
    %4977 = vadd.xlane.f32.xlu0 %v4976
    %v4978 = vpop.xlane.xlu0 %4977
    %v4979 = vsel %vm4847, %v4939, 0.0
    %4980 = vadd.xlane.f32.xlu0 %v4979
    %v4981 = vpop.xlane.xlu0 %4980
    %v4982 = vsel %vm4847, %v4940, 0.0
    %4983 = vadd.xlane.f32.xlu0 %v4982
    %v4984 = vpop.xlane.xlu0 %4983
    %v4985 = vsel %vm4847, %v4941, 0.0
    %4986 = vadd.xlane.f32.xlu0 %v4985
    %v4987 = vpop.xlane.xlu0 %4986
    %v4988 = vsel %vm4847, %v4942, 0.0
    %4989 = vadd.xlane.f32.xlu0 %v4988
    %v4990 = vpop.xlane.xlu0 %4989
    %v4991 = vsel %vm4847, %v4943, 0.0
    %4992 = vadd.xlane.f32.xlu0 %v4991
    %v4993 = vpop.xlane.xlu0 %4992
    %v4994 = vsel %vm4847, %v4944, 0.0
    %4995 = vadd.xlane.f32.xlu0 %v4994
    %v4996 = vpop.xlane.xlu0 %4995
    %v4997 = vsel %vm4847, %v4945, 0.0
    %4998 = vadd.xlane.f32.xlu0 %v4997
    %v4999 = vpop.xlane.xlu0 %4998
    %v5000 = vsel %vm4847, %v4946, 0.0
    %5001 = vadd.xlane.f32.xlu0 %v5000
    %v5002 = vpop.xlane.xlu0 %5001
    %v5003 = vsel %vm4847, %v4947, 0.0
    %5004 = vadd.xlane.f32.xlu0 %v5003
    %v5005 = vpop.xlane.xlu0 %5004
    %v5006 = vsel %vm4847, %v4948, 0.0
    %5007 = vadd.xlane.f32.xlu0 %v5006
    %v5008 = vpop.xlane.xlu0 %5007
    %v5009 = vmul.f32 %v4951, %v4908
    %v5010 = vmul.f32 %v4954, %v4908
    %v5011 = vmul.f32 %v4957, %v4908
    %v5012 = vmul.f32 %v4960, %v4908
    %v5013 = vmul.f32 %v4963, %v4908
    %v5014 = vmul.f32 %v4966, %v4908
    %v5015 = vmul.f32 %v4969, %v4908
    %v5016 = vmul.f32 %v4972, %v4908
    %v5017 = vmul.f32 %v4975, %v4908
    %v5018 = vmul.f32 %v4978, %v4908
    %v5019 = vmul.f32 %v4981, %v4908
    %v5020 = vmul.f32 %v4984, %v4908
    %v5021 = vmul.f32 %v4987, %v4908
    %v5022 = vmul.f32 %v4990, %v4908
    %v5023 = vmul.f32 %v4993, %v4908
    %v5024 = vmul.f32 %v4996, %v4908
    %v5025 = vmul.f32 %v4999, %v4908
    %v5026 = vmul.f32 %v5002, %v4908
    %v5027 = vmul.f32 %v5005, %v4908
    %v5028 = vmul.f32 %v5008, %v4908
    %v5029 = vmul.f32 %v4909, %v4909
    %v5030 = vmul.f32 %v4910, %v4910
    %v5031 = vmul.f32 %v4911, %v4911
    %v5032 = vmul.f32 %v4912, %v4912
    %v5033 = vmul.f32 %v4913, %v4913
    %v5034 = vmul.f32 %v4914, %v4914
    %v5035 = vmul.f32 %v4915, %v4915
    %v5036 = vmul.f32 %v4916, %v4916
    %v5037 = vmul.f32 %v4917, %v4917
    %v5038 = vmul.f32 %v4918, %v4918
    %v5039 = vmul.f32 %v4919, %v4919
    %v5040 = vmul.f32 %v4920, %v4920
    %v5041 = vmul.f32 %v4921, %v4921
    %v5042 = vmul.f32 %v4922, %v4922
    %v5043 = vmul.f32 %v4923, %v4923
    %v5044 = vmul.f32 %v4924, %v4924
    %v5045 = vmul.f32 %v4925, %v4925
    %v5046 = vmul.f32 %v4926, %v4926
    %v5047 = vmul.f32 %v4927, %v4927
    %v5048 = vmul.f32 %v4928, %v4928
    %v5049 = vsub.f32 %v5009, %v5029
    %v5050 = vsub.f32 %v5010, %v5030
    %v5051 = vsub.f32 %v5011, %v5031
    %v5052 = vsub.f32 %v5012, %v5032
    %v5053 = vsub.f32 %v5013, %v5033
    %v5054 = vsub.f32 %v5014, %v5034
    %v5055 = vsub.f32 %v5015, %v5035
    %v5056 = vsub.f32 %v5016, %v5036
    %v5057 = vsub.f32 %v5017, %v5037
    %v5058 = vsub.f32 %v5018, %v5038
    %v5059 = vsub.f32 %v5019, %v5039
    %v5060 = vsub.f32 %v5020, %v5040
    %v5061 = vsub.f32 %v5021, %v5041
    %v5062 = vsub.f32 %v5022, %v5042
    %v5063 = vsub.f32 %v5023, %v5043
    %v5064 = vsub.f32 %v5024, %v5044
    %v5065 = vsub.f32 %v5025, %v5045
    %v5066 = vsub.f32 %v5026, %v5046
    %v5067 = vsub.f32 %v5027, %v5047
    %v5068 = vsub.f32 %v5028, %v5048
    %v5069 = vsub.f32 %v4825, %v4909
    %v5070 = vsub.f32 %v4826, %v4910
    %v5071 = vsub.f32 %v4827, %v4911
    %v5072 = vsub.f32 %v4828, %v4912
    %v5073 = vsub.f32 %v4829, %v4913
    %v5074 = vsub.f32 %v4830, %v4914
    %v5075 = vsub.f32 %v4831, %v4915
    %v5076 = vsub.f32 %v4832, %v4916
    %v5077 = vsub.f32 %v4833, %v4917
    %v5078 = vsub.f32 %v4834, %v4918
    %v5079 = vsub.f32 %v4835, %v4919
    %v5080 = vsub.f32 %v4836, %v4920
    %v5081 = vsub.f32 %v4837, %v4921
    %v5082 = vsub.f32 %v4838, %v4922
    %v5083 = vsub.f32 %v4839, %v4923
    %v5084 = vsub.f32 %v4840, %v4924
    %v5085 = vsub.f32 %v4841, %v4925
    %v5086 = vsub.f32 %v4842, %v4926
    %v5087 = vsub.f32 %v4843, %v4927
    %v5088 = vsub.f32 %v4844, %v4928
    %v5089 = vadd.f32 %v5049, 1e-05
    %v5090 = vadd.f32 %v5050, 1e-05
    %v5091 = vadd.f32 %v5051, 1e-05
    %v5092 = vadd.f32 %v5052, 1e-05
    %v5093 = vadd.f32 %v5053, 1e-05
    %v5094 = vadd.f32 %v5054, 1e-05
    %v5095 = vadd.f32 %v5055, 1e-05
    %v5096 = vadd.f32 %v5056, 1e-05
    %v5097 = vadd.f32 %v5057, 1e-05
    %v5098 = vadd.f32 %v5058, 1e-05
    %v5099 = vadd.f32 %v5059, 1e-05
    %v5100 = vadd.f32 %v5060, 1e-05
    %v5101 = vadd.f32 %v5061, 1e-05
    %v5102 = vadd.f32 %v5062, 1e-05
    %v5103 = vadd.f32 %v5063, 1e-05
    %v5104 = vadd.f32 %v5064, 1e-05
    %v5105 = vadd.f32 %v5065, 1e-05
    %v5106 = vadd.f32 %v5066, 1e-05
    %v5107 = vadd.f32 %v5067, 1e-05
    %v5108 = vadd.f32 %v5068, 1e-05
    %v5109 = vrsqrt.pop %v5089
    %v5110 = vrsqrt.pop %v5090
    %v5111 = vrsqrt.pop %v5091
    %v5112 = vrsqrt.pop %v5092
    %v5113 = vrsqrt.pop %v5093
    %v5114 = vrsqrt.pop %v5094
    %v5115 = vrsqrt.pop %v5095
    %v5116 = vrsqrt.pop %v5096
    %v5117 = vrsqrt.pop %v5097
    %v5118 = vrsqrt.pop %v5098
    %v5119 = vrsqrt.pop %v5099
    %v5120 = vrsqrt.pop %v5100
    %v5121 = vrsqrt.pop %v5101
    %v5122 = vrsqrt.pop %v5102
    %v5123 = vrsqrt.pop %v5103
    %v5124 = vrsqrt.pop %v5104
    %v5125 = vrsqrt.pop %v5105
    %v5126 = vrsqrt.pop %v5106
    %v5127 = vrsqrt.pop %v5107
    %v5128 = vrsqrt.pop %v5108
    %v5129 = vmul.f32 %v5069, %v5109
    %v5130 = vmul.f32 %v5070, %v5110
    %v5131 = vmul.f32 %v5071, %v5111
    %v5132 = vmul.f32 %v5072, %v5112
    %v5133 = vmul.f32 %v5073, %v5113
    %v5134 = vmul.f32 %v5074, %v5114
    %v5135 = vmul.f32 %v5075, %v5115
    %v5136 = vmul.f32 %v5076, %v5116
    %v5137 = vmul.f32 %v5077, %v5117
    %v5138 = vmul.f32 %v5078, %v5118
    %v5139 = vmul.f32 %v5079, %v5119
    %v5140 = vmul.f32 %v5080, %v5120
    %v5141 = vmul.f32 %v5081, %v5121
    %v5142 = vmul.f32 %v5082, %v5122
    %v5143 = vmul.f32 %v5083, %v5123
    %v5144 = vmul.f32 %v5084, %v5124
    %v5145 = vmul.f32 %v5085, %v5125
    %v5146 = vmul.f32 %v5086, %v5126
    %v5147 = vmul.f32 %v5087, %v5127
    %v5148 = vmul.f32 %v5088, %v5128
    %v5150 = vlaneseq
    %v5151 = vshrl.u32 %v5150, 7
    %v5152 = vsub.s32 0, %v5151
    %v5153 = vrot.slane %v4845, %v5152
    %v5155 = vmul.f32 %v5129, %v5153
    %v5156 = vmul.f32 %v5130, %v5153
    %v5157 = vmul.f32 %v5131, %v5153
    %v5158 = vmul.f32 %v5132, %v5153
    %v5159 = vmul.f32 %v5133, %v5153
    %v5160 = vmul.f32 %v5134, %v5153
    %v5161 = vmul.f32 %v5135, %v5153
    %v5162 = vmul.f32 %v5136, %v5153
    %v5163 = vmul.f32 %v5137, %v5153
    %v5164 = vmul.f32 %v5138, %v5153
    %v5165 = vmul.f32 %v5139, %v5153
    %v5166 = vmul.f32 %v5140, %v5153
    %v5167 = vmul.f32 %v5141, %v5153
    %v5168 = vmul.f32 %v5142, %v5153
    %v5169 = vmul.f32 %v5143, %v5153
    %v5170 = vmul.f32 %v5144, %v5153
    %v5171 = vmul.f32 %v5145, %v5153
    %v5172 = vmul.f32 %v5146, %v5153
    %v5173 = vmul.f32 %v5147, %v5153
    %v5174 = vmul.f32 %v5148, %v5153
    %v5176 = vlaneseq
    %v5177 = vshrl.u32 %v5176, 7
    %v5178 = vsub.s32 0, %v5177
    %v5179 = vrot.slane %v4846, %v5178
    %v5181 = vadd.f32 %v5155, %v5179
    %v5182 = vadd.f32 %v5156, %v5179
    %v5183 = vadd.f32 %v5157, %v5179
    %v5184 = vadd.f32 %v5158, %v5179
    %v5185 = vadd.f32 %v5159, %v5179
    %v5186 = vadd.f32 %v5160, %v5179
    %v5187 = vadd.f32 %v5161, %v5179
    %v5188 = vadd.f32 %v5162, %v5179
    %v5189 = vadd.f32 %v5163, %v5179
    %v5190 = vadd.f32 %v5164, %v5179
    %v5191 = vadd.f32 %v5165, %v5179
    %v5192 = vadd.f32 %v5166, %v5179
    %v5193 = vadd.f32 %v5167, %v5179
    %v5194 = vadd.f32 %v5168, %v5179
    %v5195 = vadd.f32 %v5169, %v5179
    %v5196 = vadd.f32 %v5170, %v5179
    %v5197 = vadd.f32 %v5171, %v5179
    %v5198 = vadd.f32 %v5172, %v5179
    %v5199 = vadd.f32 %v5173, %v5179
    %v5200 = vadd.f32 %v5174, %v5179
    %v5201 = vpack.c.bf16 %v5182, %v5181
    %v5202 = vpack.c.bf16 %v5184, %v5183
    %v5203 = vpack.c.bf16 %v5186, %v5185
    %v5204 = vpack.c.bf16 %v5188, %v5187
    %v5205 = vpack.c.bf16 %v5190, %v5189
    %v5206 = vpack.c.bf16 %v5192, %v5191
    %v5207 = vpack.c.bf16 %v5194, %v5193
    %v5208 = vpack.c.bf16 %v5196, %v5195
    %v5209 = vpack.c.bf16 %v5198, %v5197
    %v5210 = vpack.c.bf16 %v5200, %v5199
    %v5211 = vld [vmem:[%s17] sm:$0xf]
    %v5212 = vld [vmem:[%s17 + $0x4] sm:$0xf]
    %v5213 = vld [vmem:[%s17 + $0x8] sm:$0xf]
    %v5214 = vld [vmem:[%s17 + $0xc] sm:$0xf]
    %v5215 = vld [vmem:[%s19] sm:$0x1]
    %v5217 = vlaneseq
    %v5218 = vshrl.u32 %v5217, 7
    %v5219 = vsub.s32 0, %v5218
    %v5220 = vrot.slane %v5215, %v5219
    %v5226 = vunpack.c.l.b16 %v5211
    %v5227 = vunpack.c.l.b16 %v5212
    %v5228 = vunpack.c.l.b16 %v5213
    %v5229 = vunpack.c.l.b16 %v5214
    %v5230 = vpack.c.b16 %v5227, %v5226
    %v5231 = vpack.c.b16 %v5229, %v5228
    %v5235 = vsel %vm4847, %v5201, 0
    %v5238 = vsel %vm4847, %v5202, 0
    %v5241 = vsel %vm4847, %v5203, 0
    %v5244 = vsel %vm4847, %v5204, 0
    %v5247 = vsel %vm4847, %v5205, 0
    %v5250 = vsel %vm4847, %v5206, 0
    %v5253 = vsel %vm4847, %v5207, 0
    %v5256 = vsel %vm4847, %v5208, 0
    %v5259 = vsel %vm4847, %v5209, 0
    %v5262 = vsel %vm4847, %v5210, 0
    %5264 = vmatprep.subr.bf16.mxu0 0
    %5265 = vmatpush1.bf16.msra.mxu0 %v5230
    %5266 = vmatprep.subr.bf16.mxu0 0
    %5267 = vmatpush1.bf16.msra.mxu0 %v5231
    %5268 = vmatprep.subr.bf16.mxu0 0
    %5269 = vmatpush1.bf16.msra.mxu0 0
    %5270 = vmatprep.subr.bf16.mxu0 0
    %5271 = vmatpush1.bf16.msra.mxu0 0
    %5272 = vmatprep.subr.bf16.mxu0 0
    %5273 = vmatpush1.bf16.msra.mxu0 0
    %5274 = vmatprep.subr.bf16.mxu0 0
    %5275 = vmatpush1.bf16.msra.mxu0 0
    %5276 = vmatprep.subr.bf16.mxu0 0
    %5277 = vmatpush1.bf16.msra.mxu0 0
    %5278 = vmatprep.subr.bf16.mxu0 0
    %5279 = vmatpush1.bf16.msra.mxu0 0
    %5280 = vmatprep.subr.bf16.mxu0 0
    %5281 = vmatpush1.bf16.msra.mxu0 0
    %5282 = vmatprep.subr.bf16.mxu0 0
    %5283 = vmatpush1.bf16.msra.mxu0 0
    %5284 = vmatprep.subr.bf16.mxu0 0
    %5285 = vmatpush1.bf16.msra.mxu0 0
    %5286 = vmatprep.subr.bf16.mxu0 0
    %5287 = vmatpush1.bf16.msra.mxu0 0
    %5288 = vmatprep.subr.bf16.mxu0 0
    %5289 = vmatpush1.bf16.msra.mxu0 0
    %5290 = vmatprep.subr.bf16.mxu0 0
    %5291 = vmatpush1.bf16.msra.mxu0 0
    %5292 = vmatprep.subr.bf16.mxu0 0
    %5293 = vmatpush1.bf16.msra.mxu0 0
    %5294 = vmatprep.subr.bf16.mxu0 0
    %5295 = vmatpush1.bf16.msra.mxu0 0
    %5296 = vmatprep.mubr.bf16.mxu0 0
    %5297 = vmatmul.mubr.bf16.gmra.mrb[0].mxu0 %v5235
    %v5298 = vpop.f32.mrb[0].mxu0
    %v5299 = vadd.f32 %v5220, %v5298
    %v5300 = vpop.f32.mrb[0].mxu0
    %v5301 = vpop.f32.mrb[0].mxu0
    %v5302 = vadd.f32 %v5220, %v5301
    %v5303 = vpop.f32.mrb[0].mxu0
    %5304 = vmatprep.mubr.bf16.mxu0 0
    %5305 = vmatmul.mubr.bf16.gmra.mrb[0].mxu0 %v5238
    %v5306 = vpop.f32.mrb[0].mxu0
    %v5307 = vadd.f32 %v5220, %v5306
    %v5308 = vpop.f32.mrb[0].mxu0
    %v5309 = vpop.f32.mrb[0].mxu0
    %v5310 = vadd.f32 %v5220, %v5309
    %v5311 = vpop.f32.mrb[0].mxu0
    %5312 = vmatprep.mubr.bf16.mxu0 0
    %5313 = vmatmul.mubr.bf16.gmra.mrb[0].mxu0 %v5241
    %v5314 = vpop.f32.mrb[0].mxu0
    %v5315 = vadd.f32 %v5220, %v5314
    %v5316 = vpop.f32.mrb[0].mxu0
    %v5317 = vpop.f32.mrb[0].mxu0
    %v5318 = vadd.f32 %v5220, %v5317
    %v5319 = vpop.f32.mrb[0].mxu0
    %5320 = vmatprep.mubr.bf16.mxu0 0
    %5321 = vmatmul.mubr.bf16.gmra.mrb[0].mxu0 %v5244
    %v5322 = vpop.f32.mrb[0].mxu0
    %v5323 = vadd.f32 %v5220, %v5322
    %v5324 = vpop.f32.mrb[0].mxu0
    %v5325 = vpop.f32.mrb[0].mxu0
    %v5326 = vadd.f32 %v5220, %v5325
    %v5327 = vpop.f32.mrb[0].mxu0
    %5328 = vmatprep.mubr.bf16.mxu0 0
    %5329 = vmatmul.mubr.bf16.gmra.mrb[0].mxu0 %v5247
    %v5330 = vpop.f32.mrb[0].mxu0
    %v5331 = vadd.f32 %v5220, %v5330
    %v5332 = vpop.f32.mrb[0].mxu0
    %v5333 = vpop.f32.mrb[0].mxu0
    %v5334 = vadd.f32 %v5220, %v5333
    %v5335 = vpop.f32.mrb[0].mxu0
    %5336 = vmatprep.mubr.bf16.mxu0 0
    %5337 = vmatmul.mubr.bf16.gmra.mrb[0].mxu0 %v5250
    %v5338 = vpop.f32.mrb[0].mxu0
    %v5339 = vadd.f32 %v5220, %v5338
    %v5340 = vpop.f32.mrb[0].mxu0
    %v5341 = vpop.f32.mrb[0].mxu0
    %v5342 = vadd.f32 %v5220, %v5341
    %v5343 = vpop.f32.mrb[0].mxu0
    %5344 = vmatprep.mubr.bf16.mxu0 0
    %5345 = vmatmul.mubr.bf16.gmra.mrb[0].mxu0 %v5253
    %v5346 = vpop.f32.mrb[0].mxu0
    %v5347 = vadd.f32 %v5220, %v5346
    %v5348 = vpop.f32.mrb[0].mxu0
    %v5349 = vpop.f32.mrb[0].mxu0
    %v5350 = vadd.f32 %v5220, %v5349
    %v5351 = vpop.f32.mrb[0].mxu0
    %5352 = vmatprep.mubr.bf16.mxu0 0
    %5353 = vmatmul.mubr.bf16.gmra.mrb[0].mxu0 %v5256
    %v5354 = vpop.f32.mrb[0].mxu0
    %v5355 = vadd.f32 %v5220, %v5354
    %v5356 = vpop.f32.mrb[0].mxu0
    %v5357 = vpop.f32.mrb[0].mxu0
    %v5358 = vadd.f32 %v5220, %v5357
    %v5359 = vpop.f32.mrb[0].mxu0
    %5360 = vmatprep.mubr.bf16.mxu0 0
    %5361 = vmatmul.mubr.bf16.gmra.mrb[0].mxu0 %v5259
    %v5362 = vpop.f32.mrb[0].mxu0
    %v5363 = vadd.f32 %v5220, %v5362
    %v5364 = vpop.f32.mrb[0].mxu0
    %v5365 = vpop.f32.mrb[0].mxu0
    %v5366 = vadd.f32 %v5220, %v5365
    %v5367 = vpop.f32.mrb[0].mxu0
    %5368 = vmatprep.mubr.bf16.mxu0 0
    %5369 = vmatmul.mubr.bf16.gmra.mrb[0].mxu0 %v5262
    %v5370 = vpop.f32.mrb[0].mxu0
    %v5371 = vadd.f32 %v5220, %v5370
    %v5372 = vpop.f32.mrb[0].mxu0
    %v5373 = vpop.f32.mrb[0].mxu0
    %v5374 = vadd.f32 %v5220, %v5373
    %v5375 = vpop.f32.mrb[0].mxu0
    %5376 = vdwg.mxu0
    %v5377 = vmul.f32 %v5299, 0.5
    %v5378 = vmul.f32 %v5302, 0.5
    %v5379 = vmul.f32 %v5307, 0.5
    %v5380 = vmul.f32 %v5310, 0.5
    %v5381 = vmul.f32 %v5315, 0.5
    %v5382 = vmul.f32 %v5318, 0.5
    %v5383 = vmul.f32 %v5323, 0.5
    %v5384 = vmul.f32 %v5326, 0.5
    %v5385 = vmul.f32 %v5331, 0.5
    %v5386 = vmul.f32 %v5334, 0.5
    %v5387 = vmul.f32 %v5339, 0.5
    %v5388 = vmul.f32 %v5342, 0.5
    %v5389 = vmul.f32 %v5347, 0.5
    %v5390 = vmul.f32 %v5350, 0.5
    %v5391 = vmul.f32 %v5355, 0.5
    %v5392 = vmul.f32 %v5358, 0.5
    %v5393 = vmul.f32 %v5363, 0.5
    %v5394 = vmul.f32 %v5366, 0.5
    %v5395 = vmul.f32 %v5371, 0.5
    %v5396 = vmul.f32 %v5374, 0.5
    %v5397 = vmul.f32 %v5299, 0.044715
    %v5398 = vmul.f32 %v5302, 0.044715
    %v5399 = vmul.f32 %v5307, 0.044715
    %v5400 = vmul.f32 %v5310, 0.044715
    %v5401 = vmul.f32 %v5315, 0.044715
    %v5402 = vmul.f32 %v5318, 0.044715
    %v5403 = vmul.f32 %v5323, 0.044715
    %v5404 = vmul.f32 %v5326, 0.044715
    %v5405 = vmul.f32 %v5331, 0.044715
    %v5406 = vmul.f32 %v5334, 0.044715
    %v5407 = vmul.f32 %v5339, 0.044715
    %v5408 = vmul.f32 %v5342, 0.044715
    %v5409 = vmul.f32 %v5347, 0.044715
    %v5410 = vmul.f32 %v5350, 0.044715
    %v5411 = vmul.f32 %v5355, 0.044715
    %v5412 = vmul.f32 %v5358, 0.044715
    %v5413 = vmul.f32 %v5363, 0.044715
    %v5414 = vmul.f32 %v5366, 0.044715
    %v5415 = vmul.f32 %v5371, 0.044715
    %v5416 = vmul.f32 %v5374, 0.044715
    %v5417 = vmul.f32 %v5397, %v5299
    %v5418 = vmul.f32 %v5398, %v5302
    %v5419 = vmul.f32 %v5399, %v5307
    %v5420 = vmul.f32 %v5400, %v5310
    %v5421 = vmul.f32 %v5401, %v5315
    %v5422 = vmul.f32 %v5402, %v5318
    %v5423 = vmul.f32 %v5403, %v5323
    %v5424 = vmul.f32 %v5404, %v5326
    %v5425 = vmul.f32 %v5405, %v5331
    %v5426 = vmul.f32 %v5406, %v5334
    %v5427 = vmul.f32 %v5407, %v5339
    %v5428 = vmul.f32 %v5408, %v5342
    %v5429 = vmul.f32 %v5409, %v5347
    %v5430 = vmul.f32 %v5410, %v5350
    %v5431 = vmul.f32 %v5411, %v5355
    %v5432 = vmul.f32 %v5412, %v5358
    %v5433 = vmul.f32 %v5413, %v5363
    %v5434 = vmul.f32 %v5414, %v5366
    %v5435 = vmul.f32 %v5415, %v5371
    %v5436 = vmul.f32 %v5416, %v5374
    %v5437 = vmul.f32 %v5417, %v5299
    %v5438 = vmul.f32 %v5418, %v5302
    %v5439 = vmul.f32 %v5419, %v5307
    %v5440 = vmul.f32 %v5420, %v5310
    %v5441 = vmul.f32 %v5421, %v5315
    %v5442 = vmul.f32 %v5422, %v5318
    %v5443 = vmul.f32 %v5423, %v5323
    %v5444 = vmul.f32 %v5424, %v5326
    %v5445 = vmul.f32 %v5425, %v5331
    %v5446 = vmul.f32 %v5426, %v5334
    %v5447 = vmul.f32 %v5427, %v5339
    %v5448 = vmul.f32 %v5428, %v5342
    %v5449 = vmul.f32 %v5429, %v5347
    %v5450 = vmul.f32 %v5430, %v5350
    %v5451 = vmul.f32 %v5431, %v5355
    %v5452 = vmul.f32 %v5432, %v5358
    %v5453 = vmul.f32 %v5433, %v5363
    %v5454 = vmul.f32 %v5434, %v5366
    %v5455 = vmul.f32 %v5435, %v5371
    %v5456 = vmul.f32 %v5436, %v5374
    %v5457 = vadd.f32 %v5299, %v5437
    %v5458 = vadd.f32 %v5302, %v5438
    %v5459 = vadd.f32 %v5307, %v5439
    %v5460 = vadd.f32 %v5310, %v5440
    %v5461 = vadd.f32 %v5315, %v5441
    %v5462 = vadd.f32 %v5318, %v5442
    %v5463 = vadd.f32 %v5323, %v5443
    %v5464 = vadd.f32 %v5326, %v5444
    %v5465 = vadd.f32 %v5331, %v5445
    %v5466 = vadd.f32 %v5334, %v5446
    %v5467 = vadd.f32 %v5339, %v5447
    %v5468 = vadd.f32 %v5342, %v5448
    %v5469 = vadd.f32 %v5347, %v5449
    %v5470 = vadd.f32 %v5350, %v5450
    %v5471 = vadd.f32 %v5355, %v5451
    %v5472 = vadd.f32 %v5358, %v5452
    %v5473 = vadd.f32 %v5363, %v5453
    %v5474 = vadd.f32 %v5366, %v5454
    %v5475 = vadd.f32 %v5371, %v5455
    %v5476 = vadd.f32 %v5374, %v5456
    %v5477 = vmul.f32 %v5457, 0.7978846
    %v5478 = vmul.f32 %v5458, 0.7978846
    %v5479 = vmul.f32 %v5459, 0.7978846
    %v5480 = vmul.f32 %v5460, 0.7978846
    %v5481 = vmul.f32 %v5461, 0.7978846
    %v5482 = vmul.f32 %v5462, 0.7978846
    %v5483 = vmul.f32 %v5463, 0.7978846
    %v5484 = vmul.f32 %v5464, 0.7978846
    %v5485 = vmul.f32 %v5465, 0.7978846
    %v5486 = vmul.f32 %v5466, 0.7978846
    %v5487 = vmul.f32 %v5467, 0.7978846
    %v5488 = vmul.f32 %v5468, 0.7978846
    %v5489 = vmul.f32 %v5469, 0.7978846
    %v5490 = vmul.f32 %v5470, 0.7978846
    %v5491 = vmul.f32 %v5471, 0.7978846
    %v5492 = vmul.f32 %v5472, 0.7978846
    %v5493 = vmul.f32 %v5473, 0.7978846
    %v5494 = vmul.f32 %v5474, 0.7978846
    %v5495 = vmul.f32 %v5475, 0.7978846
    %v5496 = vmul.f32 %v5476, 0.7978846
    %v5497 = vtanh.pop %v5477
    %v5498 = vtanh.pop %v5478
    %v5499 = vtanh.pop %v5479
    %v5500 = vtanh.pop %v5480
    %v5501 = vtanh.pop %v5481
    %v5502 = vtanh.pop %v5482
    %v5503 = vtanh.pop %v5483
    %v5504 = vtanh.pop %v5484
    %v5505 = vtanh.pop %v5485
    %v5506 = vtanh.pop %v5486
    %v5507 = vtanh.pop %v5487
    %v5508 = vtanh.pop %v5488
    %v5509 = vtanh.pop %v5489
    %v5510 = vtanh.pop %v5490
    %v5511 = vtanh.pop %v5491
    %v5512 = vtanh.pop %v5492
    %v5513 = vtanh.pop %v5493
    %v5514 = vtanh.pop %v5494
    %v5515 = vtanh.pop %v5495
    %v5516 = vtanh.pop %v5496
    %v5517 = vadd.f32 %v5497, 1.0
    %v5518 = vadd.f32 %v5498, 1.0
    %v5519 = vadd.f32 %v5499, 1.0
    %v5520 = vadd.f32 %v5500, 1.0
    %v5521 = vadd.f32 %v5501, 1.0
    %v5522 = vadd.f32 %v5502, 1.0
    %v5523 = vadd.f32 %v5503, 1.0
    %v5524 = vadd.f32 %v5504, 1.0
    %v5525 = vadd.f32 %v5505, 1.0
    %v5526 = vadd.f32 %v5506, 1.0
    %v5527 = vadd.f32 %v5507, 1.0
    %v5528 = vadd.f32 %v5508, 1.0
    %v5529 = vadd.f32 %v5509, 1.0
    %v5530 = vadd.f32 %v5510, 1.0
    %v5531 = vadd.f32 %v5511, 1.0
    %v5532 = vadd.f32 %v5512, 1.0
    %v5533 = vadd.f32 %v5513, 1.0
    %v5534 = vadd.f32 %v5514, 1.0
    %v5535 = vadd.f32 %v5515, 1.0
    %v5536 = vadd.f32 %v5516, 1.0
    %v5537 = vmul.f32 %v5377, %v5517
    %v5538 = vmul.f32 %v5378, %v5518
    %v5539 = vmul.f32 %v5379, %v5519
    %v5540 = vmul.f32 %v5380, %v5520
    %v5541 = vmul.f32 %v5381, %v5521
    %v5542 = vmul.f32 %v5382, %v5522
    %v5543 = vmul.f32 %v5383, %v5523
    %v5544 = vmul.f32 %v5384, %v5524
    %v5545 = vmul.f32 %v5385, %v5525
    %v5546 = vmul.f32 %v5386, %v5526
    %v5547 = vmul.f32 %v5387, %v5527
    %v5548 = vmul.f32 %v5388, %v5528
    %v5549 = vmul.f32 %v5389, %v5529
    %v5550 = vmul.f32 %v5390, %v5530
    %v5551 = vmul.f32 %v5391, %v5531
    %v5552 = vmul.f32 %v5392, %v5532
    %v5553 = vmul.f32 %v5393, %v5533
    %v5554 = vmul.f32 %v5394, %v5534
    %v5555 = vmul.f32 %v5395, %v5535
    %v5556 = vmul.f32 %v5396, %v5536
    %v5557 = vpack.c.bf16 %v5538, %v5537
    %v5558 = vpack.c.bf16 %v5540, %v5539
    %v5559 = vpack.c.bf16 %v5542, %v5541
    %v5560 = vpack.c.bf16 %v5544, %v5543
    %v5561 = vpack.c.bf16 %v5546, %v5545
    %v5562 = vpack.c.bf16 %v5548, %v5547
    %v5563 = vpack.c.bf16 %v5550, %v5549
    %v5564 = vpack.c.bf16 %v5552, %v5551
    %v5565 = vpack.c.bf16 %v5554, %v5553
    %v5566 = vpack.c.bf16 %v5556, %v5555
    %v5567 = vld [vmem:[%s21] sm:$0xf]
    %v5568 = vld [vmem:[%s21 + $0x4] sm:$0xf]
    %v5569 = vld [vmem:[%s21 + $0x8] sm:$0xf]
    %v5570 = vld [vmem:[%s21 + $0xc] sm:$0xf]
    %v5571 = vld [vmem:[%s21 + $0x10] sm:$0xf]
    %v5572 = vld [vmem:[%s21 + $0x14] sm:$0xf]
    %v5573 = vld [vmem:[%s21 + $0x18] sm:$0xf]
    %v5574 = vld [vmem:[%s21 + $0x1c] sm:$0xf]
    %v5575 = vld [vmem:[%s21 + $0x20] sm:$0xf]
    %v5576 = vld [vmem:[%s21 + $0x24] sm:$0xf]
    %v5577 = vld [vmem:[%s21 + $0x28] sm:$0xf]
    %v5578 = vld [vmem:[%s21 + $0x2c] sm:$0xf]
    %v5579 = vld [vmem:[%s21 + $0x30] sm:$0xf]
    %v5580 = vld [vmem:[%s21 + $0x34] sm:$0xf]
    %v5581 = vld [vmem:[%s21 + $0x38] sm:$0xf]
    %v5582 = vld [vmem:[%s21 + $0x3c] sm:$0xf]
    %v5583 = vld [vmem:[%s23] sm:$0x1]
    %v5585 = vlaneseq
    %v5586 = vshrl.u32 %v5585, 7
    %v5587 = vsub.s32 0, %v5586
    %v5588 = vrot.slane %v5583, %v5587
    %v5606 = vunpack.c.l.b16 %v5567
    %v5607 = vunpack.c.l.b16 %v5568
    %v5608 = vunpack.c.l.b16 %v5569
    %v5609 = vunpack.c.l.b16 %v5570
    %v5610 = vunpack.c.l.b16 %v5571
    %v5611 = vunpack.c.l.b16 %v5572
    %v5612 = vunpack.c.l.b16 %v5573
    %v5613 = vunpack.c.l.b16 %v5574
    %v5614 = vunpack.c.l.b16 %v5575
    %v5615 = vunpack.c.l.b16 %v5576
    %v5616 = vunpack.c.l.b16 %v5577
    %v5617 = vunpack.c.l.b16 %v5578
    %v5618 = vunpack.c.l.b16 %v5579
    %v5619 = vunpack.c.l.b16 %v5580
    %v5620 = vunpack.c.l.b16 %v5581
    %v5621 = vunpack.c.l.b16 %v5582
    %v5622 = vpack.c.b16 %v5607, %v5606
    %v5623 = vpack.c.b16 %v5609, %v5608
    %v5624 = vpack.c.b16 %v5611, %v5610
    %v5625 = vpack.c.b16 %v5613, %v5612
    %v5626 = vpack.c.b16 %v5615, %v5614
    %v5627 = vpack.c.b16 %v5617, %v5616
    %v5628 = vpack.c.b16 %v5619, %v5618
    %v5629 = vpack.c.b16 %v5621, %v5620
    %5638 = vmatprep.subr.bf16.mxu0 0
    %5639 = vmatpush1.bf16.msra.mxu0 %v5622
    %5640 = vmatprep.subr.bf16.mxu0 0
    %5641 = vmatpush1.bf16.msra.mxu0 %v5623
    %5642 = vmatprep.subr.bf16.mxu0 0
    %5643 = vmatpush1.bf16.msra.mxu0 %v5624
    %5644 = vmatprep.subr.bf16.mxu0 0
    %5645 = vmatpush1.bf16.msra.mxu0 %v5625
    %5646 = vmatprep.subr.bf16.mxu0 0
    %5647 = vmatpush1.bf16.msra.mxu0 %v5626
    %5648 = vmatprep.subr.bf16.mxu0 0
    %5649 = vmatpush1.bf16.msra.mxu0 %v5627
    %5650 = vmatprep.subr.bf16.mxu0 0
    %5651 = vmatpush1.bf16.msra.mxu0 %v5628
    %5652 = vmatprep.subr.bf16.mxu0 0
    %5653 = vmatpush1.bf16.msra.mxu0 %v5629
    %5654 = vmatprep.subr.bf16.mxu0 0
    %5655 = vmatpush1.bf16.msra.mxu0 0
    %5656 = vmatprep.subr.bf16.mxu0 0
    %5657 = vmatpush1.bf16.msra.mxu0 0
    %5658 = vmatprep.subr.bf16.mxu0 0
    %5659 = vmatpush1.bf16.msra.mxu0 0
    %5660 = vmatprep.subr.bf16.mxu0 0
    %5661 = vmatpush1.bf16.msra.mxu0 0
    %5662 = vmatprep.subr.bf16.mxu0 0
    %5663 = vmatpush1.bf16.msra.mxu0 0
    %5664 = vmatprep.subr.bf16.mxu0 0
    %5665 = vmatpush1.bf16.msra.mxu0 0
    %5666 = vmatprep.subr.bf16.mxu0 0
    %5667 = vmatpush1.bf16.msra.mxu0 0
    %5668 = vmatprep.subr.bf16.mxu0 0
    %5669 = vmatpush1.bf16.msra.mxu0 0
    %5670 = vmatprep.mubr.bf16.mxu0 0
    %5671 = vmatmul.mubr.bf16.gmra.mrb[0].mxu0 %v5557
    %v5672 = vpop.f32.mrb[0].mxu0
    %v5673 = vadd.f32 %v5588, %v5672
    %v5674 = vpop.f32.mrb[0].mxu0
    %v5675 = vpop.f32.mrb[0].mxu0
    %v5676 = vadd.f32 %v5588, %v5675
    %v5677 = vpop.f32.mrb[0].mxu0
    %5678 = vmatprep.mubr.bf16.mxu0 0
    %5679 = vmatmul.mubr.bf16.gmra.mrb[0].mxu0 %v5558
    %v5680 = vpop.f32.mrb[0].mxu0
    %v5681 = vadd.f32 %v5588, %v5680
    %v5682 = vpop.f32.mrb[0].mxu0
    %v5683 = vpop.f32.mrb[0].mxu0
    %v5684 = vadd.f32 %v5588, %v5683
    %v5685 = vpop.f32.mrb[0].mxu0
    %5686 = vmatprep.mubr.bf16.mxu0 0
    %5687 = vmatmul.mubr.bf16.gmra.mrb[0].mxu0 %v5559
    %v5688 = vpop.f32.mrb[0].mxu0
    %v5689 = vadd.f32 %v5588, %v5688
    %v5690 = vpop.f32.mrb[0].mxu0
    %v5691 = vpop.f32.mrb[0].mxu0
    %v5692 = vadd.f32 %v5588, %v5691
    %v5693 = vpop.f32.mrb[0].mxu0
    %5694 = vmatprep.mubr.bf16.mxu0 0
    %5695 = vmatmul.mubr.bf16.gmra.mrb[0].mxu0 %v5560
    %v5696 = vpop.f32.mrb[0].mxu0
    %v5697 = vadd.f32 %v5588, %v5696
    %v5698 = vpop.f32.mrb[0].mxu0
    %v5699 = vpop.f32.mrb[0].mxu0
    %v5700 = vadd.f32 %v5588, %v5699
    %v5701 = vpop.f32.mrb[0].mxu0
    %5702 = vmatprep.mubr.bf16.mxu0 0
    %5703 = vmatmul.mubr.bf16.gmra.mrb[0].mxu0 %v5561
    %v5704 = vpop.f32.mrb[0].mxu0
    %v5705 = vadd.f32 %v5588, %v5704
    %v5706 = vpop.f32.mrb[0].mxu0
    %v5707 = vpop.f32.mrb[0].mxu0
    %v5708 = vadd.f32 %v5588, %v5707
    %v5709 = vpop.f32.mrb[0].mxu0
    %5710 = vmatprep.mubr.bf16.mxu0 0
    %5711 = vmatmul.mubr.bf16.gmra.mrb[0].mxu0 %v5562
    %v5712 = vpop.f32.mrb[0].mxu0
    %v5713 = vadd.f32 %v5588, %v5712
    %v5714 = vpop.f32.mrb[0].mxu0
    %v5715 = vpop.f32.mrb[0].mxu0
    %v5716 = vadd.f32 %v5588, %v5715
    %v5717 = vpop.f32.mrb[0].mxu0
    %5718 = vmatprep.mubr.bf16.mxu0 0
    %5719 = vmatmul.mubr.bf16.gmra.mrb[0].mxu0 %v5563
    %v5720 = vpop.f32.mrb[0].mxu0
    %v5721 = vadd.f32 %v5588, %v5720
    %v5722 = vpop.f32.mrb[0].mxu0
    %v5723 = vpop.f32.mrb[0].mxu0
    %v5724 = vadd.f32 %v5588, %v5723
    %v5725 = vpop.f32.mrb[0].mxu0
    %5726 = vmatprep.mubr.bf16.mxu0 0
    %5727 = vmatmul.mubr.bf16.gmra.mrb[0].mxu0 %v5564
    %v5728 = vpop.f32.mrb[0].mxu0
    %v5729 = vadd.f32 %v5588, %v5728
    %v5730 = vpop.f32.mrb[0].mxu0
    %v5731 = vpop.f32.mrb[0].mxu0
    %v5732 = vadd.f32 %v5588, %v5731
    %v5733 = vpop.f32.mrb[0].mxu0
    %5734 = vmatprep.mubr.bf16.mxu0 0
    %5735 = vmatmul.mubr.bf16.gmra.mrb[0].mxu0 %v5565
    %v5736 = vpop.f32.mrb[0].mxu0
    %v5737 = vadd.f32 %v5588, %v5736
    %v5738 = vpop.f32.mrb[0].mxu0
    %v5739 = vpop.f32.mrb[0].mxu0
    %v5740 = vadd.f32 %v5588, %v5739
    %v5741 = vpop.f32.mrb[0].mxu0
    %5742 = vmatprep.mubr.bf16.mxu0 0
    %5743 = vmatmul.mubr.bf16.gmra.mrb[0].mxu0 %v5566
    %v5744 = vpop.f32.mrb[0].mxu0
    %v5745 = vadd.f32 %v5588, %v5744
    %v5746 = vpop.f32.mrb[0].mxu0
    %v5747 = vpop.f32.mrb[0].mxu0
    %v5748 = vadd.f32 %v5588, %v5747
    %v5749 = vpop.f32.mrb[0].mxu0
    %5750 = vdwg.mxu0
    %v5751 = vld [vmem:[%s25] sm:$0x1]
    %v5753 = vlaneseq
    %v5754 = vshrl.u32 %v5753, 7
    %v5755 = vsub.s32 0, %v5754
    %v5756 = vrot.slane %v5751, %v5755
    %v5758 = vmul.f32 %v5756, %v5673
    %v5759 = vmul.f32 %v5756, %v5676
    %v5760 = vmul.f32 %v5756, %v5681
    %v5761 = vmul.f32 %v5756, %v5684
    %v5762 = vmul.f32 %v5756, %v5689
    %v5763 = vmul.f32 %v5756, %v5692
    %v5764 = vmul.f32 %v5756, %v5697
    %v5765 = vmul.f32 %v5756, %v5700
    %v5766 = vmul.f32 %v5756, %v5705
    %v5767 = vmul.f32 %v5756, %v5708
    %v5768 = vmul.f32 %v5756, %v5713
    %v5769 = vmul.f32 %v5756, %v5716
    %v5770 = vmul.f32 %v5756, %v5721
    %v5771 = vmul.f32 %v5756, %v5724
    %v5772 = vmul.f32 %v5756, %v5729
    %v5773 = vmul.f32 %v5756, %v5732
    %v5774 = vmul.f32 %v5756, %v5737
    %v5775 = vmul.f32 %v5756, %v5740
    %v5776 = vmul.f32 %v5756, %v5745
    %v5777 = vmul.f32 %v5756, %v5748
    %v5778 = vadd.f32 %v553, %v5758
    %v5779 = vadd.f32 %v554, %v5759
    %v5780 = vadd.f32 %v555, %v5760
    %v5781 = vadd.f32 %v556, %v5761
    %v5782 = vadd.f32 %v557, %v5762
    %v5783 = vadd.f32 %v558, %v5763
    %v5784 = vadd.f32 %v559, %v5764
    %v5785 = vadd.f32 %v560, %v5765
    %v5786 = vadd.f32 %v561, %v5766
    %v5787 = vadd.f32 %v562, %v5767
    %v5788 = vadd.f32 %v563, %v5768
    %v5789 = vadd.f32 %v564, %v5769
    %v5790 = vadd.f32 %v565, %v5770
    %v5791 = vadd.f32 %v566, %v5771
    %v5792 = vadd.f32 %v567, %v5772
    %v5793 = vadd.f32 %v568, %v5773
    %v5794 = vadd.f32 %v569, %v5774
    %v5795 = vadd.f32 %v570, %v5775
    %v5796 = vadd.f32 %v571, %v5776
    %v5797 = vadd.f32 %v572, %v5777
    %v5798 = vld [vmem:[%s27] sm:$0xff]
    %v5799 = vld [vmem:[%s27 + $0x8] sm:$0xff]
    %v5800 = vld [vmem:[%s27 + $0x10] sm:$0xff]
    %v5801 = vld [vmem:[%s27 + $0x18] sm:$0xff]
    %v5802 = vld [vmem:[%s27 + $0x20] sm:$0xff]
    %v5803 = vld [vmem:[%s27 + $0x28] sm:$0xff]
    %v5804 = vld [vmem:[%s27 + $0x30] sm:$0xff]
    %v5805 = vld [vmem:[%s27 + $0x38] sm:$0xff]
    %v5806 = vld [vmem:[%s27 + $0x40] sm:$0xff]
    %v5807 = vld [vmem:[%s27 + $0x48] sm:$0xff]
    %v5808 = vld [vmem:[%s27 + $0x50] sm:$0xff]
    %v5809 = vld [vmem:[%s27 + $0x58] sm:$0xff]
    %v5810 = vld [vmem:[%s27 + $0x60] sm:$0xff]
    %v5811 = vld [vmem:[%s27 + $0x68] sm:$0xff]
    %v5812 = vld [vmem:[%s27 + $0x70] sm:$0xff]
    %v5813 = vld [vmem:[%s27 + $0x78] sm:$0xff]
    %v5814 = vpack.c.bf16 %v5779, %v5778
    %v5815 = vpack.c.bf16 %v5781, %v5780
    %v5816 = vpack.c.bf16 %v5783, %v5782
    %v5817 = vpack.c.bf16 %v5785, %v5784
    %v5818 = vpack.c.bf16 %v5787, %v5786
    %v5819 = vpack.c.bf16 %v5789, %v5788
    %v5820 = vpack.c.bf16 %v5791, %v5790
    %v5821 = vpack.c.bf16 %v5793, %v5792
    %v5822 = vpack.c.bf16 %v5795, %v5794
    %v5823 = vpack.c.bf16 %v5797, %v5796
    %v5840 = vunpack.c.l.b16 %v5798
    %v5841 = vunpack.c.h.b16 %v5798
    %v5842 = vunpack.c.l.b16 %v5799
    %v5843 = vunpack.c.h.b16 %v5799
    %v5844 = vunpack.c.l.b16 %v5800
    %v5845 = vunpack.c.h.b16 %v5800
    %v5846 = vunpack.c.l.b16 %v5801
    %v5847 = vunpack.c.h.b16 %v5801
    %v5848 = vunpack.c.l.b16 %v5802
    %v5849 = vunpack.c.h.b16 %v5802
    %v5850 = vunpack.c.l.b16 %v5803
    %v5851 = vunpack.c.h.b16 %v5803
    %v5852 = vunpack.c.l.b16 %v5804
    %v5853 = vunpack.c.h.b16 %v5804
    %v5854 = vunpack.c.l.b16 %v5805
    %v5855 = vunpack.c.h.b16 %v5805
    %v5856 = vunpack.c.l.b16 %v5806
    %v5857 = vunpack.c.h.b16 %v5806
    %v5858 = vunpack.c.l.b16 %v5807
    %v5859 = vunpack.c.h.b16 %v5807
    %v5860 = vunpack.c.l.b16 %v5808
    %v5861 = vunpack.c.h.b16 %v5808
    %v5862 = vunpack.c.l.b16 %v5809
    %v5863 = vunpack.c.h.b16 %v5809
    %v5864 = vunpack.c.l.b16 %v5810
    %v5865 = vunpack.c.h.b16 %v5810
    %v5866 = vunpack.c.l.b16 %v5811
    %v5867 = vunpack.c.h.b16 %v5811
    %v5868 = vunpack.c.l.b16 %v5812
    %v5869 = vunpack.c.h.b16 %v5812
    %v5870 = vunpack.c.l.b16 %v5813
    %v5871 = vunpack.c.h.b16 %v5813
    %v5872 = vpack.c.b16 %v5842, %v5840
    %v5873 = vpack.c.b16 %v5843, %v5841
    %v5874 = vpack.c.b16 %v5846, %v5844
    %v5875 = vpack.c.b16 %v5847, %v5845
    %v5876 = vpack.c.b16 %v5850, %v5848
    %v5877 = vpack.c.b16 %v5851, %v5849
    %v5878 = vpack.c.b16 %v5854, %v5852
    %v5879 = vpack.c.b16 %v5855, %v5853
    %v5880 = vpack.c.b16 %v5858, %v5856
    %v5881 = vpack.c.b16 %v5859, %v5857
    %v5882 = vpack.c.b16 %v5862, %v5860
    %v5883 = vpack.c.b16 %v5863, %v5861
    %v5884 = vpack.c.b16 %v5866, %v5864
    %v5885 = vpack.c.b16 %v5867, %v5865
    %v5886 = vpack.c.b16 %v5870, %v5868
    %v5887 = vpack.c.b16 %v5871, %v5869
    %v5897 = vsel %vm4847, %v5873, 0
    %v5900 = vsel %vm4847, %v5875, 0
    %v5903 = vsel %vm4847, %v5877, 0
    %v5906 = vsel %vm4847, %v5879, 0
    %v5909 = vsel %vm4847, %v5881, 0
    %v5912 = vsel %vm4847, %v5883, 0
    %v5915 = vsel %vm4847, %v5885, 0
    %v5918 = vsel %vm4847, %v5887, 0
    %5920 = vmatprep.subr.bf16.mxu0 0
    %5921 = vmatpush1.bf16.msra.mxu0 %v5814
    %5922 = vmatprep.subr.bf16.mxu0 0
    %5923 = vmatpush1.bf16.msra.mxu0 %v5815
    %5924 = vmatprep.subr.bf16.mxu0 0
    %5925 = vmatpush1.bf16.msra.mxu0 %v5816
    %5926 = vmatprep.subr.bf16.mxu0 0
    %5927 = vmatpush1.bf16.msra.mxu0 %v5817
    %5928 = vmatprep.subr.bf16.mxu0 0
    %5929 = vmatpush1.bf16.msra.mxu0 %v5818
    %5930 = vmatprep.subr.bf16.mxu0 0
    %5931 = vmatpush1.bf16.msra.mxu0 %v5819
    %5932 = vmatprep.subr.bf16.mxu0 0
    %5933 = vmatpush1.bf16.msra.mxu0 %v5820
    %5934 = vmatprep.subr.bf16.mxu0 0
    %5935 = vmatpush1.bf16.msra.mxu0 %v5821
    %5936 = vmatprep.subr.bf16.mxu0 0
    %5937 = vmatpush1.bf16.msra.mxu0 %v5822
    %5938 = vmatprep.subr.bf16.mxu0 0
    %5939 = vmatpush1.bf16.msra.mxu0 %v5823
    %5940 = vmatprep.subr.bf16.mxu0 0
    %5941 = vmatpush1.bf16.msra.mxu0 0
    %5942 = vmatprep.subr.bf16.mxu0 0
    %5943 = vmatpush1.bf16.msra.mxu0 0
    %5944 = vmatprep.subr.bf16.mxu0 0
    %5945 = vmatpush1.bf16.msra.mxu0 0
    %5946 = vmatprep.subr.bf16.mxu0 0
    %5947 = vmatpush1.bf16.msra.mxu0 0
    %5948 = vmatprep.subr.bf16.mxu0 0
    %5949 = vmatpush1.bf16.msra.mxu0 0
    %5950 = vmatprep.subr.bf16.mxu0 0
    %5951 = vmatpush1.bf16.msra.mxu0 0
    %5952 = vmatprep.mubr.bf16.mxu0 %v5897
    %5953 = vmatmul.mubr.bf16.gmra.mrb[0].mxu0 %v5872
    %v5954 = vpop.f32.mrb[0].mxu0
    %v5955 = vadd.f32 0.0, %v5954
    %v5956 = vpop.f32.mrb[0].mxu0
    %v5957 = vpop.f32.mrb[0].mxu0
    %v5958 = vadd.f32 0.0, %v5957
    %v5959 = vpop.f32.mrb[0].mxu0
    %5960 = vmatprep.mubr.bf16.mxu0 %v5900
    %5961 = vmatmul.mubr.bf16.gmra.mrb[0].mxu0 %v5874
    %v5962 = vpop.f32.mrb[0].mxu0
    %v5963 = vadd.f32 0.0, %v5962
    %v5964 = vpop.f32.mrb[0].mxu0
    %v5965 = vpop.f32.mrb[0].mxu0
    %v5966 = vadd.f32 0.0, %v5965
    %v5967 = vpop.f32.mrb[0].mxu0
    %5968 = vmatprep.mubr.bf16.mxu0 %v5903
    %5969 = vmatmul.mubr.bf16.gmra.mrb[0].mxu0 %v5876
    %v5970 = vpop.f32.mrb[0].mxu0
    %v5971 = vadd.f32 0.0, %v5970
    %v5972 = vpop.f32.mrb[0].mxu0
    %v5973 = vpop.f32.mrb[0].mxu0
    %v5974 = vadd.f32 0.0, %v5973
    %v5975 = vpop.f32.mrb[0].mxu0
    %5976 = vmatprep.mubr.bf16.mxu0 %v5906
    %5977 = vmatmul.mubr.bf16.gmra.mrb[0].mxu0 %v5878
    %v5978 = vpop.f32.mrb[0].mxu0
    %v5979 = vadd.f32 0.0, %v5978
    %v5980 = vpop.f32.mrb[0].mxu0
    %v5981 = vpop.f32.mrb[0].mxu0
    %v5982 = vadd.f32 0.0, %v5981
    %v5983 = vpop.f32.mrb[0].mxu0
    %5984 = vmatprep.mubr.bf16.mxu0 %v5909
    %5985 = vmatmul.mubr.bf16.gmra.mrb[0].mxu0 %v5880
    %v5986 = vpop.f32.mrb[0].mxu0
    %v5987 = vadd.f32 0.0, %v5986
    %v5988 = vpop.f32.mrb[0].mxu0
    %v5989 = vpop.f32.mrb[0].mxu0
    %v5990 = vadd.f32 0.0, %v5989
    %v5991 = vpop.f32.mrb[0].mxu0
    %5992 = vmatprep.mubr.bf16.mxu0 %v5912
    %5993 = vmatmul.mubr.bf16.gmra.mrb[0].mxu0 %v5882
    %v5994 = vpop.f32.mrb[0].mxu0
    %v5995 = vadd.f32 0.0, %v5994
    %v5996 = vpop.f32.mrb[0].mxu0
    %v5997 = vpop.f32.mrb[0].mxu0
    %v5998 = vadd.f32 0.0, %v5997
    %v5999 = vpop.f32.mrb[0].mxu0
    %6000 = vmatprep.mubr.bf16.mxu0 %v5915
    %6001 = vmatmul.mubr.bf16.gmra.mrb[0].mxu0 %v5884
    %v6002 = vpop.f32.mrb[0].mxu0
    %v6003 = vadd.f32 0.0, %v6002
    %v6004 = vpop.f32.mrb[0].mxu0
    %v6005 = vpop.f32.mrb[0].mxu0
    %v6006 = vadd.f32 0.0, %v6005
    %v6007 = vpop.f32.mrb[0].mxu0
    %6008 = vmatprep.mubr.bf16.mxu0 %v5918
    %6009 = vmatmul.mubr.bf16.gmra.mrb[0].mxu0 %v5886
    %v6010 = vpop.f32.mrb[0].mxu0
    %v6011 = vadd.f32 0.0, %v6010
    %v6012 = vpop.f32.mrb[0].mxu0
    %v6013 = vpop.f32.mrb[0].mxu0
    %v6014 = vadd.f32 0.0, %v6013
    %v6015 = vpop.f32.mrb[0].mxu0
    %6016 = vdwg.mxu0
    %v6017 = vpack.c.bf16 %v5958, %v5955
    %v6018 = vld [vmem:[%s29] sm:$0xf]
    %v6019 = vld [vmem:[%s29 + $0x4] sm:$0xf]
    %v6020 = vld [vmem:[%s29 + $0x8] sm:$0xf]
    %v6021 = vld [vmem:[%s29 + $0xc] sm:$0xf]
    %v6022 = vpack.c.bf16 %v5966, %v5963
    %s6023 = scalar_lea.vmem %s29, 16
    %v6024 = vld [vmem:[%s6023] sm:$0xf]
    %v6025 = vld [vmem:[%s6023 + $0x4] sm:$0xf]
    %v6026 = vld [vmem:[%s6023 + $0x8] sm:$0xf]
    %v6027 = vld [vmem:[%s6023 + $0xc] sm:$0xf]
    %v6032 = vunpack.c.l.b16 %v6024
    %v6033 = vunpack.c.l.b16 %v6025
    %v6034 = vunpack.c.l.b16 %v6026
    %v6035 = vunpack.c.l.b16 %v6027
    %v6036 = vpack.c.b16 %v6033, %v6032
    %v6037 = vpack.c.b16 %v6035, %v6034
    %v6041 = vsel %vm4847, %v6022, 0
    %6043 = vmatprep.subr.bf16.mxu0 0
    %6044 = vmatpush1.bf16.msra.mxu0 %v6036
    %6045 = vmatprep.subr.bf16.mxu0 0
    %6046 = vmatpush1.bf16.msra.mxu0 %v6037
    %6047 = vmatprep.subr.bf16.mxu0 0
    %6048 = vmatpush1.bf16.msra.mxu0 0
    %6049 = vmatprep.subr.bf16.mxu0 0
    %6050 = vmatpush1.bf16.msra.mxu0 0
    %6051 = vmatprep.subr.bf16.mxu0 0
    %6052 = vmatpush1.bf16.msra.mxu0 0
    %6053 = vmatprep.subr.bf16.mxu0 0
    %6054 = vmatpush1.bf16.msra.mxu0 0
    %6055 = vmatprep.subr.bf16.mxu0 0
    %6056 = vmatpush1.bf16.msra.mxu0 0
    %6057 = vmatprep.subr.bf16.mxu0 0
    %6058 = vmatpush1.bf16.msra.mxu0 0
    %6059 = vmatprep.subr.bf16.mxu0 0
    %6060 = vmatpush1.bf16.msra.mxu0 0
    %6061 = vmatprep.subr.bf16.mxu0 0
    %6062 = vmatpush1.bf16.msra.mxu0 0
    %6063 = vmatprep.subr.bf16.mxu0 0
    %6064 = vmatpush1.bf16.msra.mxu0 0
    %6065 = vmatprep.subr.bf16.mxu0 0
    %6066 = vmatpush1.bf16.msra.mxu0 0
    %6067 = vmatprep.subr.bf16.mxu0 0
    %6068 = vmatpush1.bf16.msra.mxu0 0
    %6069 = vmatprep.subr.bf16.mxu0 0
    %6070 = vmatpush1.bf16.msra.mxu0 0
    %6071 = vmatprep.subr.bf16.mxu0 0
    %6072 = vmatpush1.bf16.msra.mxu0 0
    %6073 = vmatprep.subr.bf16.mxu0 0
    %6074 = vmatpush1.bf16.msra.mxu0 0
    %6075 = vmatprep.mubr.bf16.mxu0 0
    %6076 = vmatmul.mubr.bf16.gmra.mrb[0].mxu0 %v6041
    %v6077 = vpop.f32.mrb[0].mxu0
    %v6078 = vadd.f32 0.0, %v6077
    %v6079 = vpop.f32.mrb[0].mxu0
    %v6080 = vpop.f32.mrb[0].mxu0
    %v6081 = vadd.f32 0.0, %v6080
    %v6082 = vpop.f32.mrb[0].mxu0
    %6083 = vdwg.mxu0
    %v6088 = vunpack.c.l.b16 %v6018
    %v6089 = vunpack.c.l.b16 %v6019
    %v6090 = vunpack.c.l.b16 %v6020
    %v6091 = vunpack.c.l.b16 %v6021
    %v6092 = vpack.c.b16 %v6089, %v6088
    %v6093 = vpack.c.b16 %v6091, %v6090
    %v6097 = vsel %vm4847, %v6017, 0
    %6099 = vmatprep.subr.bf16.mxu0 0
    %6100 = vmatpush1.bf16.msra.mxu0 %v6092
    %6101 = vmatprep.subr.bf16.mxu0 0
    %6102 = vmatpush1.bf16.msra.mxu0 %v6093
    %6103 = vmatprep.subr.bf16.mxu0 0
    %6104 = vmatpush1.bf16.msra.mxu0 0
    %6105 = vmatprep.subr.bf16.mxu0 0
    %6106 = vmatpush1.bf16.msra.mxu0 0
    %6107 = vmatprep.subr.bf16.mxu0 0
    %6108 = vmatpush1.bf16.msra.mxu0 0
    %6109 = vmatprep.subr.bf16.mxu0 0
    %6110 = vmatpush1.bf16.msra.mxu0 0
    %6111 = vmatprep.subr.bf16.mxu0 0
    %6112 = vmatpush1.bf16.msra.mxu0 0
    %6113 = vmatprep.subr.bf16.mxu0 0
    %6114 = vmatpush1.bf16.msra.mxu0 0
    %6115 = vmatprep.subr.bf16.mxu0 0
    %6116 = vmatpush1.bf16.msra.mxu0 0
    %6117 = vmatprep.subr.bf16.mxu0 0
    %6118 = vmatpush1.bf16.msra.mxu0 0
    %6119 = vmatprep.subr.bf16.mxu0 0
    %6120 = vmatpush1.bf16.msra.mxu0 0
    %6121 = vmatprep.subr.bf16.mxu0 0
    %6122 = vmatpush1.bf16.msra.mxu0 0
    %6123 = vmatprep.subr.bf16.mxu0 0
    %6124 = vmatpush1.bf16.msra.mxu0 0
    %6125 = vmatprep.subr.bf16.mxu0 0
    %6126 = vmatpush1.bf16.msra.mxu0 0
    %6127 = vmatprep.subr.bf16.mxu0 0
    %6128 = vmatpush1.bf16.msra.mxu0 0
    %6129 = vmatprep.subr.bf16.mxu0 0
    %6130 = vmatpush1.bf16.msra.mxu0 0
    %6131 = vmatprep.mubr.bf16.mxu0 0
    %6132 = vmatmul.mubr.bf16.gmra.mrb[0].mxu0 %v6097
    %v6133 = vpop.f32.mrb[0].mxu0
    %v6134 = vadd.f32 %v6078, %v6133
    %v6135 = vpop.f32.mrb[0].mxu0
    %v6136 = vpop.f32.mrb[0].mxu0
    %v6137 = vadd.f32 %v6081, %v6136
    %v6138 = vpop.f32.mrb[0].mxu0
    %6139 = vdwg.mxu0
    %v6140 = vpack.c.bf16 %v5974, %v5971
    %s6141 = scalar_lea.vmem %s29, 32
    %v6142 = vld [vmem:[%s6141] sm:$0xf]
    %v6143 = vld [vmem:[%s6141 + $0x4] sm:$0xf]
    %v6144 = vld [vmem:[%s6141 + $0x8] sm:$0xf]
    %v6145 = vld [vmem:[%s6141 + $0xc] sm:$0xf]
    %v6150 = vunpack.c.l.b16 %v6142
    %v6151 = vunpack.c.l.b16 %v6143
    %v6152 = vunpack.c.l.b16 %v6144
    %v6153 = vunpack.c.l.b16 %v6145
    %v6154 = vpack.c.b16 %v6151, %v6150
    %v6155 = vpack.c.b16 %v6153, %v6152
    %v6159 = vsel %vm4847, %v6140, 0
    %6161 = vmatprep.subr.bf16.mxu0 0
    %6162 = vmatpush1.bf16.msra.mxu0 %v6154
    %6163 = vmatprep.subr.bf16.mxu0 0
    %6164 = vmatpush1.bf16.msra.mxu0 %v6155
    %6165 = vmatprep.subr.bf16.mxu0 0
    %6166 = vmatpush1.bf16.msra.mxu0 0
    %6167 = vmatprep.subr.bf16.mxu0 0
    %6168 = vmatpush1.bf16.msra.mxu0 0
    %6169 = vmatprep.subr.bf16.mxu0 0
    %6170 = vmatpush1.bf16.msra.mxu0 0
    %6171 = vmatprep.subr.bf16.mxu0 0
    %6172 = vmatpush1.bf16.msra.mxu0 0
    %6173 = vmatprep.subr.bf16.mxu0 0
    %6174 = vmatpush1.bf16.msra.mxu0 0
    %6175 = vmatprep.subr.bf16.mxu0 0
    %6176 = vmatpush1.bf16.msra.mxu0 0
    %6177 = vmatprep.subr.bf16.mxu0 0
    %6178 = vmatpush1.bf16.msra.mxu0 0
    %6179 = vmatprep.subr.bf16.mxu0 0
    %6180 = vmatpush1.bf16.msra.mxu0 0
    %6181 = vmatprep.subr.bf16.mxu0 0
    %6182 = vmatpush1.bf16.msra.mxu0 0
    %6183 = vmatprep.subr.bf16.mxu0 0
    %6184 = vmatpush1.bf16.msra.mxu0 0
    %6185 = vmatprep.subr.bf16.mxu0 0
    %6186 = vmatpush1.bf16.msra.mxu0 0
    %6187 = vmatprep.subr.bf16.mxu0 0
    %6188 = vmatpush1.bf16.msra.mxu0 0
    %6189 = vmatprep.subr.bf16.mxu0 0
    %6190 = vmatpush1.bf16.msra.mxu0 0
    %6191 = vmatprep.subr.bf16.mxu0 0
    %6192 = vmatpush1.bf16.msra.mxu0 0
    %6193 = vmatprep.mubr.bf16.mxu0 0
    %6194 = vmatmul.mubr.bf16.gmra.mrb[0].mxu0 %v6159
    %v6195 = vpop.f32.mrb[0].mxu0
    %v6196 = vadd.f32 0.0, %v6195
    %v6197 = vpop.f32.mrb[0].mxu0
    %v6198 = vpop.f32.mrb[0].mxu0
    %v6199 = vadd.f32 0.0, %v6198
    %v6200 = vpop.f32.mrb[0].mxu0
    %6201 = vdwg.mxu0
    %v6202 = vadd.f32 %v6134, %v6196
    %v6203 = vadd.f32 %v6137, %v6199
    %v6204 = vpack.c.bf16 %v5982, %v5979
    %s6205 = scalar_lea.vmem %s29, 48
    %v6206 = vld [vmem:[%s6205] sm:$0xf]
    %v6207 = vld [vmem:[%s6205 + $0x4] sm:$0xf]
    %v6208 = vld [vmem:[%s6205 + $0x8] sm:$0xf]
    %v6209 = vld [vmem:[%s6205 + $0xc] sm:$0xf]
    %v6214 = vunpack.c.l.b16 %v6206
    %v6215 = vunpack.c.l.b16 %v6207
    %v6216 = vunpack.c.l.b16 %v6208
    %v6217 = vunpack.c.l.b16 %v6209
    %v6218 = vpack.c.b16 %v6215, %v6214
    %v6219 = vpack.c.b16 %v6217, %v6216
    %v6223 = vsel %vm4847, %v6204, 0
    %6225 = vmatprep.subr.bf16.mxu0 0
    %6226 = vmatpush1.bf16.msra.mxu0 %v6218
    %6227 = vmatprep.subr.bf16.mxu0 0
    %6228 = vmatpush1.bf16.msra.mxu0 %v6219
    %6229 = vmatprep.subr.bf16.mxu0 0
    %6230 = vmatpush1.bf16.msra.mxu0 0
    %6231 = vmatprep.subr.bf16.mxu0 0
    %6232 = vmatpush1.bf16.msra.mxu0 0
    %6233 = vmatprep.subr.bf16.mxu0 0
    %6234 = vmatpush1.bf16.msra.mxu0 0
    %6235 = vmatprep.subr.bf16.mxu0 0
    %6236 = vmatpush1.bf16.msra.mxu0 0
    %6237 = vmatprep.subr.bf16.mxu0 0
    %6238 = vmatpush1.bf16.msra.mxu0 0
    %6239 = vmatprep.subr.bf16.mxu0 0
    %6240 = vmatpush1.bf16.msra.mxu0 0
    %6241 = vmatprep.subr.bf16.mxu0 0
    %6242 = vmatpush1.bf16.msra.mxu0 0
    %6243 = vmatprep.subr.bf16.mxu0 0
    %6244 = vmatpush1.bf16.msra.mxu0 0
    %6245 = vmatprep.subr.bf16.mxu0 0
    %6246 = vmatpush1.bf16.msra.mxu0 0
    %6247 = vmatprep.subr.bf16.mxu0 0
    %6248 = vmatpush1.bf16.msra.mxu0 0
    %6249 = vmatprep.subr.bf16.mxu0 0
    %6250 = vmatpush1.bf16.msra.mxu0 0
    %6251 = vmatprep.subr.bf16.mxu0 0
    %6252 = vmatpush1.bf16.msra.mxu0 0
    %6253 = vmatprep.subr.bf16.mxu0 0
    %6254 = vmatpush1.bf16.msra.mxu0 0
    %6255 = vmatprep.subr.bf16.mxu0 0
    %6256 = vmatpush1.bf16.msra.mxu0 0
    %6257 = vmatprep.mubr.bf16.mxu0 0
    %6258 = vmatmul.mubr.bf16.gmra.mrb[0].mxu0 %v6223
    %v6259 = vpop.f32.mrb[0].mxu0
    %v6260 = vadd.f32 0.0, %v6259
    %v6261 = vpop.f32.mrb[0].mxu0
    %v6262 = vpop.f32.mrb[0].mxu0
    %v6263 = vadd.f32 0.0, %v6262
    %v6264 = vpop.f32.mrb[0].mxu0
    %6265 = vdwg.mxu0
    %v6266 = vadd.f32 %v6202, %v6260
    %v6267 = vadd.f32 %v6203, %v6263
    %v6268 = vpack.c.bf16 %v5990, %v5987
    %s6269 = scalar_lea.vmem %s29, 64
    %v6270 = vld [vmem:[%s6269] sm:$0xf]
    %v6271 = vld [vmem:[%s6269 + $0x4] sm:$0xf]
    %v6272 = vld [vmem:[%s6269 + $0x8] sm:$0xf]
    %v6273 = vld [vmem:[%s6269 + $0xc] sm:$0xf]
    %v6278 = vunpack.c.l.b16 %v6270
    %v6279 = vunpack.c.l.b16 %v6271
    %v6280 = vunpack.c.l.b16 %v6272
    %v6281 = vunpack.c.l.b16 %v6273
    %v6282 = vpack.c.b16 %v6279, %v6278
    %v6283 = vpack.c.b16 %v6281, %v6280
    %v6287 = vsel %vm4847, %v6268, 0
    %6289 = vmatprep.subr.bf16.mxu0 0
    %6290 = vmatpush1.bf16.msra.mxu0 %v6282
    %6291 = vmatprep.subr.bf16.mxu0 0
    %6292 = vmatpush1.bf16.msra.mxu0 %v6283
    %6293 = vmatprep.subr.bf16.mxu0 0
    %6294 = vmatpush1.bf16.msra.mxu0 0
    %6295 = vmatprep.subr.bf16.mxu0 0
    %6296 = vmatpush1.bf16.msra.mxu0 0
    %6297 = vmatprep.subr.bf16.mxu0 0
    %6298 = vmatpush1.bf16.msra.mxu0 0
    %6299 = vmatprep.subr.bf16.mxu0 0
    %6300 = vmatpush1.bf16.msra.mxu0 0
    %6301 = vmatprep.subr.bf16.mxu0 0
    %6302 = vmatpush1.bf16.msra.mxu0 0
    %6303 = vmatprep.subr.bf16.mxu0 0
    %6304 = vmatpush1.bf16.msra.mxu0 0
    %6305 = vmatprep.subr.bf16.mxu0 0
    %6306 = vmatpush1.bf16.msra.mxu0 0
    %6307 = vmatprep.subr.bf16.mxu0 0
    %6308 = vmatpush1.bf16.msra.mxu0 0
    %6309 = vmatprep.subr.bf16.mxu0 0
    %6310 = vmatpush1.bf16.msra.mxu0 0
    %6311 = vmatprep.subr.bf16.mxu0 0
    %6312 = vmatpush1.bf16.msra.mxu0 0
    %6313 = vmatprep.subr.bf16.mxu0 0
    %6314 = vmatpush1.bf16.msra.mxu0 0
    %6315 = vmatprep.subr.bf16.mxu0 0
    %6316 = vmatpush1.bf16.msra.mxu0 0
    %6317 = vmatprep.subr.bf16.mxu0 0
    %6318 = vmatpush1.bf16.msra.mxu0 0
    %6319 = vmatprep.subr.bf16.mxu0 0
    %6320 = vmatpush1.bf16.msra.mxu0 0
    %6321 = vmatprep.mubr.bf16.mxu0 0
    %6322 = vmatmul.mubr.bf16.gmra.mrb[0].mxu0 %v6287
    %v6323 = vpop.f32.mrb[0].mxu0
    %v6324 = vadd.f32 0.0, %v6323
    %v6325 = vpop.f32.mrb[0].mxu0
    %v6326 = vpop.f32.mrb[0].mxu0
    %v6327 = vadd.f32 0.0, %v6326
    %v6328 = vpop.f32.mrb[0].mxu0
    %6329 = vdwg.mxu0
    %v6330 = vadd.f32 %v6266, %v6324
    %v6331 = vadd.f32 %v6267, %v6327
    %v6332 = vpack.c.bf16 %v5998, %v5995
    %s6333 = scalar_lea.vmem %s29, 80
    %v6334 = vld [vmem:[%s6333] sm:$0xf]
    %v6335 = vld [vmem:[%s6333 + $0x4] sm:$0xf]
    %v6336 = vld [vmem:[%s6333 + $0x8] sm:$0xf]
    %v6337 = vld [vmem:[%s6333 + $0xc] sm:$0xf]
    %v6342 = vunpack.c.l.b16 %v6334
    %v6343 = vunpack.c.l.b16 %v6335
    %v6344 = vunpack.c.l.b16 %v6336
    %v6345 = vunpack.c.l.b16 %v6337
    %v6346 = vpack.c.b16 %v6343, %v6342
    %v6347 = vpack.c.b16 %v6345, %v6344
    %v6351 = vsel %vm4847, %v6332, 0
    %6353 = vmatprep.subr.bf16.mxu0 0
    %6354 = vmatpush1.bf16.msra.mxu0 %v6346
    %6355 = vmatprep.subr.bf16.mxu0 0
    %6356 = vmatpush1.bf16.msra.mxu0 %v6347
    %6357 = vmatprep.subr.bf16.mxu0 0
    %6358 = vmatpush1.bf16.msra.mxu0 0
    %6359 = vmatprep.subr.bf16.mxu0 0
    %6360 = vmatpush1.bf16.msra.mxu0 0
    %6361 = vmatprep.subr.bf16.mxu0 0
    %6362 = vmatpush1.bf16.msra.mxu0 0
    %6363 = vmatprep.subr.bf16.mxu0 0
    %6364 = vmatpush1.bf16.msra.mxu0 0
    %6365 = vmatprep.subr.bf16.mxu0 0
    %6366 = vmatpush1.bf16.msra.mxu0 0
    %6367 = vmatprep.subr.bf16.mxu0 0
    %6368 = vmatpush1.bf16.msra.mxu0 0
    %6369 = vmatprep.subr.bf16.mxu0 0
    %6370 = vmatpush1.bf16.msra.mxu0 0
    %6371 = vmatprep.subr.bf16.mxu0 0
    %6372 = vmatpush1.bf16.msra.mxu0 0
    %6373 = vmatprep.subr.bf16.mxu0 0
    %6374 = vmatpush1.bf16.msra.mxu0 0
    %6375 = vmatprep.subr.bf16.mxu0 0
    %6376 = vmatpush1.bf16.msra.mxu0 0
    %6377 = vmatprep.subr.bf16.mxu0 0
    %6378 = vmatpush1.bf16.msra.mxu0 0
    %6379 = vmatprep.subr.bf16.mxu0 0
    %6380 = vmatpush1.bf16.msra.mxu0 0
    %6381 = vmatprep.subr.bf16.mxu0 0
    %6382 = vmatpush1.bf16.msra.mxu0 0
    %6383 = vmatprep.subr.bf16.mxu0 0
    %6384 = vmatpush1.bf16.msra.mxu0 0
    %6385 = vmatprep.mubr.bf16.mxu0 0
    %6386 = vmatmul.mubr.bf16.gmra.mrb[0].mxu0 %v6351
    %v6387 = vpop.f32.mrb[0].mxu0
    %v6388 = vadd.f32 0.0, %v6387
    %v6389 = vpop.f32.mrb[0].mxu0
    %v6390 = vpop.f32.mrb[0].mxu0
    %v6391 = vadd.f32 0.0, %v6390
    %v6392 = vpop.f32.mrb[0].mxu0
    %6393 = vdwg.mxu0
    %v6394 = vadd.f32 %v6330, %v6388
    %v6395 = vadd.f32 %v6331, %v6391
    %v6396 = vpack.c.bf16 %v6006, %v6003
    %s6397 = scalar_lea.vmem %s29, 96
    %v6398 = vld [vmem:[%s6397] sm:$0xf]
    %v6399 = vld [vmem:[%s6397 + $0x4] sm:$0xf]
    %v6400 = vld [vmem:[%s6397 + $0x8] sm:$0xf]
    %v6401 = vld [vmem:[%s6397 + $0xc] sm:$0xf]
    %v6406 = vunpack.c.l.b16 %v6398
    %v6407 = vunpack.c.l.b16 %v6399
    %v6408 = vunpack.c.l.b16 %v6400
    %v6409 = vunpack.c.l.b16 %v6401
    %v6410 = vpack.c.b16 %v6407, %v6406
    %v6411 = vpack.c.b16 %v6409, %v6408
    %v6415 = vsel %vm4847, %v6396, 0
    %6417 = vmatprep.subr.bf16.mxu0 0
    %6418 = vmatpush1.bf16.msra.mxu0 %v6410
    %6419 = vmatprep.subr.bf16.mxu0 0
    %6420 = vmatpush1.bf16.msra.mxu0 %v6411
    %6421 = vmatprep.subr.bf16.mxu0 0
    %6422 = vmatpush1.bf16.msra.mxu0 0
    %6423 = vmatprep.subr.bf16.mxu0 0
    %6424 = vmatpush1.bf16.msra.mxu0 0
    %6425 = vmatprep.subr.bf16.mxu0 0
    %6426 = vmatpush1.bf16.msra.mxu0 0
    %6427 = vmatprep.subr.bf16.mxu0 0
    %6428 = vmatpush1.bf16.msra.mxu0 0
    %6429 = vmatprep.subr.bf16.mxu0 0
    %6430 = vmatpush1.bf16.msra.mxu0 0
    %6431 = vmatprep.subr.bf16.mxu0 0
    %6432 = vmatpush1.bf16.msra.mxu0 0
    %6433 = vmatprep.subr.bf16.mxu0 0
    %6434 = vmatpush1.bf16.msra.mxu0 0
    %6435 = vmatprep.subr.bf16.mxu0 0
    %6436 = vmatpush1.bf16.msra.mxu0 0
    %6437 = vmatprep.subr.bf16.mxu0 0
    %6438 = vmatpush1.bf16.msra.mxu0 0
    %6439 = vmatprep.subr.bf16.mxu0 0
    %6440 = vmatpush1.bf16.msra.mxu0 0
    %6441 = vmatprep.subr.bf16.mxu0 0
    %6442 = vmatpush1.bf16.msra.mxu0 0
    %6443 = vmatprep.subr.bf16.mxu0 0
    %6444 = vmatpush1.bf16.msra.mxu0 0
    %6445 = vmatprep.subr.bf16.mxu0 0
    %6446 = vmatpush1.bf16.msra.mxu0 0
    %6447 = vmatprep.subr.bf16.mxu0 0
    %6448 = vmatpush1.bf16.msra.mxu0 0
    %6449 = vmatprep.mubr.bf16.mxu0 0
    %6450 = vmatmul.mubr.bf16.gmra.mrb[0].mxu0 %v6415
    %v6451 = vpop.f32.mrb[0].mxu0
    %v6452 = vadd.f32 0.0, %v6451
    %v6453 = vpop.f32.mrb[0].mxu0
    %v6454 = vpop.f32.mrb[0].mxu0
    %v6455 = vadd.f32 0.0, %v6454
    %v6456 = vpop.f32.mrb[0].mxu0
    %6457 = vdwg.mxu0
    %v6458 = vadd.f32 %v6394, %v6452
    %v6459 = vadd.f32 %v6395, %v6455
    %v6460 = vpack.c.bf16 %v6014, %v6011
    %s6461 = scalar_lea.vmem %s29, 112
    %v6462 = vld [vmem:[%s6461] sm:$0xf]
    %v6463 = vld [vmem:[%s6461 + $0x4] sm:$0xf]
    %v6464 = vld [vmem:[%s6461 + $0x8] sm:$0xf]
    %v6465 = vld [vmem:[%s6461 + $0xc] sm:$0xf]
    %v6470 = vunpack.c.l.b16 %v6462
    %v6471 = vunpack.c.l.b16 %v6463
    %v6472 = vunpack.c.l.b16 %v6464
    %v6473 = vunpack.c.l.b16 %v6465
    %v6474 = vpack.c.b16 %v6471, %v6470
    %v6475 = vpack.c.b16 %v6473, %v6472
    %v6479 = vsel %vm4847, %v6460, 0
    %6481 = vmatprep.subr.bf16.mxu0 0
    %6482 = vmatpush1.bf16.msra.mxu0 %v6474
    %6483 = vmatprep.subr.bf16.mxu0 0
    %6484 = vmatpush1.bf16.msra.mxu0 %v6475
    %6485 = vmatprep.subr.bf16.mxu0 0
    %6486 = vmatpush1.bf16.msra.mxu0 0
    %6487 = vmatprep.subr.bf16.mxu0 0
    %6488 = vmatpush1.bf16.msra.mxu0 0
    %6489 = vmatprep.subr.bf16.mxu0 0
    %6490 = vmatpush1.bf16.msra.mxu0 0
    %6491 = vmatprep.subr.bf16.mxu0 0
    %6492 = vmatpush1.bf16.msra.mxu0 0
    %6493 = vmatprep.subr.bf16.mxu0 0
    %6494 = vmatpush1.bf16.msra.mxu0 0
    %6495 = vmatprep.subr.bf16.mxu0 0
    %6496 = vmatpush1.bf16.msra.mxu0 0
    %6497 = vmatprep.subr.bf16.mxu0 0
    %6498 = vmatpush1.bf16.msra.mxu0 0
    %6499 = vmatprep.subr.bf16.mxu0 0
    %6500 = vmatpush1.bf16.msra.mxu0 0
    %6501 = vmatprep.subr.bf16.mxu0 0
    %6502 = vmatpush1.bf16.msra.mxu0 0
    %6503 = vmatprep.subr.bf16.mxu0 0
    %6504 = vmatpush1.bf16.msra.mxu0 0
    %6505 = vmatprep.subr.bf16.mxu0 0
    %6506 = vmatpush1.bf16.msra.mxu0 0
    %6507 = vmatprep.subr.bf16.mxu0 0
    %6508 = vmatpush1.bf16.msra.mxu0 0
    %6509 = vmatprep.subr.bf16.mxu0 0
    %6510 = vmatpush1.bf16.msra.mxu0 0
    %6511 = vmatprep.subr.bf16.mxu0 0
    %6512 = vmatpush1.bf16.msra.mxu0 0
    %6513 = vmatprep.mubr.bf16.mxu0 0
    %6514 = vmatmul.mubr.bf16.gmra.mrb[0].mxu0 %v6479
    %v6515 = vpop.f32.mrb[0].mxu0
    %v6516 = vadd.f32 0.0, %v6515
    %v6517 = vpop.f32.mrb[0].mxu0
    %v6518 = vpop.f32.mrb[0].mxu0
    %v6519 = vadd.f32 0.0, %v6518
    %v6520 = vpop.f32.mrb[0].mxu0
    %6521 = vdwg.mxu0
    %v6522 = vadd.f32 %v6458, %v6516
    %v6523 = vadd.f32 %v6459, %v6519
    %v6524 = vld [vmem:[%s31] sm:$0x1]
    %v6526 = vlaneseq
    %v6527 = vshrl.u32 %v6526, 7
    %v6528 = vsub.s32 0, %v6527
    %v6529 = vrot.slane %v6524, %v6528
    %v6531 = vadd.f32 %v6522, %v6529
    %v6532 = vadd.f32 %v6523, %v6529
    %v6533 = vmul.f32 %v6531, 0.5
    %v6534 = vmul.f32 %v6532, 0.5
    %v6535 = vmul.f32 %v6531, 0.044715
    %v6536 = vmul.f32 %v6532, 0.044715
    %v6537 = vmul.f32 %v6535, %v6531
    %v6538 = vmul.f32 %v6536, %v6532
    %v6539 = vmul.f32 %v6537, %v6531
    %v6540 = vmul.f32 %v6538, %v6532
    %v6541 = vadd.f32 %v6531, %v6539
    %v6542 = vadd.f32 %v6532, %v6540
    %v6543 = vmul.f32 %v6541, 0.7978846
    %v6544 = vmul.f32 %v6542, 0.7978846
    %v6545 = vtanh.pop %v6543
    %v6546 = vtanh.pop %v6544
    %v6547 = vadd.f32 %v6545, 1.0
    %v6548 = vadd.f32 %v6546, 1.0
    %v6549 = vmul.f32 %v6533, %v6547
    %v6550 = vmul.f32 %v6534, %v6548
    %v6551 = vld [vmem:[%s33] sm:$0xff]
    %v6552 = vld [vmem:[%s33 + $0x8] sm:$0xff]
    %v6554 = vrot.slane %v6550, 1
    %v6557 = vrot.slane %v6549, 1
    %v6558 = vsel %vm1600, %v6557, %v6554
    %v6561 = vsel %vm1600, %v6554, %v6557
    %v6562 = vld [vmem:[%s35] sm:$0x1]
    %v6564 = vlaneseq
    %v6565 = vshrl.u32 %v6564, 7
    %v6566 = vsub.s32 0, %v6565
    %v6567 = vrot.slane %v6562, %v6566
    %v6569 = vmul.f32 %v6561, %v6567
    %v6570 = vmul.f32 %v6558, %v6567
    %6572 = vset.pattern.permute.xlu0 0
    %6573 = vperm.xlu0 %6572, %v6551
    %v6574 = vpop.permute.xlu0 %6573
    %6577 = vset.pattern.permute.xlu0 0
    %6578 = vperm.xlu0 %6577, %v6552
    %v6579 = vpop.permute.xlu0 %6578
    %v6581 = vmul.f32 %v6569, %v6574
    %v6582 = vmul.f32 %v6570, %v6579
    %v6583 = vrot.slane %v6550, 2
    %vm6585 = vcmask 1045504
    %v6586 = vrot.slane %v6549, 2
    %v6587 = vsel %vm6585, %v6586, %v6583
    %v6590 = vsel %vm6585, %v6583, %v6586
    %s6591 = scalar_lea.vmem %s35, 1
    %v6592 = vld [vmem:[%s6591] sm:$0x1]
    %v6594 = vlaneseq
    %v6595 = vshrl.u32 %v6594, 7
    %v6596 = vsub.s32 0, %v6595
    %v6597 = vrot.slane %v6592, %v6596
    %v6599 = vmul.f32 %v6590, %v6597
    %v6600 = vmul.f32 %v6587, %v6597
    %6601 = vset.pattern.permute.xlu0 1
    %6602 = vperm.xlu0 %6601, %v6551
    %v6603 = vpop.permute.xlu0 %6602
    %6605 = vset.pattern.permute.xlu0 1
    %6606 = vperm.xlu0 %6605, %v6552
    %v6607 = vpop.permute.xlu0 %6606
    %v6609 = vmul.f32 %v6599, %v6603
    %v6610 = vmul.f32 %v6600, %v6607
    %v6611 = vadd.f32 %v6581, %v6609
    %v6612 = vadd.f32 %v6582, %v6610
    %v6613 = vrot.slane %v6550, 3
    %v6615 = vrot.slane %v6549, 3
    %v6616 = vsel %vm596, %v6615, %v6613
    %v6619 = vsel %vm596, %v6613, %v6615
    %s6620 = scalar_lea.vmem %s35, 2
    %v6621 = vld [vmem:[%s6620] sm:$0x1]
    %v6623 = vlaneseq
    %v6624 = vshrl.u32 %v6623, 7
    %v6625 = vsub.s32 0, %v6624
    %v6626 = vrot.slane %v6621, %v6625
    %v6628 = vmul.f32 %v6619, %v6626
    %v6629 = vmul.f32 %v6616, %v6626
    %6630 = vset.pattern.permute.xlu0 2
    %6631 = vperm.xlu0 %6630, %v6551
    %v6632 = vpop.permute.xlu0 %6631
    %6634 = vset.pattern.permute.xlu0 2
    %6635 = vperm.xlu0 %6634, %v6552
    %v6636 = vpop.permute.xlu0 %6635
    %v6638 = vmul.f32 %v6628, %v6632
    %v6639 = vmul.f32 %v6629, %v6636
    %v6640 = vadd.f32 %v6611, %v6638
    %v6641 = vadd.f32 %v6612, %v6639
    %s6642 = scalar_lea.vmem %s35, 3
    %v6643 = vld [vmem:[%s6642] sm:$0x1]
    %v6645 = vlaneseq
    %v6646 = vshrl.u32 %v6645, 7
    %v6647 = vsub.s32 0, %v6646
    %v6648 = vrot.slane %v6643, %v6647
    %v6650 = vmul.f32 %v6619, %v6648
    %v6651 = vmul.f32 %v6616, %v6648
    %6652 = vset.pattern.permute.xlu0 3
    %6653 = vperm.xlu0 %6652, %v6551
    %v6654 = vpop.permute.xlu0 %6653
    %6656 = vset.pattern.permute.xlu0 3
    %6657 = vperm.xlu0 %6656, %v6552
    %v6658 = vpop.permute.xlu0 %6657
    %v6660 = vmul.f32 %v6650, %v6654
    %v6661 = vmul.f32 %v6651, %v6658
    %v6662 = vadd.f32 %v6640, %v6660
    %v6663 = vadd.f32 %v6641, %v6661
    %v6664 = vrot.slane %v6550, 4
    %v6666 = vrot.slane %v6549, 4
    %v6667 = vsel %vm822, %v6666, %v6664
    %v6670 = vsel %vm822, %v6664, %v6666
    %s6671 = scalar_lea.vmem %s35, 4
    %v6672 = vld [vmem:[%s6671] sm:$0x1]
    %v6674 = vlaneseq
    %v6675 = vshrl.u32 %v6674, 7
    %v6676 = vsub.s32 0, %v6675
    %v6677 = vrot.slane %v6672, %v6676
    %v6679 = vmul.f32 %v6670, %v6677
    %v6680 = vmul.f32 %v6667, %v6677
    %6681 = vset.pattern.permute.xlu0 4
    %6682 = vperm.xlu0 %6681, %v6551
    %v6683 = vpop.permute.xlu0 %6682
    %6685 = vset.pattern.permute.xlu0 4
    %6686 = vperm.xlu0 %6685, %v6552
    %v6687 = vpop.permute.xlu0 %6686
    %v6689 = vmul.f32 %v6679, %v6683
    %v6690 = vmul.f32 %v6680, %v6687
    %v6691 = vadd.f32 %v6662, %v6689
    %v6692 = vadd.f32 %v6663, %v6690
    %v6693 = vrot.slane %v6550, 5
    %v6695 = vrot.slane %v6549, 5
    %v6696 = vsel %vm1032, %v6695, %v6693
    %v6699 = vsel %vm1032, %v6693, %v6695
    %s6700 = scalar_lea.vmem %s35, 5
    %v6701 = vld [vmem:[%s6700] sm:$0x1]
    %v6703 = vlaneseq
    %v6704 = vshrl.u32 %v6703, 7
    %v6705 = vsub.s32 0, %v6704
    %v6706 = vrot.slane %v6701, %v6705
    %v6708 = vmul.f32 %v6699, %v6706
    %v6709 = vmul.f32 %v6696, %v6706
    %6710 = vset.pattern.permute.xlu0 5
    %6711 = vperm.xlu0 %6710, %v6551
    %v6712 = vpop.permute.xlu0 %6711
    %6714 = vset.pattern.permute.xlu0 5
    %6715 = vperm.xlu0 %6714, %v6552
    %v6716 = vpop.permute.xlu0 %6715
    %v6718 = vmul.f32 %v6708, %v6712
    %v6719 = vmul.f32 %v6709, %v6716
    %v6720 = vadd.f32 %v6691, %v6718
    %v6721 = vadd.f32 %v6692, %v6719
    %s6722 = scalar_lea.vmem %s35, 6
    %v6723 = vld [vmem:[%s6722] sm:$0x1]
    %v6725 = vlaneseq
    %v6726 = vshrl.u32 %v6725, 7
    %v6727 = vsub.s32 0, %v6726
    %v6728 = vrot.slane %v6723, %v6727
    %v6730 = vmul.f32 %v6699, %v6728
    %v6731 = vmul.f32 %v6696, %v6728
    %6732 = vset.pattern.permute.xlu0 6
    %6733 = vperm.xlu0 %6732, %v6551
    %v6734 = vpop.permute.xlu0 %6733
    %6736 = vset.pattern.permute.xlu0 6
    %6737 = vperm.xlu0 %6736, %v6552
    %v6738 = vpop.permute.xlu0 %6737
    %v6740 = vmul.f32 %v6730, %v6734
    %v6741 = vmul.f32 %v6731, %v6738
    %v6742 = vadd.f32 %v6720, %v6740
    %v6743 = vadd.f32 %v6721, %v6741
    %v6744 = vrot.slane %v6550, 6
    %vm6746 = vcmask 1041408
    %v6747 = vrot.slane %v6549, 6
    %v6748 = vsel %vm6746, %v6747, %v6744
    %v6751 = vsel %vm6746, %v6744, %v6747
    %s6752 = scalar_lea.vmem %s35, 7
    %v6753 = vld [vmem:[%s6752] sm:$0x1]
    %v6755 = vlaneseq
    %v6756 = vshrl.u32 %v6755, 7
    %v6757 = vsub.s32 0, %v6756
    %v6758 = vrot.slane %v6753, %v6757
    %v6760 = vmul.f32 %v6751, %v6758
    %v6761 = vmul.f32 %v6748, %v6758
    %6762 = vset.pattern.permute.xlu0 7
    %6763 = vperm.xlu0 %6762, %v6551
    %v6764 = vpop.permute.xlu0 %6763
    %6766 = vset.pattern.permute.xlu0 7
    %6767 = vperm.xlu0 %6766, %v6552
    %v6768 = vpop.permute.xlu0 %6767
    %v6770 = vmul.f32 %v6760, %v6764
    %v6771 = vmul.f32 %v6761, %v6768
    %v6772 = vadd.f32 %v6742, %v6770
    %v6773 = vadd.f32 %v6743, %v6771
    %v6774 = vrot.slane %v6550, 7
    %v6776 = vrot.slane %v6549, 7
    %v6777 = vsel %vm1242, %v6776, %v6774
    %v6780 = vsel %vm1242, %v6774, %v6776
    %s6781 = scalar_lea.vmem %s35, 8
    %v6782 = vld [vmem:[%s6781] sm:$0x1]
    %v6784 = vlaneseq
    %v6785 = vshrl.u32 %v6784, 7
    %v6786 = vsub.s32 0, %v6785
    %v6787 = vrot.slane %v6782, %v6786
    %v6789 = vmul.f32 %v6780, %v6787
    %v6790 = vmul.f32 %v6777, %v6787
    %6791 = vset.pattern.permute.xlu0 8
    %6792 = vperm.xlu0 %6791, %v6551
    %v6793 = vpop.permute.xlu0 %6792
    %6795 = vset.pattern.permute.xlu0 8
    %6796 = vperm.xlu0 %6795, %v6552
    %v6797 = vpop.permute.xlu0 %6796
    %v6799 = vmul.f32 %v6789, %v6793
    %v6800 = vmul.f32 %v6790, %v6797
    %v6801 = vadd.f32 %v6772, %v6799
    %v6802 = vadd.f32 %v6773, %v6800
    %s6803 = scalar_lea.vmem %s35, 9
    %v6804 = vld [vmem:[%s6803] sm:$0x1]
    %v6806 = vlaneseq
    %v6807 = vshrl.u32 %v6806, 7
    %v6808 = vsub.s32 0, %v6807
    %v6809 = vrot.slane %v6804, %v6808
    %v6811 = vmul.f32 %v6699, %v6809
    %v6812 = vmul.f32 %v6696, %v6809
    %6813 = vset.pattern.permute.xlu0 9
    %6814 = vperm.xlu0 %6813, %v6551
    %v6815 = vpop.permute.xlu0 %6814
    %6817 = vset.pattern.permute.xlu0 9
    %6818 = vperm.xlu0 %6817, %v6552
    %v6819 = vpop.permute.xlu0 %6818
    %v6821 = vmul.f32 %v6811, %v6815
    %v6822 = vmul.f32 %v6812, %v6819
    %v6823 = vadd.f32 %v6801, %v6821
    %v6824 = vadd.f32 %v6802, %v6822
    %s6825 = scalar_lea.vmem %s35, 10
    %v6826 = vld [vmem:[%s6825] sm:$0x1]
    %v6828 = vlaneseq
    %v6829 = vshrl.u32 %v6828, 7
    %v6830 = vsub.s32 0, %v6829
    %v6831 = vrot.slane %v6826, %v6830
    %v6833 = vmul.f32 %v6751, %v6831
    %v6834 = vmul.f32 %v6748, %v6831
    %6835 = vset.pattern.permute.xlu0 10
    %6836 = vperm.xlu0 %6835, %v6551
    %v6837 = vpop.permute.xlu0 %6836
    %6839 = vset.pattern.permute.xlu0 10
    %6840 = vperm.xlu0 %6839, %v6552
    %v6841 = vpop.permute.xlu0 %6840
    %v6843 = vmul.f32 %v6833, %v6837
    %v6844 = vmul.f32 %v6834, %v6841
    %v6845 = vadd.f32 %v6823, %v6843
    %v6846 = vadd.f32 %v6824, %v6844
    %s6847 = scalar_lea.vmem %s35, 11
    %v6848 = vld [vmem:[%s6847] sm:$0x1]
    %v6850 = vlaneseq
    %v6851 = vshrl.u32 %v6850, 7
    %v6852 = vsub.s32 0, %v6851
    %v6853 = vrot.slane %v6848, %v6852
    %v6855 = vmul.f32 %v6780, %v6853
    %v6856 = vmul.f32 %v6777, %v6853
    %6857 = vset.pattern.permute.xlu0 11
    %6858 = vperm.xlu0 %6857, %v6551
    %v6859 = vpop.permute.xlu0 %6858
    %6861 = vset.pattern.permute.xlu0 11
    %6862 = vperm.xlu0 %6861, %v6552
    %v6863 = vpop.permute.xlu0 %6862
    %v6865 = vmul.f32 %v6855, %v6859
    %v6866 = vmul.f32 %v6856, %v6863
    %v6867 = vadd.f32 %v6845, %v6865
    %v6868 = vadd.f32 %v6846, %v6866
    %s6869 = scalar_lea.vmem %s35, 12
    %v6870 = vld [vmem:[%s6869] sm:$0x1]
    %v6872 = vlaneseq
    %v6873 = vshrl.u32 %v6872, 7
    %v6874 = vsub.s32 0, %v6873
    %v6875 = vrot.slane %v6870, %v6874
    %v6877 = vmul.f32 %v6780, %v6875
    %v6878 = vmul.f32 %v6777, %v6875
    %6879 = vset.pattern.permute.xlu0 12
    %6880 = vperm.xlu0 %6879, %v6551
    %v6881 = vpop.permute.xlu0 %6880
    %6883 = vset.pattern.permute.xlu0 12
    %6884 = vperm.xlu0 %6883, %v6552
    %v6885 = vpop.permute.xlu0 %6884
    %v6887 = vmul.f32 %v6877, %v6881
    %v6888 = vmul.f32 %v6878, %v6885
    %v6889 = vadd.f32 %v6867, %v6887
    %v6890 = vadd.f32 %v6868, %v6888
    %s6891 = scalar_lea.vmem %s35, 13
    %v6892 = vld [vmem:[%s6891] sm:$0x1]
    %v6894 = vlaneseq
    %v6895 = vshrl.u32 %v6894, 7
    %v6896 = vsub.s32 0, %v6895
    %v6897 = vrot.slane %v6892, %v6896
    %v6899 = vmul.f32 %v6549, %v6897
    %v6900 = vmul.f32 %v6550, %v6897
    %v6901 = vadd.f32 %v6889, %v6899
    %v6902 = vadd.f32 %v6890, %v6900
    %s6903 = scalar_lea.vmem %s35, 14
    %v6904 = vld [vmem:[%s6903] sm:$0x1]
    %v6906 = vlaneseq
    %v6907 = vshrl.u32 %v6906, 7
    %v6908 = vsub.s32 0, %v6907
    %v6909 = vrot.slane %v6904, %v6908
    %v6911 = vmul.f32 %v6558, %v6909
    %v6912 = vmul.f32 %v6561, %v6909
    %6913 = vset.pattern.permute.xlu0 14
    %6914 = vperm.xlu0 %6913, %v6551
    %v6915 = vpop.permute.xlu0 %6914
    %6917 = vset.pattern.permute.xlu0 14
    %6918 = vperm.xlu0 %6917, %v6552
    %v6919 = vpop.permute.xlu0 %6918
    %v6921 = vmul.f32 %v6911, %v6915
    %v6922 = vmul.f32 %v6912, %v6919
    %v6923 = vadd.f32 %v6901, %v6921
    %v6924 = vadd.f32 %v6902, %v6922
    %s6925 = scalar_lea.vmem %s35, 15
    %v6926 = vld [vmem:[%s6925] sm:$0x1]
    %v6928 = vlaneseq
    %v6929 = vshrl.u32 %v6928, 7
    %v6930 = vsub.s32 0, %v6929
    %v6931 = vrot.slane %v6926, %v6930
    %v6933 = vmul.f32 %v6558, %v6931
    %v6934 = vmul.f32 %v6561, %v6931
    %6935 = vset.pattern.permute.xlu0 15
    %6936 = vperm.xlu0 %6935, %v6551
    %v6937 = vpop.permute.xlu0 %6936
    %6939 = vset.pattern.permute.xlu0 15
    %6940 = vperm.xlu0 %6939, %v6552
    %v6941 = vpop.permute.xlu0 %6940
    %v6943 = vmul.f32 %v6933, %v6937
    %v6944 = vmul.f32 %v6934, %v6941
    %v6945 = vadd.f32 %v6923, %v6943
    %v6946 = vadd.f32 %v6924, %v6944
    %s6947 = scalar_lea.vmem %s35, 16
    %v6948 = vld [vmem:[%s6947] sm:$0x1]
    %v6950 = vlaneseq
    %v6951 = vshrl.u32 %v6950, 7
    %v6952 = vsub.s32 0, %v6951
    %v6953 = vrot.slane %v6948, %v6952
    %v6955 = vmul.f32 %v6587, %v6953
    %v6956 = vmul.f32 %v6590, %v6953
    %6957 = vset.pattern.permute.xlu0 16
    %6958 = vperm.xlu0 %6957, %v6551
    %v6959 = vpop.permute.xlu0 %6958
    %6961 = vset.pattern.permute.xlu0 16
    %6962 = vperm.xlu0 %6961, %v6552
    %v6963 = vpop.permute.xlu0 %6962
    %v6965 = vmul.f32 %v6955, %v6959
    %v6966 = vmul.f32 %v6956, %v6963
    %v6967 = vadd.f32 %v6945, %v6965
    %v6968 = vadd.f32 %v6946, %v6966
    %s6969 = scalar_lea.vmem %s35, 17
    %v6970 = vld [vmem:[%s6969] sm:$0x1]
    %v6972 = vlaneseq
    %v6973 = vshrl.u32 %v6972, 7
    %v6974 = vsub.s32 0, %v6973
    %v6975 = vrot.slane %v6970, %v6974
    %v6977 = vmul.f32 %v6616, %v6975
    %v6978 = vmul.f32 %v6619, %v6975
    %6979 = vset.pattern.permute.xlu0 17
    %6980 = vperm.xlu0 %6979, %v6551
    %v6981 = vpop.permute.xlu0 %6980
    %6983 = vset.pattern.permute.xlu0 17
    %6984 = vperm.xlu0 %6983, %v6552
    %v6985 = vpop.permute.xlu0 %6984
    %v6987 = vmul.f32 %v6977, %v6981
    %v6988 = vmul.f32 %v6978, %v6985
    %v6989 = vadd.f32 %v6967, %v6987
    %v6990 = vadd.f32 %v6968, %v6988
    %s6991 = scalar_lea.vmem %s35, 18
    %v6992 = vld [vmem:[%s6991] sm:$0x1]
    %v6994 = vlaneseq
    %v6995 = vshrl.u32 %v6994, 7
    %v6996 = vsub.s32 0, %v6995
    %v6997 = vrot.slane %v6992, %v6996
    %v6999 = vmul.f32 %v6558, %v6997
    %v7000 = vmul.f32 %v6561, %v6997
    %7001 = vset.pattern.permute.xlu0 18
    %7002 = vperm.xlu0 %7001, %v6551
    %v7003 = vpop.permute.xlu0 %7002
    %7005 = vset.pattern.permute.xlu0 18
    %7006 = vperm.xlu0 %7005, %v6552
    %v7007 = vpop.permute.xlu0 %7006
    %v7009 = vmul.f32 %v6999, %v7003
    %v7010 = vmul.f32 %v7000, %v7007
    %v7011 = vadd.f32 %v6989, %v7009
    %v7012 = vadd.f32 %v6990, %v7010
    %s7013 = scalar_lea.vmem %s35, 19
    %v7014 = vld [vmem:[%s7013] sm:$0x1]
    %v7016 = vlaneseq
    %v7017 = vshrl.u32 %v7016, 7
    %v7018 = vsub.s32 0, %v7017
    %v7019 = vrot.slane %v7014, %v7018
    %v7021 = vmul.f32 %v6587, %v7019
    %v7022 = vmul.f32 %v6590, %v7019
    %7023 = vset.pattern.permute.xlu0 19
    %7024 = vperm.xlu0 %7023, %v6551
    %v7025 = vpop.permute.xlu0 %7024
    %7027 = vset.pattern.permute.xlu0 19
    %7028 = vperm.xlu0 %7027, %v6552
    %v7029 = vpop.permute.xlu0 %7028
    %v7031 = vmul.f32 %v7021, %v7025
    %v7032 = vmul.f32 %v7022, %v7029
    %v7033 = vadd.f32 %v7011, %v7031
    %v7034 = vadd.f32 %v7012, %v7032
    %s7035 = scalar_lea.vmem %s35, 20
    %v7036 = vld [vmem:[%s7035] sm:$0x1]
    %v7038 = vlaneseq
    %v7039 = vshrl.u32 %v7038, 7
    %v7040 = vsub.s32 0, %v7039
    %v7041 = vrot.slane %v7036, %v7040
    %v7043 = vmul.f32 %v6616, %v7041
    %v7044 = vmul.f32 %v6619, %v7041
    %7045 = vset.pattern.permute.xlu0 20
    %7046 = vperm.xlu0 %7045, %v6551
    %v7047 = vpop.permute.xlu0 %7046
    %7049 = vset.pattern.permute.xlu0 20
    %7050 = vperm.xlu0 %7049, %v6552
    %v7051 = vpop.permute.xlu0 %7050
    %v7053 = vmul.f32 %v7043, %v7047
    %v7054 = vmul.f32 %v7044, %v7051
    %v7055 = vadd.f32 %v7033, %v7053
    %v7056 = vadd.f32 %v7034, %v7054
    %s7057 = scalar_lea.vmem %s35, 21
    %v7058 = vld [vmem:[%s7057] sm:$0x1]
    %v7060 = vlaneseq
    %v7061 = vshrl.u32 %v7060, 7
    %v7062 = vsub.s32 0, %v7061
    %v7063 = vrot.slane %v7058, %v7062
    %v7065 = vmul.f32 %v6616, %v7063
    %v7066 = vmul.f32 %v6619, %v7063
    %7067 = vset.pattern.permute.xlu0 21
    %7068 = vperm.xlu0 %7067, %v6551
    %v7069 = vpop.permute.xlu0 %7068
    %7071 = vset.pattern.permute.xlu0 21
    %7072 = vperm.xlu0 %7071, %v6552
    %v7073 = vpop.permute.xlu0 %7072
    %v7075 = vmul.f32 %v7065, %v7069
    %v7076 = vmul.f32 %v7066, %v7073
    %v7077 = vadd.f32 %v7055, %v7075
    %v7078 = vadd.f32 %v7056, %v7076
    %s7079 = scalar_lea.vmem %s35, 22
    %v7080 = vld [vmem:[%s7079] sm:$0x1]
    %v7082 = vlaneseq
    %v7083 = vshrl.u32 %v7082, 7
    %v7084 = vsub.s32 0, %v7083
    %v7085 = vrot.slane %v7080, %v7084
    %v7087 = vmul.f32 %v6667, %v7085
    %v7088 = vmul.f32 %v6670, %v7085
    %7089 = vset.pattern.permute.xlu0 22
    %7090 = vperm.xlu0 %7089, %v6551
    %v7091 = vpop.permute.xlu0 %7090
    %7093 = vset.pattern.permute.xlu0 22
    %7094 = vperm.xlu0 %7093, %v6552
    %v7095 = vpop.permute.xlu0 %7094
    %v7097 = vmul.f32 %v7087, %v7091
    %v7098 = vmul.f32 %v7088, %v7095
    %v7099 = vadd.f32 %v7077, %v7097
    %v7100 = vadd.f32 %v7078, %v7098
    %s7101 = scalar_lea.vmem %s35, 23
    %v7102 = vld [vmem:[%s7101] sm:$0x1]
    %v7104 = vlaneseq
    %v7105 = vshrl.u32 %v7104, 7
    %v7106 = vsub.s32 0, %v7105
    %v7107 = vrot.slane %v7102, %v7106
    %v7109 = vmul.f32 %v6696, %v7107
    %v7110 = vmul.f32 %v6699, %v7107
    %7111 = vset.pattern.permute.xlu0 23
    %7112 = vperm.xlu0 %7111, %v6551
    %v7113 = vpop.permute.xlu0 %7112
    %7115 = vset.pattern.permute.xlu0 23
    %7116 = vperm.xlu0 %7115, %v6552
    %v7117 = vpop.permute.xlu0 %7116
    %v7119 = vmul.f32 %v7109, %v7113
    %v7120 = vmul.f32 %v7110, %v7117
    %v7121 = vadd.f32 %v7099, %v7119
    %v7122 = vadd.f32 %v7100, %v7120
    %s7123 = scalar_lea.vmem %s35, 24
    %v7124 = vld [vmem:[%s7123] sm:$0x1]
    %v7126 = vlaneseq
    %v7127 = vshrl.u32 %v7126, 7
    %v7128 = vsub.s32 0, %v7127
    %v7129 = vrot.slane %v7124, %v7128
    %v7131 = vmul.f32 %v6696, %v7129
    %v7132 = vmul.f32 %v6699, %v7129
    %7133 = vset.pattern.permute.xlu0 24
    %7134 = vperm.xlu0 %7133, %v6551
    %v7135 = vpop.permute.xlu0 %7134
    %7137 = vset.pattern.permute.xlu0 24
    %7138 = vperm.xlu0 %7137, %v6552
    %v7139 = vpop.permute.xlu0 %7138
    %v7141 = vmul.f32 %v7131, %v7135
    %v7142 = vmul.f32 %v7132, %v7139
    %v7143 = vadd.f32 %v7121, %v7141
    %v7144 = vadd.f32 %v7122, %v7142
    %s7145 = scalar_lea.vmem %s35, 25
    %v7146 = vld [vmem:[%s7145] sm:$0x1]
    %v7148 = vlaneseq
    %v7149 = vshrl.u32 %v7148, 7
    %v7150 = vsub.s32 0, %v7149
    %v7151 = vrot.slane %v7146, %v7150
    %v7153 = vmul.f32 %v6748, %v7151
    %v7154 = vmul.f32 %v6751, %v7151
    %7155 = vset.pattern.permute.xlu0 25
    %7156 = vperm.xlu0 %7155, %v6551
    %v7157 = vpop.permute.xlu0 %7156
    %7159 = vset.pattern.permute.xlu0 25
    %7160 = vperm.xlu0 %7159, %v6552
    %v7161 = vpop.permute.xlu0 %7160
    %v7163 = vmul.f32 %v7153, %v7157
    %v7164 = vmul.f32 %v7154, %v7161
    %v7165 = vadd.f32 %v7143, %v7163
    %v7166 = vadd.f32 %v7144, %v7164
    %s7167 = scalar_lea.vmem %s35, 26
    %v7168 = vld [vmem:[%s7167] sm:$0x1]
    %v7170 = vlaneseq
    %v7171 = vshrl.u32 %v7170, 7
    %v7172 = vsub.s32 0, %v7171
    %v7173 = vrot.slane %v7168, %v7172
    %v7175 = vmul.f32 %v6777, %v7173
    %v7176 = vmul.f32 %v6780, %v7173
    %7177 = vset.pattern.permute.xlu0 26
    %7178 = vperm.xlu0 %7177, %v6551
    %v7179 = vpop.permute.xlu0 %7178
    %7181 = vset.pattern.permute.xlu0 26
    %7182 = vperm.xlu0 %7181, %v6552
    %v7183 = vpop.permute.xlu0 %7182
    %v7185 = vmul.f32 %v7175, %v7179
    %v7186 = vmul.f32 %v7176, %v7183
    %v7187 = vadd.f32 %v7165, %v7185
    %v7188 = vadd.f32 %v7166, %v7186
    %v7189 = vld [vmem:[%s37] sm:$0x1]
    %v7191 = vlaneseq
    %v7192 = vshrl.u32 %v7191, 7
    %v7193 = vsub.s32 0, %v7192
    %v7194 = vrot.slane %v7189, %v7193
    %v7196 = vadd.f32 %v7187, %v7194
    %v7197 = vadd.f32 %v7188, %v7194
    %v7198 = vld [vmem:[%s39] sm:$0x1]
    %v7199 = vld [vmem:[%s41] sm:$0x1]
    %vm7200 = vcmask 523264
    %v7201 = vsel %vm7200, %v7196, 0.0
    %7202 = vadd.xlane.f32.xlu0 %v7201
    %v7203 = vpop.xlane.xlu0 %7202
    %v7204 = vsel %vm7200, %v7197, 0.0
    %7205 = vadd.xlane.f32.xlu0 %v7204
    %v7206 = vpop.xlane.xlu0 %7205
    %v7207 = vrcp.pop 64.0
    %v7208 = vmul.f32 %v7203, %v7207
    %v7209 = vmul.f32 %v7206, %v7207
    %v7210 = vmul.f32 %v7196, %v7196
    %v7211 = vmul.f32 %v7197, %v7197
    %v7212 = vsel %vm7200, %v7210, 0.0
    %7213 = vadd.xlane.f32.xlu0 %v7212
    %v7214 = vpop.xlane.xlu0 %7213
    %v7215 = vsel %vm7200, %v7211, 0.0
    %7216 = vadd.xlane.f32.xlu0 %v7215
    %v7217 = vpop.xlane.xlu0 %7216
    %v7218 = vmul.f32 %v7214, %v7207
    %v7219 = vmul.f32 %v7217, %v7207
    %v7220 = vmul.f32 %v7208, %v7208
    %v7221 = vmul.f32 %v7209, %v7209
    %v7222 = vsub.f32 %v7218, %v7220
    %v7223 = vsub.f32 %v7219, %v7221
    %v7224 = vsub.f32 %v7196, %v7208
    %v7225 = vsub.f32 %v7197, %v7209
    %v7226 = vadd.f32 %v7222, 1e-05
    %v7227 = vadd.f32 %v7223, 1e-05
    %v7228 = vrsqrt.pop %v7226
    %v7229 = vrsqrt.pop %v7227
    %v7230 = vmul.f32 %v7224, %v7228
    %v7231 = vmul.f32 %v7225, %v7229
    %v7233 = vlaneseq
    %v7234 = vshrl.u32 %v7233, 7
    %v7235 = vsub.s32 0, %v7234
    %v7236 = vrot.slane %v7198, %v7235
    %v7238 = vmul.f32 %v7230, %v7236
    %v7239 = vmul.f32 %v7231, %v7236
    %v7241 = vlaneseq
    %v7242 = vshrl.u32 %v7241, 7
    %v7243 = vsub.s32 0, %v7242
    %v7244 = vrot.slane %v7199, %v7243
    %v7246 = vadd.f32 %v7238, %v7244
    %v7247 = vadd.f32 %v7239, %v7244
    %v7248 = vpack.c.bf16 %v7247, %v7246
    %v7249 = vld [vmem:[%s43] sm:$0xff]
    %v7250 = vld [vmem:[%s43 + $0x8] sm:$0xff]
    %v7251 = vld [vmem:[%s43 + $0x10] sm:$0xff]
    %v7252 = vld [vmem:[%s43 + $0x18] sm:$0xff]
    %v7253 = vld [vmem:[%s43 + $0x20] sm:$0xff]
    %v7254 = vld [vmem:[%s43 + $0x28] sm:$0xff]
    %v7255 = vld [vmem:[%s43 + $0x30] sm:$0xff]
    %v7256 = vld [vmem:[%s43 + $0x38] sm:$0xff]
    %v7257 = vld [vmem:[%s45] sm:$0x3]
    %v7259 = vlaneseq
    %v7260 = vshrl.u32 %v7259, 7
    %v7261 = vsub.s32 0, %v7260
    %v7262 = vrot.slane %v7257, %v7261
    %v7263 = vlaneseq
    %v7264 = vshrl.u32 %v7263, 7
    %v7265 = vsub.s32 1, %v7264
    %v7266 = vrot.slane %v7257, %v7265
    %v7277 = vunpack.c.l.b16 %v7249
    %v7278 = vunpack.c.h.b16 %v7249
    %v7279 = vunpack.c.l.b16 %v7250
    %v7280 = vunpack.c.h.b16 %v7250
    %v7281 = vunpack.c.l.b16 %v7251
    %v7282 = vunpack.c.h.b16 %v7251
    %v7283 = vunpack.c.l.b16 %v7252
    %v7284 = vunpack.c.h.b16 %v7252
    %v7285 = vunpack.c.l.b16 %v7253
    %v7286 = vunpack.c.h.b16 %v7253
    %v7287 = vunpack.c.l.b16 %v7254
    %v7288 = vunpack.c.h.b16 %v7254
    %v7289 = vunpack.c.l.b16 %v7255
    %v7290 = vunpack.c.h.b16 %v7255
    %v7291 = vunpack.c.l.b16 %v7256
    %v7292 = vunpack.c.h.b16 %v7256
    %v7293 = vpack.c.b16 %v7279, %v7277
    %v7294 = vpack.c.b16 %v7280, %v7278
    %v7295 = vpack.c.b16 %v7283, %v7281
    %v7296 = vpack.c.b16 %v7284, %v7282
    %v7297 = vpack.c.b16 %v7287, %v7285
    %v7298 = vpack.c.b16 %v7288, %v7286
    %v7299 = vpack.c.b16 %v7291, %v7289
    %v7300 = vpack.c.b16 %v7292, %v7290
    %v7310 = vsel %vm7200, %v7248, 0
    %7312 = vmatprep.subr.bf16.mxu0 %v7294
    %7313 = vmatpush1.bf16.msra.mxu0 %v7293
    %7314 = vmatprep.subr.bf16.mxu0 %v7296
    %7315 = vmatpush1.bf16.msra.mxu0 %v7295
    %7316 = vmatprep.subr.bf16.mxu0 %v7298
    %7317 = vmatpush1.bf16.msra.mxu0 %v7297
    %7318 = vmatprep.subr.bf16.mxu0 %v7300
    %7319 = vmatpush1.bf16.msra.mxu0 %v7299
    %7320 = vmatprep.subr.bf16.mxu0 0
    %7321 = vmatpush1.bf16.msra.mxu0 0
    %7322 = vmatprep.subr.bf16.mxu0 0
    %7323 = vmatpush1.bf16.msra.mxu0 0
    %7324 = vmatprep.subr.bf16.mxu0 0
    %7325 = vmatpush1.bf16.msra.mxu0 0
    %7326 = vmatprep.subr.bf16.mxu0 0
    %7327 = vmatpush1.bf16.msra.mxu0 0
    %7328 = vmatprep.subr.bf16.mxu0 0
    %7329 = vmatpush1.bf16.msra.mxu0 0
    %7330 = vmatprep.subr.bf16.mxu0 0
    %7331 = vmatpush1.bf16.msra.mxu0 0
    %7332 = vmatprep.subr.bf16.mxu0 0
    %7333 = vmatpush1.bf16.msra.mxu0 0
    %7334 = vmatprep.subr.bf16.mxu0 0
    %7335 = vmatpush1.bf16.msra.mxu0 0
    %7336 = vmatprep.subr.bf16.mxu0 0
    %7337 = vmatpush1.bf16.msra.mxu0 0
    %7338 = vmatprep.subr.bf16.mxu0 0
    %7339 = vmatpush1.bf16.msra.mxu0 0
    %7340 = vmatprep.subr.bf16.mxu0 0
    %7341 = vmatpush1.bf16.msra.mxu0 0
    %7342 = vmatprep.subr.bf16.mxu0 0
    %7343 = vmatpush1.bf16.msra.mxu0 0
    %7344 = vmatprep.mubr.bf16.mxu0 0
    %7345 = vmatmul.mubr.bf16.gmra.mrb[0].mxu0 %v7310
    %v7346 = vpop.f32.mrb[0].mxu0
    %v7347 = vadd.f32 %v7262, %v7346
    %v7348 = vpop.f32.mrb[0].mxu0
    %v7349 = vadd.f32 %v7266, %v7348
    %v7350 = vpop.f32.mrb[0].mxu0
    %v7351 = vadd.f32 %v7262, %v7350
    %v7352 = vpop.f32.mrb[0].mxu0
    %v7353 = vadd.f32 %v7266, %v7352
    %7354 = vdwg.mxu0
    %v7355 = vmul.f32 %v7347, 0.5
    %v7356 = vmul.f32 %v7349, 0.5
    %v7357 = vmul.f32 %v7351, 0.5
    %v7358 = vmul.f32 %v7353, 0.5
    %v7359 = vmul.f32 %v7347, 0.044715
    %v7360 = vmul.f32 %v7349, 0.044715
    %v7361 = vmul.f32 %v7351, 0.044715
    %v7362 = vmul.f32 %v7353, 0.044715
    %v7363 = vmul.f32 %v7359, %v7347
    %v7364 = vmul.f32 %v7360, %v7349
    %v7365 = vmul.f32 %v7361, %v7351
    %v7366 = vmul.f32 %v7362, %v7353
    %v7367 = vmul.f32 %v7363, %v7347
    %v7368 = vmul.f32 %v7364, %v7349
    %v7369 = vmul.f32 %v7365, %v7351
    %v7370 = vmul.f32 %v7366, %v7353
    %v7371 = vadd.f32 %v7347, %v7367
    %v7372 = vadd.f32 %v7349, %v7368
    %v7373 = vadd.f32 %v7351, %v7369
    %v7374 = vadd.f32 %v7353, %v7370
    %v7375 = vmul.f32 %v7371, 0.7978846
    %v7376 = vmul.f32 %v7372, 0.7978846
    %v7377 = vmul.f32 %v7373, 0.7978846
    %v7378 = vmul.f32 %v7374, 0.7978846
    %v7379 = vtanh.pop %v7375
    %v7380 = vtanh.pop %v7376
    %v7381 = vtanh.pop %v7377
    %v7382 = vtanh.pop %v7378
    %v7383 = vadd.f32 %v7379, 1.0
    %v7384 = vadd.f32 %v7380, 1.0
    %v7385 = vadd.f32 %v7381, 1.0
    %v7386 = vadd.f32 %v7382, 1.0
    %v7387 = vmul.f32 %v7355, %v7383
    %v7388 = vmul.f32 %v7356, %v7384
    %v7389 = vmul.f32 %v7357, %v7385
    %v7390 = vmul.f32 %v7358, %v7386
    %v7391 = vpack.c.bf16 %v7389, %v7387
    %v7392 = vpack.c.bf16 %v7390, %v7388
    %v7393 = vld [vmem:[%s47] sm:$0xf]
    %v7394 = vld [vmem:[%s47 + $0x4] sm:$0xf]
    %v7395 = vld [vmem:[%s47 + $0x8] sm:$0xf]
    %v7396 = vld [vmem:[%s47 + $0xc] sm:$0xf]
    %v7397 = vld [vmem:[%s47 + $0x10] sm:$0xf]
    %v7398 = vld [vmem:[%s47 + $0x14] sm:$0xf]
    %v7399 = vld [vmem:[%s47 + $0x18] sm:$0xf]
    %v7400 = vld [vmem:[%s47 + $0x1c] sm:$0xf]
    %v7401 = vld [vmem:[%s47 + $0x20] sm:$0xf]
    %v7402 = vld [vmem:[%s47 + $0x24] sm:$0xf]
    %v7403 = vld [vmem:[%s47 + $0x28] sm:$0xf]
    %v7404 = vld [vmem:[%s47 + $0x2c] sm:$0xf]
    %v7405 = vld [vmem:[%s47 + $0x30] sm:$0xf]
    %v7406 = vld [vmem:[%s47 + $0x34] sm:$0xf]
    %v7407 = vld [vmem:[%s47 + $0x38] sm:$0xf]
    %v7408 = vld [vmem:[%s47 + $0x3c] sm:$0xf]
    %v7409 = vld [vmem:[%s47 + $0x40] sm:$0xf]
    %v7410 = vld [vmem:[%s47 + $0x44] sm:$0xf]
    %v7411 = vld [vmem:[%s47 + $0x48] sm:$0xf]
    %v7412 = vld [vmem:[%s47 + $0x4c] sm:$0xf]
    %v7413 = vld [vmem:[%s47 + $0x50] sm:$0xf]
    %v7414 = vld [vmem:[%s47 + $0x54] sm:$0xf]
    %v7415 = vld [vmem:[%s47 + $0x58] sm:$0xf]
    %v7416 = vld [vmem:[%s47 + $0x5c] sm:$0xf]
    %v7417 = vld [vmem:[%s47 + $0x60] sm:$0xf]
    %v7418 = vld [vmem:[%s47 + $0x64] sm:$0xf]
    %v7419 = vld [vmem:[%s47 + $0x68] sm:$0xf]
    %v7420 = vld [vmem:[%s47 + $0x6c] sm:$0xf]
    %v7421 = vld [vmem:[%s47 + $0x70] sm:$0xf]
    %v7422 = vld [vmem:[%s47 + $0x74] sm:$0xf]
    %v7423 = vld [vmem:[%s47 + $0x78] sm:$0xf]
    %v7424 = vld [vmem:[%s47 + $0x7c] sm:$0xf]
    %v7425 = vld [vmem:[%s49] sm:$0x1]
    %v7427 = vlaneseq
    %v7428 = vshrl.u32 %v7427, 7
    %v7429 = vsub.s32 0, %v7428
    %v7430 = vrot.slane %v7425, %v7429
    %v7464 = vunpack.c.l.b16 %v7393
    %v7465 = vunpack.c.l.b16 %v7394
    %v7466 = vunpack.c.l.b16 %v7395
    %v7467 = vunpack.c.l.b16 %v7396
    %v7468 = vunpack.c.l.b16 %v7397
    %v7469 = vunpack.c.l.b16 %v7398
    %v7470 = vunpack.c.l.b16 %v7399
    %v7471 = vunpack.c.l.b16 %v7400
    %v7472 = vunpack.c.l.b16 %v7401
    %v7473 = vunpack.c.l.b16 %v7402
    %v7474 = vunpack.c.l.b16 %v7403
    %v7475 = vunpack.c.l.b16 %v7404
    %v7476 = vunpack.c.l.b16 %v7405
    %v7477 = vunpack.c.l.b16 %v7406
    %v7478 = vunpack.c.l.b16 %v7407
    %v7479 = vunpack.c.l.b16 %v7408
    %v7480 = vunpack.c.l.b16 %v7409
    %v7481 = vunpack.c.l.b16 %v7410
    %v7482 = vunpack.c.l.b16 %v7411
    %v7483 = vunpack.c.l.b16 %v7412
    %v7484 = vunpack.c.l.b16 %v7413
    %v7485 = vunpack.c.l.b16 %v7414
    %v7486 = vunpack.c.l.b16 %v7415
    %v7487 = vunpack.c.l.b16 %v7416
    %v7488 = vunpack.c.l.b16 %v7417
    %v7489 = vunpack.c.l.b16 %v7418
    %v7490 = vunpack.c.l.b16 %v7419
    %v7491 = vunpack.c.l.b16 %v7420
    %v7492 = vunpack.c.l.b16 %v7421
    %v7493 = vunpack.c.l.b16 %v7422
    %v7494 = vunpack.c.l.b16 %v7423
    %v7495 = vunpack.c.l.b16 %v7424
    %v7496 = vpack.c.b16 %v7465, %v7464
    %v7497 = vpack.c.b16 %v7467, %v7466
    %v7498 = vpack.c.b16 %v7469, %v7468
    %v7499 = vpack.c.b16 %v7471, %v7470
    %v7500 = vpack.c.b16 %v7473, %v7472
    %v7501 = vpack.c.b16 %v7475, %v7474
    %v7502 = vpack.c.b16 %v7477, %v7476
    %v7503 = vpack.c.b16 %v7479, %v7478
    %v7504 = vpack.c.b16 %v7481, %v7480
    %v7505 = vpack.c.b16 %v7483, %v7482
    %v7506 = vpack.c.b16 %v7485, %v7484
    %v7507 = vpack.c.b16 %v7487, %v7486
    %v7508 = vpack.c.b16 %v7489, %v7488
    %v7509 = vpack.c.b16 %v7491, %v7490
    %v7510 = vpack.c.b16 %v7493, %v7492
    %v7511 = vpack.c.b16 %v7495, %v7494
    %7528 = vmatprep.subr.bf16.mxu0 0
    %7529 = vmatpush1.bf16.msra.mxu0 %v7496
    %7530 = vmatprep.subr.bf16.mxu0 0
    %7531 = vmatpush1.bf16.msra.mxu0 %v7497
    %7532 = vmatprep.subr.bf16.mxu0 0
    %7533 = vmatpush1.bf16.msra.mxu0 %v7498
    %7534 = vmatprep.subr.bf16.mxu0 0
    %7535 = vmatpush1.bf16.msra.mxu0 %v7499
    %7536 = vmatprep.subr.bf16.mxu0 0
    %7537 = vmatpush1.bf16.msra.mxu0 %v7500
    %7538 = vmatprep.subr.bf16.mxu0 0
    %7539 = vmatpush1.bf16.msra.mxu0 %v7501
    %7540 = vmatprep.subr.bf16.mxu0 0
    %7541 = vmatpush1.bf16.msra.mxu0 %v7502
    %7542 = vmatprep.subr.bf16.mxu0 0
    %7543 = vmatpush1.bf16.msra.mxu0 %v7503
    %7544 = vmatprep.subr.bf16.mxu0 0
    %7545 = vmatpush1.bf16.msra.mxu0 %v7504
    %7546 = vmatprep.subr.bf16.mxu0 0
    %7547 = vmatpush1.bf16.msra.mxu0 %v7505
    %7548 = vmatprep.subr.bf16.mxu0 0
    %7549 = vmatpush1.bf16.msra.mxu0 %v7506
    %7550 = vmatprep.subr.bf16.mxu0 0
    %7551 = vmatpush1.bf16.msra.mxu0 %v7507
    %7552 = vmatprep.subr.bf16.mxu0 0
    %7553 = vmatpush1.bf16.msra.mxu0 %v7508
    %7554 = vmatprep.subr.bf16.mxu0 0
    %7555 = vmatpush1.bf16.msra.mxu0 %v7509
    %7556 = vmatprep.subr.bf16.mxu0 0
    %7557 = vmatpush1.bf16.msra.mxu0 %v7510
    %7558 = vmatprep.subr.bf16.mxu0 0
    %7559 = vmatpush1.bf16.msra.mxu0 %v7511
    %7560 = vmatprep.mubr.bf16.mxu0 %v7392
    %7561 = vmatmul.mubr.bf16.gmra.mrb[0].mxu0 %v7391
    %v7562 = vpop.f32.mrb[0].mxu0
    %v7563 = vadd.f32 %v7430, %v7562
    %v7564 = vpop.f32.mrb[0].mxu0
    %v7565 = vpop.f32.mrb[0].mxu0
    %v7566 = vadd.f32 %v7430, %v7565
    %v7567 = vpop.f32.mrb[0].mxu0
    %7568 = vdwg.mxu0
    %v7569 = vld [vmem:[%s51] sm:$0x1]
    %v7571 = vlaneseq
    %v7572 = vshrl.u32 %v7571, 7
    %v7573 = vsub.s32 0, %v7572
    %v7574 = vrot.slane %v7569, %v7573
    %v7576 = vmul.f32 %v7574, %v7563
    %v7577 = vmul.f32 %v7574, %v7566
    %v7578 = vadd.f32 %v6549, %v7576
    %v7579 = vadd.f32 %v6550, %v7577
    %v7580 = vld [vmem:[%s53] sm:$0xf]
    %v7581 = vld [vmem:[%s53 + $0x4] sm:$0xf]
    %v7582 = vpack.c.bf16 %v7579, %v7578
    %v7585 = vunpack.c.l.b16 %v7580
    %v7586 = vunpack.c.l.b16 %v7581
    %v7587 = vpack.c.b16 %v7586, %v7585
    %vm7588 = vcmask 130048
    %v7590 = vsel %vm7588, %v7587, 0
    %7592 = vmatprep.subr.bf16.mxu0 0
    %7593 = vmatpush1.bf16.msra.mxu0 %v7582
    %7594 = vmatprep.subr.bf16.mxu0 0
    %7595 = vmatpush1.bf16.msra.mxu0 0
    %7596 = vmatprep.subr.bf16.mxu0 0
    %7597 = vmatpush1.bf16.msra.mxu0 0
    %7598 = vmatprep.subr.bf16.mxu0 0
    %7599 = vmatpush1.bf16.msra.mxu0 0
    %7600 = vmatprep.subr.bf16.mxu0 0
    %7601 = vmatpush1.bf16.msra.mxu0 0
    %7602 = vmatprep.subr.bf16.mxu0 0
    %7603 = vmatpush1.bf16.msra.mxu0 0
    %7604 = vmatprep.subr.bf16.mxu0 0
    %7605 = vmatpush1.bf16.msra.mxu0 0
    %7606 = vmatprep.subr.bf16.mxu0 0
    %7607 = vmatpush1.bf16.msra.mxu0 0
    %7608 = vmatprep.subr.bf16.mxu0 0
    %7609 = vmatpush1.bf16.msra.mxu0 0
    %7610 = vmatprep.subr.bf16.mxu0 0
    %7611 = vmatpush1.bf16.msra.mxu0 0
    %7612 = vmatprep.subr.bf16.mxu0 0
    %7613 = vmatpush1.bf16.msra.mxu0 0
    %7614 = vmatprep.subr.bf16.mxu0 0
    %7615 = vmatpush1.bf16.msra.mxu0 0
    %7616 = vmatprep.subr.bf16.mxu0 0
    %7617 = vmatpush1.bf16.msra.mxu0 0
    %7618 = vmatprep.subr.bf16.mxu0 0
    %7619 = vmatpush1.bf16.msra.mxu0 0
    %7620 = vmatprep.subr.bf16.mxu0 0
    %7621 = vmatpush1.bf16.msra.mxu0 0
    %7622 = vmatprep.subr.bf16.mxu0 0
    %7623 = vmatpush1.bf16.msra.mxu0 0
    %7624 = vmatprep.mubr.bf16.mxu0 0
    %7625 = vmatmul.mubr.bf16.gmra.mrb[0].mxu0 %v7590
    %v7626 = vpop.f32.mrb[0].mxu0
    %v7627 = vadd.f32 0.0, %v7626
    %v7628 = vpop.f32.mrb[0].mxu0
    %v7629 = vpop.f32.mrb[0].mxu0
    %v7630 = vadd.f32 0.0, %v7629
    %v7631 = vpop.f32.mrb[0].mxu0
    %7632 = vdwg.mxu0
    %v7633 = vpack.c.bf16 %v7627, %v7627
    %v7634 = vld [vmem:[%s55] sm:$0xf]
    %v7635 = vld [vmem:[%s55 + $0x4] sm:$0xf]
    %v7636 = vld [vmem:[%s55 + $0x8] sm:$0xf]
    %v7637 = vld [vmem:[%s55 + $0xc] sm:$0xf]
    %v7638 = vld [vmem:[%s55 + $0x10] sm:$0xf]
    %v7639 = vld [vmem:[%s55 + $0x14] sm:$0xf]
    %v7640 = vld [vmem:[%s55 + $0x18] sm:$0xf]
    %v7641 = vld [vmem:[%s55 + $0x1c] sm:$0xf]
    %s7642 = scalar_lea.vmem %s55, 32
    %v7643 = vld [vmem:[%s7642] sm:$0xf]
    %v7644 = vld [vmem:[%s7642 + $0x4] sm:$0xf]
    %v7645 = vld [vmem:[%s7642 + $0x8] sm:$0xf]
    %v7646 = vld [vmem:[%s7642 + $0xc] sm:$0xf]
    %v7647 = vld [vmem:[%s7642 + $0x10] sm:$0xf]
    %v7648 = vld [vmem:[%s7642 + $0x14] sm:$0xf]
    %v7649 = vld [vmem:[%s7642 + $0x18] sm:$0xf]
    %v7650 = vld [vmem:[%s7642 + $0x1c] sm:$0xf]
    %v7652 = vrot.slane %v7633, 1
    %v7661 = vunpack.c.l.b16 %v7643
    %v7662 = vunpack.c.l.b16 %v7644
    %v7663 = vunpack.c.l.b16 %v7645
    %v7664 = vunpack.c.l.b16 %v7646
    %v7665 = vunpack.c.l.b16 %v7647
    %v7666 = vunpack.c.l.b16 %v7648
    %v7667 = vunpack.c.l.b16 %v7649
    %v7668 = vunpack.c.l.b16 %v7650
    %v7669 = vpack.c.b16 %v7662, %v7661
    %v7670 = vpack.c.b16 %v7664, %v7663
    %v7671 = vpack.c.b16 %v7666, %v7665
    %v7672 = vpack.c.b16 %v7668, %v7667
    %v7678 = vsel %vm7200, %v7652, 0
    %7680 = vmatprep.subr.bf16.mxu0 0
    %7681 = vmatpush1.bf16.msra.mxu0 %v7669
    %7682 = vmatprep.subr.bf16.mxu0 0
    %7683 = vmatpush1.bf16.msra.mxu0 %v7670
    %7684 = vmatprep.subr.bf16.mxu0 0
    %7685 = vmatpush1.bf16.msra.mxu0 %v7671
    %7686 = vmatprep.subr.bf16.mxu0 0
    %7687 = vmatpush1.bf16.msra.mxu0 %v7672
    %7688 = vmatprep.subr.bf16.mxu0 0
    %7689 = vmatpush1.bf16.msra.mxu0 0
    %7690 = vmatprep.subr.bf16.mxu0 0
    %7691 = vmatpush1.bf16.msra.mxu0 0
    %7692 = vmatprep.subr.bf16.mxu0 0
    %7693 = vmatpush1.bf16.msra.mxu0 0
    %7694 = vmatprep.subr.bf16.mxu0 0
    %7695 = vmatpush1.bf16.msra.mxu0 0
    %7696 = vmatprep.subr.bf16.mxu0 0
    %7697 = vmatpush1.bf16.msra.mxu0 0
    %7698 = vmatprep.subr.bf16.mxu0 0
    %7699 = vmatpush1.bf16.msra.mxu0 0
    %7700 = vmatprep.subr.bf16.mxu0 0
    %7701 = vmatpush1.bf16.msra.mxu0 0
    %7702 = vmatprep.subr.bf16.mxu0 0
    %7703 = vmatpush1.bf16.msra.mxu0 0
    %7704 = vmatprep.subr.bf16.mxu0 0
    %7705 = vmatpush1.bf16.msra.mxu0 0
    %7706 = vmatprep.subr.bf16.mxu0 0
    %7707 = vmatpush1.bf16.msra.mxu0 0
    %7708 = vmatprep.subr.bf16.mxu0 0
    %7709 = vmatpush1.bf16.msra.mxu0 0
    %7710 = vmatprep.subr.bf16.mxu0 0
    %7711 = vmatpush1.bf16.msra.mxu0 0
    %7712 = vmatprep.mubr.bf16.mxu0 0
    %7713 = vmatmul.mubr.bf16.gmra.mrb[0].mxu0 %v7678
    %v7714 = vpop.f32.mrb[0].mxu0
    %v7715 = vadd.f32 0.0, %v7714
    %v7716 = vpop.f32.mrb[0].mxu0
    %v7717 = vpop.f32.mrb[0].mxu0
    %v7718 = vpop.f32.mrb[0].mxu0
    %7719 = vdwg.mxu0
    %v7728 = vunpack.c.l.b16 %v7634
    %v7729 = vunpack.c.l.b16 %v7635
    %v7730 = vunpack.c.l.b16 %v7636
    %v7731 = vunpack.c.l.b16 %v7637
    %v7732 = vunpack.c.l.b16 %v7638
    %v7733 = vunpack.c.l.b16 %v7639
    %v7734 = vunpack.c.l.b16 %v7640
    %v7735 = vunpack.c.l.b16 %v7641
    %v7736 = vpack.c.b16 %v7729, %v7728
    %v7737 = vpack.c.b16 %v7731, %v7730
    %v7738 = vpack.c.b16 %v7733, %v7732
    %v7739 = vpack.c.b16 %v7735, %v7734
    %v7745 = vsel %vm7200, %v7633, 0
    %7747 = vmatprep.subr.bf16.mxu0 0
    %7748 = vmatpush1.bf16.msra.mxu0 %v7736
    %7749 = vmatprep.subr.bf16.mxu0 0
    %7750 = vmatpush1.bf16.msra.mxu0 %v7737
    %7751 = vmatprep.subr.bf16.mxu0 0
    %7752 = vmatpush1.bf16.msra.mxu0 %v7738
    %7753 = vmatprep.subr.bf16.mxu0 0
    %7754 = vmatpush1.bf16.msra.mxu0 %v7739
    %7755 = vmatprep.subr.bf16.mxu0 0
    %7756 = vmatpush1.bf16.msra.mxu0 0
    %7757 = vmatprep.subr.bf16.mxu0 0
    %7758 = vmatpush1.bf16.msra.mxu0 0
    %7759 = vmatprep.subr.bf16.mxu0 0
    %7760 = vmatpush1.bf16.msra.mxu0 0
    %7761 = vmatprep.subr.bf16.mxu0 0
    %7762 = vmatpush1.bf16.msra.mxu0 0
    %7763 = vmatprep.subr.bf16.mxu0 0
    %7764 = vmatpush1.bf16.msra.mxu0 0
    %7765 = vmatprep.subr.bf16.mxu0 0
    %7766 = vmatpush1.bf16.msra.mxu0 0
    %7767 = vmatprep.subr.bf16.mxu0 0
    %7768 = vmatpush1.bf16.msra.mxu0 0
    %7769 = vmatprep.subr.bf16.mxu0 0
    %7770 = vmatpush1.bf16.msra.mxu0 0
    %7771 = vmatprep.subr.bf16.mxu0 0
    %7772 = vmatpush1.bf16.msra.mxu0 0
    %7773 = vmatprep.subr.bf16.mxu0 0
    %7774 = vmatpush1.bf16.msra.mxu0 0
    %7775 = vmatprep.subr.bf16.mxu0 0
    %7776 = vmatpush1.bf16.msra.mxu0 0
    %7777 = vmatprep.subr.bf16.mxu0 0
    %7778 = vmatpush1.bf16.msra.mxu0 0
    %7779 = vmatprep.mubr.bf16.mxu0 0
    %7780 = vmatmul.mubr.bf16.gmra.mrb[0].mxu0 %v7745
    %v7781 = vpop.f32.mrb[0].mxu0
    %v7782 = vadd.f32 %v7715, %v7781
    %v7783 = vpop.f32.mrb[0].mxu0
    %v7784 = vpop.f32.mrb[0].mxu0
    %v7785 = vpop.f32.mrb[0].mxu0
    %7786 = vdwg.mxu0
    %s7787 = scalar_lea.vmem %s55, 64
    %v7788 = vld [vmem:[%s7787] sm:$0xf]
    %v7789 = vld [vmem:[%s7787 + $0x4] sm:$0xf]
    %v7790 = vld [vmem:[%s7787 + $0x8] sm:$0xf]
    %v7791 = vld [vmem:[%s7787 + $0xc] sm:$0xf]
    %v7792 = vld [vmem:[%s7787 + $0x10] sm:$0xf]
    %v7793 = vld [vmem:[%s7787 + $0x14] sm:$0xf]
    %v7794 = vld [vmem:[%s7787 + $0x18] sm:$0xf]
    %v7795 = vld [vmem:[%s7787 + $0x1c] sm:$0xf]
    %v7796 = vrot.slane %v7633, 2
    %v7805 = vunpack.c.l.b16 %v7788
    %v7806 = vunpack.c.l.b16 %v7789
    %v7807 = vunpack.c.l.b16 %v7790
    %v7808 = vunpack.c.l.b16 %v7791
    %v7809 = vunpack.c.l.b16 %v7792
    %v7810 = vunpack.c.l.b16 %v7793
    %v7811 = vunpack.c.l.b16 %v7794
    %v7812 = vunpack.c.l.b16 %v7795
    %v7813 = vpack.c.b16 %v7806, %v7805
    %v7814 = vpack.c.b16 %v7808, %v7807
    %v7815 = vpack.c.b16 %v7810, %v7809
    %v7816 = vpack.c.b16 %v7812, %v7811
    %v7822 = vsel %vm7200, %v7796, 0
    %7824 = vmatprep.subr.bf16.mxu0 0
    %7825 = vmatpush1.bf16.msra.mxu0 %v7813
    %7826 = vmatprep.subr.bf16.mxu0 0
    %7827 = vmatpush1.bf16.msra.mxu0 %v7814
    %7828 = vmatprep.subr.bf16.mxu0 0
    %7829 = vmatpush1.bf16.msra.mxu0 %v7815
    %7830 = vmatprep.subr.bf16.mxu0 0
    %7831 = vmatpush1.bf16.msra.mxu0 %v7816
    %7832 = vmatprep.subr.bf16.mxu0 0
    %7833 = vmatpush1.bf16.msra.mxu0 0
    %7834 = vmatprep.subr.bf16.mxu0 0
    %7835 = vmatpush1.bf16.msra.mxu0 0
    %7836 = vmatprep.subr.bf16.mxu0 0
    %7837 = vmatpush1.bf16.msra.mxu0 0
    %7838 = vmatprep.subr.bf16.mxu0 0
    %7839 = vmatpush1.bf16.msra.mxu0 0
    %7840 = vmatprep.subr.bf16.mxu0 0
    %7841 = vmatpush1.bf16.msra.mxu0 0
    %7842 = vmatprep.subr.bf16.mxu0 0
    %7843 = vmatpush1.bf16.msra.mxu0 0
    %7844 = vmatprep.subr.bf16.mxu0 0
    %7845 = vmatpush1.bf16.msra.mxu0 0
    %7846 = vmatprep.subr.bf16.mxu0 0
    %7847 = vmatpush1.bf16.msra.mxu0 0
    %7848 = vmatprep.subr.bf16.mxu0 0
    %7849 = vmatpush1.bf16.msra.mxu0 0
    %7850 = vmatprep.subr.bf16.mxu0 0
    %7851 = vmatpush1.bf16.msra.mxu0 0
    %7852 = vmatprep.subr.bf16.mxu0 0
    %7853 = vmatpush1.bf16.msra.mxu0 0
    %7854 = vmatprep.subr.bf16.mxu0 0
    %7855 = vmatpush1.bf16.msra.mxu0 0
    %7856 = vmatprep.mubr.bf16.mxu0 0
    %7857 = vmatmul.mubr.bf16.gmra.mrb[0].mxu0 %v7822
    %v7858 = vpop.f32.mrb[0].mxu0
    %v7859 = vadd.f32 0.0, %v7858
    %v7860 = vpop.f32.mrb[0].mxu0
    %v7861 = vpop.f32.mrb[0].mxu0
    %v7862 = vpop.f32.mrb[0].mxu0
    %7863 = vdwg.mxu0
    %v7864 = vadd.f32 %v7782, %v7859
    %s7865 = scalar_lea.vmem %s55, 96
    %v7866 = vld [vmem:[%s7865] sm:$0xf]
    %v7867 = vld [vmem:[%s7865 + $0x4] sm:$0xf]
    %v7868 = vld [vmem:[%s7865 + $0x8] sm:$0xf]
    %v7869 = vld [vmem:[%s7865 + $0xc] sm:$0xf]
    %v7870 = vld [vmem:[%s7865 + $0x10] sm:$0xf]
    %v7871 = vld [vmem:[%s7865 + $0x14] sm:$0xf]
    %v7872 = vld [vmem:[%s7865 + $0x18] sm:$0xf]
    %v7873 = vld [vmem:[%s7865 + $0x1c] sm:$0xf]
    %v7874 = vrot.slane %v7633, 3
    %v7883 = vunpack.c.l.b16 %v7866
    %v7884 = vunpack.c.l.b16 %v7867
    %v7885 = vunpack.c.l.b16 %v7868
    %v7886 = vunpack.c.l.b16 %v7869
    %v7887 = vunpack.c.l.b16 %v7870
    %v7888 = vunpack.c.l.b16 %v7871
    %v7889 = vunpack.c.l.b16 %v7872
    %v7890 = vunpack.c.l.b16 %v7873
    %v7891 = vpack.c.b16 %v7884, %v7883
    %v7892 = vpack.c.b16 %v7886, %v7885
    %v7893 = vpack.c.b16 %v7888, %v7887
    %v7894 = vpack.c.b16 %v7890, %v7889
    %v7900 = vsel %vm7200, %v7874, 0
    %7902 = vmatprep.subr.bf16.mxu0 0
    %7903 = vmatpush1.bf16.msra.mxu0 %v7891
    %7904 = vmatprep.subr.bf16.mxu0 0
    %7905 = vmatpush1.bf16.msra.mxu0 %v7892
    %7906 = vmatprep.subr.bf16.mxu0 0
    %7907 = vmatpush1.bf16.msra.mxu0 %v7893
    %7908 = vmatprep.subr.bf16.mxu0 0
    %7909 = vmatpush1.bf16.msra.mxu0 %v7894
    %7910 = vmatprep.subr.bf16.mxu0 0
    %7911 = vmatpush1.bf16.msra.mxu0 0
    %7912 = vmatprep.subr.bf16.mxu0 0
    %7913 = vmatpush1.bf16.msra.mxu0 0
    %7914 = vmatprep.subr.bf16.mxu0 0
    %7915 = vmatpush1.bf16.msra.mxu0 0
    %7916 = vmatprep.subr.bf16.mxu0 0
    %7917 = vmatpush1.bf16.msra.mxu0 0
    %7918 = vmatprep.subr.bf16.mxu0 0
    %7919 = vmatpush1.bf16.msra.mxu0 0
    %7920 = vmatprep.subr.bf16.mxu0 0
    %7921 = vmatpush1.bf16.msra.mxu0 0
    %7922 = vmatprep.subr.bf16.mxu0 0
    %7923 = vmatpush1.bf16.msra.mxu0 0
    %7924 = vmatprep.subr.bf16.mxu0 0
    %7925 = vmatpush1.bf16.msra.mxu0 0
    %7926 = vmatprep.subr.bf16.mxu0 0
    %7927 = vmatpush1.bf16.msra.mxu0 0
    %7928 = vmatprep.subr.bf16.mxu0 0
    %7929 = vmatpush1.bf16.msra.mxu0 0
    %7930 = vmatprep.subr.bf16.mxu0 0
    %7931 = vmatpush1.bf16.msra.mxu0 0
    %7932 = vmatprep.subr.bf16.mxu0 0
    %7933 = vmatpush1.bf16.msra.mxu0 0
    %7934 = vmatprep.mubr.bf16.mxu0 0
    %7935 = vmatmul.mubr.bf16.gmra.mrb[0].mxu0 %v7900
    %v7936 = vpop.f32.mrb[0].mxu0
    %v7937 = vadd.f32 0.0, %v7936
    %v7938 = vpop.f32.mrb[0].mxu0
    %v7939 = vpop.f32.mrb[0].mxu0
    %v7940 = vpop.f32.mrb[0].mxu0
    %7941 = vdwg.mxu0
    %v7942 = vadd.f32 %v7864, %v7937
    %v7943 = vpack.c.bf16 %v7630, %v7630
    %s7944 = scalar_lea.vmem %s55, 128
    %v7945 = vld [vmem:[%s7944] sm:$0xf]
    %v7946 = vld [vmem:[%s7944 + $0x4] sm:$0xf]
    %v7947 = vld [vmem:[%s7944 + $0x8] sm:$0xf]
    %v7948 = vld [vmem:[%s7944 + $0xc] sm:$0xf]
    %v7949 = vld [vmem:[%s7944 + $0x10] sm:$0xf]
    %v7950 = vld [vmem:[%s7944 + $0x14] sm:$0xf]
    %v7951 = vld [vmem:[%s7944 + $0x18] sm:$0xf]
    %v7952 = vld [vmem:[%s7944 + $0x1c] sm:$0xf]
    %v7961 = vunpack.c.l.b16 %v7945
    %v7962 = vunpack.c.l.b16 %v7946
    %v7963 = vunpack.c.l.b16 %v7947
    %v7964 = vunpack.c.l.b16 %v7948
    %v7965 = vunpack.c.l.b16 %v7949
    %v7966 = vunpack.c.l.b16 %v7950
    %v7967 = vunpack.c.l.b16 %v7951
    %v7968 = vunpack.c.l.b16 %v7952
    %v7969 = vpack.c.b16 %v7962, %v7961
    %v7970 = vpack.c.b16 %v7964, %v7963
    %v7971 = vpack.c.b16 %v7966, %v7965
    %v7972 = vpack.c.b16 %v7968, %v7967
    %v7978 = vsel %vm7200, %v7943, 0
    %7980 = vmatprep.subr.bf16.mxu0 0
    %7981 = vmatpush1.bf16.msra.mxu0 %v7969
    %7982 = vmatprep.subr.bf16.mxu0 0
    %7983 = vmatpush1.bf16.msra.mxu0 %v7970
    %7984 = vmatprep.subr.bf16.mxu0 0
    %7985 = vmatpush1.bf16.msra.mxu0 %v7971
    %7986 = vmatprep.subr.bf16.mxu0 0
    %7987 = vmatpush1.bf16.msra.mxu0 %v7972
    %7988 = vmatprep.subr.bf16.mxu0 0
    %7989 = vmatpush1.bf16.msra.mxu0 0
    %7990 = vmatprep.subr.bf16.mxu0 0
    %7991 = vmatpush1.bf16.msra.mxu0 0
    %7992 = vmatprep.subr.bf16.mxu0 0
    %7993 = vmatpush1.bf16.msra.mxu0 0
    %7994 = vmatprep.subr.bf16.mxu0 0
    %7995 = vmatpush1.bf16.msra.mxu0 0
    %7996 = vmatprep.subr.bf16.mxu0 0
    %7997 = vmatpush1.bf16.msra.mxu0 0
    %7998 = vmatprep.subr.bf16.mxu0 0
    %7999 = vmatpush1.bf16.msra.mxu0 0
    %8000 = vmatprep.subr.bf16.mxu0 0
    %8001 = vmatpush1.bf16.msra.mxu0 0
    %8002 = vmatprep.subr.bf16.mxu0 0
    %8003 = vmatpush1.bf16.msra.mxu0 0
    %8004 = vmatprep.subr.bf16.mxu0 0
    %8005 = vmatpush1.bf16.msra.mxu0 0
    %8006 = vmatprep.subr.bf16.mxu0 0
    %8007 = vmatpush1.bf16.msra.mxu0 0
    %8008 = vmatprep.subr.bf16.mxu0 0
    %8009 = vmatpush1.bf16.msra.mxu0 0
    %8010 = vmatprep.subr.bf16.mxu0 0
    %8011 = vmatpush1.bf16.msra.mxu0 0
    %8012 = vmatprep.mubr.bf16.mxu0 0
    %8013 = vmatmul.mubr.bf16.gmra.mrb[0].mxu0 %v7978
    %v8014 = vpop.f32.mrb[0].mxu0
    %v8015 = vadd.f32 0.0, %v8014
    %v8016 = vpop.f32.mrb[0].mxu0
    %v8017 = vpop.f32.mrb[0].mxu0
    %v8018 = vpop.f32.mrb[0].mxu0
    %8019 = vdwg.mxu0
    %v8020 = vadd.f32 %v7942, %v8015
    %s8021 = scalar_lea.vmem %s55, 160
    %v8022 = vld [vmem:[%s8021] sm:$0xf]
    %v8023 = vld [vmem:[%s8021 + $0x4] sm:$0xf]
    %v8024 = vld [vmem:[%s8021 + $0x8] sm:$0xf]
    %v8025 = vld [vmem:[%s8021 + $0xc] sm:$0xf]
    %v8026 = vld [vmem:[%s8021 + $0x10] sm:$0xf]
    %v8027 = vld [vmem:[%s8021 + $0x14] sm:$0xf]
    %v8028 = vld [vmem:[%s8021 + $0x18] sm:$0xf]
    %v8029 = vld [vmem:[%s8021 + $0x1c] sm:$0xf]
    %v8031 = vrot.slane %v7943, 1
    %v8040 = vunpack.c.l.b16 %v8022
    %v8041 = vunpack.c.l.b16 %v8023
    %v8042 = vunpack.c.l.b16 %v8024
    %v8043 = vunpack.c.l.b16 %v8025
    %v8044 = vunpack.c.l.b16 %v8026
    %v8045 = vunpack.c.l.b16 %v8027
    %v8046 = vunpack.c.l.b16 %v8028
    %v8047 = vunpack.c.l.b16 %v8029
    %v8048 = vpack.c.b16 %v8041, %v8040
    %v8049 = vpack.c.b16 %v8043, %v8042
    %v8050 = vpack.c.b16 %v8045, %v8044
    %v8051 = vpack.c.b16 %v8047, %v8046
    %v8057 = vsel %vm7200, %v8031, 0
    %8059 = vmatprep.subr.bf16.mxu0 0
    %8060 = vmatpush1.bf16.msra.mxu0 %v8048
    %8061 = vmatprep.subr.bf16.mxu0 0
    %8062 = vmatpush1.bf16.msra.mxu0 %v8049
    %8063 = vmatprep.subr.bf16.mxu0 0
    %8064 = vmatpush1.bf16.msra.mxu0 %v8050
    %8065 = vmatprep.subr.bf16.mxu0 0
    %8066 = vmatpush1.bf16.msra.mxu0 %v8051
    %8067 = vmatprep.subr.bf16.mxu0 0
    %8068 = vmatpush1.bf16.msra.mxu0 0
    %8069 = vmatprep.subr.bf16.mxu0 0
    %8070 = vmatpush1.bf16.msra.mxu0 0
    %8071 = vmatprep.subr.bf16.mxu0 0
    %8072 = vmatpush1.bf16.msra.mxu0 0
    %8073 = vmatprep.subr.bf16.mxu0 0
    %8074 = vmatpush1.bf16.msra.mxu0 0
    %8075 = vmatprep.subr.bf16.mxu0 0
    %8076 = vmatpush1.bf16.msra.mxu0 0
    %8077 = vmatprep.subr.bf16.mxu0 0
    %8078 = vmatpush1.bf16.msra.mxu0 0
    %8079 = vmatprep.subr.bf16.mxu0 0
    %8080 = vmatpush1.bf16.msra.mxu0 0
    %8081 = vmatprep.subr.bf16.mxu0 0
    %8082 = vmatpush1.bf16.msra.mxu0 0
    %8083 = vmatprep.subr.bf16.mxu0 0
    %8084 = vmatpush1.bf16.msra.mxu0 0
    %8085 = vmatprep.subr.bf16.mxu0 0
    %8086 = vmatpush1.bf16.msra.mxu0 0
    %8087 = vmatprep.subr.bf16.mxu0 0
    %8088 = vmatpush1.bf16.msra.mxu0 0
    %8089 = vmatprep.subr.bf16.mxu0 0
    %8090 = vmatpush1.bf16.msra.mxu0 0
    %8091 = vmatprep.mubr.bf16.mxu0 0
    %8092 = vmatmul.mubr.bf16.gmra.mrb[0].mxu0 %v8057
    %v8093 = vpop.f32.mrb[0].mxu0
    %v8094 = vadd.f32 0.0, %v8093
    %v8095 = vpop.f32.mrb[0].mxu0
    %v8096 = vpop.f32.mrb[0].mxu0
    %v8097 = vpop.f32.mrb[0].mxu0
    %8098 = vdwg.mxu0
    %v8099 = vadd.f32 %v8020, %v8094
    %s8100 = scalar_lea.vmem %s55, 192
    %v8101 = vld [vmem:[%s8100] sm:$0xf]
    %v8102 = vld [vmem:[%s8100 + $0x4] sm:$0xf]
    %v8103 = vld [vmem:[%s8100 + $0x8] sm:$0xf]
    %v8104 = vld [vmem:[%s8100 + $0xc] sm:$0xf]
    %v8105 = vld [vmem:[%s8100 + $0x10] sm:$0xf]
    %v8106 = vld [vmem:[%s8100 + $0x14] sm:$0xf]
    %v8107 = vld [vmem:[%s8100 + $0x18] sm:$0xf]
    %v8108 = vld [vmem:[%s8100 + $0x1c] sm:$0xf]
    %v8109 = vrot.slane %v7943, 2
    %v8118 = vunpack.c.l.b16 %v8101
    %v8119 = vunpack.c.l.b16 %v8102
    %v8120 = vunpack.c.l.b16 %v8103
    %v8121 = vunpack.c.l.b16 %v8104
    %v8122 = vunpack.c.l.b16 %v8105
    %v8123 = vunpack.c.l.b16 %v8106
    %v8124 = vunpack.c.l.b16 %v8107
    %v8125 = vunpack.c.l.b16 %v8108
    %v8126 = vpack.c.b16 %v8119, %v8118
    %v8127 = vpack.c.b16 %v8121, %v8120
    %v8128 = vpack.c.b16 %v8123, %v8122
    %v8129 = vpack.c.b16 %v8125, %v8124
    %v8135 = vsel %vm7200, %v8109, 0
    %8137 = vmatprep.subr.bf16.mxu0 0
    %8138 = vmatpush1.bf16.msra.mxu0 %v8126
    %8139 = vmatprep.subr.bf16.mxu0 0
    %8140 = vmatpush1.bf16.msra.mxu0 %v8127
    %8141 = vmatprep.subr.bf16.mxu0 0
    %8142 = vmatpush1.bf16.msra.mxu0 %v8128
    %8143 = vmatprep.subr.bf16.mxu0 0
    %8144 = vmatpush1.bf16.msra.mxu0 %v8129
    %8145 = vmatprep.subr.bf16.mxu0 0
    %8146 = vmatpush1.bf16.msra.mxu0 0
    %8147 = vmatprep.subr.bf16.mxu0 0
    %8148 = vmatpush1.bf16.msra.mxu0 0
    %8149 = vmatprep.subr.bf16.mxu0 0
    %8150 = vmatpush1.bf16.msra.mxu0 0
    %8151 = vmatprep.subr.bf16.mxu0 0
    %8152 = vmatpush1.bf16.msra.mxu0 0
    %8153 = vmatprep.subr.bf16.mxu0 0
    %8154 = vmatpush1.bf16.msra.mxu0 0
    %8155 = vmatprep.subr.bf16.mxu0 0
    %8156 = vmatpush1.bf16.msra.mxu0 0
    %8157 = vmatprep.subr.bf16.mxu0 0
    %8158 = vmatpush1.bf16.msra.mxu0 0
    %8159 = vmatprep.subr.bf16.mxu0 0
    %8160 = vmatpush1.bf16.msra.mxu0 0
    %8161 = vmatprep.subr.bf16.mxu0 0
    %8162 = vmatpush1.bf16.msra.mxu0 0
    %8163 = vmatprep.subr.bf16.mxu0 0
    %8164 = vmatpush1.bf16.msra.mxu0 0
    %8165 = vmatprep.subr.bf16.mxu0 0
    %8166 = vmatpush1.bf16.msra.mxu0 0
    %8167 = vmatprep.subr.bf16.mxu0 0
    %8168 = vmatpush1.bf16.msra.mxu0 0
    %8169 = vmatprep.mubr.bf16.mxu0 0
    %8170 = vmatmul.mubr.bf16.gmra.mrb[0].mxu0 %v8135
    %v8171 = vpop.f32.mrb[0].mxu0
    %v8172 = vadd.f32 0.0, %v8171
    %v8173 = vpop.f32.mrb[0].mxu0
    %v8174 = vpop.f32.mrb[0].mxu0
    %v8175 = vpop.f32.mrb[0].mxu0
    %8176 = vdwg.mxu0
    %v8177 = vadd.f32 %v8099, %v8172
    %s8178 = scalar_lea.vmem %s55, 224
    %v8179 = vld [vmem:[%s8178] sm:$0xf]
    %v8180 = vld [vmem:[%s8178 + $0x4] sm:$0xf]
    %v8181 = vld [vmem:[%s8178 + $0x8] sm:$0xf]
    %v8182 = vld [vmem:[%s8178 + $0xc] sm:$0xf]
    %v8183 = vld [vmem:[%s8178 + $0x10] sm:$0xf]
    %v8184 = vld [vmem:[%s8178 + $0x14] sm:$0xf]
    %v8185 = vld [vmem:[%s8178 + $0x18] sm:$0xf]
    %v8186 = vld [vmem:[%s8178 + $0x1c] sm:$0xf]
    %v8187 = vrot.slane %v7943, 3
    %v8196 = vunpack.c.l.b16 %v8179
    %v8197 = vunpack.c.l.b16 %v8180
    %v8198 = vunpack.c.l.b16 %v8181
    %v8199 = vunpack.c.l.b16 %v8182
    %v8200 = vunpack.c.l.b16 %v8183
    %v8201 = vunpack.c.l.b16 %v8184
    %v8202 = vunpack.c.l.b16 %v8185
    %v8203 = vunpack.c.l.b16 %v8186
    %v8204 = vpack.c.b16 %v8197, %v8196
    %v8205 = vpack.c.b16 %v8199, %v8198
    %v8206 = vpack.c.b16 %v8201, %v8200
    %v8207 = vpack.c.b16 %v8203, %v8202
    %v8213 = vsel %vm7200, %v8187, 0
    %8215 = vmatprep.subr.bf16.mxu0 0
    %8216 = vmatpush1.bf16.msra.mxu0 %v8204
    %8217 = vmatprep.subr.bf16.mxu0 0
    %8218 = vmatpush1.bf16.msra.mxu0 %v8205
    %8219 = vmatprep.subr.bf16.mxu0 0
    %8220 = vmatpush1.bf16.msra.mxu0 %v8206
    %8221 = vmatprep.subr.bf16.mxu0 0
    %8222 = vmatpush1.bf16.msra.mxu0 %v8207
    %8223 = vmatprep.subr.bf16.mxu0 0
    %8224 = vmatpush1.bf16.msra.mxu0 0
    %8225 = vmatprep.subr.bf16.mxu0 0
    %8226 = vmatpush1.bf16.msra.mxu0 0
    %8227 = vmatprep.subr.bf16.mxu0 0
    %8228 = vmatpush1.bf16.msra.mxu0 0
    %8229 = vmatprep.subr.bf16.mxu0 0
    %8230 = vmatpush1.bf16.msra.mxu0 0
    %8231 = vmatprep.subr.bf16.mxu0 0
    %8232 = vmatpush1.bf16.msra.mxu0 0
    %8233 = vmatprep.subr.bf16.mxu0 0
    %8234 = vmatpush1.bf16.msra.mxu0 0
    %8235 = vmatprep.subr.bf16.mxu0 0
    %8236 = vmatpush1.bf16.msra.mxu0 0
    %8237 = vmatprep.subr.bf16.mxu0 0
    %8238 = vmatpush1.bf16.msra.mxu0 0
    %8239 = vmatprep.subr.bf16.mxu0 0
    %8240 = vmatpush1.bf16.msra.mxu0 0
    %8241 = vmatprep.subr.bf16.mxu0 0
    %8242 = vmatpush1.bf16.msra.mxu0 0
    %8243 = vmatprep.subr.bf16.mxu0 0
    %8244 = vmatpush1.bf16.msra.mxu0 0
    %8245 = vmatprep.subr.bf16.mxu0 0
    %8246 = vmatpush1.bf16.msra.mxu0 0
    %8247 = vmatprep.mubr.bf16.mxu0 0
    %8248 = vmatmul.mubr.bf16.gmra.mrb[0].mxu0 %v8213
    %v8249 = vpop.f32.mrb[0].mxu0
    %v8250 = vadd.f32 0.0, %v8249
    %v8251 = vpop.f32.mrb[0].mxu0
    %v8252 = vpop.f32.mrb[0].mxu0
    %v8253 = vpop.f32.mrb[0].mxu0
    %8254 = vdwg.mxu0
    %v8255 = vadd.f32 %v8177, %v8250
    %v8256 = vld [vmem:[%s57] sm:$0x1]
    %v8258 = vlaneseq
    %v8259 = vshrl.u32 %v8258, 7
    %v8260 = vsub.s32 0, %v8259
    %v8261 = vrot.slane %v8256, %v8260
    %v8263 = vadd.f32 %v8255, %v8261
    %v8264 = vmul.f32 %v8263, 0.5
    %v8265 = vmul.f32 %v8263, 0.044715
    %v8266 = vmul.f32 %v8265, %v8263
    %v8267 = vmul.f32 %v8266, %v8263
    %v8268 = vadd.f32 %v8263, %v8267
    %v8269 = vmul.f32 %v8268, 0.7978846
    %v8270 = vtanh.pop %v8269
    %v8271 = vadd.f32 %v8270, 1.0
    %v8272 = vmul.f32 %v8264, %v8271
    %s8273 = scalar_lea.vmem %s61, 13
    %v8274 = vld [vmem:[%s8273] sm:$0x1]
    %v8276 = vlaneseq
    %v8277 = vshrl.u32 %v8276, 7
    %v8278 = vsub.s32 0, %v8277
    %v8279 = vrot.slane %v8274, %v8278
    %v8281 = vmul.f32 %v8272, %v8279
    %v8282 = vld [vmem:[%s63] sm:$0x1]
    %v8284 = vlaneseq
    %v8285 = vshrl.u32 %v8284, 7
    %v8286 = vsub.s32 0, %v8285
    %v8287 = vrot.slane %v8282, %v8286
    %v8289 = vadd.f32 %v8281, %v8287
    %v8290 = vld [vmem:[%s65] sm:$0x1]
    %v8291 = vld [vmem:[%s67] sm:$0x1]
    %v8292 = vsel %vm6746, %v8289, 0.0
    %8293 = vadd.xlane.f32.xlu0 %v8292
    %v8294 = vpop.xlane.xlu0 %8293
    %v8295 = vrcp.pop 128.0
    %v8296 = vmul.f32 %v8294, %v8295
    %v8297 = vmul.f32 %v8289, %v8289
    %v8298 = vsel %vm6746, %v8297, 0.0
    %8299 = vadd.xlane.f32.xlu0 %v8298
    %v8300 = vpop.xlane.xlu0 %8299
    %v8301 = vmul.f32 %v8300, %v8295
    %v8302 = vmul.f32 %v8296, %v8296
    %v8303 = vsub.f32 %v8301, %v8302
    %v8304 = vsub.f32 %v8289, %v8296
    %v8305 = vadd.f32 %v8303, 1e-05
    %v8306 = vrsqrt.pop %v8305
    %v8307 = vmul.f32 %v8304, %v8306
    %v8309 = vlaneseq
    %v8310 = vshrl.u32 %v8309, 7
    %v8311 = vsub.s32 0, %v8310
    %v8312 = vrot.slane %v8290, %v8311
    %v8314 = vmul.f32 %v8307, %v8312
    %v8316 = vlaneseq
    %v8317 = vshrl.u32 %v8316, 7
    %v8318 = vsub.s32 0, %v8317
    %v8319 = vrot.slane %v8291, %v8318
    %v8321 = vadd.f32 %v8314, %v8319
    %v8322 = vpack.c.bf16 %v8321, %v8321
    %v8323 = vld [vmem:[%s69] sm:$0xff]
    %v8324 = vld [vmem:[%s69 + $0x8] sm:$0xff]
    %v8325 = vld [vmem:[%s69 + $0x10] sm:$0xff]
    %v8326 = vld [vmem:[%s69 + $0x18] sm:$0xff]
    %v8327 = vld [vmem:[%s69 + $0x20] sm:$0xff]
    %v8328 = vld [vmem:[%s69 + $0x28] sm:$0xff]
    %v8329 = vld [vmem:[%s69 + $0x30] sm:$0xff]
    %v8330 = vld [vmem:[%s69 + $0x38] sm:$0xff]
    %v8331 = vld [vmem:[%s69 + $0x40] sm:$0xff]
    %v8332 = vld [vmem:[%s69 + $0x48] sm:$0xff]
    %v8333 = vld [vmem:[%s69 + $0x50] sm:$0xff]
    %v8334 = vld [vmem:[%s69 + $0x58] sm:$0xff]
    %v8335 = vld [vmem:[%s69 + $0x60] sm:$0xff]
    %v8336 = vld [vmem:[%s69 + $0x68] sm:$0xff]
    %v8337 = vld [vmem:[%s69 + $0x70] sm:$0xff]
    %v8338 = vld [vmem:[%s69 + $0x78] sm:$0xff]
    %v8339 = vld [vmem:[%s69 + $0x80] sm:$0xff]
    %v8340 = vld [vmem:[%s69 + $0x88] sm:$0xff]
    %v8341 = vld [vmem:[%s69 + $0x90] sm:$0xff]
    %v8342 = vld [vmem:[%s69 + $0x98] sm:$0xff]
    %v8343 = vld [vmem:[%s69 + $0xa0] sm:$0xff]
    %v8344 = vld [vmem:[%s69 + $0xa8] sm:$0xff]
    %v8345 = vld [vmem:[%s69 + $0xb0] sm:$0xff]
    %v8346 = vld [vmem:[%s69 + $0xb8] sm:$0xff]
    %v8347 = vld [vmem:[%s69 + $0xc0] sm:$0xff]
    %v8348 = vld [vmem:[%s69 + $0xc8] sm:$0xff]
    %v8349 = vld [vmem:[%s69 + $0xd0] sm:$0xff]
    %v8350 = vld [vmem:[%s69 + $0xd8] sm:$0xff]
    %v8351 = vld [vmem:[%s69 + $0xe0] sm:$0xff]
    %v8352 = vld [vmem:[%s69 + $0xe8] sm:$0xff]
    %v8353 = vld [vmem:[%s69 + $0xf0] sm:$0xff]
    %v8354 = vld [vmem:[%s69 + $0xf8] sm:$0xff]
    %v8355 = vld [vmem:[%s71] sm:$0xf]
    %v8357 = vlaneseq
    %v8358 = vshrl.u32 %v8357, 7
    %v8359 = vsub.s32 0, %v8358
    %v8360 = vrot.slane %v8355, %v8359
    %v8361 = vlaneseq
    %v8362 = vshrl.u32 %v8361, 7
    %v8363 = vsub.s32 1, %v8362
    %v8364 = vrot.slane %v8355, %v8363
    %v8365 = vlaneseq
    %v8366 = vshrl.u32 %v8365, 7
    %v8367 = vsub.s32 2, %v8366
    %v8368 = vrot.slane %v8355, %v8367
    %v8369 = vlaneseq
    %v8370 = vshrl.u32 %v8369, 7
    %v8371 = vsub.s32 3, %v8370
    %v8372 = vrot.slane %v8355, %v8371
    %v8409 = vunpack.c.l.b16 %v8323
    %v8410 = vunpack.c.h.b16 %v8323
    %v8411 = vunpack.c.l.b16 %v8324
    %v8412 = vunpack.c.h.b16 %v8324
    %v8413 = vunpack.c.l.b16 %v8325
    %v8414 = vunpack.c.h.b16 %v8325
    %v8415 = vunpack.c.l.b16 %v8326
    %v8416 = vunpack.c.h.b16 %v8326
    %v8417 = vunpack.c.l.b16 %v8327
    %v8418 = vunpack.c.h.b16 %v8327
    %v8419 = vunpack.c.l.b16 %v8328
    %v8420 = vunpack.c.h.b16 %v8328
    %v8421 = vunpack.c.l.b16 %v8329
    %v8422 = vunpack.c.h.b16 %v8329
    %v8423 = vunpack.c.l.b16 %v8330
    %v8424 = vunpack.c.h.b16 %v8330
    %v8425 = vunpack.c.l.b16 %v8331
    %v8426 = vunpack.c.h.b16 %v8331
    %v8427 = vunpack.c.l.b16 %v8332
    %v8428 = vunpack.c.h.b16 %v8332
    %v8429 = vunpack.c.l.b16 %v8333
    %v8430 = vunpack.c.h.b16 %v8333
    %v8431 = vunpack.c.l.b16 %v8334
    %v8432 = vunpack.c.h.b16 %v8334
    %v8433 = vunpack.c.l.b16 %v8335
    %v8434 = vunpack.c.h.b16 %v8335
    %v8435 = vunpack.c.l.b16 %v8336
    %v8436 = vunpack.c.h.b16 %v8336
    %v8437 = vunpack.c.l.b16 %v8337
    %v8438 = vunpack.c.h.b16 %v8337
    %v8439 = vunpack.c.l.b16 %v8338
    %v8440 = vunpack.c.h.b16 %v8338
    %v8441 = vunpack.c.l.b16 %v8339
    %v8442 = vunpack.c.h.b16 %v8339
    %v8443 = vunpack.c.l.b16 %v8340
    %v8444 = vunpack.c.h.b16 %v8340
    %v8445 = vunpack.c.l.b16 %v8341
    %v8446 = vunpack.c.h.b16 %v8341
    %v8447 = vunpack.c.l.b16 %v8342
    %v8448 = vunpack.c.h.b16 %v8342
    %v8449 = vunpack.c.l.b16 %v8343
    %v8450 = vunpack.c.h.b16 %v8343
    %v8451 = vunpack.c.l.b16 %v8344
    %v8452 = vunpack.c.h.b16 %v8344
    %v8453 = vunpack.c.l.b16 %v8345
    %v8454 = vunpack.c.h.b16 %v8345
    %v8455 = vunpack.c.l.b16 %v8346
    %v8456 = vunpack.c.h.b16 %v8346
    %v8457 = vunpack.c.l.b16 %v8347
    %v8458 = vunpack.c.h.b16 %v8347
    %v8459 = vunpack.c.l.b16 %v8348
    %v8460 = vunpack.c.h.b16 %v8348
    %v8461 = vunpack.c.l.b16 %v8349
    %v8462 = vunpack.c.h.b16 %v8349
    %v8463 = vunpack.c.l.b16 %v8350
    %v8464 = vunpack.c.h.b16 %v8350
    %v8465 = vunpack.c.l.b16 %v8351
    %v8466 = vunpack.c.h.b16 %v8351
    %v8467 = vunpack.c.l.b16 %v8352
    %v8468 = vunpack.c.h.b16 %v8352
    %v8469 = vunpack.c.l.b16 %v8353
    %v8470 = vunpack.c.h.b16 %v8353
    %v8471 = vunpack.c.l.b16 %v8354
    %v8472 = vunpack.c.h.b16 %v8354
    %v8473 = vpack.c.b16 %v8413, %v8409
    %v8474 = vpack.c.b16 %v8414, %v8410
    %v8475 = vpack.c.b16 %v8415, %v8411
    %v8476 = vpack.c.b16 %v8416, %v8412
    %v8477 = vpack.c.b16 %v8421, %v8417
    %v8478 = vpack.c.b16 %v8422, %v8418
    %v8479 = vpack.c.b16 %v8423, %v8419
    %v8480 = vpack.c.b16 %v8424, %v8420
    %v8481 = vpack.c.b16 %v8429, %v8425
    %v8482 = vpack.c.b16 %v8430, %v8426
    %v8483 = vpack.c.b16 %v8431, %v8427
    %v8484 = vpack.c.b16 %v8432, %v8428
    %v8485 = vpack.c.b16 %v8437, %v8433
    %v8486 = vpack.c.b16 %v8438, %v8434
    %v8487 = vpack.c.b16 %v8439, %v8435
    %v8488 = vpack.c.b16 %v8440, %v8436
    %v8489 = vpack.c.b16 %v8445, %v8441
    %v8490 = vpack.c.b16 %v8446, %v8442
    %v8491 = vpack.c.b16 %v8447, %v8443
    %v8492 = vpack.c.b16 %v8448, %v8444
    %v8493 = vpack.c.b16 %v8453, %v8449
    %v8494 = vpack.c.b16 %v8454, %v8450
    %v8495 = vpack.c.b16 %v8455, %v8451
    %v8496 = vpack.c.b16 %v8456, %v8452
    %v8497 = vpack.c.b16 %v8461, %v8457
    %v8498 = vpack.c.b16 %v8462, %v8458
    %v8499 = vpack.c.b16 %v8463, %v8459
    %v8500 = vpack.c.b16 %v8464, %v8460
    %v8501 = vpack.c.b16 %v8469, %v8465
    %v8502 = vpack.c.b16 %v8470, %v8466
    %v8503 = vpack.c.b16 %v8471, %v8467
    %v8504 = vpack.c.b16 %v8472, %v8468
    %8537 = vmatprep.subr.bf16.mxu0 %v8474
    %8538 = vmatpush1.bf16.msra.mxu0 %v8473
    %8539 = vmatprep.subr.bf16.mxu0 %v8478
    %8540 = vmatpush1.bf16.msra.mxu0 %v8477
    %8541 = vmatprep.subr.bf16.mxu0 %v8482
    %8542 = vmatpush1.bf16.msra.mxu0 %v8481
    %8543 = vmatprep.subr.bf16.mxu0 %v8486
    %8544 = vmatpush1.bf16.msra.mxu0 %v8485
    %8545 = vmatprep.subr.bf16.mxu0 %v8490
    %8546 = vmatpush1.bf16.msra.mxu0 %v8489
    %8547 = vmatprep.subr.bf16.mxu0 %v8494
    %8548 = vmatpush1.bf16.msra.mxu0 %v8493
    %8549 = vmatprep.subr.bf16.mxu0 %v8498
    %8550 = vmatpush1.bf16.msra.mxu0 %v8497
    %8551 = vmatprep.subr.bf16.mxu0 %v8502
    %8552 = vmatpush1.bf16.msra.mxu0 %v8501
    %8553 = vmatprep.subr.bf16.mxu0 0
    %8554 = vmatpush1.bf16.msra.mxu0 0
    %8555 = vmatprep.subr.bf16.mxu0 0
    %8556 = vmatpush1.bf16.msra.mxu0 0
    %8557 = vmatprep.subr.bf16.mxu0 0
    %8558 = vmatpush1.bf16.msra.mxu0 0
    %8559 = vmatprep.subr.bf16.mxu0 0
    %8560 = vmatpush1.bf16.msra.mxu0 0
    %8561 = vmatprep.subr.bf16.mxu0 0
    %8562 = vmatpush1.bf16.msra.mxu0 0
    %8563 = vmatprep.subr.bf16.mxu0 0
    %8564 = vmatpush1.bf16.msra.mxu0 0
    %8565 = vmatprep.subr.bf16.mxu0 0
    %8566 = vmatpush1.bf16.msra.mxu0 0
    %8567 = vmatprep.subr.bf16.mxu0 0
    %8568 = vmatpush1.bf16.msra.mxu0 0
    %8569 = vmatprep.mubr.bf16.mxu0 0
    %8570 = vmatmul.mubr.bf16.gmra.mrb[0].mxu0 %v8322
    %v8571 = vpop.f32.mrb[0].mxu0
    %v8572 = vadd.f32 %v8360, %v8571
    %v8573 = vpop.f32.mrb[0].mxu0
    %v8574 = vadd.f32 %v8364, %v8573
    %v8575 = vpop.f32.mrb[0].mxu0
    %v8576 = vpop.f32.mrb[0].mxu0
    %8577 = vdwg.mxu0
    %8578 = vmatprep.subr.bf16.mxu0 %v8476
    %8579 = vmatpush1.bf16.msra.mxu0 %v8475
    %8580 = vmatprep.subr.bf16.mxu0 %v8480
    %8581 = vmatpush1.bf16.msra.mxu0 %v8479
    %8582 = vmatprep.subr.bf16.mxu0 %v8484
    %8583 = vmatpush1.bf16.msra.mxu0 %v8483
    %8584 = vmatprep.subr.bf16.mxu0 %v8488
    %8585 = vmatpush1.bf16.msra.mxu0 %v8487
    %8586 = vmatprep.subr.bf16.mxu0 %v8492
    %8587 = vmatpush1.bf16.msra.mxu0 %v8491
    %8588 = vmatprep.subr.bf16.mxu0 %v8496
    %8589 = vmatpush1.bf16.msra.mxu0 %v8495
    %8590 = vmatprep.subr.bf16.mxu0 %v8500
    %8591 = vmatpush1.bf16.msra.mxu0 %v8499
    %8592 = vmatprep.subr.bf16.mxu0 %v8504
    %8593 = vmatpush1.bf16.msra.mxu0 %v8503
    %8594 = vmatprep.subr.bf16.mxu0 0
    %8595 = vmatpush1.bf16.msra.mxu0 0
    %8596 = vmatprep.subr.bf16.mxu0 0
    %8597 = vmatpush1.bf16.msra.mxu0 0
    %8598 = vmatprep.subr.bf16.mxu0 0
    %8599 = vmatpush1.bf16.msra.mxu0 0
    %8600 = vmatprep.subr.bf16.mxu0 0
    %8601 = vmatpush1.bf16.msra.mxu0 0
    %8602 = vmatprep.subr.bf16.mxu0 0
    %8603 = vmatpush1.bf16.msra.mxu0 0
    %8604 = vmatprep.subr.bf16.mxu0 0
    %8605 = vmatpush1.bf16.msra.mxu0 0
    %8606 = vmatprep.subr.bf16.mxu0 0
    %8607 = vmatpush1.bf16.msra.mxu0 0
    %8608 = vmatprep.subr.bf16.mxu0 0
    %8609 = vmatpush1.bf16.msra.mxu0 0
    %8610 = vmatprep.mubr.bf16.mxu0 0
    %8611 = vmatmul.mubr.bf16.gmra.mrb[0].mxu0 %v8322
    %v8612 = vpop.f32.mrb[0].mxu0
    %v8613 = vadd.f32 %v8368, %v8612
    %v8614 = vpop.f32.mrb[0].mxu0
    %v8615 = vadd.f32 %v8372, %v8614
    %v8616 = vpop.f32.mrb[0].mxu0
    %v8617 = vpop.f32.mrb[0].mxu0
    %8618 = vdwg.mxu0
    %v8619 = vmul.f32 %v8572, 0.5
    %v8620 = vmul.f32 %v8574, 0.5
    %v8621 = vmul.f32 %v8613, 0.5
    %v8622 = vmul.f32 %v8615, 0.5
    %v8623 = vmul.f32 %v8572, 0.044715
    %v8624 = vmul.f32 %v8574, 0.044715
    %v8625 = vmul.f32 %v8613, 0.044715
    %v8626 = vmul.f32 %v8615, 0.044715
    %v8627 = vmul.f32 %v8623, %v8572
    %v8628 = vmul.f32 %v8624, %v8574
    %v8629 = vmul.f32 %v8625, %v8613
    %v8630 = vmul.f32 %v8626, %v8615
    %v8631 = vmul.f32 %v8627, %v8572
    %v8632 = vmul.f32 %v8628, %v8574
    %v8633 = vmul.f32 %v8629, %v8613
    %v8634 = vmul.f32 %v8630, %v8615
    %v8635 = vadd.f32 %v8572, %v8631
    %v8636 = vadd.f32 %v8574, %v8632
    %v8637 = vadd.f32 %v8613, %v8633
    %v8638 = vadd.f32 %v8615, %v8634
    %v8639 = vmul.f32 %v8635, 0.7978846
    %v8640 = vmul.f32 %v8636, 0.7978846
    %v8641 = vmul.f32 %v8637, 0.7978846
    %v8642 = vmul.f32 %v8638, 0.7978846
    %v8643 = vtanh.pop %v8639
    %v8644 = vtanh.pop %v8640
    %v8645 = vtanh.pop %v8641
    %v8646 = vtanh.pop %v8642
    %v8647 = vadd.f32 %v8643, 1.0
    %v8648 = vadd.f32 %v8644, 1.0
    %v8649 = vadd.f32 %v8645, 1.0
    %v8650 = vadd.f32 %v8646, 1.0
    %v8651 = vmul.f32 %v8619, %v8647
    %v8652 = vmul.f32 %v8620, %v8648
    %v8653 = vmul.f32 %v8621, %v8649
    %v8654 = vmul.f32 %v8622, %v8650
    %v8655 = vpack.c.bf16 %v8651, %v8651
    %v8656 = vpack.c.bf16 %v8652, %v8652
    %v8657 = vpack.c.bf16 %v8653, %v8653
    %v8658 = vpack.c.bf16 %v8654, %v8654
    %v8659 = vld [vmem:[%s73] sm:$0xf]
    %v8660 = vld [vmem:[%s73 + $0x4] sm:$0xf]
    %v8661 = vld [vmem:[%s73 + $0x8] sm:$0xf]
    %v8662 = vld [vmem:[%s73 + $0xc] sm:$0xf]
    %v8663 = vld [vmem:[%s73 + $0x10] sm:$0xf]
    %v8664 = vld [vmem:[%s73 + $0x14] sm:$0xf]
    %v8665 = vld [vmem:[%s73 + $0x18] sm:$0xf]
    %v8666 = vld [vmem:[%s73 + $0x1c] sm:$0xf]
    %v8667 = vld [vmem:[%s73 + $0x20] sm:$0xf]
    %v8668 = vld [vmem:[%s73 + $0x24] sm:$0xf]
    %v8669 = vld [vmem:[%s73 + $0x28] sm:$0xf]
    %v8670 = vld [vmem:[%s73 + $0x2c] sm:$0xf]
    %v8671 = vld [vmem:[%s73 + $0x30] sm:$0xf]
    %v8672 = vld [vmem:[%s73 + $0x34] sm:$0xf]
    %v8673 = vld [vmem:[%s73 + $0x38] sm:$0xf]
    %v8674 = vld [vmem:[%s73 + $0x3c] sm:$0xf]
    %v8675 = vld [vmem:[%s73 + $0x40] sm:$0xf]
    %v8676 = vld [vmem:[%s73 + $0x44] sm:$0xf]
    %v8677 = vld [vmem:[%s73 + $0x48] sm:$0xf]
    %v8678 = vld [vmem:[%s73 + $0x4c] sm:$0xf]
    %v8679 = vld [vmem:[%s73 + $0x50] sm:$0xf]
    %v8680 = vld [vmem:[%s73 + $0x54] sm:$0xf]
    %v8681 = vld [vmem:[%s73 + $0x58] sm:$0xf]
    %v8682 = vld [vmem:[%s73 + $0x5c] sm:$0xf]
    %v8683 = vld [vmem:[%s73 + $0x60] sm:$0xf]
    %v8684 = vld [vmem:[%s73 + $0x64] sm:$0xf]
    %v8685 = vld [vmem:[%s73 + $0x68] sm:$0xf]
    %v8686 = vld [vmem:[%s73 + $0x6c] sm:$0xf]
    %v8687 = vld [vmem:[%s73 + $0x70] sm:$0xf]
    %v8688 = vld [vmem:[%s73 + $0x74] sm:$0xf]
    %v8689 = vld [vmem:[%s73 + $0x78] sm:$0xf]
    %v8690 = vld [vmem:[%s73 + $0x7c] sm:$0xf]
    %v8691 = vld [vmem:[%s73 + $0x80] sm:$0xf]
    %v8692 = vld [vmem:[%s73 + $0x84] sm:$0xf]
    %v8693 = vld [vmem:[%s73 + $0x88] sm:$0xf]
    %v8694 = vld [vmem:[%s73 + $0x8c] sm:$0xf]
    %v8695 = vld [vmem:[%s73 + $0x90] sm:$0xf]
    %v8696 = vld [vmem:[%s73 + $0x94] sm:$0xf]
    %v8697 = vld [vmem:[%s73 + $0x98] sm:$0xf]
    %v8698 = vld [vmem:[%s73 + $0x9c] sm:$0xf]
    %v8699 = vld [vmem:[%s73 + $0xa0] sm:$0xf]
    %v8700 = vld [vmem:[%s73 + $0xa4] sm:$0xf]
    %v8701 = vld [vmem:[%s73 + $0xa8] sm:$0xf]
    %v8702 = vld [vmem:[%s73 + $0xac] sm:$0xf]
    %v8703 = vld [vmem:[%s73 + $0xb0] sm:$0xf]
    %v8704 = vld [vmem:[%s73 + $0xb4] sm:$0xf]
    %v8705 = vld [vmem:[%s73 + $0xb8] sm:$0xf]
    %v8706 = vld [vmem:[%s73 + $0xbc] sm:$0xf]
    %v8707 = vld [vmem:[%s73 + $0xc0] sm:$0xf]
    %v8708 = vld [vmem:[%s73 + $0xc4] sm:$0xf]
    %v8709 = vld [vmem:[%s73 + $0xc8] sm:$0xf]
    %v8710 = vld [vmem:[%s73 + $0xcc] sm:$0xf]
    %v8711 = vld [vmem:[%s73 + $0xd0] sm:$0xf]
    %v8712 = vld [vmem:[%s73 + $0xd4] sm:$0xf]
    %v8713 = vld [vmem:[%s73 + $0xd8] sm:$0xf]
    %v8714 = vld [vmem:[%s73 + $0xdc] sm:$0xf]
    %v8715 = vld [vmem:[%s73 + $0xe0] sm:$0xf]
    %v8716 = vld [vmem:[%s73 + $0xe4] sm:$0xf]
    %v8717 = vld [vmem:[%s73 + $0xe8] sm:$0xf]
    %v8718 = vld [vmem:[%s73 + $0xec] sm:$0xf]
    %v8719 = vld [vmem:[%s73 + $0xf0] sm:$0xf]
    %v8720 = vld [vmem:[%s73 + $0xf4] sm:$0xf]
    %v8721 = vld [vmem:[%s73 + $0xf8] sm:$0xf]
    %v8722 = vld [vmem:[%s73 + $0xfc] sm:$0xf]
    %v8723 = vld [vmem:[%s75] sm:$0x1]
    %v8725 = vlaneseq
    %v8726 = vshrl.u32 %v8725, 7
    %v8727 = vsub.s32 0, %v8726
    %v8728 = vrot.slane %v8723, %v8727
    %v8794 = vunpack.c.l.b16 %v8659
    %v8795 = vunpack.c.l.b16 %v8660
    %v8796 = vunpack.c.l.b16 %v8661
    %v8797 = vunpack.c.l.b16 %v8662
    %v8798 = vunpack.c.l.b16 %v8663
    %v8799 = vunpack.c.l.b16 %v8664
    %v8800 = vunpack.c.l.b16 %v8665
    %v8801 = vunpack.c.l.b16 %v8666
    %v8802 = vunpack.c.l.b16 %v8667
    %v8803 = vunpack.c.l.b16 %v8668
    %v8804 = vunpack.c.l.b16 %v8669
    %v8805 = vunpack.c.l.b16 %v8670
    %v8806 = vunpack.c.l.b16 %v8671
    %v8807 = vunpack.c.l.b16 %v8672
    %v8808 = vunpack.c.l.b16 %v8673
    %v8809 = vunpack.c.l.b16 %v8674
    %v8810 = vunpack.c.l.b16 %v8675
    %v8811 = vunpack.c.l.b16 %v8676
    %v8812 = vunpack.c.l.b16 %v8677
    %v8813 = vunpack.c.l.b16 %v8678
    %v8814 = vunpack.c.l.b16 %v8679
    %v8815 = vunpack.c.l.b16 %v8680
    %v8816 = vunpack.c.l.b16 %v8681
    %v8817 = vunpack.c.l.b16 %v8682
    %v8818 = vunpack.c.l.b16 %v8683
    %v8819 = vunpack.c.l.b16 %v8684
    %v8820 = vunpack.c.l.b16 %v8685
    %v8821 = vunpack.c.l.b16 %v8686
    %v8822 = vunpack.c.l.b16 %v8687
    %v8823 = vunpack.c.l.b16 %v8688
    %v8824 = vunpack.c.l.b16 %v8689
    %v8825 = vunpack.c.l.b16 %v8690
    %v8826 = vunpack.c.l.b16 %v8691
    %v8827 = vunpack.c.l.b16 %v8692
    %v8828 = vunpack.c.l.b16 %v8693
    %v8829 = vunpack.c.l.b16 %v8694
    %v8830 = vunpack.c.l.b16 %v8695
    %v8831 = vunpack.c.l.b16 %v8696
    %v8832 = vunpack.c.l.b16 %v8697
    %v8833 = vunpack.c.l.b16 %v8698
    %v8834 = vunpack.c.l.b16 %v8699
    %v8835 = vunpack.c.l.b16 %v8700
    %v8836 = vunpack.c.l.b16 %v8701
    %v8837 = vunpack.c.l.b16 %v8702
    %v8838 = vunpack.c.l.b16 %v8703
    %v8839 = vunpack.c.l.b16 %v8704
    %v8840 = vunpack.c.l.b16 %v8705
    %v8841 = vunpack.c.l.b16 %v8706
    %v8842 = vunpack.c.l.b16 %v8707
    %v8843 = vunpack.c.l.b16 %v8708
    %v8844 = vunpack.c.l.b16 %v8709
    %v8845 = vunpack.c.l.b16 %v8710
    %v8846 = vunpack.c.l.b16 %v8711
    %v8847 = vunpack.c.l.b16 %v8712
    %v8848 = vunpack.c.l.b16 %v8713
    %v8849 = vunpack.c.l.b16 %v8714
    %v8850 = vunpack.c.l.b16 %v8715
    %v8851 = vunpack.c.l.b16 %v8716
    %v8852 = vunpack.c.l.b16 %v8717
    %v8853 = vunpack.c.l.b16 %v8718
    %v8854 = vunpack.c.l.b16 %v8719
    %v8855 = vunpack.c.l.b16 %v8720
    %v8856 = vunpack.c.l.b16 %v8721
    %v8857 = vunpack.c.l.b16 %v8722
    %v8858 = vpack.c.b16 %v8795, %v8794
    %v8859 = vpack.c.b16 %v8797, %v8796
    %v8860 = vpack.c.b16 %v8799, %v8798
    %v8861 = vpack.c.b16 %v8801, %v8800
    %v8862 = vpack.c.b16 %v8803, %v8802
    %v8863 = vpack.c.b16 %v8805, %v8804
    %v8864 = vpack.c.b16 %v8807, %v8806
    %v8865 = vpack.c.b16 %v8809, %v8808
    %v8866 = vpack.c.b16 %v8811, %v8810
    %v8867 = vpack.c.b16 %v8813, %v8812
    %v8868 = vpack.c.b16 %v8815, %v8814
    %v8869 = vpack.c.b16 %v8817, %v8816
    %v8870 = vpack.c.b16 %v8819, %v8818
    %v8871 = vpack.c.b16 %v8821, %v8820
    %v8872 = vpack.c.b16 %v8823, %v8822
    %v8873 = vpack.c.b16 %v8825, %v8824
    %v8874 = vpack.c.b16 %v8827, %v8826
    %v8875 = vpack.c.b16 %v8829, %v8828
    %v8876 = vpack.c.b16 %v8831, %v8830
    %v8877 = vpack.c.b16 %v8833, %v8832
    %v8878 = vpack.c.b16 %v8835, %v8834
    %v8879 = vpack.c.b16 %v8837, %v8836
    %v8880 = vpack.c.b16 %v8839, %v8838
    %v8881 = vpack.c.b16 %v8841, %v8840
    %v8882 = vpack.c.b16 %v8843, %v8842
    %v8883 = vpack.c.b16 %v8845, %v8844
    %v8884 = vpack.c.b16 %v8847, %v8846
    %v8885 = vpack.c.b16 %v8849, %v8848
    %v8886 = vpack.c.b16 %v8851, %v8850
    %v8887 = vpack.c.b16 %v8853, %v8852
    %v8888 = vpack.c.b16 %v8855, %v8854
    %v8889 = vpack.c.b16 %v8857, %v8856
    %8922 = vmatprep.subr.bf16.mxu0 0
    %8923 = vmatpush1.bf16.msra.mxu0 %v8858
    %8924 = vmatprep.subr.bf16.mxu0 0
    %8925 = vmatpush1.bf16.msra.mxu0 %v8859
    %8926 = vmatprep.subr.bf16.mxu0 0
    %8927 = vmatpush1.bf16.msra.mxu0 %v8860
    %8928 = vmatprep.subr.bf16.mxu0 0
    %8929 = vmatpush1.bf16.msra.mxu0 %v8861
    %8930 = vmatprep.subr.bf16.mxu0 0
    %8931 = vmatpush1.bf16.msra.mxu0 %v8862
    %8932 = vmatprep.subr.bf16.mxu0 0
    %8933 = vmatpush1.bf16.msra.mxu0 %v8863
    %8934 = vmatprep.subr.bf16.mxu0 0
    %8935 = vmatpush1.bf16.msra.mxu0 %v8864
    %8936 = vmatprep.subr.bf16.mxu0 0
    %8937 = vmatpush1.bf16.msra.mxu0 %v8865
    %8938 = vmatprep.subr.bf16.mxu0 0
    %8939 = vmatpush1.bf16.msra.mxu0 %v8866
    %8940 = vmatprep.subr.bf16.mxu0 0
    %8941 = vmatpush1.bf16.msra.mxu0 %v8867
    %8942 = vmatprep.subr.bf16.mxu0 0
    %8943 = vmatpush1.bf16.msra.mxu0 %v8868
    %8944 = vmatprep.subr.bf16.mxu0 0
    %8945 = vmatpush1.bf16.msra.mxu0 %v8869
    %8946 = vmatprep.subr.bf16.mxu0 0
    %8947 = vmatpush1.bf16.msra.mxu0 %v8870
    %8948 = vmatprep.subr.bf16.mxu0 0
    %8949 = vmatpush1.bf16.msra.mxu0 %v8871
    %8950 = vmatprep.subr.bf16.mxu0 0
    %8951 = vmatpush1.bf16.msra.mxu0 %v8872
    %8952 = vmatprep.subr.bf16.mxu0 0
    %8953 = vmatpush1.bf16.msra.mxu0 %v8873
    %8954 = vmatprep.mubr.bf16.mxu0 %v8656
    %8955 = vmatmul.mubr.bf16.gmra.mrb[0].mxu0 %v8655
    %v8956 = vpop.f32.mrb[0].mxu0
    %v8957 = vadd.f32 %v8728, %v8956
    %v8958 = vpop.f32.mrb[0].mxu0
    %v8959 = vpop.f32.mrb[0].mxu0
    %v8960 = vpop.f32.mrb[0].mxu0
    %8961 = vdwg.mxu0
    %8962 = vmatprep.subr.bf16.mxu0 0
    %8963 = vmatpush1.bf16.msra.mxu0 %v8874
    %8964 = vmatprep.subr.bf16.mxu0 0
    %8965 = vmatpush1.bf16.msra.mxu0 %v8875
    %8966 = vmatprep.subr.bf16.mxu0 0
    %8967 = vmatpush1.bf16.msra.mxu0 %v8876
    %8968 = vmatprep.subr.bf16.mxu0 0
    %8969 = vmatpush1.bf16.msra.mxu0 %v8877
    %8970 = vmatprep.subr.bf16.mxu0 0
    %8971 = vmatpush1.bf16.msra.mxu0 %v8878
    %8972 = vmatprep.subr.bf16.mxu0 0
    %8973 = vmatpush1.bf16.msra.mxu0 %v8879
    %8974 = vmatprep.subr.bf16.mxu0 0
    %8975 = vmatpush1.bf16.msra.mxu0 %v8880
    %8976 = vmatprep.subr.bf16.mxu0 0
    %8977 = vmatpush1.bf16.msra.mxu0 %v8881
    %8978 = vmatprep.subr.bf16.mxu0 0
    %8979 = vmatpush1.bf16.msra.mxu0 %v8882
    %8980 = vmatprep.subr.bf16.mxu0 0
    %8981 = vmatpush1.bf16.msra.mxu0 %v8883
    %8982 = vmatprep.subr.bf16.mxu0 0
    %8983 = vmatpush1.bf16.msra.mxu0 %v8884
    %8984 = vmatprep.subr.bf16.mxu0 0
    %8985 = vmatpush1.bf16.msra.mxu0 %v8885
    %8986 = vmatprep.subr.bf16.mxu0 0
    %8987 = vmatpush1.bf16.msra.mxu0 %v8886
    %8988 = vmatprep.subr.bf16.mxu0 0
    %8989 = vmatpush1.bf16.msra.mxu0 %v8887
    %8990 = vmatprep.subr.bf16.mxu0 0
    %8991 = vmatpush1.bf16.msra.mxu0 %v8888
    %8992 = vmatprep.subr.bf16.mxu0 0
    %8993 = vmatpush1.bf16.msra.mxu0 %v8889
    %8994 = vmatprep.mubr.bf16.mxu0 %v8658
    %8995 = vmatmul.mubr.bf16.gmra.mrb[0].mxu0 %v8657
    %v8996 = vpop.f32.mrb[0].mxu0
    %v8997 = vadd.f32 %v8957, %v8996
    %v8998 = vpop.f32.mrb[0].mxu0
    %v8999 = vpop.f32.mrb[0].mxu0
    %v9000 = vpop.f32.mrb[0].mxu0
    %9001 = vdwg.mxu0
    %v9002 = vld [vmem:[%s77] sm:$0x1]
    %v9004 = vlaneseq
    %v9005 = vshrl.u32 %v9004, 7
    %v9006 = vsub.s32 0, %v9005
    %v9007 = vrot.slane %v9002, %v9006
    %v9009 = vmul.f32 %v9007, %v8997
    %v9010 = vadd.f32 %v8272, %v9009
    %v9011 = vld [vmem:[%s79] sm:$0x3]
    %vm9012 = vcmask 15360
    %v9014 = vsel %vm9012, %v9011, 0
    %v9017 = vsel %vm6746, %v9010, 0
    %9019 = vmatprep.subr.mxu0 0.0
    %9020 = vmatpush1.msra.mxu0 %v9017
    %9021 = vmatprep.subr.mxu0 0.0
    %9022 = vmatpush1.msra.mxu0 0.0
    %9023 = vmatprep.subr.mxu0 0.0
    %9024 = vmatpush1.msra.mxu0 0.0
    %9025 = vmatprep.subr.mxu0 0.0
    %9026 = vmatpush1.msra.mxu0 0.0
    %9027 = vmatprep.subr.mxu0 0.0
    %9028 = vmatpush1.msra.mxu0 0.0
    %9029 = vmatprep.subr.mxu0 0.0
    %9030 = vmatpush1.msra.mxu0 0.0
    %9031 = vmatprep.subr.mxu0 0.0
    %9032 = vmatpush1.msra.mxu0 0.0
    %9033 = vmatprep.subr.mxu0 0.0
    %9034 = vmatpush1.msra.mxu0 0.0
    %9035 = vmatprep.subr.mxu0 0.0
    %9036 = vmatpush1.msra.mxu0 0.0
    %9037 = vmatprep.subr.mxu0 0.0
    %9038 = vmatpush1.msra.mxu0 0.0
    %9039 = vmatprep.subr.mxu0 0.0
    %9040 = vmatpush1.msra.mxu0 0.0
    %9041 = vmatprep.subr.mxu0 0.0
    %9042 = vmatpush1.msra.mxu0 0.0
    %9043 = vmatprep.subr.mxu0 0.0
    %9044 = vmatpush1.msra.mxu0 0.0
    %9045 = vmatprep.subr.mxu0 0.0
    %9046 = vmatpush1.msra.mxu0 0.0
    %9047 = vmatprep.subr.mxu0 0.0
    %9048 = vmatpush1.msra.mxu0 0.0
    %9049 = vmatprep.subr.mxu0 0.0
    %9050 = vmatpush1.msra.mxu0 0.0
    %9051 = vmatprep.subr.mxu0 0.0
    %9052 = vmatpush1.msra.mxu0 0.0
    %9053 = vmatprep.subr.mxu0 0.0
    %9054 = vmatpush1.msra.mxu0 0.0
    %9055 = vmatprep.subr.mxu0 0.0
    %9056 = vmatpush1.msra.mxu0 0.0
    %9057 = vmatprep.subr.mxu0 0.0
    %9058 = vmatpush1.msra.mxu0 0.0
    %9059 = vmatprep.subr.mxu0 0.0
    %9060 = vmatpush1.msra.mxu0 0.0
    %9061 = vmatprep.subr.mxu0 0.0
    %9062 = vmatpush1.msra.mxu0 0.0
    %9063 = vmatprep.subr.mxu0 0.0
    %9064 = vmatpush1.msra.mxu0 0.0
    %9065 = vmatprep.subr.mxu0 0.0
    %9066 = vmatpush1.msra.mxu0 0.0
    %9067 = vmatprep.subr.mxu0 0.0
    %9068 = vmatpush1.msra.mxu0 0.0
    %9069 = vmatprep.subr.mxu0 0.0
    %9070 = vmatpush1.msra.mxu0 0.0
    %9071 = vmatprep.subr.mxu0 0.0
    %9072 = vmatpush1.msra.mxu0 0.0
    %9073 = vmatprep.subr.mxu0 0.0
    %9074 = vmatpush1.msra.mxu0 0.0
    %9075 = vmatprep.subr.mxu0 0.0
    %9076 = vmatpush1.msra.mxu0 0.0
    %9077 = vmatprep.subr.mxu0 0.0
    %9078 = vmatpush1.msra.mxu0 0.0
    %9079 = vmatprep.subr.mxu0 0.0
    %9080 = vmatpush1.msra.mxu0 0.0
    %9081 = vmatprep.subr.mxu0 0.0
    %9082 = vmatpush1.msra.mxu0 0.0
    %9083 = vmatprep.mubr.f32.mxu0 0.0
    %9084 = vmatmul.mubr.f32.gmra.mrb[0].mxu0 %v9014
    %v9085 = vpop.f32.mrb[0].mxu0
    %v9086 = vadd.f32 0.0, %v9085
    %v9087 = vpop.f32.mrb[0].mxu0
    %9088 = vdwg.mxu0
    %v9089 = vpack.c.bf16 %v9086, %v9086
    %v9090 = vld [vmem:[%s81] sm:$0xf]
    %v9091 = vld [vmem:[%s81 + $0x4] sm:$0xf]
    %v9092 = vld [vmem:[%s81 + $0x8] sm:$0xf]
    %v9093 = vld [vmem:[%s81 + $0xc] sm:$0xf]
    %v9094 = vld [vmem:[%s81 + $0x10] sm:$0xf]
    %v9095 = vld [vmem:[%s81 + $0x14] sm:$0xf]
    %v9096 = vld [vmem:[%s81 + $0x18] sm:$0xf]
    %v9097 = vld [vmem:[%s81 + $0x1c] sm:$0xf]
    %v9098 = vld [vmem:[%s81 + $0x20] sm:$0xf]
    %v9099 = vld [vmem:[%s81 + $0x24] sm:$0xf]
    %v9100 = vld [vmem:[%s81 + $0x28] sm:$0xf]
    %v9101 = vld [vmem:[%s81 + $0x2c] sm:$0xf]
    %v9102 = vld [vmem:[%s81 + $0x30] sm:$0xf]
    %v9103 = vld [vmem:[%s81 + $0x34] sm:$0xf]
    %v9104 = vld [vmem:[%s81 + $0x38] sm:$0xf]
    %v9105 = vld [vmem:[%s81 + $0x3c] sm:$0xf]
    %v9106 = vld [vmem:[#allocation2] sm:$0x1]
    %v9108 = vlaneseq
    %v9109 = vshrl.u32 %v9108, 7
    %v9110 = vsub.s32 0, %v9109
    %v9111 = vrot.slane %v9106, %v9110
    %v9129 = vunpack.c.l.b16 %v9090
    %v9130 = vunpack.c.l.b16 %v9091
    %v9131 = vunpack.c.l.b16 %v9092
    %v9132 = vunpack.c.l.b16 %v9093
    %v9133 = vunpack.c.l.b16 %v9094
    %v9134 = vunpack.c.l.b16 %v9095
    %v9135 = vunpack.c.l.b16 %v9096
    %v9136 = vunpack.c.l.b16 %v9097
    %v9137 = vunpack.c.l.b16 %v9098
    %v9138 = vunpack.c.l.b16 %v9099
    %v9139 = vunpack.c.l.b16 %v9100
    %v9140 = vunpack.c.l.b16 %v9101
    %v9141 = vunpack.c.l.b16 %v9102
    %v9142 = vunpack.c.l.b16 %v9103
    %v9143 = vunpack.c.l.b16 %v9104
    %v9144 = vunpack.c.l.b16 %v9105
    %v9145 = vpack.c.b16 %v9130, %v9129
    %v9146 = vpack.c.b16 %v9132, %v9131
    %v9147 = vpack.c.b16 %v9134, %v9133
    %v9148 = vpack.c.b16 %v9136, %v9135
    %v9149 = vpack.c.b16 %v9138, %v9137
    %v9150 = vpack.c.b16 %v9140, %v9139
    %v9151 = vpack.c.b16 %v9142, %v9141
    %v9152 = vpack.c.b16 %v9144, %v9143
    %9161 = vmatprep.subr.bf16.mxu0 0
    %9162 = vmatpush1.bf16.msra.mxu0 %v9145
    %9163 = vmatprep.subr.bf16.mxu0 0
    %9164 = vmatpush1.bf16.msra.mxu0 %v9146
    %9165 = vmatprep.subr.bf16.mxu0 0
    %9166 = vmatpush1.bf16.msra.mxu0 %v9147
    %9167 = vmatprep.subr.bf16.mxu0 0
    %9168 = vmatpush1.bf16.msra.mxu0 %v9148
    %9169 = vmatprep.subr.bf16.mxu0 0
    %9170 = vmatpush1.bf16.msra.mxu0 %v9149
    %9171 = vmatprep.subr.bf16.mxu0 0
    %9172 = vmatpush1.bf16.msra.mxu0 %v9150
    %9173 = vmatprep.subr.bf16.mxu0 0
    %9174 = vmatpush1.bf16.msra.mxu0 %v9151
    %9175 = vmatprep.subr.bf16.mxu0 0
    %9176 = vmatpush1.bf16.msra.mxu0 %v9152
    %9177 = vmatprep.subr.bf16.mxu0 0
    %9178 = vmatpush1.bf16.msra.mxu0 0
    %9179 = vmatprep.subr.bf16.mxu0 0
    %9180 = vmatpush1.bf16.msra.mxu0 0
    %9181 = vmatprep.subr.bf16.mxu0 0
    %9182 = vmatpush1.bf16.msra.mxu0 0
    %9183 = vmatprep.subr.bf16.mxu0 0
    %9184 = vmatpush1.bf16.msra.mxu0 0
    %9185 = vmatprep.subr.bf16.mxu0 0
    %9186 = vmatpush1.bf16.msra.mxu0 0
    %9187 = vmatprep.subr.bf16.mxu0 0
    %9188 = vmatpush1.bf16.msra.mxu0 0
    %9189 = vmatprep.subr.bf16.mxu0 0
    %9190 = vmatpush1.bf16.msra.mxu0 0
    %9191 = vmatprep.subr.bf16.mxu0 0
    %9192 = vmatpush1.bf16.msra.mxu0 0
    %9193 = vmatprep.mubr.bf16.mxu0 0
    %9194 = vmatmul.mubr.bf16.gmra.mrb[0].mxu0 %v9089
    %v9195 = vpop.f32.mrb[0].mxu0
    %v9196 = vadd.f32 %v9111, %v9195
    %v9197 = vpop.f32.mrb[0].mxu0
    %v9198 = vpop.f32.mrb[0].mxu0
    %v9199 = vpop.f32.mrb[0].mxu0
    %9200 = vdwg.mxu0
    %9201 = vst [vmem:[#allocation5] sm:$0x3] %v9196
    // Predicated region
    $region174: #{convnext3d_forward.1} parent=1 // pred_check
      _
    $region175: #{convnext3d_forward.1} parent=1 // pred_check_branch
      %9203 = sbr.rel (0) target = $region177
    $region176: #{convnext3d_forward.1} parent=1 // pred_region
      %s9205 = ssub.s32 32, 32
      %9206 = vsyncadd [#allocation4], %s9205
      %s9208 = sshll.u32 [#allocation5], 4
      %s9209 = int_to_ptr.vmem [resolvable:$true] %s9208
      %9211 = dma.vmem_to_hbm [thread:$0]  %s9209, 32, %s85, [#allocation4]
    $region177: #{convnext3d_forward.1} parent=1 // pred_fallthru
      _
    // Predicated region
    $region178: #{convnext3d_forward.1} parent=1 // pred_check
      _
    $region179: #{convnext3d_forward.1} parent=1 // pred_check_branch
      %9213 = sbr.rel (0) target = $region181
    $region180: #{convnext3d_forward.1} parent=1 // pred_region
      %9214 = dma.done [#allocation4], 32
    $region181: #{convnext3d_forward.1} parent=1 // pred_fallthru
      _
    %9215 = vsyncpa [#allocation3], 1
    %9216 = vsyncpa [#allocation4], 1

</llo_original>
